<compile_context>
chip_gen: v5e
topology: v5e:2x2
jax: 0.10.0
libtpu: 0.0.40
codegen_flags: <defaults>
</compile_context>

<pallas_src>
import functools

import numpy as np
import jax
import jax.numpy as jnp
from jax.experimental import pallas as pl
from jax.experimental.pallas import tpu as pltpu


_VMEM = pl.BlockSpec(memory_space=pltpu.MemorySpace.VMEM)
_SUBLANE = 8   # f32 sublane tile
_LANE = 128    # lane tile


def _round_up(x, m):
    return ((x + m - 1) // m) * m


# --------------------------------------------------------------------------
# Single fused kernel: bidirectional encoder LSTM -> [fwd|bwd] concat ->
# autoregressive decoder LSTM (head folded in) -> one lane-dense head matmul.
# --------------------------------------------------------------------------
def _seq2seq_kernel(src_ref,        # [T*Bp, I]   time-major, batch padded
                    wx_ref,         # [I, 8H]  = [Wih_f^T | Wih_b^T]
                    b_enc_ref,      # [1, 8H]  = [bih_f+bhh_f | bih_b+bhh_b]
                    whh_f_ref,      # [H, 4H]  fwd recurrent weight (f32/bf16)
                    whh_b_ref,      # [H, 4H]  bwd recurrent weight
                    whh0_ref,       # [Hd, 4Hd] plain decoder Whh^T   (t = 0)
                    b0_ref,         # [1, 4Hd]  bih + bhh              (t = 0)
                    whhp_ref,       # [Hd, 4Hd] Whh^T + Wout^T Wih^T   (t >= 1)
                    bp_ref,         # [1, 4Hd]  b + bout @ Wih^T       (t >= 1)
                    wout_ref,       # [Hd, Op]  head weight, O padded to 128
                    bout_ref,       # [1, Op]
                    out_ref,        # [Tout*Bp, Op]
                    gx_ref,         # scratch [T*Bp, 8H]
                    h_all_ref,      # scratch [Tout*Bp, Hd]
                    *, T, Tout, Bp, H):
    Hd = 2 * H
    H4 = 4 * H
    rdt = whh_f_ref.dtype    # bf16 (perf) or f32 (tight numerics)

    # ---- hoisted input projection for ALL timesteps & both directions.
    if src_ref.shape[1] == 1:
        # input_size == 1: degenerate outer product -> VPU broadcast multiply
        # (frees the MXU / vex slot; no padded K=1 contraction).
        gx_ref[...] = src_ref[...] * wx_ref[...] + b_enc_ref[...]
    else:
        gx_ref[...] = (jnp.dot(src_ref[...], wx_ref[...],
                               preferred_element_type=jnp.float32)
                       + b_enc_ref[...])

    def cell(g, c, Hh):
        # PyTorch gate order (i, f, g, o); every slice is 128-lane aligned.
        i = jax.nn.sigmoid(g[:, 0:Hh])
        f = jax.nn.sigmoid(g[:, Hh:2 * Hh])
        gg = jnp.tanh(g[:, 2 * Hh:3 * Hh])
        o = jax.nn.sigmoid(g[:, 3 * Hh:4 * Hh])
        c_new = f * c + i * gg
        return o * jnp.tanh(c_new), c_new

    # ---- encoder t = 0 : zero state -> recurrent term vanishes (no matmul)
    zc = jnp.zeros((Bp, H), jnp.float32)
    h_f, c_f = cell(gx_ref[0:Bp, 0:H4], zc, H)                      # src[0]
    h_b, c_b = cell(gx_ref[(T - 1) * Bp:T * Bp, H4:2 * H4], zc, H)  # src[T-1]

    # ---- encoder t = 1 .. T-1 : two INDEPENDENT direction chains, unrolled,
    # so one direction's EUP/VPU gate math overlaps the other's MXU push.
    for t in range(1, T):
        gh_f = jnp.dot(h_f.astype(rdt), whh_f_ref[...],
                       preferred_element_type=jnp.float32)
        gh_b = jnp.dot(h_b.astype(rdt), whh_b_ref[...],
                       preferred_element_type=jnp.float32)
        h_f, c_f = cell(gh_f + gx_ref[t * Bp:(t + 1) * Bp, 0:H4], c_f, H)
        h_b, c_b = cell(gh_b + gx_ref[(T - 1 - t) * Bp:(T - t) * Bp,
                                      H4:2 * H4], c_b, H)

    # ---- Seq2Seq `concat_hidden`: [fwd | bwd] along features (done ONCE,
    # inside VMEM — no HBM writeback / reload between encoder and decoder).
    h = jnp.concatenate([h_f, h_b], axis=1)      # [Bp, Hd]
    c = jnp.concatenate([c_f, c_b], axis=1)      # [Bp, Hd]

    # ---- decoder t = 0 : input x_0 = 0 -> only the recurrent term
    g0 = (jnp.dot(h.astype(rdt), whh0_ref[...],
                  preferred_element_type=jnp.float32) + b0_ref[...])
    h, c = cell(g0, c, Hd)
    h_all_ref[0:Bp, :] = h

    # ---- decoder t >= 1 : linear head folded in (x_t = h_{t-1} @ Wout^T + bout)
    for t in range(1, Tout):
        g = (jnp.dot(h.astype(rdt), whhp_ref[...],
                     preferred_element_type=jnp.float32) + bp_ref[...])
        h, c = cell(g, c, Hd)
        h_all_ref[t * Bp:(t + 1) * Bp, :] = h

    # ---- single lane-dense head matmul + ONE unmasked store for all steps
    out_ref[...] = (jnp.dot(h_all_ref[...], wout_ref[...],
                            preferred_element_type=jnp.float32)
                    + bout_ref[...])


# --------------------------------------------------------------------------
# One-time parameter packing (transposes, head folding, bias fusion, padding).
# Call ONCE outside the per-call forward; the result is static across calls.
# --------------------------------------------------------------------------
def pack_params(enc_p, dec_p, output_size, use_bf16=True):
    rdt = jnp.bfloat16 if use_bf16 else jnp.float32

    # Encoder: input projection + combined biases, per-direction recurrent W.
    wx = jnp.concatenate([enc_p["wih_f"].T, enc_p["wih_b"].T], axis=1)  # [I,8H]
    b_enc = jnp.concatenate([enc_p["bih_f"] + enc_p["bhh_f"],
                             enc_p["bih_b"] + enc_p["bhh_b"]])[None, :]  # [1,8H]
    whh_f = enc_p["whh_f"].T.astype(rdt)                                # [H,4H]
    whh_b = enc_p["whh_b"].T.astype(rdt)                                # [H,4H]

    # Decoder: fold the Linear head into the recurrence for t >= 1.
    wihT = dec_p["wih"].T                                   # [O, 4Hd]
    whhT = dec_p["whh"].T                                   # [Hd, 4Hd]
    woutT = dec_p["wout"].T                                 # [Hd, O]
    Hd = whhT.shape[0]
    b0 = (dec_p["bih"] + dec_p["bhh"])[None, :]             # [1, 4Hd]
    whh_fused = whhT + jnp.dot(woutT, wihT)                 # [Hd, 4Hd]
    b_fused = b0 + jnp.dot(dec_p["bout"][None, :], wihT)    # [1, 4Hd]

    # Head weight/bias padded so the final output store is lane-dense.
    Op = max(_LANE, _round_up(output_size, _LANE))
    wout_pad = jnp.zeros((Hd, Op), jnp.float32).at[:, :output_size].set(woutT)
    bout_pad = jnp.zeros((1, Op), jnp.float32).at[:, :output_size].set(
        dec_p["bout"][None, :])

    return dict(wx=wx, b_enc=b_enc, whh_f=whh_f, whh_b=whh_b,
                whh0=whhT.astype(rdt), b0=b0,
                whhp=whh_fused.astype(rdt), bp=b_fused,
                wout=wout_pad, bout=bout_pad)


# --------------------------------------------------------------------------
# Public forward (batch-first [B, T, D], like the PyTorch module).
# --------------------------------------------------------------------------
def seq2seq_forward(source, target_tensor, packed):
    B, T, I = source.shape
    Tout = target_tensor.shape[1]
    O = target_tensor.shape[-1]
    H = packed["whh_f"].shape[0]
    Hd = 2 * H
    Op = packed["wout"].shape[1]
    Bp = _round_up(max(B, _SUBLANE), _SUBLANE)

    # time-major, batch padded to the sublane tile, flattened for 2-D slicing
    src_tm = jnp.transpose(source.astype(jnp.float32), (1, 0, 2))   # [T, B, I]
    src_flat = jnp.pad(src_tm, ((0, 0), (0, Bp - B), (0, 0))).reshape(T * Bp, I)

    kernel = functools.partial(_seq2seq_kernel, T=T, Tout=Tout, Bp=Bp, H=H)
    out_flat = pl.pallas_call(
        kernel,
        out_shape=jax.ShapeDtypeStruct((Tout * Bp, Op), jnp.float32),
        in_specs=[_VMEM] * 11,
        out_specs=_VMEM,
        scratch_shapes=[pltpu.VMEM((T * Bp, 8 * H), jnp.float32),
                        pltpu.VMEM((Tout * Bp, Hd), jnp.float32)],
    )(src_flat, packed["wx"], packed["b_enc"], packed["whh_f"],
      packed["whh_b"], packed["whh0"], packed["b0"], packed["whhp"],
      packed["bp"], packed["wout"], packed["bout"])

    out = out_flat.reshape(Tout, Bp, Op)[:, :B, :O]     # drop pad rows / lanes
    return jnp.transpose(out, (1, 0, 2))                # [B, Tout, O]


# --------------------------------------------------------------------------
# Deterministic parameter init (PyTorch-style uniform(-1/sqrt(H), 1/sqrt(H)))
# --------------------------------------------------------------------------
def init_params(key, input_size, hidden_dim, output_size):
    H, Hd = hidden_dim, 2 * hidden_dim
    ke, kd = 1.0 / np.sqrt(H), 1.0 / np.sqrt(Hd)
    ks = jax.random.split(key, 14)
    u = lambda k, shape, s: jax.random.uniform(k, shape, jnp.float32, -s, s)
    enc = dict(
        wih_f=u(ks[0], (4 * H, input_size), ke),
        whh_f=u(ks[1], (4 * H, H), ke),
        bih_f=u(ks[2], (4 * H,), ke),
        bhh_f=u(ks[3], (4 * H,), ke),
        wih_b=u(ks[4], (4 * H, input_size), ke),
        whh_b=u(ks[5], (4 * H, H), ke),
        bih_b=u(ks[6], (4 * H,), ke),
        bhh_b=u(ks[7], (4 * H,), ke),
    )
    dec = dict(
        wih=u(ks[8], (4 * Hd, output_size), kd),
        whh=u(ks[9], (4 * Hd, Hd), kd),
        bih=u(ks[10], (4 * Hd,), kd),
        bhh=u(ks[11], (4 * Hd,), kd),
        wout=u(ks[12], (output_size, Hd), kd),
        bout=u(ks[13], (output_size,), kd),
    )
    return enc, dec


# --------------------------------------------------------------------------
# Pure NumPy reference (mirrors the PyTorch forward semantics) for checking.
# --------------------------------------------------------------------------
def ref_forward(source, target_length, enc_p, dec_p):
    src = np.asarray(source, np.float32)
    B, T, _ = src.shape
    H = enc_p["whh_f"].shape[1]

    def cell(x, h, c, wih, whh, b):
        g = x @ np.asarray(wih).T + h @ np.asarray(whh).T + np.asarray(b)
        Hh = h.shape[1]
        sig = lambda z: 1.0 / (1.0 + np.exp(-z))
        i, f = sig(g[:, :Hh]), sig(g[:, Hh:2 * Hh])
        gg, o = np.tanh(g[:, 2 * Hh:3 * Hh]), sig(g[:, 3 * Hh:])
        c = f * c + i * gg
        return o * np.tanh(c), c

    hf = np.zeros((B, H), np.float32); cf = np.zeros((B, H), np.float32)
    hb = np.zeros((B, H), np.float32); cb = np.zeros((B, H), np.float32)
    bf = np.asarray(enc_p["bih_f"]) + np.asarray(enc_p["bhh_f"])
    bb = np.asarray(enc_p["bih_b"]) + np.asarray(enc_p["bhh_b"])
    for t in range(T):
        hf, cf = cell(src[:, t], hf, cf, enc_p["wih_f"], enc_p["whh_f"], bf)
        hb, cb = cell(src[:, T - 1 - t], hb, cb, enc_p["wih_b"], enc_p["whh_b"], bb)
    h = np.concatenate([hf, hb], axis=1)
    c = np.concatenate([cf, cb], axis=1)

    O = np.asarray(dec_p["wout"]).shape[0]
    bd = np.asarray(dec_p["bih"]) + np.asarray(dec_p["bhh"])
    x = np.zeros((B, O), np.float32)
    outs = np.zeros((B, target_length, O), np.float32)
    for t in range(target_length):
        h, c = cell(x, h, c, dec_p["wih"], dec_p["whh"], bd)
        x = h @ np.asarray(dec_p["wout"]).T + np.asarray(dec_p["bout"])
        outs[:, t] = x
    return outs


if __name__ == "__main__":
    # Shapes consistent with the PyTorch spec: input_size=1, hidden_dim=128,
    # output_size=1; small batch / sequence lengths for the demo.
    B, T_in, T_out = 2, 8, 4
    input_size, hidden_dim, output_size = 1, 128, 1

    key = jax.random.PRNGKey(0)
    kp, ksrc, ktgt = jax.random.split(key, 3)
    enc_p, dec_p = init_params(kp, input_size, hidden_dim, output_size)

    source = jax.random.normal(ksrc, (B, T_in, input_size), jnp.float32)
    target = jax.random.normal(ktgt, (B, T_out, output_size), jnp.float32)

    ref = ref_forward(source, T_out, enc_p, dec_p)
    fwd = jax.jit(seq2seq_forward)

    # f32 recurrent path: tight numerical check against the reference.
    packed_f32 = pack_params(enc_p, dec_p, output_size, use_bf16=False)
    out_f32 = jax.block_until_ready(fwd(source, target, packed_f32))
    assert out_f32.shape == (B, T_out, output_size)
    np.testing.assert_allclose(np.asarray(out_f32), ref, rtol=1e-4, atol=1e-4)

    # bf16 recurrent-weight path (default for perf): looser tolerance.
    packed_bf16 = pack_params(enc_p, dec_p, output_size, use_bf16=True)
    out_bf16 = jax.block_until_ready(fwd(source, target, packed_bf16))
    assert out_bf16.shape == (B, T_out, output_size)
    np.testing.assert_allclose(np.asarray(out_bf16), ref, rtol=5e-2, atol=5e-2)

    print("KERNEL_OK")
</pallas_src>

<mosaic_0001>
module attributes {stable_mosaic.version = 11 : i64} {
  func.func @_seq2seq_kernel(%arg0: memref<64x1xf32, #tpu.memory_space<vmem>>, %arg1: memref<1x1024xf32, #tpu.memory_space<vmem>>, %arg2: memref<1x1024xf32, #tpu.memory_space<vmem>>, %arg3: memref<128x512xf32, #tpu.memory_space<vmem>>, %arg4: memref<128x512xf32, #tpu.memory_space<vmem>>, %arg5: memref<256x1024xf32, #tpu.memory_space<vmem>>, %arg6: memref<1x1024xf32, #tpu.memory_space<vmem>>, %arg7: memref<256x1024xf32, #tpu.memory_space<vmem>>, %arg8: memref<1x1024xf32, #tpu.memory_space<vmem>>, %arg9: memref<256x128xf32, #tpu.memory_space<vmem>>, %arg10: memref<1x128xf32, #tpu.memory_space<vmem>>, %arg11: memref<32x128xf32, #tpu.memory_space<vmem>>, %arg12: memref<64x1024xf32, #tpu.memory_space<vmem>>, %arg13: memref<32x256xf32, #tpu.memory_space<vmem>>) attributes {dimension_semantics = [], scalar_prefetch = 0 : i64, scratch_operands = 2 : i64, tpu.core_type = #tpu.core_type<tc>} {
    %c0 = arith.constant 0 : index
    %c0_0 = arith.constant 0 : index
    %0 = vector.load %arg0[%c0, %c0_0] : memref<64x1xf32, #tpu.memory_space<vmem>>, vector<64x1xf32>
    %c0_1 = arith.constant 0 : index
    %c0_2 = arith.constant 0 : index
    %1 = vector.load %arg1[%c0_1, %c0_2] : memref<1x1024xf32, #tpu.memory_space<vmem>>, vector<1x1024xf32>
    %2 = vector.broadcast %0 : vector<64x1xf32> to vector<64x1024xf32>
    %3 = vector.broadcast %1 : vector<1x1024xf32> to vector<64x1024xf32>
    %4 = arith.mulf %2, %3 : vector<64x1024xf32>
    %c0_3 = arith.constant 0 : index
    %c0_4 = arith.constant 0 : index
    %5 = vector.load %arg2[%c0_3, %c0_4] : memref<1x1024xf32, #tpu.memory_space<vmem>>, vector<1x1024xf32>
    %6 = vector.broadcast %5 : vector<1x1024xf32> to vector<64x1024xf32>
    %7 = arith.addf %4, %6 : vector<64x1024xf32>
    %c0_5 = arith.constant 0 : index
    %c0_6 = arith.constant 0 : index
    %8 = vector.load %arg12[%c0_5, %c0_6] : memref<64x1024xf32, #tpu.memory_space<vmem>>, vector<64x1024xf32>
    tpu.vector_store %arg12[%c0_5, %c0_6], %7 {strides = array<i32>} : memref<64x1024xf32, #tpu.memory_space<vmem>>, vector<64x1024xf32>,
    %cst = arith.constant 0.000000e+00 : f32
    %9 = vector.broadcast %cst : f32 to vector<8x128xf32>
    %c0_7 = arith.constant 0 : index
    %c0_8 = arith.constant 0 : index
    %10 = vector.load %arg12[%c0_7, %c0_8] : memref<64x1024xf32, #tpu.memory_space<vmem>>, vector<8x512xf32>
    %11 = vector.extract_strided_slice %10 {offsets = [0, 0], sizes = [8, 128], strides = [1, 1]} : vector<8x512xf32> to vector<8x128xf32>
    %12 = arith.negf %11 : vector<8x128xf32>
    %13 = math.exp %12 : vector<8x128xf32>
    %cst_9 = arith.constant 1.000000e+00 : f32
    %14 = vector.broadcast %cst_9 : f32 to vector<8x128xf32>
    %15 = arith.addf %14, %13 : vector<8x128xf32>
    %16 = arith.divf %14, %15 : vector<8x128xf32>
    %17 = vector.extract_strided_slice %10 {offsets = [0, 128], sizes = [8, 128], strides = [1, 1]} : vector<8x512xf32> to vector<8x128xf32>
    %18 = arith.negf %17 : vector<8x128xf32>
    %19 = math.exp %18 : vector<8x128xf32>
    %cst_10 = arith.constant 1.000000e+00 : f32
    %20 = vector.broadcast %cst_10 : f32 to vector<8x128xf32>
    %21 = arith.addf %20, %19 : vector<8x128xf32>
    %22 = arith.divf %20, %21 : vector<8x128xf32>
    %23 = vector.extract_strided_slice %10 {offsets = [0, 256], sizes = [8, 128], strides = [1, 1]} : vector<8x512xf32> to vector<8x128xf32>
    %24 = math.tanh %23 : vector<8x128xf32>
    %25 = vector.extract_strided_slice %10 {offsets = [0, 384], sizes = [8, 128], strides = [1, 1]} : vector<8x512xf32> to vector<8x128xf32>
    %26 = arith.negf %25 : vector<8x128xf32>
    %27 = math.exp %26 : vector<8x128xf32>
    %cst_11 = arith.constant 1.000000e+00 : f32
    %28 = vector.broadcast %cst_11 : f32 to vector<8x128xf32>
    %29 = arith.addf %28, %27 : vector<8x128xf32>
    %30 = arith.divf %28, %29 : vector<8x128xf32>
    %31 = arith.mulf %22, %9 : vector<8x128xf32>
    %32 = arith.mulf %16, %24 : vector<8x128xf32>
    %33 = arith.addf %31, %32 : vector<8x128xf32>
    %34 = math.tanh %33 : vector<8x128xf32>
    %35 = arith.mulf %30, %34 : vector<8x128xf32>
    %c56 = arith.constant 56 : index
    %c512 = arith.constant 512 : index
    %36 = vector.load %arg12[%c56, %c512] : memref<64x1024xf32, #tpu.memory_space<vmem>>, vector<8x512xf32>
    %37 = vector.extract_strided_slice %36 {offsets = [0, 0], sizes = [8, 128], strides = [1, 1]} : vector<8x512xf32> to vector<8x128xf32>
    %38 = arith.negf %37 : vector<8x128xf32>
    %39 = math.exp %38 : vector<8x128xf32>
    %cst_12 = arith.constant 1.000000e+00 : f32
    %40 = vector.broadcast %cst_12 : f32 to vector<8x128xf32>
    %41 = arith.addf %40, %39 : vector<8x128xf32>
    %42 = arith.divf %40, %41 : vector<8x128xf32>
    %43 = vector.extract_strided_slice %36 {offsets = [0, 128], sizes = [8, 128], strides = [1, 1]} : vector<8x512xf32> to vector<8x128xf32>
    %44 = arith.negf %43 : vector<8x128xf32>
    %45 = math.exp %44 : vector<8x128xf32>
    %cst_13 = arith.constant 1.000000e+00 : f32
    %46 = vector.broadcast %cst_13 : f32 to vector<8x128xf32>
    %47 = arith.addf %46, %45 : vector<8x128xf32>
    %48 = arith.divf %46, %47 : vector<8x128xf32>
    %49 = vector.extract_strided_slice %36 {offsets = [0, 256], sizes = [8, 128], strides = [1, 1]} : vector<8x512xf32> to vector<8x128xf32>
    %50 = math.tanh %49 : vector<8x128xf32>
    %51 = vector.extract_strided_slice %36 {offsets = [0, 384], sizes = [8, 128], strides = [1, 1]} : vector<8x512xf32> to vector<8x128xf32>
    %52 = arith.negf %51 : vector<8x128xf32>
    %53 = math.exp %52 : vector<8x128xf32>
    %cst_14 = arith.constant 1.000000e+00 : f32
    %54 = vector.broadcast %cst_14 : f32 to vector<8x128xf32>
    %55 = arith.addf %54, %53 : vector<8x128xf32>
    %56 = arith.divf %54, %55 : vector<8x128xf32>
    %57 = arith.mulf %48, %9 : vector<8x128xf32>
    %58 = arith.mulf %42, %50 : vector<8x128xf32>
    %59 = arith.addf %57, %58 : vector<8x128xf32>
    %60 = math.tanh %59 : vector<8x128xf32>
    %61 = arith.mulf %56, %60 : vector<8x128xf32>
    %c0_15 = arith.constant 0 : index
    %c0_16 = arith.constant 0 : index
    %62 = vector.load %arg3[%c0_15, %c0_16] : memref<128x512xf32, #tpu.memory_space<vmem>>, vector<128x512xf32>
    %cst_17 = arith.constant dense<0.000000e+00> : vector<8x512xf32>
    %63 = tpu.matmul %35, %62, %cst_17 {dimension_numbers = #tpu.dot_dimension_numbers<[1], [0], [0], [1], [0, 0, 1, 1], [], []>} : vector<8x128xf32>, vector<128x512xf32>, vector<8x512xf32> -> vector<8x512xf32>
    %c0_18 = arith.constant 0 : index
    %c0_19 = arith.constant 0 : index
    %64 = vector.load %arg4[%c0_18, %c0_19] : memref<128x512xf32, #tpu.memory_space<vmem>>, vector<128x512xf32>
    %cst_20 = arith.constant dense<0.000000e+00> : vector<8x512xf32>
    %65 = tpu.matmul %61, %64, %cst_20 {dimension_numbers = #tpu.dot_dimension_numbers<[1], [0], [0], [1], [0, 0, 1, 1], [], []>} : vector<8x128xf32>, vector<128x512xf32>, vector<8x512xf32> -> vector<8x512xf32>
    %c8 = arith.constant 8 : index
    %c0_21 = arith.constant 0 : index
    %66 = vector.load %arg12[%c8, %c0_21] : memref<64x1024xf32, #tpu.memory_space<vmem>>, vector<8x512xf32>
    %67 = arith.addf %63, %66 : vector<8x512xf32>
    %68 = vector.extract_strided_slice %67 {offsets = [0, 0], sizes = [8, 128], strides = [1, 1]} : vector<8x512xf32> to vector<8x128xf32>
    %69 = arith.negf %68 : vector<8x128xf32>
    %70 = math.exp %69 : vector<8x128xf32>
    %cst_22 = arith.constant 1.000000e+00 : f32
    %71 = vector.broadcast %cst_22 : f32 to vector<8x128xf32>
    %72 = arith.addf %71, %70 : vector<8x128xf32>
    %73 = arith.divf %71, %72 : vector<8x128xf32>
    %74 = vector.extract_strided_slice %67 {offsets = [0, 128], sizes = [8, 128], strides = [1, 1]} : vector<8x512xf32> to vector<8x128xf32>
    %75 = arith.negf %74 : vector<8x128xf32>
    %76 = math.exp %75 : vector<8x128xf32>
    %cst_23 = arith.constant 1.000000e+00 : f32
    %77 = vector.broadcast %cst_23 : f32 to vector<8x128xf32>
    %78 = arith.addf %77, %76 : vector<8x128xf32>
    %79 = arith.divf %77, %78 : vector<8x128xf32>
    %80 = vector.extract_strided_slice %67 {offsets = [0, 256], sizes = [8, 128], strides = [1, 1]} : vector<8x512xf32> to vector<8x128xf32>
    %81 = math.tanh %80 : vector<8x128xf32>
    %82 = vector.extract_strided_slice %67 {offsets = [0, 384], sizes = [8, 128], strides = [1, 1]} : vector<8x512xf32> to vector<8x128xf32>
    %83 = arith.negf %82 : vector<8x128xf32>
    %84 = math.exp %83 : vector<8x128xf32>
    %cst_24 = arith.constant 1.000000e+00 : f32
    %85 = vector.broadcast %cst_24 : f32 to vector<8x128xf32>
    %86 = arith.addf %85, %84 : vector<8x128xf32>
    %87 = arith.divf %85, %86 : vector<8x128xf32>
    %88 = arith.mulf %79, %33 : vector<8x128xf32>
    %89 = arith.mulf %73, %81 : vector<8x128xf32>
    %90 = arith.addf %88, %89 : vector<8x128xf32>
    %91 = math.tanh %90 : vector<8x128xf32>
    %92 = arith.mulf %87, %91 : vector<8x128xf32>
    %c48 = arith.constant 48 : index
    %c512_25 = arith.constant 512 : index
    %93 = vector.load %arg12[%c48, %c512_25] : memref<64x1024xf32, #tpu.memory_space<vmem>>, vector<8x512xf32>
    %94 = arith.addf %65, %93 : vector<8x512xf32>
    %95 = vector.extract_strided_slice %94 {offsets = [0, 0], sizes = [8, 128], strides = [1, 1]} : vector<8x512xf32> to vector<8x128xf32>
    %96 = arith.negf %95 : vector<8x128xf32>
    %97 = math.exp %96 : vector<8x128xf32>
    %cst_26 = arith.constant 1.000000e+00 : f32
    %98 = vector.broadcast %cst_26 : f32 to vector<8x128xf32>
    %99 = arith.addf %98, %97 : vector<8x128xf32>
    %100 = arith.divf %98, %99 : vector<8x128xf32>
    %101 = vector.extract_strided_slice %94 {offsets = [0, 128], sizes = [8, 128], strides = [1, 1]} : vector<8x512xf32> to vector<8x128xf32>
    %102 = arith.negf %101 : vector<8x128xf32>
    %103 = math.exp %102 : vector<8x128xf32>
    %cst_27 = arith.constant 1.000000e+00 : f32
    %104 = vector.broadcast %cst_27 : f32 to vector<8x128xf32>
    %105 = arith.addf %104, %103 : vector<8x128xf32>
    %106 = arith.divf %104, %105 : vector<8x128xf32>
    %107 = vector.extract_strided_slice %94 {offsets = [0, 256], sizes = [8, 128], strides = [1, 1]} : vector<8x512xf32> to vector<8x128xf32>
    %108 = math.tanh %107 : vector<8x128xf32>
    %109 = vector.extract_strided_slice %94 {offsets = [0, 384], sizes = [8, 128], strides = [1, 1]} : vector<8x512xf32> to vector<8x128xf32>
    %110 = arith.negf %109 : vector<8x128xf32>
    %111 = math.exp %110 : vector<8x128xf32>
    %cst_28 = arith.constant 1.000000e+00 : f32
    %112 = vector.broadcast %cst_28 : f32 to vector<8x128xf32>
    %113 = arith.addf %112, %111 : vector<8x128xf32>
    %114 = arith.divf %112, %113 : vector<8x128xf32>
    %115 = arith.mulf %106, %59 : vector<8x128xf32>
    %116 = arith.mulf %100, %108 : vector<8x128xf32>
    %117 = arith.addf %115, %116 : vector<8x128xf32>
    %118 = math.tanh %117 : vector<8x128xf32>
    %119 = arith.mulf %114, %118 : vector<8x128xf32>
    %c0_29 = arith.constant 0 : index
    %c0_30 = arith.constant 0 : index
    %120 = vector.load %arg3[%c0_29, %c0_30] : memref<128x512xf32, #tpu.memory_space<vmem>>, vector<128x512xf32>
    %cst_31 = arith.constant dense<0.000000e+00> : vector<8x512xf32>
    %121 = tpu.matmul %92, %120, %cst_31 {dimension_numbers = #tpu.dot_dimension_numbers<[1], [0], [0], [1], [0, 0, 1, 1], [], []>} : vector<8x128xf32>, vector<128x512xf32>, vector<8x512xf32> -> vector<8x512xf32>
    %c0_32 = arith.constant 0 : index
    %c0_33 = arith.constant 0 : index
    %122 = vector.load %arg4[%c0_32, %c0_33] : memref<128x512xf32, #tpu.memory_space<vmem>>, vector<128x512xf32>
    %cst_34 = arith.constant dense<0.000000e+00> : vector<8x512xf32>
    %123 = tpu.matmul %119, %122, %cst_34 {dimension_numbers = #tpu.dot_dimension_numbers<[1], [0], [0], [1], [0, 0, 1, 1], [], []>} : vector<8x128xf32>, vector<128x512xf32>, vector<8x512xf32> -> vector<8x512xf32>
    %c16 = arith.constant 16 : index
    %c0_35 = arith.constant 0 : index
    %124 = vector.load %arg12[%c16, %c0_35] : memref<64x1024xf32, #tpu.memory_space<vmem>>, vector<8x512xf32>
    %125 = arith.addf %121, %124 : vector<8x512xf32>
    %126 = vector.extract_strided_slice %125 {offsets = [0, 0], sizes = [8, 128], strides = [1, 1]} : vector<8x512xf32> to vector<8x128xf32>
    %127 = arith.negf %126 : vector<8x128xf32>
    %128 = math.exp %127 : vector<8x128xf32>
    %cst_36 = arith.constant 1.000000e+00 : f32
    %129 = vector.broadcast %cst_36 : f32 to vector<8x128xf32>
    %130 = arith.addf %129, %128 : vector<8x128xf32>
    %131 = arith.divf %129, %130 : vector<8x128xf32>
    %132 = vector.extract_strided_slice %125 {offsets = [0, 128], sizes = [8, 128], strides = [1, 1]} : vector<8x512xf32> to vector<8x128xf32>
    %133 = arith.negf %132 : vector<8x128xf32>
    %134 = math.exp %133 : vector<8x128xf32>
    %cst_37 = arith.constant 1.000000e+00 : f32
    %135 = vector.broadcast %cst_37 : f32 to vector<8x128xf32>
    %136 = arith.addf %135, %134 : vector<8x128xf32>
    %137 = arith.divf %135, %136 : vector<8x128xf32>
    %138 = vector.extract_strided_slice %125 {offsets = [0, 256], sizes = [8, 128], strides = [1, 1]} : vector<8x512xf32> to vector<8x128xf32>
    %139 = math.tanh %138 : vector<8x128xf32>
    %140 = vector.extract_strided_slice %125 {offsets = [0, 384], sizes = [8, 128], strides = [1, 1]} : vector<8x512xf32> to vector<8x128xf32>
    %141 = arith.negf %140 : vector<8x128xf32>
    %142 = math.exp %141 : vector<8x128xf32>
    %cst_38 = arith.constant 1.000000e+00 : f32
    %143 = vector.broadcast %cst_38 : f32 to vector<8x128xf32>
    %144 = arith.addf %143, %142 : vector<8x128xf32>
    %145 = arith.divf %143, %144 : vector<8x128xf32>
    %146 = arith.mulf %137, %90 : vector<8x128xf32>
    %147 = arith.mulf %131, %139 : vector<8x128xf32>
    %148 = arith.addf %146, %147 : vector<8x128xf32>
    %149 = math.tanh %148 : vector<8x128xf32>
    %150 = arith.mulf %145, %149 : vector<8x128xf32>
    %c40 = arith.constant 40 : index
    %c512_39 = arith.constant 512 : index
    %151 = vector.load %arg12[%c40, %c512_39] : memref<64x1024xf32, #tpu.memory_space<vmem>>, vector<8x512xf32>
    %152 = arith.addf %123, %151 : vector<8x512xf32>
    %153 = vector.extract_strided_slice %152 {offsets = [0, 0], sizes = [8, 128], strides = [1, 1]} : vector<8x512xf32> to vector<8x128xf32>
    %154 = arith.negf %153 : vector<8x128xf32>
    %155 = math.exp %154 : vector<8x128xf32>
    %cst_40 = arith.constant 1.000000e+00 : f32
    %156 = vector.broadcast %cst_40 : f32 to vector<8x128xf32>
    %157 = arith.addf %156, %155 : vector<8x128xf32>
    %158 = arith.divf %156, %157 : vector<8x128xf32>
    %159 = vector.extract_strided_slice %152 {offsets = [0, 128], sizes = [8, 128], strides = [1, 1]} : vector<8x512xf32> to vector<8x128xf32>
    %160 = arith.negf %159 : vector<8x128xf32>
    %161 = math.exp %160 : vector<8x128xf32>
    %cst_41 = arith.constant 1.000000e+00 : f32
    %162 = vector.broadcast %cst_41 : f32 to vector<8x128xf32>
    %163 = arith.addf %162, %161 : vector<8x128xf32>
    %164 = arith.divf %162, %163 : vector<8x128xf32>
    %165 = vector.extract_strided_slice %152 {offsets = [0, 256], sizes = [8, 128], strides = [1, 1]} : vector<8x512xf32> to vector<8x128xf32>
    %166 = math.tanh %165 : vector<8x128xf32>
    %167 = vector.extract_strided_slice %152 {offsets = [0, 384], sizes = [8, 128], strides = [1, 1]} : vector<8x512xf32> to vector<8x128xf32>
    %168 = arith.negf %167 : vector<8x128xf32>
    %169 = math.exp %168 : vector<8x128xf32>
    %cst_42 = arith.constant 1.000000e+00 : f32
    %170 = vector.broadcast %cst_42 : f32 to vector<8x128xf32>
    %171 = arith.addf %170, %169 : vector<8x128xf32>
    %172 = arith.divf %170, %171 : vector<8x128xf32>
    %173 = arith.mulf %164, %117 : vector<8x128xf32>
    %174 = arith.mulf %158, %166 : vector<8x128xf32>
    %175 = arith.addf %173, %174 : vector<8x128xf32>
    %176 = math.tanh %175 : vector<8x128xf32>
    %177 = arith.mulf %172, %176 : vector<8x128xf32>
    %c0_43 = arith.constant 0 : index
    %c0_44 = arith.constant 0 : index
    %178 = vector.load %arg3[%c0_43, %c0_44] : memref<128x512xf32, #tpu.memory_space<vmem>>, vector<128x512xf32>
    %cst_45 = arith.constant dense<0.000000e+00> : vector<8x512xf32>
    %179 = tpu.matmul %150, %178, %cst_45 {dimension_numbers = #tpu.dot_dimension_numbers<[1], [0], [0], [1], [0, 0, 1, 1], [], []>} : vector<8x128xf32>, vector<128x512xf32>, vector<8x512xf32> -> vector<8x512xf32>
    %c0_46 = arith.constant 0 : index
    %c0_47 = arith.constant 0 : index
    %180 = vector.load %arg4[%c0_46, %c0_47] : memref<128x512xf32, #tpu.memory_space<vmem>>, vector<128x512xf32>
    %cst_48 = arith.constant dense<0.000000e+00> : vector<8x512xf32>
    %181 = tpu.matmul %177, %180, %cst_48 {dimension_numbers = #tpu.dot_dimension_numbers<[1], [0], [0], [1], [0, 0, 1, 1], [], []>} : vector<8x128xf32>, vector<128x512xf32>, vector<8x512xf32> -> vector<8x512xf32>
    %c24 = arith.constant 24 : index
    %c0_49 = arith.constant 0 : index
    %182 = vector.load %arg12[%c24, %c0_49] : memref<64x1024xf32, #tpu.memory_space<vmem>>, vector<8x512xf32>
    %183 = arith.addf %179, %182 : vector<8x512xf32>
    %184 = vector.extract_strided_slice %183 {offsets = [0, 0], sizes = [8, 128], strides = [1, 1]} : vector<8x512xf32> to vector<8x128xf32>
    %185 = arith.negf %184 : vector<8x128xf32>
    %186 = math.exp %185 : vector<8x128xf32>
    %cst_50 = arith.constant 1.000000e+00 : f32
    %187 = vector.broadcast %cst_50 : f32 to vector<8x128xf32>
    %188 = arith.addf %187, %186 : vector<8x128xf32>
    %189 = arith.divf %187, %188 : vector<8x128xf32>
    %190 = vector.extract_strided_slice %183 {offsets = [0, 128], sizes = [8, 128], strides = [1, 1]} : vector<8x512xf32> to vector<8x128xf32>
    %191 = arith.negf %190 : vector<8x128xf32>
    %192 = math.exp %191 : vector<8x128xf32>
    %cst_51 = arith.constant 1.000000e+00 : f32
    %193 = vector.broadcast %cst_51 : f32 to vector<8x128xf32>
    %194 = arith.addf %193, %192 : vector<8x128xf32>
    %195 = arith.divf %193, %194 : vector<8x128xf32>
    %196 = vector.extract_strided_slice %183 {offsets = [0, 256], sizes = [8, 128], strides = [1, 1]} : vector<8x512xf32> to vector<8x128xf32>
    %197 = math.tanh %196 : vector<8x128xf32>
    %198 = vector.extract_strided_slice %183 {offsets = [0, 384], sizes = [8, 128], strides = [1, 1]} : vector<8x512xf32> to vector<8x128xf32>
    %199 = arith.negf %198 : vector<8x128xf32>
    %200 = math.exp %199 : vector<8x128xf32>
    %cst_52 = arith.constant 1.000000e+00 : f32
    %201 = vector.broadcast %cst_52 : f32 to vector<8x128xf32>
    %202 = arith.addf %201, %200 : vector<8x128xf32>
    %203 = arith.divf %201, %202 : vector<8x128xf32>
    %204 = arith.mulf %195, %148 : vector<8x128xf32>
    %205 = arith.mulf %189, %197 : vector<8x128xf32>
    %206 = arith.addf %204, %205 : vector<8x128xf32>
    %207 = math.tanh %206 : vector<8x128xf32>
    %208 = arith.mulf %203, %207 : vector<8x128xf32>
    %c32 = arith.constant 32 : index
    %c512_53 = arith.constant 512 : index
    %209 = vector.load %arg12[%c32, %c512_53] : memref<64x1024xf32, #tpu.memory_space<vmem>>, vector<8x512xf32>
    %210 = arith.addf %181, %209 : vector<8x512xf32>
    %211 = vector.extract_strided_slice %210 {offsets = [0, 0], sizes = [8, 128], strides = [1, 1]} : vector<8x512xf32> to vector<8x128xf32>
    %212 = arith.negf %211 : vector<8x128xf32>
    %213 = math.exp %212 : vector<8x128xf32>
    %cst_54 = arith.constant 1.000000e+00 : f32
    %214 = vector.broadcast %cst_54 : f32 to vector<8x128xf32>
    %215 = arith.addf %214, %213 : vector<8x128xf32>
    %216 = arith.divf %214, %215 : vector<8x128xf32>
    %217 = vector.extract_strided_slice %210 {offsets = [0, 128], sizes = [8, 128], strides = [1, 1]} : vector<8x512xf32> to vector<8x128xf32>
    %218 = arith.negf %217 : vector<8x128xf32>
    %219 = math.exp %218 : vector<8x128xf32>
    %cst_55 = arith.constant 1.000000e+00 : f32
    %220 = vector.broadcast %cst_55 : f32 to vector<8x128xf32>
    %221 = arith.addf %220, %219 : vector<8x128xf32>
    %222 = arith.divf %220, %221 : vector<8x128xf32>
    %223 = vector.extract_strided_slice %210 {offsets = [0, 256], sizes = [8, 128], strides = [1, 1]} : vector<8x512xf32> to vector<8x128xf32>
    %224 = math.tanh %223 : vector<8x128xf32>
    %225 = vector.extract_strided_slice %210 {offsets = [0, 384], sizes = [8, 128], strides = [1, 1]} : vector<8x512xf32> to vector<8x128xf32>
    %226 = arith.negf %225 : vector<8x128xf32>
    %227 = math.exp %226 : vector<8x128xf32>
    %cst_56 = arith.constant 1.000000e+00 : f32
    %228 = vector.broadcast %cst_56 : f32 to vector<8x128xf32>
    %229 = arith.addf %228, %227 : vector<8x128xf32>
    %230 = arith.divf %228, %229 : vector<8x128xf32>
    %231 = arith.mulf %222, %175 : vector<8x128xf32>
    %232 = arith.mulf %216, %224 : vector<8x128xf32>
    %233 = arith.addf %231, %232 : vector<8x128xf32>
    %234 = math.tanh %233 : vector<8x128xf32>
    %235 = arith.mulf %230, %234 : vector<8x128xf32>
    %c0_57 = arith.constant 0 : index
    %c0_58 = arith.constant 0 : index
    %236 = vector.load %arg3[%c0_57, %c0_58] : memref<128x512xf32, #tpu.memory_space<vmem>>, vector<128x512xf32>
    %cst_59 = arith.constant dense<0.000000e+00> : vector<8x512xf32>
    %237 = tpu.matmul %208, %236, %cst_59 {dimension_numbers = #tpu.dot_dimension_numbers<[1], [0], [0], [1], [0, 0, 1, 1], [], []>} : vector<8x128xf32>, vector<128x512xf32>, vector<8x512xf32> -> vector<8x512xf32>
    %c0_60 = arith.constant 0 : index
    %c0_61 = arith.constant 0 : index
    %238 = vector.load %arg4[%c0_60, %c0_61] : memref<128x512xf32, #tpu.memory_space<vmem>>, vector<128x512xf32>
    %cst_62 = arith.constant dense<0.000000e+00> : vector<8x512xf32>
    %239 = tpu.matmul %235, %238, %cst_62 {dimension_numbers = #tpu.dot_dimension_numbers<[1], [0], [0], [1], [0, 0, 1, 1], [], []>} : vector<8x128xf32>, vector<128x512xf32>, vector<8x512xf32> -> vector<8x512xf32>
    %c32_63 = arith.constant 32 : index
    %c0_64 = arith.constant 0 : index
    %240 = vector.load %arg12[%c32_63, %c0_64] : memref<64x1024xf32, #tpu.memory_space<vmem>>, vector<8x512xf32>
    %241 = arith.addf %237, %240 : vector<8x512xf32>
    %242 = vector.extract_strided_slice %241 {offsets = [0, 0], sizes = [8, 128], strides = [1, 1]} : vector<8x512xf32> to vector<8x128xf32>
    %243 = arith.negf %242 : vector<8x128xf32>
    %244 = math.exp %243 : vector<8x128xf32>
    %cst_65 = arith.constant 1.000000e+00 : f32
    %245 = vector.broadcast %cst_65 : f32 to vector<8x128xf32>
    %246 = arith.addf %245, %244 : vector<8x128xf32>
    %247 = arith.divf %245, %246 : vector<8x128xf32>
    %248 = vector.extract_strided_slice %241 {offsets = [0, 128], sizes = [8, 128], strides = [1, 1]} : vector<8x512xf32> to vector<8x128xf32>
    %249 = arith.negf %248 : vector<8x128xf32>
    %250 = math.exp %249 : vector<8x128xf32>
    %cst_66 = arith.constant 1.000000e+00 : f32
    %251 = vector.broadcast %cst_66 : f32 to vector<8x128xf32>
    %252 = arith.addf %251, %250 : vector<8x128xf32>
    %253 = arith.divf %251, %252 : vector<8x128xf32>
    %254 = vector.extract_strided_slice %241 {offsets = [0, 256], sizes = [8, 128], strides = [1, 1]} : vector<8x512xf32> to vector<8x128xf32>
    %255 = math.tanh %254 : vector<8x128xf32>
    %256 = vector.extract_strided_slice %241 {offsets = [0, 384], sizes = [8, 128], strides = [1, 1]} : vector<8x512xf32> to vector<8x128xf32>
    %257 = arith.negf %256 : vector<8x128xf32>
    %258 = math.exp %257 : vector<8x128xf32>
    %cst_67 = arith.constant 1.000000e+00 : f32
    %259 = vector.broadcast %cst_67 : f32 to vector<8x128xf32>
    %260 = arith.addf %259, %258 : vector<8x128xf32>
    %261 = arith.divf %259, %260 : vector<8x128xf32>
    %262 = arith.mulf %253, %206 : vector<8x128xf32>
    %263 = arith.mulf %247, %255 : vector<8x128xf32>
    %264 = arith.addf %262, %263 : vector<8x128xf32>
    %265 = math.tanh %264 : vector<8x128xf32>
    %266 = arith.mulf %261, %265 : vector<8x128xf32>
    %c24_68 = arith.constant 24 : index
    %c512_69 = arith.constant 512 : index
    %267 = vector.load %arg12[%c24_68, %c512_69] : memref<64x1024xf32, #tpu.memory_space<vmem>>, vector<8x512xf32>
    %268 = arith.addf %239, %267 : vector<8x512xf32>
    %269 = vector.extract_strided_slice %268 {offsets = [0, 0], sizes = [8, 128], strides = [1, 1]} : vector<8x512xf32> to vector<8x128xf32>
    %270 = arith.negf %269 : vector<8x128xf32>
    %271 = math.exp %270 : vector<8x128xf32>
    %cst_70 = arith.constant 1.000000e+00 : f32
    %272 = vector.broadcast %cst_70 : f32 to vector<8x128xf32>
    %273 = arith.addf %272, %271 : vector<8x128xf32>
    %274 = arith.divf %272, %273 : vector<8x128xf32>
    %275 = vector.extract_strided_slice %268 {offsets = [0, 128], sizes = [8, 128], strides = [1, 1]} : vector<8x512xf32> to vector<8x128xf32>
    %276 = arith.negf %275 : vector<8x128xf32>
    %277 = math.exp %276 : vector<8x128xf32>
    %cst_71 = arith.constant 1.000000e+00 : f32
    %278 = vector.broadcast %cst_71 : f32 to vector<8x128xf32>
    %279 = arith.addf %278, %277 : vector<8x128xf32>
    %280 = arith.divf %278, %279 : vector<8x128xf32>
    %281 = vector.extract_strided_slice %268 {offsets = [0, 256], sizes = [8, 128], strides = [1, 1]} : vector<8x512xf32> to vector<8x128xf32>
    %282 = math.tanh %281 : vector<8x128xf32>
    %283 = vector.extract_strided_slice %268 {offsets = [0, 384], sizes = [8, 128], strides = [1, 1]} : vector<8x512xf32> to vector<8x128xf32>
    %284 = arith.negf %283 : vector<8x128xf32>
    %285 = math.exp %284 : vector<8x128xf32>
    %cst_72 = arith.constant 1.000000e+00 : f32
    %286 = vector.broadcast %cst_72 : f32 to vector<8x128xf32>
    %287 = arith.addf %286, %285 : vector<8x128xf32>
    %288 = arith.divf %286, %287 : vector<8x128xf32>
    %289 = arith.mulf %280, %233 : vector<8x128xf32>
    %290 = arith.mulf %274, %282 : vector<8x128xf32>
    %291 = arith.addf %289, %290 : vector<8x128xf32>
    %292 = math.tanh %291 : vector<8x128xf32>
    %293 = arith.mulf %288, %292 : vector<8x128xf32>
    %c0_73 = arith.constant 0 : index
    %c0_74 = arith.constant 0 : index
    %294 = vector.load %arg3[%c0_73, %c0_74] : memref<128x512xf32, #tpu.memory_space<vmem>>, vector<128x512xf32>
    %cst_75 = arith.constant dense<0.000000e+00> : vector<8x512xf32>
    %295 = tpu.matmul %266, %294, %cst_75 {dimension_numbers = #tpu.dot_dimension_numbers<[1], [0], [0], [1], [0, 0, 1, 1], [], []>} : vector<8x128xf32>, vector<128x512xf32>, vector<8x512xf32> -> vector<8x512xf32>
    %c0_76 = arith.constant 0 : index
    %c0_77 = arith.constant 0 : index
    %296 = vector.load %arg4[%c0_76, %c0_77] : memref<128x512xf32, #tpu.memory_space<vmem>>, vector<128x512xf32>
    %cst_78 = arith.constant dense<0.000000e+00> : vector<8x512xf32>
    %297 = tpu.matmul %293, %296, %cst_78 {dimension_numbers = #tpu.dot_dimension_numbers<[1], [0], [0], [1], [0, 0, 1, 1], [], []>} : vector<8x128xf32>, vector<128x512xf32>, vector<8x512xf32> -> vector<8x512xf32>
    %c40_79 = arith.constant 40 : index
    %c0_80 = arith.constant 0 : index
    %298 = vector.load %arg12[%c40_79, %c0_80] : memref<64x1024xf32, #tpu.memory_space<vmem>>, vector<8x512xf32>
    %299 = arith.addf %295, %298 : vector<8x512xf32>
    %300 = vector.extract_strided_slice %299 {offsets = [0, 0], sizes = [8, 128], strides = [1, 1]} : vector<8x512xf32> to vector<8x128xf32>
    %301 = arith.negf %300 : vector<8x128xf32>
    %302 = math.exp %301 : vector<8x128xf32>
    %cst_81 = arith.constant 1.000000e+00 : f32
    %303 = vector.broadcast %cst_81 : f32 to vector<8x128xf32>
    %304 = arith.addf %303, %302 : vector<8x128xf32>
    %305 = arith.divf %303, %304 : vector<8x128xf32>
    %306 = vector.extract_strided_slice %299 {offsets = [0, 128], sizes = [8, 128], strides = [1, 1]} : vector<8x512xf32> to vector<8x128xf32>
    %307 = arith.negf %306 : vector<8x128xf32>
    %308 = math.exp %307 : vector<8x128xf32>
    %cst_82 = arith.constant 1.000000e+00 : f32
    %309 = vector.broadcast %cst_82 : f32 to vector<8x128xf32>
    %310 = arith.addf %309, %308 : vector<8x128xf32>
    %311 = arith.divf %309, %310 : vector<8x128xf32>
    %312 = vector.extract_strided_slice %299 {offsets = [0, 256], sizes = [8, 128], strides = [1, 1]} : vector<8x512xf32> to vector<8x128xf32>
    %313 = math.tanh %312 : vector<8x128xf32>
    %314 = vector.extract_strided_slice %299 {offsets = [0, 384], sizes = [8, 128], strides = [1, 1]} : vector<8x512xf32> to vector<8x128xf32>
    %315 = arith.negf %314 : vector<8x128xf32>
    %316 = math.exp %315 : vector<8x128xf32>
    %cst_83 = arith.constant 1.000000e+00 : f32
    %317 = vector.broadcast %cst_83 : f32 to vector<8x128xf32>
    %318 = arith.addf %317, %316 : vector<8x128xf32>
    %319 = arith.divf %317, %318 : vector<8x128xf32>
    %320 = arith.mulf %311, %264 : vector<8x128xf32>
    %321 = arith.mulf %305, %313 : vector<8x128xf32>
    %322 = arith.addf %320, %321 : vector<8x128xf32>
    %323 = math.tanh %322 : vector<8x128xf32>
    %324 = arith.mulf %319, %323 : vector<8x128xf32>
    %c16_84 = arith.constant 16 : index
    %c512_85 = arith.constant 512 : index
    %325 = vector.load %arg12[%c16_84, %c512_85] : memref<64x1024xf32, #tpu.memory_space<vmem>>, vector<8x512xf32>
    %326 = arith.addf %297, %325 : vector<8x512xf32>
    %327 = vector.extract_strided_slice %326 {offsets = [0, 0], sizes = [8, 128], strides = [1, 1]} : vector<8x512xf32> to vector<8x128xf32>
    %328 = arith.negf %327 : vector<8x128xf32>
    %329 = math.exp %328 : vector<8x128xf32>
    %cst_86 = arith.constant 1.000000e+00 : f32
    %330 = vector.broadcast %cst_86 : f32 to vector<8x128xf32>
    %331 = arith.addf %330, %329 : vector<8x128xf32>
    %332 = arith.divf %330, %331 : vector<8x128xf32>
    %333 = vector.extract_strided_slice %326 {offsets = [0, 128], sizes = [8, 128], strides = [1, 1]} : vector<8x512xf32> to vector<8x128xf32>
    %334 = arith.negf %333 : vector<8x128xf32>
    %335 = math.exp %334 : vector<8x128xf32>
    %cst_87 = arith.constant 1.000000e+00 : f32
    %336 = vector.broadcast %cst_87 : f32 to vector<8x128xf32>
    %337 = arith.addf %336, %335 : vector<8x128xf32>
    %338 = arith.divf %336, %337 : vector<8x128xf32>
    %339 = vector.extract_strided_slice %326 {offsets = [0, 256], sizes = [8, 128], strides = [1, 1]} : vector<8x512xf32> to vector<8x128xf32>
    %340 = math.tanh %339 : vector<8x128xf32>
    %341 = vector.extract_strided_slice %326 {offsets = [0, 384], sizes = [8, 128], strides = [1, 1]} : vector<8x512xf32> to vector<8x128xf32>
    %342 = arith.negf %341 : vector<8x128xf32>
    %343 = math.exp %342 : vector<8x128xf32>
    %cst_88 = arith.constant 1.000000e+00 : f32
    %344 = vector.broadcast %cst_88 : f32 to vector<8x128xf32>
    %345 = arith.addf %344, %343 : vector<8x128xf32>
    %346 = arith.divf %344, %345 : vector<8x128xf32>
    %347 = arith.mulf %338, %291 : vector<8x128xf32>
    %348 = arith.mulf %332, %340 : vector<8x128xf32>
    %349 = arith.addf %347, %348 : vector<8x128xf32>
    %350 = math.tanh %349 : vector<8x128xf32>
    %351 = arith.mulf %346, %350 : vector<8x128xf32>
    %c0_89 = arith.constant 0 : index
    %c0_90 = arith.constant 0 : index
    %352 = vector.load %arg3[%c0_89, %c0_90] : memref<128x512xf32, #tpu.memory_space<vmem>>, vector<128x512xf32>
    %cst_91 = arith.constant dense<0.000000e+00> : vector<8x512xf32>
    %353 = tpu.matmul %324, %352, %cst_91 {dimension_numbers = #tpu.dot_dimension_numbers<[1], [0], [0], [1], [0, 0, 1, 1], [], []>} : vector<8x128xf32>, vector<128x512xf32>, vector<8x512xf32> -> vector<8x512xf32>
    %c0_92 = arith.constant 0 : index
    %c0_93 = arith.constant 0 : index
    %354 = vector.load %arg4[%c0_92, %c0_93] : memref<128x512xf32, #tpu.memory_space<vmem>>, vector<128x512xf32>
    %cst_94 = arith.constant dense<0.000000e+00> : vector<8x512xf32>
    %355 = tpu.matmul %351, %354, %cst_94 {dimension_numbers = #tpu.dot_dimension_numbers<[1], [0], [0], [1], [0, 0, 1, 1], [], []>} : vector<8x128xf32>, vector<128x512xf32>, vector<8x512xf32> -> vector<8x512xf32>
    %c48_95 = arith.constant 48 : index
    %c0_96 = arith.constant 0 : index
    %356 = vector.load %arg12[%c48_95, %c0_96] : memref<64x1024xf32, #tpu.memory_space<vmem>>, vector<8x512xf32>
    %357 = arith.addf %353, %356 : vector<8x512xf32>
    %358 = vector.extract_strided_slice %357 {offsets = [0, 0], sizes = [8, 128], strides = [1, 1]} : vector<8x512xf32> to vector<8x128xf32>
    %359 = arith.negf %358 : vector<8x128xf32>
    %360 = math.exp %359 : vector<8x128xf32>
    %cst_97 = arith.constant 1.000000e+00 : f32
    %361 = vector.broadcast %cst_97 : f32 to vector<8x128xf32>
    %362 = arith.addf %361, %360 : vector<8x128xf32>
    %363 = arith.divf %361, %362 : vector<8x128xf32>
    %364 = vector.extract_strided_slice %357 {offsets = [0, 128], sizes = [8, 128], strides = [1, 1]} : vector<8x512xf32> to vector<8x128xf32>
    %365 = arith.negf %364 : vector<8x128xf32>
    %366 = math.exp %365 : vector<8x128xf32>
    %cst_98 = arith.constant 1.000000e+00 : f32
    %367 = vector.broadcast %cst_98 : f32 to vector<8x128xf32>
    %368 = arith.addf %367, %366 : vector<8x128xf32>
    %369 = arith.divf %367, %368 : vector<8x128xf32>
    %370 = vector.extract_strided_slice %357 {offsets = [0, 256], sizes = [8, 128], strides = [1, 1]} : vector<8x512xf32> to vector<8x128xf32>
    %371 = math.tanh %370 : vector<8x128xf32>
    %372 = vector.extract_strided_slice %357 {offsets = [0, 384], sizes = [8, 128], strides = [1, 1]} : vector<8x512xf32> to vector<8x128xf32>
    %373 = arith.negf %372 : vector<8x128xf32>
    %374 = math.exp %373 : vector<8x128xf32>
    %cst_99 = arith.constant 1.000000e+00 : f32
    %375 = vector.broadcast %cst_99 : f32 to vector<8x128xf32>
    %376 = arith.addf %375, %374 : vector<8x128xf32>
    %377 = arith.divf %375, %376 : vector<8x128xf32>
    %378 = arith.mulf %369, %322 : vector<8x128xf32>
    %379 = arith.mulf %363, %371 : vector<8x128xf32>
    %380 = arith.addf %378, %379 : vector<8x128xf32>
    %381 = math.tanh %380 : vector<8x128xf32>
    %382 = arith.mulf %377, %381 : vector<8x128xf32>
    %c8_100 = arith.constant 8 : index
    %c512_101 = arith.constant 512 : index
    %383 = vector.load %arg12[%c8_100, %c512_101] : memref<64x1024xf32, #tpu.memory_space<vmem>>, vector<8x512xf32>
    %384 = arith.addf %355, %383 : vector<8x512xf32>
    %385 = vector.extract_strided_slice %384 {offsets = [0, 0], sizes = [8, 128], strides = [1, 1]} : vector<8x512xf32> to vector<8x128xf32>
    %386 = arith.negf %385 : vector<8x128xf32>
    %387 = math.exp %386 : vector<8x128xf32>
    %cst_102 = arith.constant 1.000000e+00 : f32
    %388 = vector.broadcast %cst_102 : f32 to vector<8x128xf32>
    %389 = arith.addf %388, %387 : vector<8x128xf32>
    %390 = arith.divf %388, %389 : vector<8x128xf32>
    %391 = vector.extract_strided_slice %384 {offsets = [0, 128], sizes = [8, 128], strides = [1, 1]} : vector<8x512xf32> to vector<8x128xf32>
    %392 = arith.negf %391 : vector<8x128xf32>
    %393 = math.exp %392 : vector<8x128xf32>
    %cst_103 = arith.constant 1.000000e+00 : f32
    %394 = vector.broadcast %cst_103 : f32 to vector<8x128xf32>
    %395 = arith.addf %394, %393 : vector<8x128xf32>
    %396 = arith.divf %394, %395 : vector<8x128xf32>
    %397 = vector.extract_strided_slice %384 {offsets = [0, 256], sizes = [8, 128], strides = [1, 1]} : vector<8x512xf32> to vector<8x128xf32>
    %398 = math.tanh %397 : vector<8x128xf32>
    %399 = vector.extract_strided_slice %384 {offsets = [0, 384], sizes = [8, 128], strides = [1, 1]} : vector<8x512xf32> to vector<8x128xf32>
    %400 = arith.negf %399 : vector<8x128xf32>
    %401 = math.exp %400 : vector<8x128xf32>
    %cst_104 = arith.constant 1.000000e+00 : f32
    %402 = vector.broadcast %cst_104 : f32 to vector<8x128xf32>
    %403 = arith.addf %402, %401 : vector<8x128xf32>
    %404 = arith.divf %402, %403 : vector<8x128xf32>
    %405 = arith.mulf %396, %349 : vector<8x128xf32>
    %406 = arith.mulf %390, %398 : vector<8x128xf32>
    %407 = arith.addf %405, %406 : vector<8x128xf32>
    %408 = math.tanh %407 : vector<8x128xf32>
    %409 = arith.mulf %404, %408 : vector<8x128xf32>
    %c0_105 = arith.constant 0 : index
    %c0_106 = arith.constant 0 : index
    %410 = vector.load %arg3[%c0_105, %c0_106] : memref<128x512xf32, #tpu.memory_space<vmem>>, vector<128x512xf32>
    %cst_107 = arith.constant dense<0.000000e+00> : vector<8x512xf32>
    %411 = tpu.matmul %382, %410, %cst_107 {dimension_numbers = #tpu.dot_dimension_numbers<[1], [0], [0], [1], [0, 0, 1, 1], [], []>} : vector<8x128xf32>, vector<128x512xf32>, vector<8x512xf32> -> vector<8x512xf32>
    %c0_108 = arith.constant 0 : index
    %c0_109 = arith.constant 0 : index
    %412 = vector.load %arg4[%c0_108, %c0_109] : memref<128x512xf32, #tpu.memory_space<vmem>>, vector<128x512xf32>
    %cst_110 = arith.constant dense<0.000000e+00> : vector<8x512xf32>
    %413 = tpu.matmul %409, %412, %cst_110 {dimension_numbers = #tpu.dot_dimension_numbers<[1], [0], [0], [1], [0, 0, 1, 1], [], []>} : vector<8x128xf32>, vector<128x512xf32>, vector<8x512xf32> -> vector<8x512xf32>
    %c56_111 = arith.constant 56 : index
    %c0_112 = arith.constant 0 : index
    %414 = vector.load %arg12[%c56_111, %c0_112] : memref<64x1024xf32, #tpu.memory_space<vmem>>, vector<8x512xf32>
    %415 = arith.addf %411, %414 : vector<8x512xf32>
    %416 = vector.extract_strided_slice %415 {offsets = [0, 0], sizes = [8, 128], strides = [1, 1]} : vector<8x512xf32> to vector<8x128xf32>
    %417 = arith.negf %416 : vector<8x128xf32>
    %418 = math.exp %417 : vector<8x128xf32>
    %cst_113 = arith.constant 1.000000e+00 : f32
    %419 = vector.broadcast %cst_113 : f32 to vector<8x128xf32>
    %420 = arith.addf %419, %418 : vector<8x128xf32>
    %421 = arith.divf %419, %420 : vector<8x128xf32>
    %422 = vector.extract_strided_slice %415 {offsets = [0, 128], sizes = [8, 128], strides = [1, 1]} : vector<8x512xf32> to vector<8x128xf32>
    %423 = arith.negf %422 : vector<8x128xf32>
    %424 = math.exp %423 : vector<8x128xf32>
    %cst_114 = arith.constant 1.000000e+00 : f32
    %425 = vector.broadcast %cst_114 : f32 to vector<8x128xf32>
    %426 = arith.addf %425, %424 : vector<8x128xf32>
    %427 = arith.divf %425, %426 : vector<8x128xf32>
    %428 = vector.extract_strided_slice %415 {offsets = [0, 256], sizes = [8, 128], strides = [1, 1]} : vector<8x512xf32> to vector<8x128xf32>
    %429 = math.tanh %428 : vector<8x128xf32>
    %430 = vector.extract_strided_slice %415 {offsets = [0, 384], sizes = [8, 128], strides = [1, 1]} : vector<8x512xf32> to vector<8x128xf32>
    %431 = arith.negf %430 : vector<8x128xf32>
    %432 = math.exp %431 : vector<8x128xf32>
    %cst_115 = arith.constant 1.000000e+00 : f32
    %433 = vector.broadcast %cst_115 : f32 to vector<8x128xf32>
    %434 = arith.addf %433, %432 : vector<8x128xf32>
    %435 = arith.divf %433, %434 : vector<8x128xf32>
    %436 = arith.mulf %427, %380 : vector<8x128xf32>
    %437 = arith.mulf %421, %429 : vector<8x128xf32>
    %438 = arith.addf %436, %437 : vector<8x128xf32>
    %439 = math.tanh %438 : vector<8x128xf32>
    %440 = arith.mulf %435, %439 : vector<8x128xf32>
    %c0_116 = arith.constant 0 : index
    %c512_117 = arith.constant 512 : index
    %441 = vector.load %arg12[%c0_116, %c512_117] : memref<64x1024xf32, #tpu.memory_space<vmem>>, vector<8x512xf32>
    %442 = arith.addf %413, %441 : vector<8x512xf32>
    %443 = vector.extract_strided_slice %442 {offsets = [0, 0], sizes = [8, 128], strides = [1, 1]} : vector<8x512xf32> to vector<8x128xf32>
    %444 = arith.negf %443 : vector<8x128xf32>
    %445 = math.exp %444 : vector<8x128xf32>
    %cst_118 = arith.constant 1.000000e+00 : f32
    %446 = vector.broadcast %cst_118 : f32 to vector<8x128xf32>
    %447 = arith.addf %446, %445 : vector<8x128xf32>
    %448 = arith.divf %446, %447 : vector<8x128xf32>
    %449 = vector.extract_strided_slice %442 {offsets = [0, 128], sizes = [8, 128], strides = [1, 1]} : vector<8x512xf32> to vector<8x128xf32>
    %450 = arith.negf %449 : vector<8x128xf32>
    %451 = math.exp %450 : vector<8x128xf32>
    %cst_119 = arith.constant 1.000000e+00 : f32
    %452 = vector.broadcast %cst_119 : f32 to vector<8x128xf32>
    %453 = arith.addf %452, %451 : vector<8x128xf32>
    %454 = arith.divf %452, %453 : vector<8x128xf32>
    %455 = vector.extract_strided_slice %442 {offsets = [0, 256], sizes = [8, 128], strides = [1, 1]} : vector<8x512xf32> to vector<8x128xf32>
    %456 = math.tanh %455 : vector<8x128xf32>
    %457 = vector.extract_strided_slice %442 {offsets = [0, 384], sizes = [8, 128], strides = [1, 1]} : vector<8x512xf32> to vector<8x128xf32>
    %458 = arith.negf %457 : vector<8x128xf32>
    %459 = math.exp %458 : vector<8x128xf32>
    %cst_120 = arith.constant 1.000000e+00 : f32
    %460 = vector.broadcast %cst_120 : f32 to vector<8x128xf32>
    %461 = arith.addf %460, %459 : vector<8x128xf32>
    %462 = arith.divf %460, %461 : vector<8x128xf32>
    %463 = arith.mulf %454, %407 : vector<8x128xf32>
    %464 = arith.mulf %448, %456 : vector<8x128xf32>
    %465 = arith.addf %463, %464 : vector<8x128xf32>
    %466 = math.tanh %465 : vector<8x128xf32>
    %467 = arith.mulf %462, %466 : vector<8x128xf32>
    %468 = tpu.concatenate %440, %467 in 1 : vector<8x128xf32>, vector<8x128xf32> -> vector<8x256xf32>
    %469 = tpu.concatenate %438, %465 in 1 : vector<8x128xf32>, vector<8x128xf32> -> vector<8x256xf32>
    %c0_121 = arith.constant 0 : index
    %c0_122 = arith.constant 0 : index
    %470 = vector.load %arg5[%c0_121, %c0_122] : memref<256x1024xf32, #tpu.memory_space<vmem>>, vector<256x1024xf32>
    %cst_123 = arith.constant dense<0.000000e+00> : vector<8x1024xf32>
    %471 = tpu.matmul %468, %470, %cst_123 {dimension_numbers = #tpu.dot_dimension_numbers<[1], [0], [0], [1], [0, 0, 1, 1], [], []>} : vector<8x256xf32>, vector<256x1024xf32>, vector<8x1024xf32> -> vector<8x1024xf32>
    %c0_124 = arith.constant 0 : index
    %c0_125 = arith.constant 0 : index
    %472 = vector.load %arg6[%c0_124, %c0_125] : memref<1x1024xf32, #tpu.memory_space<vmem>>, vector<1x1024xf32>
    %473 = vector.broadcast %472 : vector<1x1024xf32> to vector<8x1024xf32>
    %474 = arith.addf %471, %473 : vector<8x1024xf32>
    %475 = vector.extract_strided_slice %474 {offsets = [0, 0], sizes = [8, 256], strides = [1, 1]} : vector<8x1024xf32> to vector<8x256xf32>
    %476 = arith.negf %475 : vector<8x256xf32>
    %477 = math.exp %476 : vector<8x256xf32>
    %cst_126 = arith.constant 1.000000e+00 : f32
    %478 = vector.broadcast %cst_126 : f32 to vector<8x256xf32>
    %479 = arith.addf %478, %477 : vector<8x256xf32>
    %480 = arith.divf %478, %479 : vector<8x256xf32>
    %481 = vector.extract_strided_slice %474 {offsets = [0, 256], sizes = [8, 256], strides = [1, 1]} : vector<8x1024xf32> to vector<8x256xf32>
    %482 = arith.negf %481 : vector<8x256xf32>
    %483 = math.exp %482 : vector<8x256xf32>
    %cst_127 = arith.constant 1.000000e+00 : f32
    %484 = vector.broadcast %cst_127 : f32 to vector<8x256xf32>
    %485 = arith.addf %484, %483 : vector<8x256xf32>
    %486 = arith.divf %484, %485 : vector<8x256xf32>
    %487 = vector.extract_strided_slice %474 {offsets = [0, 512], sizes = [8, 256], strides = [1, 1]} : vector<8x1024xf32> to vector<8x256xf32>
    %488 = math.tanh %487 : vector<8x256xf32>
    %489 = vector.extract_strided_slice %474 {offsets = [0, 768], sizes = [8, 256], strides = [1, 1]} : vector<8x1024xf32> to vector<8x256xf32>
    %490 = arith.negf %489 : vector<8x256xf32>
    %491 = math.exp %490 : vector<8x256xf32>
    %cst_128 = arith.constant 1.000000e+00 : f32
    %492 = vector.broadcast %cst_128 : f32 to vector<8x256xf32>
    %493 = arith.addf %492, %491 : vector<8x256xf32>
    %494 = arith.divf %492, %493 : vector<8x256xf32>
    %495 = arith.mulf %486, %469 : vector<8x256xf32>
    %496 = arith.mulf %480, %488 : vector<8x256xf32>
    %497 = arith.addf %495, %496 : vector<8x256xf32>
    %498 = math.tanh %497 : vector<8x256xf32>
    %499 = arith.mulf %494, %498 : vector<8x256xf32>
    %c0_129 = arith.constant 0 : index
    %c0_130 = arith.constant 0 : index
    %500 = vector.load %arg13[%c0_129, %c0_130] : memref<32x256xf32, #tpu.memory_space<vmem>>, vector<8x256xf32>
    tpu.vector_store %arg13[%c0_129, %c0_130], %499 {strides = array<i32>} : memref<32x256xf32, #tpu.memory_space<vmem>>, vector<8x256xf32>,
    %c0_131 = arith.constant 0 : index
    %c0_132 = arith.constant 0 : index
    %501 = vector.load %arg7[%c0_131, %c0_132] : memref<256x1024xf32, #tpu.memory_space<vmem>>, vector<256x1024xf32>
    %cst_133 = arith.constant dense<0.000000e+00> : vector<8x1024xf32>
    %502 = tpu.matmul %499, %501, %cst_133 {dimension_numbers = #tpu.dot_dimension_numbers<[1], [0], [0], [1], [0, 0, 1, 1], [], []>} : vector<8x256xf32>, vector<256x1024xf32>, vector<8x1024xf32> -> vector<8x1024xf32>
    %c0_134 = arith.constant 0 : index
    %c0_135 = arith.constant 0 : index
    %503 = vector.load %arg8[%c0_134, %c0_135] : memref<1x1024xf32, #tpu.memory_space<vmem>>, vector<1x1024xf32>
    %504 = vector.broadcast %503 : vector<1x1024xf32> to vector<8x1024xf32>
    %505 = arith.addf %502, %504 : vector<8x1024xf32>
    %506 = vector.extract_strided_slice %505 {offsets = [0, 0], sizes = [8, 256], strides = [1, 1]} : vector<8x1024xf32> to vector<8x256xf32>
    %507 = arith.negf %506 : vector<8x256xf32>
    %508 = math.exp %507 : vector<8x256xf32>
    %cst_136 = arith.constant 1.000000e+00 : f32
    %509 = vector.broadcast %cst_136 : f32 to vector<8x256xf32>
    %510 = arith.addf %509, %508 : vector<8x256xf32>
    %511 = arith.divf %509, %510 : vector<8x256xf32>
    %512 = vector.extract_strided_slice %505 {offsets = [0, 256], sizes = [8, 256], strides = [1, 1]} : vector<8x1024xf32> to vector<8x256xf32>
    %513 = arith.negf %512 : vector<8x256xf32>
    %514 = math.exp %513 : vector<8x256xf32>
    %cst_137 = arith.constant 1.000000e+00 : f32
    %515 = vector.broadcast %cst_137 : f32 to vector<8x256xf32>
    %516 = arith.addf %515, %514 : vector<8x256xf32>
    %517 = arith.divf %515, %516 : vector<8x256xf32>
    %518 = vector.extract_strided_slice %505 {offsets = [0, 512], sizes = [8, 256], strides = [1, 1]} : vector<8x1024xf32> to vector<8x256xf32>
    %519 = math.tanh %518 : vector<8x256xf32>
    %520 = vector.extract_strided_slice %505 {offsets = [0, 768], sizes = [8, 256], strides = [1, 1]} : vector<8x1024xf32> to vector<8x256xf32>
    %521 = arith.negf %520 : vector<8x256xf32>
    %522 = math.exp %521 : vector<8x256xf32>
    %cst_138 = arith.constant 1.000000e+00 : f32
    %523 = vector.broadcast %cst_138 : f32 to vector<8x256xf32>
    %524 = arith.addf %523, %522 : vector<8x256xf32>
    %525 = arith.divf %523, %524 : vector<8x256xf32>
    %526 = arith.mulf %517, %497 : vector<8x256xf32>
    %527 = arith.mulf %511, %519 : vector<8x256xf32>
    %528 = arith.addf %526, %527 : vector<8x256xf32>
    %529 = math.tanh %528 : vector<8x256xf32>
    %530 = arith.mulf %525, %529 : vector<8x256xf32>
    %c8_139 = arith.constant 8 : index
    %c0_140 = arith.constant 0 : index
    %531 = vector.load %arg13[%c8_139, %c0_140] : memref<32x256xf32, #tpu.memory_space<vmem>>, vector<8x256xf32>
    tpu.vector_store %arg13[%c8_139, %c0_140], %530 {strides = array<i32>} : memref<32x256xf32, #tpu.memory_space<vmem>>, vector<8x256xf32>,
    %c0_141 = arith.constant 0 : index
    %c0_142 = arith.constant 0 : index
    %532 = vector.load %arg7[%c0_141, %c0_142] : memref<256x1024xf32, #tpu.memory_space<vmem>>, vector<256x1024xf32>
    %cst_143 = arith.constant dense<0.000000e+00> : vector<8x1024xf32>
    %533 = tpu.matmul %530, %532, %cst_143 {dimension_numbers = #tpu.dot_dimension_numbers<[1], [0], [0], [1], [0, 0, 1, 1], [], []>} : vector<8x256xf32>, vector<256x1024xf32>, vector<8x1024xf32> -> vector<8x1024xf32>
    %c0_144 = arith.constant 0 : index
    %c0_145 = arith.constant 0 : index
    %534 = vector.load %arg8[%c0_144, %c0_145] : memref<1x1024xf32, #tpu.memory_space<vmem>>, vector<1x1024xf32>
    %535 = vector.broadcast %534 : vector<1x1024xf32> to vector<8x1024xf32>
    %536 = arith.addf %533, %535 : vector<8x1024xf32>
    %537 = vector.extract_strided_slice %536 {offsets = [0, 0], sizes = [8, 256], strides = [1, 1]} : vector<8x1024xf32> to vector<8x256xf32>
    %538 = arith.negf %537 : vector<8x256xf32>
    %539 = math.exp %538 : vector<8x256xf32>
    %cst_146 = arith.constant 1.000000e+00 : f32
    %540 = vector.broadcast %cst_146 : f32 to vector<8x256xf32>
    %541 = arith.addf %540, %539 : vector<8x256xf32>
    %542 = arith.divf %540, %541 : vector<8x256xf32>
    %543 = vector.extract_strided_slice %536 {offsets = [0, 256], sizes = [8, 256], strides = [1, 1]} : vector<8x1024xf32> to vector<8x256xf32>
    %544 = arith.negf %543 : vector<8x256xf32>
    %545 = math.exp %544 : vector<8x256xf32>
    %cst_147 = arith.constant 1.000000e+00 : f32
    %546 = vector.broadcast %cst_147 : f32 to vector<8x256xf32>
    %547 = arith.addf %546, %545 : vector<8x256xf32>
    %548 = arith.divf %546, %547 : vector<8x256xf32>
    %549 = vector.extract_strided_slice %536 {offsets = [0, 512], sizes = [8, 256], strides = [1, 1]} : vector<8x1024xf32> to vector<8x256xf32>
    %550 = math.tanh %549 : vector<8x256xf32>
    %551 = vector.extract_strided_slice %536 {offsets = [0, 768], sizes = [8, 256], strides = [1, 1]} : vector<8x1024xf32> to vector<8x256xf32>
    %552 = arith.negf %551 : vector<8x256xf32>
    %553 = math.exp %552 : vector<8x256xf32>
    %cst_148 = arith.constant 1.000000e+00 : f32
    %554 = vector.broadcast %cst_148 : f32 to vector<8x256xf32>
    %555 = arith.addf %554, %553 : vector<8x256xf32>
    %556 = arith.divf %554, %555 : vector<8x256xf32>
    %557 = arith.mulf %548, %528 : vector<8x256xf32>
    %558 = arith.mulf %542, %550 : vector<8x256xf32>
    %559 = arith.addf %557, %558 : vector<8x256xf32>
    %560 = math.tanh %559 : vector<8x256xf32>
    %561 = arith.mulf %556, %560 : vector<8x256xf32>
    %c16_149 = arith.constant 16 : index
    %c0_150 = arith.constant 0 : index
    %562 = vector.load %arg13[%c16_149, %c0_150] : memref<32x256xf32, #tpu.memory_space<vmem>>, vector<8x256xf32>
    tpu.vector_store %arg13[%c16_149, %c0_150], %561 {strides = array<i32>} : memref<32x256xf32, #tpu.memory_space<vmem>>, vector<8x256xf32>,
    %c0_151 = arith.constant 0 : index
    %c0_152 = arith.constant 0 : index
    %563 = vector.load %arg7[%c0_151, %c0_152] : memref<256x1024xf32, #tpu.memory_space<vmem>>, vector<256x1024xf32>
    %cst_153 = arith.constant dense<0.000000e+00> : vector<8x1024xf32>
    %564 = tpu.matmul %561, %563, %cst_153 {dimension_numbers = #tpu.dot_dimension_numbers<[1], [0], [0], [1], [0, 0, 1, 1], [], []>} : vector<8x256xf32>, vector<256x1024xf32>, vector<8x1024xf32> -> vector<8x1024xf32>
    %c0_154 = arith.constant 0 : index
    %c0_155 = arith.constant 0 : index
    %565 = vector.load %arg8[%c0_154, %c0_155] : memref<1x1024xf32, #tpu.memory_space<vmem>>, vector<1x1024xf32>
    %566 = vector.broadcast %565 : vector<1x1024xf32> to vector<8x1024xf32>
    %567 = arith.addf %564, %566 : vector<8x1024xf32>
    %568 = vector.extract_strided_slice %567 {offsets = [0, 0], sizes = [8, 256], strides = [1, 1]} : vector<8x1024xf32> to vector<8x256xf32>
    %569 = arith.negf %568 : vector<8x256xf32>
    %570 = math.exp %569 : vector<8x256xf32>
    %cst_156 = arith.constant 1.000000e+00 : f32
    %571 = vector.broadcast %cst_156 : f32 to vector<8x256xf32>
    %572 = arith.addf %571, %570 : vector<8x256xf32>
    %573 = arith.divf %571, %572 : vector<8x256xf32>
    %574 = vector.extract_strided_slice %567 {offsets = [0, 256], sizes = [8, 256], strides = [1, 1]} : vector<8x1024xf32> to vector<8x256xf32>
    %575 = arith.negf %574 : vector<8x256xf32>
    %576 = math.exp %575 : vector<8x256xf32>
    %cst_157 = arith.constant 1.000000e+00 : f32
    %577 = vector.broadcast %cst_157 : f32 to vector<8x256xf32>
    %578 = arith.addf %577, %576 : vector<8x256xf32>
    %579 = arith.divf %577, %578 : vector<8x256xf32>
    %580 = vector.extract_strided_slice %567 {offsets = [0, 512], sizes = [8, 256], strides = [1, 1]} : vector<8x1024xf32> to vector<8x256xf32>
    %581 = math.tanh %580 : vector<8x256xf32>
    %582 = vector.extract_strided_slice %567 {offsets = [0, 768], sizes = [8, 256], strides = [1, 1]} : vector<8x1024xf32> to vector<8x256xf32>
    %583 = arith.negf %582 : vector<8x256xf32>
    %584 = math.exp %583 : vector<8x256xf32>
    %cst_158 = arith.constant 1.000000e+00 : f32
    %585 = vector.broadcast %cst_158 : f32 to vector<8x256xf32>
    %586 = arith.addf %585, %584 : vector<8x256xf32>
    %587 = arith.divf %585, %586 : vector<8x256xf32>
    %588 = arith.mulf %579, %559 : vector<8x256xf32>
    %589 = arith.mulf %573, %581 : vector<8x256xf32>
    %590 = arith.addf %588, %589 : vector<8x256xf32>
    %591 = math.tanh %590 : vector<8x256xf32>
    %592 = arith.mulf %587, %591 : vector<8x256xf32>
    %c24_159 = arith.constant 24 : index
    %c0_160 = arith.constant 0 : index
    %593 = vector.load %arg13[%c24_159, %c0_160] : memref<32x256xf32, #tpu.memory_space<vmem>>, vector<8x256xf32>
    tpu.vector_store %arg13[%c24_159, %c0_160], %592 {strides = array<i32>} : memref<32x256xf32, #tpu.memory_space<vmem>>, vector<8x256xf32>,
    %c0_161 = arith.constant 0 : index
    %c0_162 = arith.constant 0 : index
    %594 = vector.load %arg13[%c0_161, %c0_162] : memref<32x256xf32, #tpu.memory_space<vmem>>, vector<32x256xf32>
    %c0_163 = arith.constant 0 : index
    %c0_164 = arith.constant 0 : index
    %595 = vector.load %arg9[%c0_163, %c0_164] : memref<256x128xf32, #tpu.memory_space<vmem>>, vector<256x128xf32>
    %cst_165 = arith.constant dense<0.000000e+00> : vector<32x128xf32>
    %596 = tpu.matmul %594, %595, %cst_165 {dimension_numbers = #tpu.dot_dimension_numbers<[1], [0], [0], [1], [0, 0, 1, 1], [], []>} : vector<32x256xf32>, vector<256x128xf32>, vector<32x128xf32> -> vector<32x128xf32>
    %c0_166 = arith.constant 0 : index
    %c0_167 = arith.constant 0 : index
    %597 = vector.load %arg10[%c0_166, %c0_167] : memref<1x128xf32, #tpu.memory_space<vmem>>, vector<1x128xf32>
    %598 = vector.broadcast %597 : vector<1x128xf32> to vector<32x128xf32>
    %599 = arith.addf %596, %598 : vector<32x128xf32>
    %c0_168 = arith.constant 0 : index
    %c0_169 = arith.constant 0 : index
    %600 = vector.load %arg11[%c0_168, %c0_169] : memref<32x128xf32, #tpu.memory_space<vmem>>, vector<32x128xf32>
    tpu.vector_store %arg11[%c0_168, %c0_169], %599 {strides = array<i32>} : memref<32x128xf32, #tpu.memory_space<vmem>>, vector<32x128xf32>,
    return
  }
}

</mosaic_0001>

<llo_original>
// kernel: seq2seq_forward.1
$region0: #{seq2seq_forward.1}
  #allocation0 [shape = 'u32[]', space=smem, size = 0x4, offset = 0x4, fixed_abs, tag = 'smem constant byte address 0x4 - core index']
  #allocation1 [shape = 'u32[72,128]{1,0:T(1,128)}', space=vmem, size = 0x9000, scoped, tag = 'internal scratch']
  #allocation2 [shape = 'f32[64,1024]{1,0:T(8,128)}', space=vmem, size = 0x40000, scoped, tag = 'scratch operand']
  #allocation3 [shape = 'f32[32,256]{1,0:T(8,128)}', space=vmem, size = 0x8000, scoped, tag = 'scratch operand']
  %s0 = inlined_call_operand.vmem [shape: f32[64,1], index: 0, kind: input, shape index: {}]
  %s1 = inlined_call_operand.vmem [shape: f32[1,1024], index: 1, kind: input, shape index: {}]
  %s2 = inlined_call_operand.vmem [shape: f32[1,1024], index: 2, kind: input, shape index: {}]
  %s3 = inlined_call_operand.hbm [shape: f32[128,512], index: 3, kind: input, shape index: {}]
  %s4 = inlined_call_operand.hbm [shape: f32[128,512], index: 4, kind: input, shape index: {}]
  %s5 = inlined_call_operand.hbm [shape: f32[256,1024], index: 5, kind: input, shape index: {}]
  %s6 = inlined_call_operand.vmem [shape: f32[1,1024], index: 6, kind: input, shape index: {}]
  %s7 = inlined_call_operand.hbm [shape: f32[256,1024], index: 7, kind: input, shape index: {}]
  %s8 = inlined_call_operand.vmem [shape: f32[1,1024], index: 8, kind: input, shape index: {}]
  %s9 = inlined_call_operand.hbm [shape: f32[256,128], index: 9, kind: input, shape index: {}]
  %s10 = inlined_call_operand.vmem [shape: f32[1,128], index: 10, kind: input, shape index: {}]
  %s11 = inlined_call_operand.vmem [shape: f32[32,128], index: 11, kind: output, shape index: {}]
  %s12 = sld [smem:[#allocation0]]
  $region74: #{seq2seq_forward.1} parent=0
    _
  %s14 = ssub.s32 1, %s12
  %s15 = scalar_select 0, %s14, %s12
  $region1: #{seq2seq_forward.1} parent=0
    #allocation4 [shape = 'u8[262144]{0}', space=vmem, size = 0x40000, scoped, tag = 'input window, operand 3, single buffered']
    #allocation5 [shape = 's32[1]{0}', space=sflag, size = 0x4, scoped, tag = 'scoped memory for seq2seq_forward.1']
    #allocation6 [shape = 'u8[262144]{0}', space=vmem, size = 0x40000, scoped, tag = 'input window, operand 4, single buffered']
    #allocation7 [shape = 's32[1]{0}', space=sflag, size = 0x4, scoped, tag = 'scoped memory for seq2seq_forward.1']
    #allocation8 [shape = 'u8[1048576]{0}', space=vmem, size = 0x100000, scoped, tag = 'input window, operand 5, single buffered']
    #allocation9 [shape = 'u8[1048576]{0}', space=vmem, size = 0x100000, scoped, tag = 'input window, operand 7, single buffered']
    #allocation10 [shape = 's32[1]{0}', space=sflag, size = 0x4, scoped, tag = 'scoped memory for seq2seq_forward.1']
    #allocation11 [shape = 'u8[131072]{0}', space=vmem, size = 0x20000, scoped, tag = 'input window, operand 9, single buffered']
    %16 = vsyncpa [#allocation5], 0
    %17 = vsyncpa [#allocation7], 0
    %18 = vsyncpa [#allocation10], 0
    // Predicated region
    $region2: #{seq2seq_forward.1} parent=1 // pred_check
      _
    $region3: #{seq2seq_forward.1} parent=1 // pred_check_branch
      %20 = sbr.rel (0) target = $region5
    $region4: #{seq2seq_forward.1} parent=1 // pred_region
      _
    $region5: #{seq2seq_forward.1} parent=1 // pred_fallthru
      _
    // Predicated region
    $region6: #{seq2seq_forward.1} parent=1 // pred_check
      _
    $region7: #{seq2seq_forward.1} parent=1 // pred_check_branch
      %22 = sbr.rel (0) target = $region9
    $region8: #{seq2seq_forward.1} parent=1 // pred_region
      _
    $region9: #{seq2seq_forward.1} parent=1 // pred_fallthru
      _
    // Predicated region
    $region10: #{seq2seq_forward.1} parent=1 // pred_check
      _
    $region11: #{seq2seq_forward.1} parent=1 // pred_check_branch
      %24 = sbr.rel (0) target = $region13
    $region12: #{seq2seq_forward.1} parent=1 // pred_region
      _
    $region13: #{seq2seq_forward.1} parent=1 // pred_fallthru
      _
    // Predicated region
    $region14: #{seq2seq_forward.1} parent=1 // pred_check
      _
    $region15: #{seq2seq_forward.1} parent=1 // pred_check_branch
      %26 = sbr.rel (0) target = $region17
    $region16: #{seq2seq_forward.1} parent=1 // pred_region
      %28 = vsyncadd [#allocation5], 0
      %s29 = sshll.u32 %s3, 4
      %s30 = int_to_ptr.hbm [resolvable:$true] %s29
      %s31 = sshll.u32 [#allocation4], 4
      %s32 = int_to_ptr.vmem [resolvable:$true] %s31
      %37 = dma.hbm_to_vmem [thread:$0]  %s30, 8192, %s32, [#allocation5], 512, 512, 32
    $region17: #{seq2seq_forward.1} parent=1 // pred_fallthru
      _
    // Predicated region
    $region18: #{seq2seq_forward.1} parent=1 // pred_check
      _
    $region19: #{seq2seq_forward.1} parent=1 // pred_check_branch
      %39 = sbr.rel (0) target = $region21
    $region20: #{seq2seq_forward.1} parent=1 // pred_region
      %41 = vsyncadd [#allocation7], 0
      %s42 = sshll.u32 %s4, 4
      %s43 = int_to_ptr.hbm [resolvable:$true] %s42
      %s44 = sshll.u32 [#allocation6], 4
      %s45 = int_to_ptr.vmem [resolvable:$true] %s44
      %50 = dma.hbm_to_vmem [thread:$0]  %s43, 8192, %s45, [#allocation7], 512, 512, 32
    $region21: #{seq2seq_forward.1} parent=1 // pred_fallthru
      _
    // Predicated region
    $region22: #{seq2seq_forward.1} parent=1 // pred_check
      _
    $region23: #{seq2seq_forward.1} parent=1 // pred_check_branch
      %52 = sbr.rel (0) target = $region25
    $region24: #{seq2seq_forward.1} parent=1 // pred_region
      %54 = vsyncadd [#allocation7], 0
      %s55 = sshll.u32 %s5, 4
      %s56 = int_to_ptr.hbm [resolvable:$true] %s55
      %s57 = sshll.u32 [#allocation8], 4
      %s58 = int_to_ptr.vmem [resolvable:$true] %s57
      %63 = dma.hbm_to_vmem [thread:$0]  %s56, 32768, %s58, [#allocation7], 1024, 1024, 64
    $region25: #{seq2seq_forward.1} parent=1 // pred_fallthru
      _
    // Predicated region
    $region26: #{seq2seq_forward.1} parent=1 // pred_check
      _
    $region27: #{seq2seq_forward.1} parent=1 // pred_check_branch
      %65 = sbr.rel (0) target = $region29
    $region28: #{seq2seq_forward.1} parent=1 // pred_region
      _
    $region29: #{seq2seq_forward.1} parent=1 // pred_fallthru
      _
    // Predicated region
    $region30: #{seq2seq_forward.1} parent=1 // pred_check
      _
    $region31: #{seq2seq_forward.1} parent=1 // pred_check_branch
      %67 = sbr.rel (0) target = $region33
    $region32: #{seq2seq_forward.1} parent=1 // pred_region
      %69 = vsyncadd [#allocation10], 0
      %s70 = sshll.u32 %s7, 4
      %s71 = int_to_ptr.hbm [resolvable:$true] %s70
      %s72 = sshll.u32 [#allocation9], 4
      %s73 = int_to_ptr.vmem [resolvable:$true] %s72
      %78 = dma.hbm_to_vmem [thread:$0]  %s71, 32768, %s73, [#allocation10], 1024, 1024, 64
    $region33: #{seq2seq_forward.1} parent=1 // pred_fallthru
      _
    // Predicated region
    $region34: #{seq2seq_forward.1} parent=1 // pred_check
      _
    $region35: #{seq2seq_forward.1} parent=1 // pred_check_branch
      %80 = sbr.rel (0) target = $region37
    $region36: #{seq2seq_forward.1} parent=1 // pred_region
      _
    $region37: #{seq2seq_forward.1} parent=1 // pred_fallthru
      _
    // Predicated region
    $region38: #{seq2seq_forward.1} parent=1 // pred_check
      _
    $region39: #{seq2seq_forward.1} parent=1 // pred_check_branch
      %82 = sbr.rel (0) target = $region41
    $region40: #{seq2seq_forward.1} parent=1 // pred_region
      %84 = vsyncadd [#allocation10], 0
      %s85 = sshll.u32 %s9, 4
      %s86 = int_to_ptr.hbm [resolvable:$true] %s85
      %s87 = sshll.u32 [#allocation11], 4
      %s88 = int_to_ptr.vmem [resolvable:$true] %s87
      %93 = dma.hbm_to_vmem [thread:$0]  %s86, 4096, %s88, [#allocation10], 128, 128, 8
    $region41: #{seq2seq_forward.1} parent=1 // pred_fallthru
      _
    // Predicated region
    $region42: #{seq2seq_forward.1} parent=1 // pred_check
      _
    $region43: #{seq2seq_forward.1} parent=1 // pred_check_branch
      %95 = sbr.rel (0) target = $region45
    $region44: #{seq2seq_forward.1} parent=1 // pred_region
      _
    $region45: #{seq2seq_forward.1} parent=1 // pred_fallthru
      _
    // Predicated region
    $region46: #{seq2seq_forward.1} parent=1 // pred_check
      _
    $region47: #{seq2seq_forward.1} parent=1 // pred_check_branch
      %97 = sbr.rel (0) target = $region49
    $region48: #{seq2seq_forward.1} parent=1 // pred_region
      %99 = dma.done [#allocation5], 8192
    $region49: #{seq2seq_forward.1} parent=1 // pred_fallthru
      _
    // Predicated region
    $region50: #{seq2seq_forward.1} parent=1 // pred_check
      _
    $region51: #{seq2seq_forward.1} parent=1 // pred_check_branch
      %101 = sbr.rel (0) target = $region53
    $region52: #{seq2seq_forward.1} parent=1 // pred_region
      %103 = dma.done [#allocation7], 8192
    $region53: #{seq2seq_forward.1} parent=1 // pred_fallthru
      _
    // Predicated region
    $region54: #{seq2seq_forward.1} parent=1 // pred_check
      _
    $region55: #{seq2seq_forward.1} parent=1 // pred_check_branch
      %105 = sbr.rel (0) target = $region57
    $region56: #{seq2seq_forward.1} parent=1 // pred_region
      %107 = dma.done [#allocation7], 32768
    $region57: #{seq2seq_forward.1} parent=1 // pred_fallthru
      _
    // Predicated region
    $region58: #{seq2seq_forward.1} parent=1 // pred_check
      _
    $region59: #{seq2seq_forward.1} parent=1 // pred_check_branch
      %109 = sbr.rel (0) target = $region61
    $region60: #{seq2seq_forward.1} parent=1 // pred_region
      %111 = dma.done [#allocation10], 32768
    $region61: #{seq2seq_forward.1} parent=1 // pred_fallthru
      _
    // Predicated region
    $region62: #{seq2seq_forward.1} parent=1 // pred_check
      _
    $region63: #{seq2seq_forward.1} parent=1 // pred_check_branch
      %113 = sbr.rel (0) target = $region65
    $region64: #{seq2seq_forward.1} parent=1 // pred_region
      %115 = dma.done [#allocation10], 4096
    $region65: #{seq2seq_forward.1} parent=1 // pred_fallthru
      _
    %v116 = vld [vmem:[%s0] sm:$0xff]
    %v117 = vld [vmem:[%s0 + $0x8] sm:$0xff]
    %v118 = vld [vmem:[%s0 + $0x10] sm:$0xff]
    %v119 = vld [vmem:[%s0 + $0x18] sm:$0xff]
    %v120 = vld [vmem:[%s0 + $0x20] sm:$0xff]
    %v121 = vld [vmem:[%s0 + $0x28] sm:$0xff]
    %v122 = vld [vmem:[%s0 + $0x30] sm:$0xff]
    %v123 = vld [vmem:[%s0 + $0x38] sm:$0xff]
    %v124 = vld [vmem:[%s1] sm:$0xff]
    %126 = vset.pattern.permute.xlu0 0
    %127 = vperm.xlu0 %126, %v116
    %v128 = vpop.permute.xlu0 %127
    %131 = vset.pattern.permute.xlu0 0
    %132 = vperm.xlu0 %131, %v117
    %v133 = vpop.permute.xlu0 %132
    %136 = vset.pattern.permute.xlu0 0
    %137 = vperm.xlu0 %136, %v118
    %v138 = vpop.permute.xlu0 %137
    %141 = vset.pattern.permute.xlu0 0
    %142 = vperm.xlu0 %141, %v119
    %v143 = vpop.permute.xlu0 %142
    %146 = vset.pattern.permute.xlu0 0
    %147 = vperm.xlu0 %146, %v120
    %v148 = vpop.permute.xlu0 %147
    %151 = vset.pattern.permute.xlu0 0
    %152 = vperm.xlu0 %151, %v121
    %v153 = vpop.permute.xlu0 %152
    %156 = vset.pattern.permute.xlu0 0
    %157 = vperm.xlu0 %156, %v122
    %v158 = vpop.permute.xlu0 %157
    %161 = vset.pattern.permute.xlu0 0
    %162 = vperm.xlu0 %161, %v123
    %v163 = vpop.permute.xlu0 %162
    %v166 = vperm.slane %v124, 0
    %v167 = vperm.slane %v124, 1
    %v168 = vperm.slane %v124, 2
    %v169 = vperm.slane %v124, 3
    %v170 = vperm.slane %v124, 4
    %v171 = vperm.slane %v124, 5
    %v172 = vperm.slane %v124, 6
    %v173 = vperm.slane %v124, 7
    %v182 = vmul.f32 %v128, %v166
    %v183 = vmul.f32 %v128, %v167
    %v184 = vmul.f32 %v128, %v168
    %v185 = vmul.f32 %v128, %v169
    %v186 = vmul.f32 %v128, %v170
    %v187 = vmul.f32 %v128, %v171
    %v188 = vmul.f32 %v128, %v172
    %v189 = vmul.f32 %v128, %v173
    %v190 = vmul.f32 %v133, %v166
    %v191 = vmul.f32 %v133, %v167
    %v192 = vmul.f32 %v133, %v168
    %v193 = vmul.f32 %v133, %v169
    %v194 = vmul.f32 %v133, %v170
    %v195 = vmul.f32 %v133, %v171
    %v196 = vmul.f32 %v133, %v172
    %v197 = vmul.f32 %v133, %v173
    %v198 = vmul.f32 %v138, %v166
    %v199 = vmul.f32 %v138, %v167
    %v200 = vmul.f32 %v138, %v168
    %v201 = vmul.f32 %v138, %v169
    %v202 = vmul.f32 %v138, %v170
    %v203 = vmul.f32 %v138, %v171
    %v204 = vmul.f32 %v138, %v172
    %v205 = vmul.f32 %v138, %v173
    %v206 = vmul.f32 %v143, %v166
    %v207 = vmul.f32 %v143, %v167
    %v208 = vmul.f32 %v143, %v168
    %v209 = vmul.f32 %v143, %v169
    %v210 = vmul.f32 %v143, %v170
    %v211 = vmul.f32 %v143, %v171
    %v212 = vmul.f32 %v143, %v172
    %v213 = vmul.f32 %v143, %v173
    %v214 = vmul.f32 %v148, %v166
    %v215 = vmul.f32 %v148, %v167
    %v216 = vmul.f32 %v148, %v168
    %v217 = vmul.f32 %v148, %v169
    %v218 = vmul.f32 %v148, %v170
    %v219 = vmul.f32 %v148, %v171
    %v220 = vmul.f32 %v148, %v172
    %v221 = vmul.f32 %v148, %v173
    %v222 = vmul.f32 %v153, %v166
    %v223 = vmul.f32 %v153, %v167
    %v224 = vmul.f32 %v153, %v168
    %v225 = vmul.f32 %v153, %v169
    %v226 = vmul.f32 %v153, %v170
    %v227 = vmul.f32 %v153, %v171
    %v228 = vmul.f32 %v153, %v172
    %v229 = vmul.f32 %v153, %v173
    %v230 = vmul.f32 %v158, %v166
    %v231 = vmul.f32 %v158, %v167
    %v232 = vmul.f32 %v158, %v168
    %v233 = vmul.f32 %v158, %v169
    %v234 = vmul.f32 %v158, %v170
    %v235 = vmul.f32 %v158, %v171
    %v236 = vmul.f32 %v158, %v172
    %v237 = vmul.f32 %v158, %v173
    %v238 = vmul.f32 %v163, %v166
    %v239 = vmul.f32 %v163, %v167
    %v240 = vmul.f32 %v163, %v168
    %v241 = vmul.f32 %v163, %v169
    %v242 = vmul.f32 %v163, %v170
    %v243 = vmul.f32 %v163, %v171
    %v244 = vmul.f32 %v163, %v172
    %v245 = vmul.f32 %v163, %v173
    %v246 = vld [vmem:[%s2] sm:$0xff]
    %v248 = vperm.slane %v246, 0
    %v249 = vperm.slane %v246, 1
    %v250 = vperm.slane %v246, 2
    %v251 = vperm.slane %v246, 3
    %v252 = vperm.slane %v246, 4
    %v253 = vperm.slane %v246, 5
    %v254 = vperm.slane %v246, 6
    %v255 = vperm.slane %v246, 7
    %v264 = vadd.f32 %v182, %v248
    %v265 = vadd.f32 %v183, %v249
    %v266 = vadd.f32 %v184, %v250
    %v267 = vadd.f32 %v185, %v251
    %v268 = vadd.f32 %v186, %v252
    %v269 = vadd.f32 %v187, %v253
    %v270 = vadd.f32 %v188, %v254
    %v271 = vadd.f32 %v189, %v255
    %v272 = vadd.f32 %v190, %v248
    %v273 = vadd.f32 %v191, %v249
    %v274 = vadd.f32 %v192, %v250
    %v275 = vadd.f32 %v193, %v251
    %v276 = vadd.f32 %v194, %v252
    %v277 = vadd.f32 %v195, %v253
    %v278 = vadd.f32 %v196, %v254
    %v279 = vadd.f32 %v197, %v255
    %v280 = vadd.f32 %v198, %v248
    %v281 = vadd.f32 %v199, %v249
    %v282 = vadd.f32 %v200, %v250
    %v283 = vadd.f32 %v201, %v251
    %v284 = vadd.f32 %v202, %v252
    %v285 = vadd.f32 %v203, %v253
    %v286 = vadd.f32 %v204, %v254
    %v287 = vadd.f32 %v205, %v255
    %v288 = vadd.f32 %v206, %v248
    %v289 = vadd.f32 %v207, %v249
    %v290 = vadd.f32 %v208, %v250
    %v291 = vadd.f32 %v209, %v251
    %v292 = vadd.f32 %v210, %v252
    %v293 = vadd.f32 %v211, %v253
    %v294 = vadd.f32 %v212, %v254
    %v295 = vadd.f32 %v213, %v255
    %v296 = vadd.f32 %v214, %v248
    %v297 = vadd.f32 %v215, %v249
    %v298 = vadd.f32 %v216, %v250
    %v299 = vadd.f32 %v217, %v251
    %v300 = vadd.f32 %v218, %v252
    %v301 = vadd.f32 %v219, %v253
    %v302 = vadd.f32 %v220, %v254
    %v303 = vadd.f32 %v221, %v255
    %v304 = vadd.f32 %v222, %v248
    %v305 = vadd.f32 %v223, %v249
    %v306 = vadd.f32 %v224, %v250
    %v307 = vadd.f32 %v225, %v251
    %v308 = vadd.f32 %v226, %v252
    %v309 = vadd.f32 %v227, %v253
    %v310 = vadd.f32 %v228, %v254
    %v311 = vadd.f32 %v229, %v255
    %v312 = vadd.f32 %v230, %v248
    %v313 = vadd.f32 %v231, %v249
    %v314 = vadd.f32 %v232, %v250
    %v315 = vadd.f32 %v233, %v251
    %v316 = vadd.f32 %v234, %v252
    %v317 = vadd.f32 %v235, %v253
    %v318 = vadd.f32 %v236, %v254
    %v319 = vadd.f32 %v237, %v255
    %v320 = vadd.f32 %v238, %v248
    %v321 = vadd.f32 %v239, %v249
    %v322 = vadd.f32 %v240, %v250
    %v323 = vadd.f32 %v241, %v251
    %v324 = vadd.f32 %v242, %v252
    %v325 = vadd.f32 %v243, %v253
    %v326 = vadd.f32 %v244, %v254
    %v327 = vadd.f32 %v245, %v255
    %328 = vst [vmem:[#allocation2] sm:$0xff] %v264
    %329 = vst [vmem:[#allocation2 + $0x8] sm:$0xff] %v265
    %330 = vst [vmem:[#allocation2 + $0x10] sm:$0xff] %v266
    %331 = vst [vmem:[#allocation2 + $0x18] sm:$0xff] %v267
    %332 = vst [vmem:[#allocation2 + $0x20] sm:$0xff] %v268
    %333 = vst [vmem:[#allocation2 + $0x28] sm:$0xff] %v269
    %334 = vst [vmem:[#allocation2 + $0x30] sm:$0xff] %v270
    %335 = vst [vmem:[#allocation2 + $0x38] sm:$0xff] %v271
    %336 = vst [vmem:[#allocation2 + $0x40] sm:$0xff] %v272
    %337 = vst [vmem:[#allocation2 + $0x48] sm:$0xff] %v273
    %338 = vst [vmem:[#allocation2 + $0x50] sm:$0xff] %v274
    %339 = vst [vmem:[#allocation2 + $0x58] sm:$0xff] %v275
    %340 = vst [vmem:[#allocation2 + $0x60] sm:$0xff] %v276
    %341 = vst [vmem:[#allocation2 + $0x68] sm:$0xff] %v277
    %342 = vst [vmem:[#allocation2 + $0x70] sm:$0xff] %v278
    %343 = vst [vmem:[#allocation2 + $0x78] sm:$0xff] %v279
    %344 = vst [vmem:[#allocation2 + $0x80] sm:$0xff] %v280
    %345 = vst [vmem:[#allocation2 + $0x88] sm:$0xff] %v281
    %346 = vst [vmem:[#allocation2 + $0x90] sm:$0xff] %v282
    %347 = vst [vmem:[#allocation2 + $0x98] sm:$0xff] %v283
    %348 = vst [vmem:[#allocation2 + $0xa0] sm:$0xff] %v284
    %349 = vst [vmem:[#allocation2 + $0xa8] sm:$0xff] %v285
    %350 = vst [vmem:[#allocation2 + $0xb0] sm:$0xff] %v286
    %351 = vst [vmem:[#allocation2 + $0xb8] sm:$0xff] %v287
    %352 = vst [vmem:[#allocation2 + $0xc0] sm:$0xff] %v288
    %353 = vst [vmem:[#allocation2 + $0xc8] sm:$0xff] %v289
    %354 = vst [vmem:[#allocation2 + $0xd0] sm:$0xff] %v290
    %355 = vst [vmem:[#allocation2 + $0xd8] sm:$0xff] %v291
    %356 = vst [vmem:[#allocation2 + $0xe0] sm:$0xff] %v292
    %357 = vst [vmem:[#allocation2 + $0xe8] sm:$0xff] %v293
    %358 = vst [vmem:[#allocation2 + $0xf0] sm:$0xff] %v294
    %359 = vst [vmem:[#allocation2 + $0xf8] sm:$0xff] %v295
    %360 = vst [vmem:[#allocation2 + $0x100] sm:$0xff] %v296
    %361 = vst [vmem:[#allocation2 + $0x108] sm:$0xff] %v297
    %362 = vst [vmem:[#allocation2 + $0x110] sm:$0xff] %v298
    %363 = vst [vmem:[#allocation2 + $0x118] sm:$0xff] %v299
    %364 = vst [vmem:[#allocation2 + $0x120] sm:$0xff] %v300
    %365 = vst [vmem:[#allocation2 + $0x128] sm:$0xff] %v301
    %366 = vst [vmem:[#allocation2 + $0x130] sm:$0xff] %v302
    %367 = vst [vmem:[#allocation2 + $0x138] sm:$0xff] %v303
    %368 = vst [vmem:[#allocation2 + $0x140] sm:$0xff] %v304
    %369 = vst [vmem:[#allocation2 + $0x148] sm:$0xff] %v305
    %370 = vst [vmem:[#allocation2 + $0x150] sm:$0xff] %v306
    %371 = vst [vmem:[#allocation2 + $0x158] sm:$0xff] %v307
    %372 = vst [vmem:[#allocation2 + $0x160] sm:$0xff] %v308
    %373 = vst [vmem:[#allocation2 + $0x168] sm:$0xff] %v309
    %374 = vst [vmem:[#allocation2 + $0x170] sm:$0xff] %v310
    %375 = vst [vmem:[#allocation2 + $0x178] sm:$0xff] %v311
    %376 = vst [vmem:[#allocation2 + $0x180] sm:$0xff] %v312
    %377 = vst [vmem:[#allocation2 + $0x188] sm:$0xff] %v313
    %378 = vst [vmem:[#allocation2 + $0x190] sm:$0xff] %v314
    %379 = vst [vmem:[#allocation2 + $0x198] sm:$0xff] %v315
    %380 = vst [vmem:[#allocation2 + $0x1a0] sm:$0xff] %v316
    %381 = vst [vmem:[#allocation2 + $0x1a8] sm:$0xff] %v317
    %382 = vst [vmem:[#allocation2 + $0x1b0] sm:$0xff] %v318
    %383 = vst [vmem:[#allocation2 + $0x1b8] sm:$0xff] %v319
    %384 = vst [vmem:[#allocation2 + $0x1c0] sm:$0xff] %v320
    %385 = vst [vmem:[#allocation2 + $0x1c8] sm:$0xff] %v321
    %386 = vst [vmem:[#allocation2 + $0x1d0] sm:$0xff] %v322
    %387 = vst [vmem:[#allocation2 + $0x1d8] sm:$0xff] %v323
    %388 = vst [vmem:[#allocation2 + $0x1e0] sm:$0xff] %v324
    %389 = vst [vmem:[#allocation2 + $0x1e8] sm:$0xff] %v325
    %390 = vst [vmem:[#allocation2 + $0x1f0] sm:$0xff] %v326
    %391 = vst [vmem:[#allocation2 + $0x1f8] sm:$0xff] %v327
    %v392 = vld [vmem:[#allocation2] sm:$0xff]
    %v393 = vld [vmem:[#allocation2 + $0x8] sm:$0xff]
    %v394 = vld [vmem:[#allocation2 + $0x10] sm:$0xff]
    %v395 = vld [vmem:[#allocation2 + $0x18] sm:$0xff]
    %v396 = vxor.u32 %v392, 2147483648
    %v397 = vmul.f32 %v396, 1.442695
    %v398 = vpow.pop %v397
    %v399 = vadd.f32 %v398, 1.0
    %v400 = vrcp.pop %v399
    %v401 = vmul.f32 %v399, %v400
    %v402 = vsub.f32 1.0, %v401
    %v403 = vmul.f32 %v400, %v402
    %v404 = vadd.f32 %v400, %v403
    %vm405 = vweird.f32 %v399
    %vm406 = vweird.f32 %v400
    %vm407 = vmor %vm405, %vm406
    %v408 = vsel %vm407, %v400, %v404
    %v409 = vand.u32 2147483647, %v399
    %vm410 = vcmp.eq.f32.partialorder %v409, 8.507059e+37
    %v411 = vand.u32 %v399, 2147483648
    %v412 = vor.u32 1.1754944e-38, %v411
    %v413 = vsel %vm410, %v412, %v408
    %v414 = vmul.f32 1.0, %v413
    %v415 = vxor.u32 %v393, 2147483648
    %v416 = vmul.f32 %v415, 1.442695
    %v417 = vpow.pop %v416
    %v418 = vadd.f32 %v417, 1.0
    %v419 = vrcp.pop %v418
    %v420 = vmul.f32 %v418, %v419
    %v421 = vsub.f32 1.0, %v420
    %v422 = vmul.f32 %v419, %v421
    %v423 = vadd.f32 %v419, %v422
    %vm424 = vweird.f32 %v418
    %vm425 = vweird.f32 %v419
    %vm426 = vmor %vm424, %vm425
    %v427 = vsel %vm426, %v419, %v423
    %v428 = vand.u32 2147483647, %v418
    %vm429 = vcmp.eq.f32.partialorder %v428, 8.507059e+37
    %v430 = vand.u32 %v418, 2147483648
    %v431 = vor.u32 1.1754944e-38, %v430
    %v432 = vsel %vm429, %v431, %v427
    %v433 = vmul.f32 1.0, %v432
    %v434 = vtanh.pop %v394
    %v435 = vxor.u32 %v395, 2147483648
    %v436 = vmul.f32 %v435, 1.442695
    %v437 = vpow.pop %v436
    %v438 = vadd.f32 %v437, 1.0
    %v439 = vrcp.pop %v438
    %v440 = vmul.f32 %v438, %v439
    %v441 = vsub.f32 1.0, %v440
    %v442 = vmul.f32 %v439, %v441
    %v443 = vadd.f32 %v439, %v442
    %vm444 = vweird.f32 %v438
    %vm445 = vweird.f32 %v439
    %vm446 = vmor %vm444, %vm445
    %v447 = vsel %vm446, %v439, %v443
    %v448 = vand.u32 2147483647, %v438
    %vm449 = vcmp.eq.f32.partialorder %v448, 8.507059e+37
    %v450 = vand.u32 %v438, 2147483648
    %v451 = vor.u32 1.1754944e-38, %v450
    %v452 = vsel %vm449, %v451, %v447
    %v453 = vmul.f32 1.0, %v452
    %v454 = vmul.f32 %v433, 0.0
    %v455 = vmul.f32 %v414, %v434
    %v456 = vadd.f32 %v454, %v455
    %v457 = vtanh.pop %v456
    %v458 = vmul.f32 %v453, %v457
    %v459 = vld [vmem:[#allocation2 + $0x1e0] sm:$0xff]
    %v460 = vld [vmem:[#allocation2 + $0x1e8] sm:$0xff]
    %v461 = vld [vmem:[#allocation2 + $0x1f0] sm:$0xff]
    %v462 = vld [vmem:[#allocation2 + $0x1f8] sm:$0xff]
    %v463 = vxor.u32 %v459, 2147483648
    %v464 = vmul.f32 %v463, 1.442695
    %v465 = vpow.pop %v464
    %v466 = vadd.f32 %v465, 1.0
    %v467 = vrcp.pop %v466
    %v468 = vmul.f32 %v466, %v467
    %v469 = vsub.f32 1.0, %v468
    %v470 = vmul.f32 %v467, %v469
    %v471 = vadd.f32 %v467, %v470
    %vm472 = vweird.f32 %v466
    %vm473 = vweird.f32 %v467
    %vm474 = vmor %vm472, %vm473
    %v475 = vsel %vm474, %v467, %v471
    %v476 = vand.u32 2147483647, %v466
    %vm477 = vcmp.eq.f32.partialorder %v476, 8.507059e+37
    %v478 = vand.u32 %v466, 2147483648
    %v479 = vor.u32 1.1754944e-38, %v478
    %v480 = vsel %vm477, %v479, %v475
    %v481 = vmul.f32 1.0, %v480
    %v482 = vxor.u32 %v460, 2147483648
    %v483 = vmul.f32 %v482, 1.442695
    %v484 = vpow.pop %v483
    %v485 = vadd.f32 %v484, 1.0
    %v486 = vrcp.pop %v485
    %v487 = vmul.f32 %v485, %v486
    %v488 = vsub.f32 1.0, %v487
    %v489 = vmul.f32 %v486, %v488
    %v490 = vadd.f32 %v486, %v489
    %vm491 = vweird.f32 %v485
    %vm492 = vweird.f32 %v486
    %vm493 = vmor %vm491, %vm492
    %v494 = vsel %vm493, %v486, %v490
    %v495 = vand.u32 2147483647, %v485
    %vm496 = vcmp.eq.f32.partialorder %v495, 8.507059e+37
    %v497 = vand.u32 %v485, 2147483648
    %v498 = vor.u32 1.1754944e-38, %v497
    %v499 = vsel %vm496, %v498, %v494
    %v500 = vmul.f32 1.0, %v499
    %v501 = vtanh.pop %v461
    %v502 = vxor.u32 %v462, 2147483648
    %v503 = vmul.f32 %v502, 1.442695
    %v504 = vpow.pop %v503
    %v505 = vadd.f32 %v504, 1.0
    %v506 = vrcp.pop %v505
    %v507 = vmul.f32 %v505, %v506
    %v508 = vsub.f32 1.0, %v507
    %v509 = vmul.f32 %v506, %v508
    %v510 = vadd.f32 %v506, %v509
    %vm511 = vweird.f32 %v505
    %vm512 = vweird.f32 %v506
    %vm513 = vmor %vm511, %vm512
    %v514 = vsel %vm513, %v506, %v510
    %v515 = vand.u32 2147483647, %v505
    %vm516 = vcmp.eq.f32.partialorder %v515, 8.507059e+37
    %v517 = vand.u32 %v505, 2147483648
    %v518 = vor.u32 1.1754944e-38, %v517
    %v519 = vsel %vm516, %v518, %v514
    %v520 = vmul.f32 1.0, %v519
    %v521 = vmul.f32 %v500, 0.0
    %v522 = vmul.f32 %v481, %v501
    %v523 = vadd.f32 %v521, %v522
    %v524 = vtanh.pop %v523
    %v525 = vmul.f32 %v520, %v524
    %v526 = vld [vmem:[#allocation4] sm:$0xff]
    %v527 = vld [vmem:[#allocation4 + $0x8] sm:$0xff]
    %v528 = vld [vmem:[#allocation4 + $0x10] sm:$0xff]
    %v529 = vld [vmem:[#allocation4 + $0x18] sm:$0xff]
    %v530 = vld [vmem:[#allocation4 + $0x20] sm:$0xff]
    %v531 = vld [vmem:[#allocation4 + $0x28] sm:$0xff]
    %v532 = vld [vmem:[#allocation4 + $0x30] sm:$0xff]
    %v533 = vld [vmem:[#allocation4 + $0x38] sm:$0xff]
    %v534 = vld [vmem:[#allocation4 + $0x40] sm:$0xff]
    %v535 = vld [vmem:[#allocation4 + $0x48] sm:$0xff]
    %v536 = vld [vmem:[#allocation4 + $0x50] sm:$0xff]
    %v537 = vld [vmem:[#allocation4 + $0x58] sm:$0xff]
    %v538 = vld [vmem:[#allocation4 + $0x60] sm:$0xff]
    %v539 = vld [vmem:[#allocation4 + $0x68] sm:$0xff]
    %v540 = vld [vmem:[#allocation4 + $0x70] sm:$0xff]
    %v541 = vld [vmem:[#allocation4 + $0x78] sm:$0xff]
    %v542 = vld [vmem:[#allocation4 + $0x80] sm:$0xff]
    %v543 = vld [vmem:[#allocation4 + $0x88] sm:$0xff]
    %v544 = vld [vmem:[#allocation4 + $0x90] sm:$0xff]
    %v545 = vld [vmem:[#allocation4 + $0x98] sm:$0xff]
    %v546 = vld [vmem:[#allocation4 + $0xa0] sm:$0xff]
    %v547 = vld [vmem:[#allocation4 + $0xa8] sm:$0xff]
    %v548 = vld [vmem:[#allocation4 + $0xb0] sm:$0xff]
    %v549 = vld [vmem:[#allocation4 + $0xb8] sm:$0xff]
    %v550 = vld [vmem:[#allocation4 + $0xc0] sm:$0xff]
    %v551 = vld [vmem:[#allocation4 + $0xc8] sm:$0xff]
    %v552 = vld [vmem:[#allocation4 + $0xd0] sm:$0xff]
    %v553 = vld [vmem:[#allocation4 + $0xd8] sm:$0xff]
    %v554 = vld [vmem:[#allocation4 + $0xe0] sm:$0xff]
    %v555 = vld [vmem:[#allocation4 + $0xe8] sm:$0xff]
    %v556 = vld [vmem:[#allocation4 + $0xf0] sm:$0xff]
    %v557 = vld [vmem:[#allocation4 + $0xf8] sm:$0xff]
    %v558 = vld [vmem:[#allocation4 + $0x100] sm:$0xff]
    %v559 = vld [vmem:[#allocation4 + $0x108] sm:$0xff]
    %v560 = vld [vmem:[#allocation4 + $0x110] sm:$0xff]
    %v561 = vld [vmem:[#allocation4 + $0x118] sm:$0xff]
    %v562 = vld [vmem:[#allocation4 + $0x120] sm:$0xff]
    %v563 = vld [vmem:[#allocation4 + $0x128] sm:$0xff]
    %v564 = vld [vmem:[#allocation4 + $0x130] sm:$0xff]
    %v565 = vld [vmem:[#allocation4 + $0x138] sm:$0xff]
    %v566 = vld [vmem:[#allocation4 + $0x140] sm:$0xff]
    %v567 = vld [vmem:[#allocation4 + $0x148] sm:$0xff]
    %v568 = vld [vmem:[#allocation4 + $0x150] sm:$0xff]
    %v569 = vld [vmem:[#allocation4 + $0x158] sm:$0xff]
    %v570 = vld [vmem:[#allocation4 + $0x160] sm:$0xff]
    %v571 = vld [vmem:[#allocation4 + $0x168] sm:$0xff]
    %v572 = vld [vmem:[#allocation4 + $0x170] sm:$0xff]
    %v573 = vld [vmem:[#allocation4 + $0x178] sm:$0xff]
    %v574 = vld [vmem:[#allocation4 + $0x180] sm:$0xff]
    %v575 = vld [vmem:[#allocation4 + $0x188] sm:$0xff]
    %v576 = vld [vmem:[#allocation4 + $0x190] sm:$0xff]
    %v577 = vld [vmem:[#allocation4 + $0x198] sm:$0xff]
    %v578 = vld [vmem:[#allocation4 + $0x1a0] sm:$0xff]
    %v579 = vld [vmem:[#allocation4 + $0x1a8] sm:$0xff]
    %v580 = vld [vmem:[#allocation4 + $0x1b0] sm:$0xff]
    %v581 = vld [vmem:[#allocation4 + $0x1b8] sm:$0xff]
    %v582 = vld [vmem:[#allocation4 + $0x1c0] sm:$0xff]
    %v583 = vld [vmem:[#allocation4 + $0x1c8] sm:$0xff]
    %v584 = vld [vmem:[#allocation4 + $0x1d0] sm:$0xff]
    %v585 = vld [vmem:[#allocation4 + $0x1d8] sm:$0xff]
    %v586 = vld [vmem:[#allocation4 + $0x1e0] sm:$0xff]
    %v587 = vld [vmem:[#allocation4 + $0x1e8] sm:$0xff]
    %v588 = vld [vmem:[#allocation4 + $0x1f0] sm:$0xff]
    %v589 = vld [vmem:[#allocation4 + $0x1f8] sm:$0xff]
    %v590 = vld [vmem:[#allocation6] sm:$0xff]
    %v591 = vld [vmem:[#allocation6 + $0x8] sm:$0xff]
    %v592 = vld [vmem:[#allocation6 + $0x10] sm:$0xff]
    %v593 = vld [vmem:[#allocation6 + $0x18] sm:$0xff]
    %v594 = vld [vmem:[#allocation6 + $0x20] sm:$0xff]
    %v595 = vld [vmem:[#allocation6 + $0x28] sm:$0xff]
    %v596 = vld [vmem:[#allocation6 + $0x30] sm:$0xff]
    %v597 = vld [vmem:[#allocation6 + $0x38] sm:$0xff]
    %v598 = vld [vmem:[#allocation6 + $0x40] sm:$0xff]
    %v599 = vld [vmem:[#allocation6 + $0x48] sm:$0xff]
    %v600 = vld [vmem:[#allocation6 + $0x50] sm:$0xff]
    %v601 = vld [vmem:[#allocation6 + $0x58] sm:$0xff]
    %v602 = vld [vmem:[#allocation6 + $0x60] sm:$0xff]
    %v603 = vld [vmem:[#allocation6 + $0x68] sm:$0xff]
    %v604 = vld [vmem:[#allocation6 + $0x70] sm:$0xff]
    %v605 = vld [vmem:[#allocation6 + $0x78] sm:$0xff]
    %v606 = vld [vmem:[#allocation6 + $0x80] sm:$0xff]
    %v607 = vld [vmem:[#allocation6 + $0x88] sm:$0xff]
    %v608 = vld [vmem:[#allocation6 + $0x90] sm:$0xff]
    %v609 = vld [vmem:[#allocation6 + $0x98] sm:$0xff]
    %v610 = vld [vmem:[#allocation6 + $0xa0] sm:$0xff]
    %v611 = vld [vmem:[#allocation6 + $0xa8] sm:$0xff]
    %v612 = vld [vmem:[#allocation6 + $0xb0] sm:$0xff]
    %v613 = vld [vmem:[#allocation6 + $0xb8] sm:$0xff]
    %v614 = vld [vmem:[#allocation6 + $0xc0] sm:$0xff]
    %v615 = vld [vmem:[#allocation6 + $0xc8] sm:$0xff]
    %v616 = vld [vmem:[#allocation6 + $0xd0] sm:$0xff]
    %v617 = vld [vmem:[#allocation6 + $0xd8] sm:$0xff]
    %v618 = vld [vmem:[#allocation6 + $0xe0] sm:$0xff]
    %v619 = vld [vmem:[#allocation6 + $0xe8] sm:$0xff]
    %v620 = vld [vmem:[#allocation6 + $0xf0] sm:$0xff]
    %v621 = vld [vmem:[#allocation6 + $0xf8] sm:$0xff]
    %v622 = vld [vmem:[#allocation6 + $0x100] sm:$0xff]
    %v623 = vld [vmem:[#allocation6 + $0x108] sm:$0xff]
    %v624 = vld [vmem:[#allocation6 + $0x110] sm:$0xff]
    %v625 = vld [vmem:[#allocation6 + $0x118] sm:$0xff]
    %v626 = vld [vmem:[#allocation6 + $0x120] sm:$0xff]
    %v627 = vld [vmem:[#allocation6 + $0x128] sm:$0xff]
    %v628 = vld [vmem:[#allocation6 + $0x130] sm:$0xff]
    %v629 = vld [vmem:[#allocation6 + $0x138] sm:$0xff]
    %v630 = vld [vmem:[#allocation6 + $0x140] sm:$0xff]
    %v631 = vld [vmem:[#allocation6 + $0x148] sm:$0xff]
    %v632 = vld [vmem:[#allocation6 + $0x150] sm:$0xff]
    %v633 = vld [vmem:[#allocation6 + $0x158] sm:$0xff]
    %v634 = vld [vmem:[#allocation6 + $0x160] sm:$0xff]
    %v635 = vld [vmem:[#allocation6 + $0x168] sm:$0xff]
    %v636 = vld [vmem:[#allocation6 + $0x170] sm:$0xff]
    %v637 = vld [vmem:[#allocation6 + $0x178] sm:$0xff]
    %v638 = vld [vmem:[#allocation6 + $0x180] sm:$0xff]
    %v639 = vld [vmem:[#allocation6 + $0x188] sm:$0xff]
    %v640 = vld [vmem:[#allocation6 + $0x190] sm:$0xff]
    %v641 = vld [vmem:[#allocation6 + $0x198] sm:$0xff]
    %v642 = vld [vmem:[#allocation6 + $0x1a0] sm:$0xff]
    %v643 = vld [vmem:[#allocation6 + $0x1a8] sm:$0xff]
    %v644 = vld [vmem:[#allocation6 + $0x1b0] sm:$0xff]
    %v645 = vld [vmem:[#allocation6 + $0x1b8] sm:$0xff]
    %v646 = vld [vmem:[#allocation6 + $0x1c0] sm:$0xff]
    %v647 = vld [vmem:[#allocation6 + $0x1c8] sm:$0xff]
    %v648 = vld [vmem:[#allocation6 + $0x1d0] sm:$0xff]
    %v649 = vld [vmem:[#allocation6 + $0x1d8] sm:$0xff]
    %v650 = vld [vmem:[#allocation6 + $0x1e0] sm:$0xff]
    %v651 = vld [vmem:[#allocation6 + $0x1e8] sm:$0xff]
    %v652 = vld [vmem:[#allocation6 + $0x1f0] sm:$0xff]
    %v653 = vld [vmem:[#allocation6 + $0x1f8] sm:$0xff]
    %v654 = vld [vmem:[#allocation2 + $0x40] sm:$0xff]
    %v655 = vld [vmem:[#allocation2 + $0x48] sm:$0xff]
    %v656 = vld [vmem:[#allocation2 + $0x50] sm:$0xff]
    %v657 = vld [vmem:[#allocation2 + $0x58] sm:$0xff]
    %658 = vmatpush.msra.mxu0 %v586
    %659 = vmatpush.msra.mxu0 %v582
    %660 = vmatpush.msra.mxu0 %v578
    %661 = vmatpush.msra.mxu0 %v574
    %662 = vmatpush.msra.mxu0 %v570
    %663 = vmatpush.msra.mxu0 %v566
    %664 = vmatpush.msra.mxu0 %v562
    %665 = vmatpush.msra.mxu0 %v558
    %666 = vmatpush.msra.mxu0 %v554
    %667 = vmatpush.msra.mxu0 %v550
    %668 = vmatpush.msra.mxu0 %v546
    %669 = vmatpush.msra.mxu0 %v542
    %670 = vmatpush.msra.mxu0 %v538
    %671 = vmatpush.msra.mxu0 %v534
    %672 = vmatpush.msra.mxu0 %v530
    %673 = vmatpush.msra.mxu0 %v526
    %674 = vmatmul.f32.gmra.mxu0 %v458
    %v675 = vpop.f32.mrf.mxu0
    %v676 = vadd.f32 %v654, %v675
    %677 = vdwg.mxu0
    %678 = vmatpush.msra.mxu0 %v587
    %679 = vmatpush.msra.mxu0 %v583
    %680 = vmatpush.msra.mxu0 %v579
    %681 = vmatpush.msra.mxu0 %v575
    %682 = vmatpush.msra.mxu0 %v571
    %683 = vmatpush.msra.mxu0 %v567
    %684 = vmatpush.msra.mxu0 %v563
    %685 = vmatpush.msra.mxu0 %v559
    %686 = vmatpush.msra.mxu0 %v555
    %687 = vmatpush.msra.mxu0 %v551
    %688 = vmatpush.msra.mxu0 %v547
    %689 = vmatpush.msra.mxu0 %v543
    %690 = vmatpush.msra.mxu0 %v539
    %691 = vmatpush.msra.mxu0 %v535
    %692 = vmatpush.msra.mxu0 %v531
    %693 = vmatpush.msra.mxu0 %v527
    %694 = vmatmul.f32.gmra.mxu0 %v458
    %v695 = vpop.f32.mrf.mxu0
    %v696 = vadd.f32 %v655, %v695
    %697 = vdwg.mxu0
    %698 = vmatpush.msra.mxu0 %v588
    %699 = vmatpush.msra.mxu0 %v584
    %700 = vmatpush.msra.mxu0 %v580
    %701 = vmatpush.msra.mxu0 %v576
    %702 = vmatpush.msra.mxu0 %v572
    %703 = vmatpush.msra.mxu0 %v568
    %704 = vmatpush.msra.mxu0 %v564
    %705 = vmatpush.msra.mxu0 %v560
    %706 = vmatpush.msra.mxu0 %v556
    %707 = vmatpush.msra.mxu0 %v552
    %708 = vmatpush.msra.mxu0 %v548
    %709 = vmatpush.msra.mxu0 %v544
    %710 = vmatpush.msra.mxu0 %v540
    %711 = vmatpush.msra.mxu0 %v536
    %712 = vmatpush.msra.mxu0 %v532
    %713 = vmatpush.msra.mxu0 %v528
    %714 = vmatmul.f32.gmra.mxu0 %v458
    %v715 = vpop.f32.mrf.mxu0
    %v716 = vadd.f32 %v656, %v715
    %717 = vdwg.mxu0
    %718 = vmatpush.msra.mxu0 %v589
    %719 = vmatpush.msra.mxu0 %v585
    %720 = vmatpush.msra.mxu0 %v581
    %721 = vmatpush.msra.mxu0 %v577
    %722 = vmatpush.msra.mxu0 %v573
    %723 = vmatpush.msra.mxu0 %v569
    %724 = vmatpush.msra.mxu0 %v565
    %725 = vmatpush.msra.mxu0 %v561
    %726 = vmatpush.msra.mxu0 %v557
    %727 = vmatpush.msra.mxu0 %v553
    %728 = vmatpush.msra.mxu0 %v549
    %729 = vmatpush.msra.mxu0 %v545
    %730 = vmatpush.msra.mxu0 %v541
    %731 = vmatpush.msra.mxu0 %v537
    %732 = vmatpush.msra.mxu0 %v533
    %733 = vmatpush.msra.mxu0 %v529
    %734 = vmatmul.f32.gmra.mxu0 %v458
    %v735 = vpop.f32.mrf.mxu0
    %v736 = vadd.f32 %v657, %v735
    %737 = vdwg.mxu0
    %v738 = vxor.u32 %v676, 2147483648
    %v739 = vmul.f32 %v738, 1.442695
    %v740 = vpow.pop %v739
    %v741 = vadd.f32 %v740, 1.0
    %v742 = vrcp.pop %v741
    %v743 = vmul.f32 %v741, %v742
    %v744 = vsub.f32 1.0, %v743
    %v745 = vmul.f32 %v742, %v744
    %v746 = vadd.f32 %v742, %v745
    %vm747 = vweird.f32 %v741
    %vm748 = vweird.f32 %v742
    %vm749 = vmor %vm747, %vm748
    %v750 = vsel %vm749, %v742, %v746
    %v751 = vand.u32 2147483647, %v741
    %vm752 = vcmp.eq.f32.partialorder %v751, 8.507059e+37
    %v753 = vand.u32 %v741, 2147483648
    %v754 = vor.u32 1.1754944e-38, %v753
    %v755 = vsel %vm752, %v754, %v750
    %v756 = vmul.f32 1.0, %v755
    %v757 = vxor.u32 %v696, 2147483648
    %v758 = vmul.f32 %v757, 1.442695
    %v759 = vpow.pop %v758
    %v760 = vadd.f32 %v759, 1.0
    %v761 = vrcp.pop %v760
    %v762 = vmul.f32 %v760, %v761
    %v763 = vsub.f32 1.0, %v762
    %v764 = vmul.f32 %v761, %v763
    %v765 = vadd.f32 %v761, %v764
    %vm766 = vweird.f32 %v760
    %vm767 = vweird.f32 %v761
    %vm768 = vmor %vm766, %vm767
    %v769 = vsel %vm768, %v761, %v765
    %v770 = vand.u32 2147483647, %v760
    %vm771 = vcmp.eq.f32.partialorder %v770, 8.507059e+37
    %v772 = vand.u32 %v760, 2147483648
    %v773 = vor.u32 1.1754944e-38, %v772
    %v774 = vsel %vm771, %v773, %v769
    %v775 = vmul.f32 1.0, %v774
    %v776 = vtanh.pop %v716
    %v777 = vxor.u32 %v736, 2147483648
    %v778 = vmul.f32 %v777, 1.442695
    %v779 = vpow.pop %v778
    %v780 = vadd.f32 %v779, 1.0
    %v781 = vrcp.pop %v780
    %v782 = vmul.f32 %v780, %v781
    %v783 = vsub.f32 1.0, %v782
    %v784 = vmul.f32 %v781, %v783
    %v785 = vadd.f32 %v781, %v784
    %vm786 = vweird.f32 %v780
    %vm787 = vweird.f32 %v781
    %vm788 = vmor %vm786, %vm787
    %v789 = vsel %vm788, %v781, %v785
    %v790 = vand.u32 2147483647, %v780
    %vm791 = vcmp.eq.f32.partialorder %v790, 8.507059e+37
    %v792 = vand.u32 %v780, 2147483648
    %v793 = vor.u32 1.1754944e-38, %v792
    %v794 = vsel %vm791, %v793, %v789
    %v795 = vmul.f32 1.0, %v794
    %v796 = vmul.f32 %v775, %v456
    %v797 = vmul.f32 %v756, %v776
    %v798 = vadd.f32 %v796, %v797
    %v799 = vtanh.pop %v798
    %v800 = vmul.f32 %v795, %v799
    %v801 = vld [vmem:[#allocation2 + $0x1a0] sm:$0xff]
    %v802 = vld [vmem:[#allocation2 + $0x1a8] sm:$0xff]
    %v803 = vld [vmem:[#allocation2 + $0x1b0] sm:$0xff]
    %v804 = vld [vmem:[#allocation2 + $0x1b8] sm:$0xff]
    %805 = vmatpush.msra.mxu0 %v650
    %806 = vmatpush.msra.mxu0 %v646
    %807 = vmatpush.msra.mxu0 %v642
    %808 = vmatpush.msra.mxu0 %v638
    %809 = vmatpush.msra.mxu0 %v634
    %810 = vmatpush.msra.mxu0 %v630
    %811 = vmatpush.msra.mxu0 %v626
    %812 = vmatpush.msra.mxu0 %v622
    %813 = vmatpush.msra.mxu0 %v618
    %814 = vmatpush.msra.mxu0 %v614
    %815 = vmatpush.msra.mxu0 %v610
    %816 = vmatpush.msra.mxu0 %v606
    %817 = vmatpush.msra.mxu0 %v602
    %818 = vmatpush.msra.mxu0 %v598
    %819 = vmatpush.msra.mxu0 %v594
    %820 = vmatpush.msra.mxu0 %v590
    %821 = vmatmul.f32.gmra.mxu0 %v525
    %v822 = vpop.f32.mrf.mxu0
    %v823 = vadd.f32 %v801, %v822
    %824 = vdwg.mxu0
    %825 = vmatpush.msra.mxu0 %v651
    %826 = vmatpush.msra.mxu0 %v647
    %827 = vmatpush.msra.mxu0 %v643
    %828 = vmatpush.msra.mxu0 %v639
    %829 = vmatpush.msra.mxu0 %v635
    %830 = vmatpush.msra.mxu0 %v631
    %831 = vmatpush.msra.mxu0 %v627
    %832 = vmatpush.msra.mxu0 %v623
    %833 = vmatpush.msra.mxu0 %v619
    %834 = vmatpush.msra.mxu0 %v615
    %835 = vmatpush.msra.mxu0 %v611
    %836 = vmatpush.msra.mxu0 %v607
    %837 = vmatpush.msra.mxu0 %v603
    %838 = vmatpush.msra.mxu0 %v599
    %839 = vmatpush.msra.mxu0 %v595
    %840 = vmatpush.msra.mxu0 %v591
    %841 = vmatmul.f32.gmra.mxu0 %v525
    %v842 = vpop.f32.mrf.mxu0
    %v843 = vadd.f32 %v802, %v842
    %844 = vdwg.mxu0
    %845 = vmatpush.msra.mxu0 %v652
    %846 = vmatpush.msra.mxu0 %v648
    %847 = vmatpush.msra.mxu0 %v644
    %848 = vmatpush.msra.mxu0 %v640
    %849 = vmatpush.msra.mxu0 %v636
    %850 = vmatpush.msra.mxu0 %v632
    %851 = vmatpush.msra.mxu0 %v628
    %852 = vmatpush.msra.mxu0 %v624
    %853 = vmatpush.msra.mxu0 %v620
    %854 = vmatpush.msra.mxu0 %v616
    %855 = vmatpush.msra.mxu0 %v612
    %856 = vmatpush.msra.mxu0 %v608
    %857 = vmatpush.msra.mxu0 %v604
    %858 = vmatpush.msra.mxu0 %v600
    %859 = vmatpush.msra.mxu0 %v596
    %860 = vmatpush.msra.mxu0 %v592
    %861 = vmatmul.f32.gmra.mxu0 %v525
    %v862 = vpop.f32.mrf.mxu0
    %v863 = vadd.f32 %v803, %v862
    %864 = vdwg.mxu0
    %865 = vmatpush.msra.mxu0 %v653
    %866 = vmatpush.msra.mxu0 %v649
    %867 = vmatpush.msra.mxu0 %v645
    %868 = vmatpush.msra.mxu0 %v641
    %869 = vmatpush.msra.mxu0 %v637
    %870 = vmatpush.msra.mxu0 %v633
    %871 = vmatpush.msra.mxu0 %v629
    %872 = vmatpush.msra.mxu0 %v625
    %873 = vmatpush.msra.mxu0 %v621
    %874 = vmatpush.msra.mxu0 %v617
    %875 = vmatpush.msra.mxu0 %v613
    %876 = vmatpush.msra.mxu0 %v609
    %877 = vmatpush.msra.mxu0 %v605
    %878 = vmatpush.msra.mxu0 %v601
    %879 = vmatpush.msra.mxu0 %v597
    %880 = vmatpush.msra.mxu0 %v593
    %881 = vmatmul.f32.gmra.mxu0 %v525
    %v882 = vpop.f32.mrf.mxu0
    %v883 = vadd.f32 %v804, %v882
    %884 = vdwg.mxu0
    %v885 = vxor.u32 %v823, 2147483648
    %v886 = vmul.f32 %v885, 1.442695
    %v887 = vpow.pop %v886
    %v888 = vadd.f32 %v887, 1.0
    %v889 = vrcp.pop %v888
    %v890 = vmul.f32 %v888, %v889
    %v891 = vsub.f32 1.0, %v890
    %v892 = vmul.f32 %v889, %v891
    %v893 = vadd.f32 %v889, %v892
    %vm894 = vweird.f32 %v888
    %vm895 = vweird.f32 %v889
    %vm896 = vmor %vm894, %vm895
    %v897 = vsel %vm896, %v889, %v893
    %v898 = vand.u32 2147483647, %v888
    %vm899 = vcmp.eq.f32.partialorder %v898, 8.507059e+37
    %v900 = vand.u32 %v888, 2147483648
    %v901 = vor.u32 1.1754944e-38, %v900
    %v902 = vsel %vm899, %v901, %v897
    %v903 = vmul.f32 1.0, %v902
    %v904 = vxor.u32 %v843, 2147483648
    %v905 = vmul.f32 %v904, 1.442695
    %v906 = vpow.pop %v905
    %v907 = vadd.f32 %v906, 1.0
    %v908 = vrcp.pop %v907
    %v909 = vmul.f32 %v907, %v908
    %v910 = vsub.f32 1.0, %v909
    %v911 = vmul.f32 %v908, %v910
    %v912 = vadd.f32 %v908, %v911
    %vm913 = vweird.f32 %v907
    %vm914 = vweird.f32 %v908
    %vm915 = vmor %vm913, %vm914
    %v916 = vsel %vm915, %v908, %v912
    %v917 = vand.u32 2147483647, %v907
    %vm918 = vcmp.eq.f32.partialorder %v917, 8.507059e+37
    %v919 = vand.u32 %v907, 2147483648
    %v920 = vor.u32 1.1754944e-38, %v919
    %v921 = vsel %vm918, %v920, %v916
    %v922 = vmul.f32 1.0, %v921
    %v923 = vtanh.pop %v863
    %v924 = vxor.u32 %v883, 2147483648
    %v925 = vmul.f32 %v924, 1.442695
    %v926 = vpow.pop %v925
    %v927 = vadd.f32 %v926, 1.0
    %v928 = vrcp.pop %v927
    %v929 = vmul.f32 %v927, %v928
    %v930 = vsub.f32 1.0, %v929
    %v931 = vmul.f32 %v928, %v930
    %v932 = vadd.f32 %v928, %v931
    %vm933 = vweird.f32 %v927
    %vm934 = vweird.f32 %v928
    %vm935 = vmor %vm933, %vm934
    %v936 = vsel %vm935, %v928, %v932
    %v937 = vand.u32 2147483647, %v927
    %vm938 = vcmp.eq.f32.partialorder %v937, 8.507059e+37
    %v939 = vand.u32 %v927, 2147483648
    %v940 = vor.u32 1.1754944e-38, %v939
    %v941 = vsel %vm938, %v940, %v936
    %v942 = vmul.f32 1.0, %v941
    %v943 = vmul.f32 %v922, %v523
    %v944 = vmul.f32 %v903, %v923
    %v945 = vadd.f32 %v943, %v944
    %v946 = vtanh.pop %v945
    %v947 = vmul.f32 %v942, %v946
    %v948 = vld [vmem:[#allocation2 + $0x80] sm:$0xff]
    %v949 = vld [vmem:[#allocation2 + $0x88] sm:$0xff]
    %v950 = vld [vmem:[#allocation2 + $0x90] sm:$0xff]
    %v951 = vld [vmem:[#allocation2 + $0x98] sm:$0xff]
    %952 = vmatpush.msra.mxu0 %v586
    %953 = vmatpush.msra.mxu0 %v582
    %954 = vmatpush.msra.mxu0 %v578
    %955 = vmatpush.msra.mxu0 %v574
    %956 = vmatpush.msra.mxu0 %v570
    %957 = vmatpush.msra.mxu0 %v566
    %958 = vmatpush.msra.mxu0 %v562
    %959 = vmatpush.msra.mxu0 %v558
    %960 = vmatpush.msra.mxu0 %v554
    %961 = vmatpush.msra.mxu0 %v550
    %962 = vmatpush.msra.mxu0 %v546
    %963 = vmatpush.msra.mxu0 %v542
    %964 = vmatpush.msra.mxu0 %v538
    %965 = vmatpush.msra.mxu0 %v534
    %966 = vmatpush.msra.mxu0 %v530
    %967 = vmatpush.msra.mxu0 %v526
    %968 = vmatmul.f32.gmra.mxu0 %v800
    %v969 = vpop.f32.mrf.mxu0
    %v970 = vadd.f32 %v948, %v969
    %971 = vdwg.mxu0
    %972 = vmatpush.msra.mxu0 %v587
    %973 = vmatpush.msra.mxu0 %v583
    %974 = vmatpush.msra.mxu0 %v579
    %975 = vmatpush.msra.mxu0 %v575
    %976 = vmatpush.msra.mxu0 %v571
    %977 = vmatpush.msra.mxu0 %v567
    %978 = vmatpush.msra.mxu0 %v563
    %979 = vmatpush.msra.mxu0 %v559
    %980 = vmatpush.msra.mxu0 %v555
    %981 = vmatpush.msra.mxu0 %v551
    %982 = vmatpush.msra.mxu0 %v547
    %983 = vmatpush.msra.mxu0 %v543
    %984 = vmatpush.msra.mxu0 %v539
    %985 = vmatpush.msra.mxu0 %v535
    %986 = vmatpush.msra.mxu0 %v531
    %987 = vmatpush.msra.mxu0 %v527
    %988 = vmatmul.f32.gmra.mxu0 %v800
    %v989 = vpop.f32.mrf.mxu0
    %v990 = vadd.f32 %v949, %v989
    %991 = vdwg.mxu0
    %992 = vmatpush.msra.mxu0 %v588
    %993 = vmatpush.msra.mxu0 %v584
    %994 = vmatpush.msra.mxu0 %v580
    %995 = vmatpush.msra.mxu0 %v576
    %996 = vmatpush.msra.mxu0 %v572
    %997 = vmatpush.msra.mxu0 %v568
    %998 = vmatpush.msra.mxu0 %v564
    %999 = vmatpush.msra.mxu0 %v560
    %1000 = vmatpush.msra.mxu0 %v556
    %1001 = vmatpush.msra.mxu0 %v552
    %1002 = vmatpush.msra.mxu0 %v548
    %1003 = vmatpush.msra.mxu0 %v544
    %1004 = vmatpush.msra.mxu0 %v540
    %1005 = vmatpush.msra.mxu0 %v536
    %1006 = vmatpush.msra.mxu0 %v532
    %1007 = vmatpush.msra.mxu0 %v528
    %1008 = vmatmul.f32.gmra.mxu0 %v800
    %v1009 = vpop.f32.mrf.mxu0
    %v1010 = vadd.f32 %v950, %v1009
    %1011 = vdwg.mxu0
    %1012 = vmatpush.msra.mxu0 %v589
    %1013 = vmatpush.msra.mxu0 %v585
    %1014 = vmatpush.msra.mxu0 %v581
    %1015 = vmatpush.msra.mxu0 %v577
    %1016 = vmatpush.msra.mxu0 %v573
    %1017 = vmatpush.msra.mxu0 %v569
    %1018 = vmatpush.msra.mxu0 %v565
    %1019 = vmatpush.msra.mxu0 %v561
    %1020 = vmatpush.msra.mxu0 %v557
    %1021 = vmatpush.msra.mxu0 %v553
    %1022 = vmatpush.msra.mxu0 %v549
    %1023 = vmatpush.msra.mxu0 %v545
    %1024 = vmatpush.msra.mxu0 %v541
    %1025 = vmatpush.msra.mxu0 %v537
    %1026 = vmatpush.msra.mxu0 %v533
    %1027 = vmatpush.msra.mxu0 %v529
    %1028 = vmatmul.f32.gmra.mxu0 %v800
    %v1029 = vpop.f32.mrf.mxu0
    %v1030 = vadd.f32 %v951, %v1029
    %1031 = vdwg.mxu0
    %v1032 = vxor.u32 %v970, 2147483648
    %v1033 = vmul.f32 %v1032, 1.442695
    %v1034 = vpow.pop %v1033
    %v1035 = vadd.f32 %v1034, 1.0
    %v1036 = vrcp.pop %v1035
    %v1037 = vmul.f32 %v1035, %v1036
    %v1038 = vsub.f32 1.0, %v1037
    %v1039 = vmul.f32 %v1036, %v1038
    %v1040 = vadd.f32 %v1036, %v1039
    %vm1041 = vweird.f32 %v1035
    %vm1042 = vweird.f32 %v1036
    %vm1043 = vmor %vm1041, %vm1042
    %v1044 = vsel %vm1043, %v1036, %v1040
    %v1045 = vand.u32 2147483647, %v1035
    %vm1046 = vcmp.eq.f32.partialorder %v1045, 8.507059e+37
    %v1047 = vand.u32 %v1035, 2147483648
    %v1048 = vor.u32 1.1754944e-38, %v1047
    %v1049 = vsel %vm1046, %v1048, %v1044
    %v1050 = vmul.f32 1.0, %v1049
    %v1051 = vxor.u32 %v990, 2147483648
    %v1052 = vmul.f32 %v1051, 1.442695
    %v1053 = vpow.pop %v1052
    %v1054 = vadd.f32 %v1053, 1.0
    %v1055 = vrcp.pop %v1054
    %v1056 = vmul.f32 %v1054, %v1055
    %v1057 = vsub.f32 1.0, %v1056
    %v1058 = vmul.f32 %v1055, %v1057
    %v1059 = vadd.f32 %v1055, %v1058
    %vm1060 = vweird.f32 %v1054
    %vm1061 = vweird.f32 %v1055
    %vm1062 = vmor %vm1060, %vm1061
    %v1063 = vsel %vm1062, %v1055, %v1059
    %v1064 = vand.u32 2147483647, %v1054
    %vm1065 = vcmp.eq.f32.partialorder %v1064, 8.507059e+37
    %v1066 = vand.u32 %v1054, 2147483648
    %v1067 = vor.u32 1.1754944e-38, %v1066
    %v1068 = vsel %vm1065, %v1067, %v1063
    %v1069 = vmul.f32 1.0, %v1068
    %v1070 = vtanh.pop %v1010
    %v1071 = vxor.u32 %v1030, 2147483648
    %v1072 = vmul.f32 %v1071, 1.442695
    %v1073 = vpow.pop %v1072
    %v1074 = vadd.f32 %v1073, 1.0
    %v1075 = vrcp.pop %v1074
    %v1076 = vmul.f32 %v1074, %v1075
    %v1077 = vsub.f32 1.0, %v1076
    %v1078 = vmul.f32 %v1075, %v1077
    %v1079 = vadd.f32 %v1075, %v1078
    %vm1080 = vweird.f32 %v1074
    %vm1081 = vweird.f32 %v1075
    %vm1082 = vmor %vm1080, %vm1081
    %v1083 = vsel %vm1082, %v1075, %v1079
    %v1084 = vand.u32 2147483647, %v1074
    %vm1085 = vcmp.eq.f32.partialorder %v1084, 8.507059e+37
    %v1086 = vand.u32 %v1074, 2147483648
    %v1087 = vor.u32 1.1754944e-38, %v1086
    %v1088 = vsel %vm1085, %v1087, %v1083
    %v1089 = vmul.f32 1.0, %v1088
    %v1090 = vmul.f32 %v1069, %v798
    %v1091 = vmul.f32 %v1050, %v1070
    %v1092 = vadd.f32 %v1090, %v1091
    %v1093 = vtanh.pop %v1092
    %v1094 = vmul.f32 %v1089, %v1093
    %v1095 = vld [vmem:[#allocation2 + $0x160] sm:$0xff]
    %v1096 = vld [vmem:[#allocation2 + $0x168] sm:$0xff]
    %v1097 = vld [vmem:[#allocation2 + $0x170] sm:$0xff]
    %v1098 = vld [vmem:[#allocation2 + $0x178] sm:$0xff]
    %1099 = vmatpush.msra.mxu0 %v650
    %1100 = vmatpush.msra.mxu0 %v646
    %1101 = vmatpush.msra.mxu0 %v642
    %1102 = vmatpush.msra.mxu0 %v638
    %1103 = vmatpush.msra.mxu0 %v634
    %1104 = vmatpush.msra.mxu0 %v630
    %1105 = vmatpush.msra.mxu0 %v626
    %1106 = vmatpush.msra.mxu0 %v622
    %1107 = vmatpush.msra.mxu0 %v618
    %1108 = vmatpush.msra.mxu0 %v614
    %1109 = vmatpush.msra.mxu0 %v610
    %1110 = vmatpush.msra.mxu0 %v606
    %1111 = vmatpush.msra.mxu0 %v602
    %1112 = vmatpush.msra.mxu0 %v598
    %1113 = vmatpush.msra.mxu0 %v594
    %1114 = vmatpush.msra.mxu0 %v590
    %1115 = vmatmul.f32.gmra.mxu0 %v947
    %v1116 = vpop.f32.mrf.mxu0
    %v1117 = vadd.f32 %v1095, %v1116
    %1118 = vdwg.mxu0
    %1119 = vmatpush.msra.mxu0 %v651
    %1120 = vmatpush.msra.mxu0 %v647
    %1121 = vmatpush.msra.mxu0 %v643
    %1122 = vmatpush.msra.mxu0 %v639
    %1123 = vmatpush.msra.mxu0 %v635
    %1124 = vmatpush.msra.mxu0 %v631
    %1125 = vmatpush.msra.mxu0 %v627
    %1126 = vmatpush.msra.mxu0 %v623
    %1127 = vmatpush.msra.mxu0 %v619
    %1128 = vmatpush.msra.mxu0 %v615
    %1129 = vmatpush.msra.mxu0 %v611
    %1130 = vmatpush.msra.mxu0 %v607
    %1131 = vmatpush.msra.mxu0 %v603
    %1132 = vmatpush.msra.mxu0 %v599
    %1133 = vmatpush.msra.mxu0 %v595
    %1134 = vmatpush.msra.mxu0 %v591
    %1135 = vmatmul.f32.gmra.mxu0 %v947
    %v1136 = vpop.f32.mrf.mxu0
    %v1137 = vadd.f32 %v1096, %v1136
    %1138 = vdwg.mxu0
    %1139 = vmatpush.msra.mxu0 %v652
    %1140 = vmatpush.msra.mxu0 %v648
    %1141 = vmatpush.msra.mxu0 %v644
    %1142 = vmatpush.msra.mxu0 %v640
    %1143 = vmatpush.msra.mxu0 %v636
    %1144 = vmatpush.msra.mxu0 %v632
    %1145 = vmatpush.msra.mxu0 %v628
    %1146 = vmatpush.msra.mxu0 %v624
    %1147 = vmatpush.msra.mxu0 %v620
    %1148 = vmatpush.msra.mxu0 %v616
    %1149 = vmatpush.msra.mxu0 %v612
    %1150 = vmatpush.msra.mxu0 %v608
    %1151 = vmatpush.msra.mxu0 %v604
    %1152 = vmatpush.msra.mxu0 %v600
    %1153 = vmatpush.msra.mxu0 %v596
    %1154 = vmatpush.msra.mxu0 %v592
    %1155 = vmatmul.f32.gmra.mxu0 %v947
    %v1156 = vpop.f32.mrf.mxu0
    %v1157 = vadd.f32 %v1097, %v1156
    %1158 = vdwg.mxu0
    %1159 = vmatpush.msra.mxu0 %v653
    %1160 = vmatpush.msra.mxu0 %v649
    %1161 = vmatpush.msra.mxu0 %v645
    %1162 = vmatpush.msra.mxu0 %v641
    %1163 = vmatpush.msra.mxu0 %v637
    %1164 = vmatpush.msra.mxu0 %v633
    %1165 = vmatpush.msra.mxu0 %v629
    %1166 = vmatpush.msra.mxu0 %v625
    %1167 = vmatpush.msra.mxu0 %v621
    %1168 = vmatpush.msra.mxu0 %v617
    %1169 = vmatpush.msra.mxu0 %v613
    %1170 = vmatpush.msra.mxu0 %v609
    %1171 = vmatpush.msra.mxu0 %v605
    %1172 = vmatpush.msra.mxu0 %v601
    %1173 = vmatpush.msra.mxu0 %v597
    %1174 = vmatpush.msra.mxu0 %v593
    %1175 = vmatmul.f32.gmra.mxu0 %v947
    %v1176 = vpop.f32.mrf.mxu0
    %v1177 = vadd.f32 %v1098, %v1176
    %1178 = vdwg.mxu0
    %v1179 = vxor.u32 %v1117, 2147483648
    %v1180 = vmul.f32 %v1179, 1.442695
    %v1181 = vpow.pop %v1180
    %v1182 = vadd.f32 %v1181, 1.0
    %v1183 = vrcp.pop %v1182
    %v1184 = vmul.f32 %v1182, %v1183
    %v1185 = vsub.f32 1.0, %v1184
    %v1186 = vmul.f32 %v1183, %v1185
    %v1187 = vadd.f32 %v1183, %v1186
    %vm1188 = vweird.f32 %v1182
    %vm1189 = vweird.f32 %v1183
    %vm1190 = vmor %vm1188, %vm1189
    %v1191 = vsel %vm1190, %v1183, %v1187
    %v1192 = vand.u32 2147483647, %v1182
    %vm1193 = vcmp.eq.f32.partialorder %v1192, 8.507059e+37
    %v1194 = vand.u32 %v1182, 2147483648
    %v1195 = vor.u32 1.1754944e-38, %v1194
    %v1196 = vsel %vm1193, %v1195, %v1191
    %v1197 = vmul.f32 1.0, %v1196
    %v1198 = vxor.u32 %v1137, 2147483648
    %v1199 = vmul.f32 %v1198, 1.442695
    %v1200 = vpow.pop %v1199
    %v1201 = vadd.f32 %v1200, 1.0
    %v1202 = vrcp.pop %v1201
    %v1203 = vmul.f32 %v1201, %v1202
    %v1204 = vsub.f32 1.0, %v1203
    %v1205 = vmul.f32 %v1202, %v1204
    %v1206 = vadd.f32 %v1202, %v1205
    %vm1207 = vweird.f32 %v1201
    %vm1208 = vweird.f32 %v1202
    %vm1209 = vmor %vm1207, %vm1208
    %v1210 = vsel %vm1209, %v1202, %v1206
    %v1211 = vand.u32 2147483647, %v1201
    %vm1212 = vcmp.eq.f32.partialorder %v1211, 8.507059e+37
    %v1213 = vand.u32 %v1201, 2147483648
    %v1214 = vor.u32 1.1754944e-38, %v1213
    %v1215 = vsel %vm1212, %v1214, %v1210
    %v1216 = vmul.f32 1.0, %v1215
    %v1217 = vtanh.pop %v1157
    %v1218 = vxor.u32 %v1177, 2147483648
    %v1219 = vmul.f32 %v1218, 1.442695
    %v1220 = vpow.pop %v1219
    %v1221 = vadd.f32 %v1220, 1.0
    %v1222 = vrcp.pop %v1221
    %v1223 = vmul.f32 %v1221, %v1222
    %v1224 = vsub.f32 1.0, %v1223
    %v1225 = vmul.f32 %v1222, %v1224
    %v1226 = vadd.f32 %v1222, %v1225
    %vm1227 = vweird.f32 %v1221
    %vm1228 = vweird.f32 %v1222
    %vm1229 = vmor %vm1227, %vm1228
    %v1230 = vsel %vm1229, %v1222, %v1226
    %v1231 = vand.u32 2147483647, %v1221
    %vm1232 = vcmp.eq.f32.partialorder %v1231, 8.507059e+37
    %v1233 = vand.u32 %v1221, 2147483648
    %v1234 = vor.u32 1.1754944e-38, %v1233
    %v1235 = vsel %vm1232, %v1234, %v1230
    %v1236 = vmul.f32 1.0, %v1235
    %v1237 = vmul.f32 %v1216, %v945
    %v1238 = vmul.f32 %v1197, %v1217
    %v1239 = vadd.f32 %v1237, %v1238
    %v1240 = vtanh.pop %v1239
    %v1241 = vmul.f32 %v1236, %v1240
    %v1242 = vld [vmem:[#allocation2 + $0xc0] sm:$0xff]
    %v1243 = vld [vmem:[#allocation2 + $0xc8] sm:$0xff]
    %v1244 = vld [vmem:[#allocation2 + $0xd0] sm:$0xff]
    %v1245 = vld [vmem:[#allocation2 + $0xd8] sm:$0xff]
    %1246 = vmatpush.msra.mxu0 %v586
    %1247 = vmatpush.msra.mxu0 %v582
    %1248 = vmatpush.msra.mxu0 %v578
    %1249 = vmatpush.msra.mxu0 %v574
    %1250 = vmatpush.msra.mxu0 %v570
    %1251 = vmatpush.msra.mxu0 %v566
    %1252 = vmatpush.msra.mxu0 %v562
    %1253 = vmatpush.msra.mxu0 %v558
    %1254 = vmatpush.msra.mxu0 %v554
    %1255 = vmatpush.msra.mxu0 %v550
    %1256 = vmatpush.msra.mxu0 %v546
    %1257 = vmatpush.msra.mxu0 %v542
    %1258 = vmatpush.msra.mxu0 %v538
    %1259 = vmatpush.msra.mxu0 %v534
    %1260 = vmatpush.msra.mxu0 %v530
    %1261 = vmatpush.msra.mxu0 %v526
    %1262 = vmatmul.f32.gmra.mxu0 %v1094
    %v1263 = vpop.f32.mrf.mxu0
    %v1264 = vadd.f32 %v1242, %v1263
    %1265 = vdwg.mxu0
    %1266 = vmatpush.msra.mxu0 %v587
    %1267 = vmatpush.msra.mxu0 %v583
    %1268 = vmatpush.msra.mxu0 %v579
    %1269 = vmatpush.msra.mxu0 %v575
    %1270 = vmatpush.msra.mxu0 %v571
    %1271 = vmatpush.msra.mxu0 %v567
    %1272 = vmatpush.msra.mxu0 %v563
    %1273 = vmatpush.msra.mxu0 %v559
    %1274 = vmatpush.msra.mxu0 %v555
    %1275 = vmatpush.msra.mxu0 %v551
    %1276 = vmatpush.msra.mxu0 %v547
    %1277 = vmatpush.msra.mxu0 %v543
    %1278 = vmatpush.msra.mxu0 %v539
    %1279 = vmatpush.msra.mxu0 %v535
    %1280 = vmatpush.msra.mxu0 %v531
    %1281 = vmatpush.msra.mxu0 %v527
    %1282 = vmatmul.f32.gmra.mxu0 %v1094
    %v1283 = vpop.f32.mrf.mxu0
    %v1284 = vadd.f32 %v1243, %v1283
    %1285 = vdwg.mxu0
    %1286 = vmatpush.msra.mxu0 %v588
    %1287 = vmatpush.msra.mxu0 %v584
    %1288 = vmatpush.msra.mxu0 %v580
    %1289 = vmatpush.msra.mxu0 %v576
    %1290 = vmatpush.msra.mxu0 %v572
    %1291 = vmatpush.msra.mxu0 %v568
    %1292 = vmatpush.msra.mxu0 %v564
    %1293 = vmatpush.msra.mxu0 %v560
    %1294 = vmatpush.msra.mxu0 %v556
    %1295 = vmatpush.msra.mxu0 %v552
    %1296 = vmatpush.msra.mxu0 %v548
    %1297 = vmatpush.msra.mxu0 %v544
    %1298 = vmatpush.msra.mxu0 %v540
    %1299 = vmatpush.msra.mxu0 %v536
    %1300 = vmatpush.msra.mxu0 %v532
    %1301 = vmatpush.msra.mxu0 %v528
    %1302 = vmatmul.f32.gmra.mxu0 %v1094
    %v1303 = vpop.f32.mrf.mxu0
    %v1304 = vadd.f32 %v1244, %v1303
    %1305 = vdwg.mxu0
    %1306 = vmatpush.msra.mxu0 %v589
    %1307 = vmatpush.msra.mxu0 %v585
    %1308 = vmatpush.msra.mxu0 %v581
    %1309 = vmatpush.msra.mxu0 %v577
    %1310 = vmatpush.msra.mxu0 %v573
    %1311 = vmatpush.msra.mxu0 %v569
    %1312 = vmatpush.msra.mxu0 %v565
    %1313 = vmatpush.msra.mxu0 %v561
    %1314 = vmatpush.msra.mxu0 %v557
    %1315 = vmatpush.msra.mxu0 %v553
    %1316 = vmatpush.msra.mxu0 %v549
    %1317 = vmatpush.msra.mxu0 %v545
    %1318 = vmatpush.msra.mxu0 %v541
    %1319 = vmatpush.msra.mxu0 %v537
    %1320 = vmatpush.msra.mxu0 %v533
    %1321 = vmatpush.msra.mxu0 %v529
    %1322 = vmatmul.f32.gmra.mxu0 %v1094
    %v1323 = vpop.f32.mrf.mxu0
    %v1324 = vadd.f32 %v1245, %v1323
    %1325 = vdwg.mxu0
    %v1326 = vxor.u32 %v1264, 2147483648
    %v1327 = vmul.f32 %v1326, 1.442695
    %v1328 = vpow.pop %v1327
    %v1329 = vadd.f32 %v1328, 1.0
    %v1330 = vrcp.pop %v1329
    %v1331 = vmul.f32 %v1329, %v1330
    %v1332 = vsub.f32 1.0, %v1331
    %v1333 = vmul.f32 %v1330, %v1332
    %v1334 = vadd.f32 %v1330, %v1333
    %vm1335 = vweird.f32 %v1329
    %vm1336 = vweird.f32 %v1330
    %vm1337 = vmor %vm1335, %vm1336
    %v1338 = vsel %vm1337, %v1330, %v1334
    %v1339 = vand.u32 2147483647, %v1329
    %vm1340 = vcmp.eq.f32.partialorder %v1339, 8.507059e+37
    %v1341 = vand.u32 %v1329, 2147483648
    %v1342 = vor.u32 1.1754944e-38, %v1341
    %v1343 = vsel %vm1340, %v1342, %v1338
    %v1344 = vmul.f32 1.0, %v1343
    %v1345 = vxor.u32 %v1284, 2147483648
    %v1346 = vmul.f32 %v1345, 1.442695
    %v1347 = vpow.pop %v1346
    %v1348 = vadd.f32 %v1347, 1.0
    %v1349 = vrcp.pop %v1348
    %v1350 = vmul.f32 %v1348, %v1349
    %v1351 = vsub.f32 1.0, %v1350
    %v1352 = vmul.f32 %v1349, %v1351
    %v1353 = vadd.f32 %v1349, %v1352
    %vm1354 = vweird.f32 %v1348
    %vm1355 = vweird.f32 %v1349
    %vm1356 = vmor %vm1354, %vm1355
    %v1357 = vsel %vm1356, %v1349, %v1353
    %v1358 = vand.u32 2147483647, %v1348
    %vm1359 = vcmp.eq.f32.partialorder %v1358, 8.507059e+37
    %v1360 = vand.u32 %v1348, 2147483648
    %v1361 = vor.u32 1.1754944e-38, %v1360
    %v1362 = vsel %vm1359, %v1361, %v1357
    %v1363 = vmul.f32 1.0, %v1362
    %v1364 = vtanh.pop %v1304
    %v1365 = vxor.u32 %v1324, 2147483648
    %v1366 = vmul.f32 %v1365, 1.442695
    %v1367 = vpow.pop %v1366
    %v1368 = vadd.f32 %v1367, 1.0
    %v1369 = vrcp.pop %v1368
    %v1370 = vmul.f32 %v1368, %v1369
    %v1371 = vsub.f32 1.0, %v1370
    %v1372 = vmul.f32 %v1369, %v1371
    %v1373 = vadd.f32 %v1369, %v1372
    %vm1374 = vweird.f32 %v1368
    %vm1375 = vweird.f32 %v1369
    %vm1376 = vmor %vm1374, %vm1375
    %v1377 = vsel %vm1376, %v1369, %v1373
    %v1378 = vand.u32 2147483647, %v1368
    %vm1379 = vcmp.eq.f32.partialorder %v1378, 8.507059e+37
    %v1380 = vand.u32 %v1368, 2147483648
    %v1381 = vor.u32 1.1754944e-38, %v1380
    %v1382 = vsel %vm1379, %v1381, %v1377
    %v1383 = vmul.f32 1.0, %v1382
    %v1384 = vmul.f32 %v1363, %v1092
    %v1385 = vmul.f32 %v1344, %v1364
    %v1386 = vadd.f32 %v1384, %v1385
    %v1387 = vtanh.pop %v1386
    %v1388 = vmul.f32 %v1383, %v1387
    %v1389 = vld [vmem:[#allocation2 + $0x120] sm:$0xff]
    %v1390 = vld [vmem:[#allocation2 + $0x128] sm:$0xff]
    %v1391 = vld [vmem:[#allocation2 + $0x130] sm:$0xff]
    %v1392 = vld [vmem:[#allocation2 + $0x138] sm:$0xff]
    %1393 = vmatpush.msra.mxu0 %v650
    %1394 = vmatpush.msra.mxu0 %v646
    %1395 = vmatpush.msra.mxu0 %v642
    %1396 = vmatpush.msra.mxu0 %v638
    %1397 = vmatpush.msra.mxu0 %v634
    %1398 = vmatpush.msra.mxu0 %v630
    %1399 = vmatpush.msra.mxu0 %v626
    %1400 = vmatpush.msra.mxu0 %v622
    %1401 = vmatpush.msra.mxu0 %v618
    %1402 = vmatpush.msra.mxu0 %v614
    %1403 = vmatpush.msra.mxu0 %v610
    %1404 = vmatpush.msra.mxu0 %v606
    %1405 = vmatpush.msra.mxu0 %v602
    %1406 = vmatpush.msra.mxu0 %v598
    %1407 = vmatpush.msra.mxu0 %v594
    %1408 = vmatpush.msra.mxu0 %v590
    %1409 = vmatmul.f32.gmra.mxu0 %v1241
    %v1410 = vpop.f32.mrf.mxu0
    %v1411 = vadd.f32 %v1389, %v1410
    %1412 = vdwg.mxu0
    %1413 = vmatpush.msra.mxu0 %v651
    %1414 = vmatpush.msra.mxu0 %v647
    %1415 = vmatpush.msra.mxu0 %v643
    %1416 = vmatpush.msra.mxu0 %v639
    %1417 = vmatpush.msra.mxu0 %v635
    %1418 = vmatpush.msra.mxu0 %v631
    %1419 = vmatpush.msra.mxu0 %v627
    %1420 = vmatpush.msra.mxu0 %v623
    %1421 = vmatpush.msra.mxu0 %v619
    %1422 = vmatpush.msra.mxu0 %v615
    %1423 = vmatpush.msra.mxu0 %v611
    %1424 = vmatpush.msra.mxu0 %v607
    %1425 = vmatpush.msra.mxu0 %v603
    %1426 = vmatpush.msra.mxu0 %v599
    %1427 = vmatpush.msra.mxu0 %v595
    %1428 = vmatpush.msra.mxu0 %v591
    %1429 = vmatmul.f32.gmra.mxu0 %v1241
    %v1430 = vpop.f32.mrf.mxu0
    %v1431 = vadd.f32 %v1390, %v1430
    %1432 = vdwg.mxu0
    %1433 = vmatpush.msra.mxu0 %v652
    %1434 = vmatpush.msra.mxu0 %v648
    %1435 = vmatpush.msra.mxu0 %v644
    %1436 = vmatpush.msra.mxu0 %v640
    %1437 = vmatpush.msra.mxu0 %v636
    %1438 = vmatpush.msra.mxu0 %v632
    %1439 = vmatpush.msra.mxu0 %v628
    %1440 = vmatpush.msra.mxu0 %v624
    %1441 = vmatpush.msra.mxu0 %v620
    %1442 = vmatpush.msra.mxu0 %v616
    %1443 = vmatpush.msra.mxu0 %v612
    %1444 = vmatpush.msra.mxu0 %v608
    %1445 = vmatpush.msra.mxu0 %v604
    %1446 = vmatpush.msra.mxu0 %v600
    %1447 = vmatpush.msra.mxu0 %v596
    %1448 = vmatpush.msra.mxu0 %v592
    %1449 = vmatmul.f32.gmra.mxu0 %v1241
    %v1450 = vpop.f32.mrf.mxu0
    %v1451 = vadd.f32 %v1391, %v1450
    %1452 = vdwg.mxu0
    %1453 = vmatpush.msra.mxu0 %v653
    %1454 = vmatpush.msra.mxu0 %v649
    %1455 = vmatpush.msra.mxu0 %v645
    %1456 = vmatpush.msra.mxu0 %v641
    %1457 = vmatpush.msra.mxu0 %v637
    %1458 = vmatpush.msra.mxu0 %v633
    %1459 = vmatpush.msra.mxu0 %v629
    %1460 = vmatpush.msra.mxu0 %v625
    %1461 = vmatpush.msra.mxu0 %v621
    %1462 = vmatpush.msra.mxu0 %v617
    %1463 = vmatpush.msra.mxu0 %v613
    %1464 = vmatpush.msra.mxu0 %v609
    %1465 = vmatpush.msra.mxu0 %v605
    %1466 = vmatpush.msra.mxu0 %v601
    %1467 = vmatpush.msra.mxu0 %v597
    %1468 = vmatpush.msra.mxu0 %v593
    %1469 = vmatmul.f32.gmra.mxu0 %v1241
    %v1470 = vpop.f32.mrf.mxu0
    %v1471 = vadd.f32 %v1392, %v1470
    %1472 = vdwg.mxu0
    %v1473 = vxor.u32 %v1411, 2147483648
    %v1474 = vmul.f32 %v1473, 1.442695
    %v1475 = vpow.pop %v1474
    %v1476 = vadd.f32 %v1475, 1.0
    %v1477 = vrcp.pop %v1476
    %v1478 = vmul.f32 %v1476, %v1477
    %v1479 = vsub.f32 1.0, %v1478
    %v1480 = vmul.f32 %v1477, %v1479
    %v1481 = vadd.f32 %v1477, %v1480
    %vm1482 = vweird.f32 %v1476
    %vm1483 = vweird.f32 %v1477
    %vm1484 = vmor %vm1482, %vm1483
    %v1485 = vsel %vm1484, %v1477, %v1481
    %v1486 = vand.u32 2147483647, %v1476
    %vm1487 = vcmp.eq.f32.partialorder %v1486, 8.507059e+37
    %v1488 = vand.u32 %v1476, 2147483648
    %v1489 = vor.u32 1.1754944e-38, %v1488
    %v1490 = vsel %vm1487, %v1489, %v1485
    %v1491 = vmul.f32 1.0, %v1490
    %v1492 = vxor.u32 %v1431, 2147483648
    %v1493 = vmul.f32 %v1492, 1.442695
    %v1494 = vpow.pop %v1493
    %v1495 = vadd.f32 %v1494, 1.0
    %v1496 = vrcp.pop %v1495
    %v1497 = vmul.f32 %v1495, %v1496
    %v1498 = vsub.f32 1.0, %v1497
    %v1499 = vmul.f32 %v1496, %v1498
    %v1500 = vadd.f32 %v1496, %v1499
    %vm1501 = vweird.f32 %v1495
    %vm1502 = vweird.f32 %v1496
    %vm1503 = vmor %vm1501, %vm1502
    %v1504 = vsel %vm1503, %v1496, %v1500
    %v1505 = vand.u32 2147483647, %v1495
    %vm1506 = vcmp.eq.f32.partialorder %v1505, 8.507059e+37
    %v1507 = vand.u32 %v1495, 2147483648
    %v1508 = vor.u32 1.1754944e-38, %v1507
    %v1509 = vsel %vm1506, %v1508, %v1504
    %v1510 = vmul.f32 1.0, %v1509
    %v1511 = vtanh.pop %v1451
    %v1512 = vxor.u32 %v1471, 2147483648
    %v1513 = vmul.f32 %v1512, 1.442695
    %v1514 = vpow.pop %v1513
    %v1515 = vadd.f32 %v1514, 1.0
    %v1516 = vrcp.pop %v1515
    %v1517 = vmul.f32 %v1515, %v1516
    %v1518 = vsub.f32 1.0, %v1517
    %v1519 = vmul.f32 %v1516, %v1518
    %v1520 = vadd.f32 %v1516, %v1519
    %vm1521 = vweird.f32 %v1515
    %vm1522 = vweird.f32 %v1516
    %vm1523 = vmor %vm1521, %vm1522
    %v1524 = vsel %vm1523, %v1516, %v1520
    %v1525 = vand.u32 2147483647, %v1515
    %vm1526 = vcmp.eq.f32.partialorder %v1525, 8.507059e+37
    %v1527 = vand.u32 %v1515, 2147483648
    %v1528 = vor.u32 1.1754944e-38, %v1527
    %v1529 = vsel %vm1526, %v1528, %v1524
    %v1530 = vmul.f32 1.0, %v1529
    %v1531 = vmul.f32 %v1510, %v1239
    %v1532 = vmul.f32 %v1491, %v1511
    %v1533 = vadd.f32 %v1531, %v1532
    %v1534 = vtanh.pop %v1533
    %v1535 = vmul.f32 %v1530, %v1534
    %v1536 = vld [vmem:[#allocation2 + $0x100] sm:$0xff]
    %v1537 = vld [vmem:[#allocation2 + $0x108] sm:$0xff]
    %v1538 = vld [vmem:[#allocation2 + $0x110] sm:$0xff]
    %v1539 = vld [vmem:[#allocation2 + $0x118] sm:$0xff]
    %1540 = vmatpush.msra.mxu0 %v586
    %1541 = vmatpush.msra.mxu0 %v582
    %1542 = vmatpush.msra.mxu0 %v578
    %1543 = vmatpush.msra.mxu0 %v574
    %1544 = vmatpush.msra.mxu0 %v570
    %1545 = vmatpush.msra.mxu0 %v566
    %1546 = vmatpush.msra.mxu0 %v562
    %1547 = vmatpush.msra.mxu0 %v558
    %1548 = vmatpush.msra.mxu0 %v554
    %1549 = vmatpush.msra.mxu0 %v550
    %1550 = vmatpush.msra.mxu0 %v546
    %1551 = vmatpush.msra.mxu0 %v542
    %1552 = vmatpush.msra.mxu0 %v538
    %1553 = vmatpush.msra.mxu0 %v534
    %1554 = vmatpush.msra.mxu0 %v530
    %1555 = vmatpush.msra.mxu0 %v526
    %1556 = vmatmul.f32.gmra.mxu0 %v1388
    %v1557 = vpop.f32.mrf.mxu0
    %v1558 = vadd.f32 %v1536, %v1557
    %1559 = vdwg.mxu0
    %1560 = vmatpush.msra.mxu0 %v587
    %1561 = vmatpush.msra.mxu0 %v583
    %1562 = vmatpush.msra.mxu0 %v579
    %1563 = vmatpush.msra.mxu0 %v575
    %1564 = vmatpush.msra.mxu0 %v571
    %1565 = vmatpush.msra.mxu0 %v567
    %1566 = vmatpush.msra.mxu0 %v563
    %1567 = vmatpush.msra.mxu0 %v559
    %1568 = vmatpush.msra.mxu0 %v555
    %1569 = vmatpush.msra.mxu0 %v551
    %1570 = vmatpush.msra.mxu0 %v547
    %1571 = vmatpush.msra.mxu0 %v543
    %1572 = vmatpush.msra.mxu0 %v539
    %1573 = vmatpush.msra.mxu0 %v535
    %1574 = vmatpush.msra.mxu0 %v531
    %1575 = vmatpush.msra.mxu0 %v527
    %1576 = vmatmul.f32.gmra.mxu0 %v1388
    %v1577 = vpop.f32.mrf.mxu0
    %v1578 = vadd.f32 %v1537, %v1577
    %1579 = vdwg.mxu0
    %1580 = vmatpush.msra.mxu0 %v588
    %1581 = vmatpush.msra.mxu0 %v584
    %1582 = vmatpush.msra.mxu0 %v580
    %1583 = vmatpush.msra.mxu0 %v576
    %1584 = vmatpush.msra.mxu0 %v572
    %1585 = vmatpush.msra.mxu0 %v568
    %1586 = vmatpush.msra.mxu0 %v564
    %1587 = vmatpush.msra.mxu0 %v560
    %1588 = vmatpush.msra.mxu0 %v556
    %1589 = vmatpush.msra.mxu0 %v552
    %1590 = vmatpush.msra.mxu0 %v548
    %1591 = vmatpush.msra.mxu0 %v544
    %1592 = vmatpush.msra.mxu0 %v540
    %1593 = vmatpush.msra.mxu0 %v536
    %1594 = vmatpush.msra.mxu0 %v532
    %1595 = vmatpush.msra.mxu0 %v528
    %1596 = vmatmul.f32.gmra.mxu0 %v1388
    %v1597 = vpop.f32.mrf.mxu0
    %v1598 = vadd.f32 %v1538, %v1597
    %1599 = vdwg.mxu0
    %1600 = vmatpush.msra.mxu0 %v589
    %1601 = vmatpush.msra.mxu0 %v585
    %1602 = vmatpush.msra.mxu0 %v581
    %1603 = vmatpush.msra.mxu0 %v577
    %1604 = vmatpush.msra.mxu0 %v573
    %1605 = vmatpush.msra.mxu0 %v569
    %1606 = vmatpush.msra.mxu0 %v565
    %1607 = vmatpush.msra.mxu0 %v561
    %1608 = vmatpush.msra.mxu0 %v557
    %1609 = vmatpush.msra.mxu0 %v553
    %1610 = vmatpush.msra.mxu0 %v549
    %1611 = vmatpush.msra.mxu0 %v545
    %1612 = vmatpush.msra.mxu0 %v541
    %1613 = vmatpush.msra.mxu0 %v537
    %1614 = vmatpush.msra.mxu0 %v533
    %1615 = vmatpush.msra.mxu0 %v529
    %1616 = vmatmul.f32.gmra.mxu0 %v1388
    %v1617 = vpop.f32.mrf.mxu0
    %v1618 = vadd.f32 %v1539, %v1617
    %1619 = vdwg.mxu0
    %v1620 = vxor.u32 %v1558, 2147483648
    %v1621 = vmul.f32 %v1620, 1.442695
    %v1622 = vpow.pop %v1621
    %v1623 = vadd.f32 %v1622, 1.0
    %v1624 = vrcp.pop %v1623
    %v1625 = vmul.f32 %v1623, %v1624
    %v1626 = vsub.f32 1.0, %v1625
    %v1627 = vmul.f32 %v1624, %v1626
    %v1628 = vadd.f32 %v1624, %v1627
    %vm1629 = vweird.f32 %v1623
    %vm1630 = vweird.f32 %v1624
    %vm1631 = vmor %vm1629, %vm1630
    %v1632 = vsel %vm1631, %v1624, %v1628
    %v1633 = vand.u32 2147483647, %v1623
    %vm1634 = vcmp.eq.f32.partialorder %v1633, 8.507059e+37
    %v1635 = vand.u32 %v1623, 2147483648
    %v1636 = vor.u32 1.1754944e-38, %v1635
    %v1637 = vsel %vm1634, %v1636, %v1632
    %v1638 = vmul.f32 1.0, %v1637
    %v1639 = vxor.u32 %v1578, 2147483648
    %v1640 = vmul.f32 %v1639, 1.442695
    %v1641 = vpow.pop %v1640
    %v1642 = vadd.f32 %v1641, 1.0
    %v1643 = vrcp.pop %v1642
    %v1644 = vmul.f32 %v1642, %v1643
    %v1645 = vsub.f32 1.0, %v1644
    %v1646 = vmul.f32 %v1643, %v1645
    %v1647 = vadd.f32 %v1643, %v1646
    %vm1648 = vweird.f32 %v1642
    %vm1649 = vweird.f32 %v1643
    %vm1650 = vmor %vm1648, %vm1649
    %v1651 = vsel %vm1650, %v1643, %v1647
    %v1652 = vand.u32 2147483647, %v1642
    %vm1653 = vcmp.eq.f32.partialorder %v1652, 8.507059e+37
    %v1654 = vand.u32 %v1642, 2147483648
    %v1655 = vor.u32 1.1754944e-38, %v1654
    %v1656 = vsel %vm1653, %v1655, %v1651
    %v1657 = vmul.f32 1.0, %v1656
    %v1658 = vtanh.pop %v1598
    %v1659 = vxor.u32 %v1618, 2147483648
    %v1660 = vmul.f32 %v1659, 1.442695
    %v1661 = vpow.pop %v1660
    %v1662 = vadd.f32 %v1661, 1.0
    %v1663 = vrcp.pop %v1662
    %v1664 = vmul.f32 %v1662, %v1663
    %v1665 = vsub.f32 1.0, %v1664
    %v1666 = vmul.f32 %v1663, %v1665
    %v1667 = vadd.f32 %v1663, %v1666
    %vm1668 = vweird.f32 %v1662
    %vm1669 = vweird.f32 %v1663
    %vm1670 = vmor %vm1668, %vm1669
    %v1671 = vsel %vm1670, %v1663, %v1667
    %v1672 = vand.u32 2147483647, %v1662
    %vm1673 = vcmp.eq.f32.partialorder %v1672, 8.507059e+37
    %v1674 = vand.u32 %v1662, 2147483648
    %v1675 = vor.u32 1.1754944e-38, %v1674
    %v1676 = vsel %vm1673, %v1675, %v1671
    %v1677 = vmul.f32 1.0, %v1676
    %v1678 = vmul.f32 %v1657, %v1386
    %v1679 = vmul.f32 %v1638, %v1658
    %v1680 = vadd.f32 %v1678, %v1679
    %v1681 = vtanh.pop %v1680
    %v1682 = vmul.f32 %v1677, %v1681
    %v1683 = vld [vmem:[#allocation2 + $0xe0] sm:$0xff]
    %v1684 = vld [vmem:[#allocation2 + $0xe8] sm:$0xff]
    %v1685 = vld [vmem:[#allocation2 + $0xf0] sm:$0xff]
    %v1686 = vld [vmem:[#allocation2 + $0xf8] sm:$0xff]
    %1687 = vmatpush.msra.mxu0 %v650
    %1688 = vmatpush.msra.mxu0 %v646
    %1689 = vmatpush.msra.mxu0 %v642
    %1690 = vmatpush.msra.mxu0 %v638
    %1691 = vmatpush.msra.mxu0 %v634
    %1692 = vmatpush.msra.mxu0 %v630
    %1693 = vmatpush.msra.mxu0 %v626
    %1694 = vmatpush.msra.mxu0 %v622
    %1695 = vmatpush.msra.mxu0 %v618
    %1696 = vmatpush.msra.mxu0 %v614
    %1697 = vmatpush.msra.mxu0 %v610
    %1698 = vmatpush.msra.mxu0 %v606
    %1699 = vmatpush.msra.mxu0 %v602
    %1700 = vmatpush.msra.mxu0 %v598
    %1701 = vmatpush.msra.mxu0 %v594
    %1702 = vmatpush.msra.mxu0 %v590
    %1703 = vmatmul.f32.gmra.mxu0 %v1535
    %v1704 = vpop.f32.mrf.mxu0
    %v1705 = vadd.f32 %v1683, %v1704
    %1706 = vdwg.mxu0
    %1707 = vmatpush.msra.mxu0 %v651
    %1708 = vmatpush.msra.mxu0 %v647
    %1709 = vmatpush.msra.mxu0 %v643
    %1710 = vmatpush.msra.mxu0 %v639
    %1711 = vmatpush.msra.mxu0 %v635
    %1712 = vmatpush.msra.mxu0 %v631
    %1713 = vmatpush.msra.mxu0 %v627
    %1714 = vmatpush.msra.mxu0 %v623
    %1715 = vmatpush.msra.mxu0 %v619
    %1716 = vmatpush.msra.mxu0 %v615
    %1717 = vmatpush.msra.mxu0 %v611
    %1718 = vmatpush.msra.mxu0 %v607
    %1719 = vmatpush.msra.mxu0 %v603
    %1720 = vmatpush.msra.mxu0 %v599
    %1721 = vmatpush.msra.mxu0 %v595
    %1722 = vmatpush.msra.mxu0 %v591
    %1723 = vmatmul.f32.gmra.mxu0 %v1535
    %v1724 = vpop.f32.mrf.mxu0
    %v1725 = vadd.f32 %v1684, %v1724
    %1726 = vdwg.mxu0
    %1727 = vmatpush.msra.mxu0 %v652
    %1728 = vmatpush.msra.mxu0 %v648
    %1729 = vmatpush.msra.mxu0 %v644
    %1730 = vmatpush.msra.mxu0 %v640
    %1731 = vmatpush.msra.mxu0 %v636
    %1732 = vmatpush.msra.mxu0 %v632
    %1733 = vmatpush.msra.mxu0 %v628
    %1734 = vmatpush.msra.mxu0 %v624
    %1735 = vmatpush.msra.mxu0 %v620
    %1736 = vmatpush.msra.mxu0 %v616
    %1737 = vmatpush.msra.mxu0 %v612
    %1738 = vmatpush.msra.mxu0 %v608
    %1739 = vmatpush.msra.mxu0 %v604
    %1740 = vmatpush.msra.mxu0 %v600
    %1741 = vmatpush.msra.mxu0 %v596
    %1742 = vmatpush.msra.mxu0 %v592
    %1743 = vmatmul.f32.gmra.mxu0 %v1535
    %v1744 = vpop.f32.mrf.mxu0
    %v1745 = vadd.f32 %v1685, %v1744
    %1746 = vdwg.mxu0
    %1747 = vmatpush.msra.mxu0 %v653
    %1748 = vmatpush.msra.mxu0 %v649
    %1749 = vmatpush.msra.mxu0 %v645
    %1750 = vmatpush.msra.mxu0 %v641
    %1751 = vmatpush.msra.mxu0 %v637
    %1752 = vmatpush.msra.mxu0 %v633
    %1753 = vmatpush.msra.mxu0 %v629
    %1754 = vmatpush.msra.mxu0 %v625
    %1755 = vmatpush.msra.mxu0 %v621
    %1756 = vmatpush.msra.mxu0 %v617
    %1757 = vmatpush.msra.mxu0 %v613
    %1758 = vmatpush.msra.mxu0 %v609
    %1759 = vmatpush.msra.mxu0 %v605
    %1760 = vmatpush.msra.mxu0 %v601
    %1761 = vmatpush.msra.mxu0 %v597
    %1762 = vmatpush.msra.mxu0 %v593
    %1763 = vmatmul.f32.gmra.mxu0 %v1535
    %v1764 = vpop.f32.mrf.mxu0
    %v1765 = vadd.f32 %v1686, %v1764
    %1766 = vdwg.mxu0
    %v1767 = vxor.u32 %v1705, 2147483648
    %v1768 = vmul.f32 %v1767, 1.442695
    %v1769 = vpow.pop %v1768
    %v1770 = vadd.f32 %v1769, 1.0
    %v1771 = vrcp.pop %v1770
    %v1772 = vmul.f32 %v1770, %v1771
    %v1773 = vsub.f32 1.0, %v1772
    %v1774 = vmul.f32 %v1771, %v1773
    %v1775 = vadd.f32 %v1771, %v1774
    %vm1776 = vweird.f32 %v1770
    %vm1777 = vweird.f32 %v1771
    %vm1778 = vmor %vm1776, %vm1777
    %v1779 = vsel %vm1778, %v1771, %v1775
    %v1780 = vand.u32 2147483647, %v1770
    %vm1781 = vcmp.eq.f32.partialorder %v1780, 8.507059e+37
    %v1782 = vand.u32 %v1770, 2147483648
    %v1783 = vor.u32 1.1754944e-38, %v1782
    %v1784 = vsel %vm1781, %v1783, %v1779
    %v1785 = vmul.f32 1.0, %v1784
    %v1786 = vxor.u32 %v1725, 2147483648
    %v1787 = vmul.f32 %v1786, 1.442695
    %v1788 = vpow.pop %v1787
    %v1789 = vadd.f32 %v1788, 1.0
    %v1790 = vrcp.pop %v1789
    %v1791 = vmul.f32 %v1789, %v1790
    %v1792 = vsub.f32 1.0, %v1791
    %v1793 = vmul.f32 %v1790, %v1792
    %v1794 = vadd.f32 %v1790, %v1793
    %vm1795 = vweird.f32 %v1789
    %vm1796 = vweird.f32 %v1790
    %vm1797 = vmor %vm1795, %vm1796
    %v1798 = vsel %vm1797, %v1790, %v1794
    %v1799 = vand.u32 2147483647, %v1789
    %vm1800 = vcmp.eq.f32.partialorder %v1799, 8.507059e+37
    %v1801 = vand.u32 %v1789, 2147483648
    %v1802 = vor.u32 1.1754944e-38, %v1801
    %v1803 = vsel %vm1800, %v1802, %v1798
    %v1804 = vmul.f32 1.0, %v1803
    %v1805 = vtanh.pop %v1745
    %v1806 = vxor.u32 %v1765, 2147483648
    %v1807 = vmul.f32 %v1806, 1.442695
    %v1808 = vpow.pop %v1807
    %v1809 = vadd.f32 %v1808, 1.0
    %v1810 = vrcp.pop %v1809
    %v1811 = vmul.f32 %v1809, %v1810
    %v1812 = vsub.f32 1.0, %v1811
    %v1813 = vmul.f32 %v1810, %v1812
    %v1814 = vadd.f32 %v1810, %v1813
    %vm1815 = vweird.f32 %v1809
    %vm1816 = vweird.f32 %v1810
    %vm1817 = vmor %vm1815, %vm1816
    %v1818 = vsel %vm1817, %v1810, %v1814
    %v1819 = vand.u32 2147483647, %v1809
    %vm1820 = vcmp.eq.f32.partialorder %v1819, 8.507059e+37
    %v1821 = vand.u32 %v1809, 2147483648
    %v1822 = vor.u32 1.1754944e-38, %v1821
    %v1823 = vsel %vm1820, %v1822, %v1818
    %v1824 = vmul.f32 1.0, %v1823
    %v1825 = vmul.f32 %v1804, %v1533
    %v1826 = vmul.f32 %v1785, %v1805
    %v1827 = vadd.f32 %v1825, %v1826
    %v1828 = vtanh.pop %v1827
    %v1829 = vmul.f32 %v1824, %v1828
    %v1830 = vld [vmem:[#allocation2 + $0x140] sm:$0xff]
    %v1831 = vld [vmem:[#allocation2 + $0x148] sm:$0xff]
    %v1832 = vld [vmem:[#allocation2 + $0x150] sm:$0xff]
    %v1833 = vld [vmem:[#allocation2 + $0x158] sm:$0xff]
    %1834 = vmatpush.msra.mxu0 %v586
    %1835 = vmatpush.msra.mxu0 %v582
    %1836 = vmatpush.msra.mxu0 %v578
    %1837 = vmatpush.msra.mxu0 %v574
    %1838 = vmatpush.msra.mxu0 %v570
    %1839 = vmatpush.msra.mxu0 %v566
    %1840 = vmatpush.msra.mxu0 %v562
    %1841 = vmatpush.msra.mxu0 %v558
    %1842 = vmatpush.msra.mxu0 %v554
    %1843 = vmatpush.msra.mxu0 %v550
    %1844 = vmatpush.msra.mxu0 %v546
    %1845 = vmatpush.msra.mxu0 %v542
    %1846 = vmatpush.msra.mxu0 %v538
    %1847 = vmatpush.msra.mxu0 %v534
    %1848 = vmatpush.msra.mxu0 %v530
    %1849 = vmatpush.msra.mxu0 %v526
    %1850 = vmatmul.f32.gmra.mxu0 %v1682
    %v1851 = vpop.f32.mrf.mxu0
    %v1852 = vadd.f32 %v1830, %v1851
    %1853 = vdwg.mxu0
    %1854 = vmatpush.msra.mxu0 %v587
    %1855 = vmatpush.msra.mxu0 %v583
    %1856 = vmatpush.msra.mxu0 %v579
    %1857 = vmatpush.msra.mxu0 %v575
    %1858 = vmatpush.msra.mxu0 %v571
    %1859 = vmatpush.msra.mxu0 %v567
    %1860 = vmatpush.msra.mxu0 %v563
    %1861 = vmatpush.msra.mxu0 %v559
    %1862 = vmatpush.msra.mxu0 %v555
    %1863 = vmatpush.msra.mxu0 %v551
    %1864 = vmatpush.msra.mxu0 %v547
    %1865 = vmatpush.msra.mxu0 %v543
    %1866 = vmatpush.msra.mxu0 %v539
    %1867 = vmatpush.msra.mxu0 %v535
    %1868 = vmatpush.msra.mxu0 %v531
    %1869 = vmatpush.msra.mxu0 %v527
    %1870 = vmatmul.f32.gmra.mxu0 %v1682
    %v1871 = vpop.f32.mrf.mxu0
    %v1872 = vadd.f32 %v1831, %v1871
    %1873 = vdwg.mxu0
    %1874 = vmatpush.msra.mxu0 %v588
    %1875 = vmatpush.msra.mxu0 %v584
    %1876 = vmatpush.msra.mxu0 %v580
    %1877 = vmatpush.msra.mxu0 %v576
    %1878 = vmatpush.msra.mxu0 %v572
    %1879 = vmatpush.msra.mxu0 %v568
    %1880 = vmatpush.msra.mxu0 %v564
    %1881 = vmatpush.msra.mxu0 %v560
    %1882 = vmatpush.msra.mxu0 %v556
    %1883 = vmatpush.msra.mxu0 %v552
    %1884 = vmatpush.msra.mxu0 %v548
    %1885 = vmatpush.msra.mxu0 %v544
    %1886 = vmatpush.msra.mxu0 %v540
    %1887 = vmatpush.msra.mxu0 %v536
    %1888 = vmatpush.msra.mxu0 %v532
    %1889 = vmatpush.msra.mxu0 %v528
    %1890 = vmatmul.f32.gmra.mxu0 %v1682
    %v1891 = vpop.f32.mrf.mxu0
    %v1892 = vadd.f32 %v1832, %v1891
    %1893 = vdwg.mxu0
    %1894 = vmatpush.msra.mxu0 %v589
    %1895 = vmatpush.msra.mxu0 %v585
    %1896 = vmatpush.msra.mxu0 %v581
    %1897 = vmatpush.msra.mxu0 %v577
    %1898 = vmatpush.msra.mxu0 %v573
    %1899 = vmatpush.msra.mxu0 %v569
    %1900 = vmatpush.msra.mxu0 %v565
    %1901 = vmatpush.msra.mxu0 %v561
    %1902 = vmatpush.msra.mxu0 %v557
    %1903 = vmatpush.msra.mxu0 %v553
    %1904 = vmatpush.msra.mxu0 %v549
    %1905 = vmatpush.msra.mxu0 %v545
    %1906 = vmatpush.msra.mxu0 %v541
    %1907 = vmatpush.msra.mxu0 %v537
    %1908 = vmatpush.msra.mxu0 %v533
    %1909 = vmatpush.msra.mxu0 %v529
    %1910 = vmatmul.f32.gmra.mxu0 %v1682
    %v1911 = vpop.f32.mrf.mxu0
    %v1912 = vadd.f32 %v1833, %v1911
    %1913 = vdwg.mxu0
    %v1914 = vxor.u32 %v1852, 2147483648
    %v1915 = vmul.f32 %v1914, 1.442695
    %v1916 = vpow.pop %v1915
    %v1917 = vadd.f32 %v1916, 1.0
    %v1918 = vrcp.pop %v1917
    %v1919 = vmul.f32 %v1917, %v1918
    %v1920 = vsub.f32 1.0, %v1919
    %v1921 = vmul.f32 %v1918, %v1920
    %v1922 = vadd.f32 %v1918, %v1921
    %vm1923 = vweird.f32 %v1917
    %vm1924 = vweird.f32 %v1918
    %vm1925 = vmor %vm1923, %vm1924
    %v1926 = vsel %vm1925, %v1918, %v1922
    %v1927 = vand.u32 2147483647, %v1917
    %vm1928 = vcmp.eq.f32.partialorder %v1927, 8.507059e+37
    %v1929 = vand.u32 %v1917, 2147483648
    %v1930 = vor.u32 1.1754944e-38, %v1929
    %v1931 = vsel %vm1928, %v1930, %v1926
    %v1932 = vmul.f32 1.0, %v1931
    %v1933 = vxor.u32 %v1872, 2147483648
    %v1934 = vmul.f32 %v1933, 1.442695
    %v1935 = vpow.pop %v1934
    %v1936 = vadd.f32 %v1935, 1.0
    %v1937 = vrcp.pop %v1936
    %v1938 = vmul.f32 %v1936, %v1937
    %v1939 = vsub.f32 1.0, %v1938
    %v1940 = vmul.f32 %v1937, %v1939
    %v1941 = vadd.f32 %v1937, %v1940
    %vm1942 = vweird.f32 %v1936
    %vm1943 = vweird.f32 %v1937
    %vm1944 = vmor %vm1942, %vm1943
    %v1945 = vsel %vm1944, %v1937, %v1941
    %v1946 = vand.u32 2147483647, %v1936
    %vm1947 = vcmp.eq.f32.partialorder %v1946, 8.507059e+37
    %v1948 = vand.u32 %v1936, 2147483648
    %v1949 = vor.u32 1.1754944e-38, %v1948
    %v1950 = vsel %vm1947, %v1949, %v1945
    %v1951 = vmul.f32 1.0, %v1950
    %v1952 = vtanh.pop %v1892
    %v1953 = vxor.u32 %v1912, 2147483648
    %v1954 = vmul.f32 %v1953, 1.442695
    %v1955 = vpow.pop %v1954
    %v1956 = vadd.f32 %v1955, 1.0
    %v1957 = vrcp.pop %v1956
    %v1958 = vmul.f32 %v1956, %v1957
    %v1959 = vsub.f32 1.0, %v1958
    %v1960 = vmul.f32 %v1957, %v1959
    %v1961 = vadd.f32 %v1957, %v1960
    %vm1962 = vweird.f32 %v1956
    %vm1963 = vweird.f32 %v1957
    %vm1964 = vmor %vm1962, %vm1963
    %v1965 = vsel %vm1964, %v1957, %v1961
    %v1966 = vand.u32 2147483647, %v1956
    %vm1967 = vcmp.eq.f32.partialorder %v1966, 8.507059e+37
    %v1968 = vand.u32 %v1956, 2147483648
    %v1969 = vor.u32 1.1754944e-38, %v1968
    %v1970 = vsel %vm1967, %v1969, %v1965
    %v1971 = vmul.f32 1.0, %v1970
    %v1972 = vmul.f32 %v1951, %v1680
    %v1973 = vmul.f32 %v1932, %v1952
    %v1974 = vadd.f32 %v1972, %v1973
    %v1975 = vtanh.pop %v1974
    %v1976 = vmul.f32 %v1971, %v1975
    %v1977 = vld [vmem:[#allocation2 + $0xa0] sm:$0xff]
    %v1978 = vld [vmem:[#allocation2 + $0xa8] sm:$0xff]
    %v1979 = vld [vmem:[#allocation2 + $0xb0] sm:$0xff]
    %v1980 = vld [vmem:[#allocation2 + $0xb8] sm:$0xff]
    %1981 = vmatpush.msra.mxu0 %v650
    %1982 = vmatpush.msra.mxu0 %v646
    %1983 = vmatpush.msra.mxu0 %v642
    %1984 = vmatpush.msra.mxu0 %v638
    %1985 = vmatpush.msra.mxu0 %v634
    %1986 = vmatpush.msra.mxu0 %v630
    %1987 = vmatpush.msra.mxu0 %v626
    %1988 = vmatpush.msra.mxu0 %v622
    %1989 = vmatpush.msra.mxu0 %v618
    %1990 = vmatpush.msra.mxu0 %v614
    %1991 = vmatpush.msra.mxu0 %v610
    %1992 = vmatpush.msra.mxu0 %v606
    %1993 = vmatpush.msra.mxu0 %v602
    %1994 = vmatpush.msra.mxu0 %v598
    %1995 = vmatpush.msra.mxu0 %v594
    %1996 = vmatpush.msra.mxu0 %v590
    %1997 = vmatmul.f32.gmra.mxu0 %v1829
    %v1998 = vpop.f32.mrf.mxu0
    %v1999 = vadd.f32 %v1977, %v1998
    %2000 = vdwg.mxu0
    %2001 = vmatpush.msra.mxu0 %v651
    %2002 = vmatpush.msra.mxu0 %v647
    %2003 = vmatpush.msra.mxu0 %v643
    %2004 = vmatpush.msra.mxu0 %v639
    %2005 = vmatpush.msra.mxu0 %v635
    %2006 = vmatpush.msra.mxu0 %v631
    %2007 = vmatpush.msra.mxu0 %v627
    %2008 = vmatpush.msra.mxu0 %v623
    %2009 = vmatpush.msra.mxu0 %v619
    %2010 = vmatpush.msra.mxu0 %v615
    %2011 = vmatpush.msra.mxu0 %v611
    %2012 = vmatpush.msra.mxu0 %v607
    %2013 = vmatpush.msra.mxu0 %v603
    %2014 = vmatpush.msra.mxu0 %v599
    %2015 = vmatpush.msra.mxu0 %v595
    %2016 = vmatpush.msra.mxu0 %v591
    %2017 = vmatmul.f32.gmra.mxu0 %v1829
    %v2018 = vpop.f32.mrf.mxu0
    %v2019 = vadd.f32 %v1978, %v2018
    %2020 = vdwg.mxu0
    %2021 = vmatpush.msra.mxu0 %v652
    %2022 = vmatpush.msra.mxu0 %v648
    %2023 = vmatpush.msra.mxu0 %v644
    %2024 = vmatpush.msra.mxu0 %v640
    %2025 = vmatpush.msra.mxu0 %v636
    %2026 = vmatpush.msra.mxu0 %v632
    %2027 = vmatpush.msra.mxu0 %v628
    %2028 = vmatpush.msra.mxu0 %v624
    %2029 = vmatpush.msra.mxu0 %v620
    %2030 = vmatpush.msra.mxu0 %v616
    %2031 = vmatpush.msra.mxu0 %v612
    %2032 = vmatpush.msra.mxu0 %v608
    %2033 = vmatpush.msra.mxu0 %v604
    %2034 = vmatpush.msra.mxu0 %v600
    %2035 = vmatpush.msra.mxu0 %v596
    %2036 = vmatpush.msra.mxu0 %v592
    %2037 = vmatmul.f32.gmra.mxu0 %v1829
    %v2038 = vpop.f32.mrf.mxu0
    %v2039 = vadd.f32 %v1979, %v2038
    %2040 = vdwg.mxu0
    %2041 = vmatpush.msra.mxu0 %v653
    %2042 = vmatpush.msra.mxu0 %v649
    %2043 = vmatpush.msra.mxu0 %v645
    %2044 = vmatpush.msra.mxu0 %v641
    %2045 = vmatpush.msra.mxu0 %v637
    %2046 = vmatpush.msra.mxu0 %v633
    %2047 = vmatpush.msra.mxu0 %v629
    %2048 = vmatpush.msra.mxu0 %v625
    %2049 = vmatpush.msra.mxu0 %v621
    %2050 = vmatpush.msra.mxu0 %v617
    %2051 = vmatpush.msra.mxu0 %v613
    %2052 = vmatpush.msra.mxu0 %v609
    %2053 = vmatpush.msra.mxu0 %v605
    %2054 = vmatpush.msra.mxu0 %v601
    %2055 = vmatpush.msra.mxu0 %v597
    %2056 = vmatpush.msra.mxu0 %v593
    %2057 = vmatmul.f32.gmra.mxu0 %v1829
    %v2058 = vpop.f32.mrf.mxu0
    %v2059 = vadd.f32 %v1980, %v2058
    %2060 = vdwg.mxu0
    %v2061 = vxor.u32 %v1999, 2147483648
    %v2062 = vmul.f32 %v2061, 1.442695
    %v2063 = vpow.pop %v2062
    %v2064 = vadd.f32 %v2063, 1.0
    %v2065 = vrcp.pop %v2064
    %v2066 = vmul.f32 %v2064, %v2065
    %v2067 = vsub.f32 1.0, %v2066
    %v2068 = vmul.f32 %v2065, %v2067
    %v2069 = vadd.f32 %v2065, %v2068
    %vm2070 = vweird.f32 %v2064
    %vm2071 = vweird.f32 %v2065
    %vm2072 = vmor %vm2070, %vm2071
    %v2073 = vsel %vm2072, %v2065, %v2069
    %v2074 = vand.u32 2147483647, %v2064
    %vm2075 = vcmp.eq.f32.partialorder %v2074, 8.507059e+37
    %v2076 = vand.u32 %v2064, 2147483648
    %v2077 = vor.u32 1.1754944e-38, %v2076
    %v2078 = vsel %vm2075, %v2077, %v2073
    %v2079 = vmul.f32 1.0, %v2078
    %v2080 = vxor.u32 %v2019, 2147483648
    %v2081 = vmul.f32 %v2080, 1.442695
    %v2082 = vpow.pop %v2081
    %v2083 = vadd.f32 %v2082, 1.0
    %v2084 = vrcp.pop %v2083
    %v2085 = vmul.f32 %v2083, %v2084
    %v2086 = vsub.f32 1.0, %v2085
    %v2087 = vmul.f32 %v2084, %v2086
    %v2088 = vadd.f32 %v2084, %v2087
    %vm2089 = vweird.f32 %v2083
    %vm2090 = vweird.f32 %v2084
    %vm2091 = vmor %vm2089, %vm2090
    %v2092 = vsel %vm2091, %v2084, %v2088
    %v2093 = vand.u32 2147483647, %v2083
    %vm2094 = vcmp.eq.f32.partialorder %v2093, 8.507059e+37
    %v2095 = vand.u32 %v2083, 2147483648
    %v2096 = vor.u32 1.1754944e-38, %v2095
    %v2097 = vsel %vm2094, %v2096, %v2092
    %v2098 = vmul.f32 1.0, %v2097
    %v2099 = vtanh.pop %v2039
    %v2100 = vxor.u32 %v2059, 2147483648
    %v2101 = vmul.f32 %v2100, 1.442695
    %v2102 = vpow.pop %v2101
    %v2103 = vadd.f32 %v2102, 1.0
    %v2104 = vrcp.pop %v2103
    %v2105 = vmul.f32 %v2103, %v2104
    %v2106 = vsub.f32 1.0, %v2105
    %v2107 = vmul.f32 %v2104, %v2106
    %v2108 = vadd.f32 %v2104, %v2107
    %vm2109 = vweird.f32 %v2103
    %vm2110 = vweird.f32 %v2104
    %vm2111 = vmor %vm2109, %vm2110
    %v2112 = vsel %vm2111, %v2104, %v2108
    %v2113 = vand.u32 2147483647, %v2103
    %vm2114 = vcmp.eq.f32.partialorder %v2113, 8.507059e+37
    %v2115 = vand.u32 %v2103, 2147483648
    %v2116 = vor.u32 1.1754944e-38, %v2115
    %v2117 = vsel %vm2114, %v2116, %v2112
    %v2118 = vmul.f32 1.0, %v2117
    %v2119 = vmul.f32 %v2098, %v1827
    %v2120 = vmul.f32 %v2079, %v2099
    %v2121 = vadd.f32 %v2119, %v2120
    %v2122 = vtanh.pop %v2121
    %v2123 = vmul.f32 %v2118, %v2122
    %v2124 = vld [vmem:[#allocation2 + $0x180] sm:$0xff]
    %v2125 = vld [vmem:[#allocation2 + $0x188] sm:$0xff]
    %v2126 = vld [vmem:[#allocation2 + $0x190] sm:$0xff]
    %v2127 = vld [vmem:[#allocation2 + $0x198] sm:$0xff]
    %2128 = vmatpush.msra.mxu0 %v586
    %2129 = vmatpush.msra.mxu0 %v582
    %2130 = vmatpush.msra.mxu0 %v578
    %2131 = vmatpush.msra.mxu0 %v574
    %2132 = vmatpush.msra.mxu0 %v570
    %2133 = vmatpush.msra.mxu0 %v566
    %2134 = vmatpush.msra.mxu0 %v562
    %2135 = vmatpush.msra.mxu0 %v558
    %2136 = vmatpush.msra.mxu0 %v554
    %2137 = vmatpush.msra.mxu0 %v550
    %2138 = vmatpush.msra.mxu0 %v546
    %2139 = vmatpush.msra.mxu0 %v542
    %2140 = vmatpush.msra.mxu0 %v538
    %2141 = vmatpush.msra.mxu0 %v534
    %2142 = vmatpush.msra.mxu0 %v530
    %2143 = vmatpush.msra.mxu0 %v526
    %2144 = vmatmul.f32.gmra.mxu0 %v1976
    %v2145 = vpop.f32.mrf.mxu0
    %v2146 = vadd.f32 %v2124, %v2145
    %2147 = vdwg.mxu0
    %2148 = vmatpush.msra.mxu0 %v587
    %2149 = vmatpush.msra.mxu0 %v583
    %2150 = vmatpush.msra.mxu0 %v579
    %2151 = vmatpush.msra.mxu0 %v575
    %2152 = vmatpush.msra.mxu0 %v571
    %2153 = vmatpush.msra.mxu0 %v567
    %2154 = vmatpush.msra.mxu0 %v563
    %2155 = vmatpush.msra.mxu0 %v559
    %2156 = vmatpush.msra.mxu0 %v555
    %2157 = vmatpush.msra.mxu0 %v551
    %2158 = vmatpush.msra.mxu0 %v547
    %2159 = vmatpush.msra.mxu0 %v543
    %2160 = vmatpush.msra.mxu0 %v539
    %2161 = vmatpush.msra.mxu0 %v535
    %2162 = vmatpush.msra.mxu0 %v531
    %2163 = vmatpush.msra.mxu0 %v527
    %2164 = vmatmul.f32.gmra.mxu0 %v1976
    %v2165 = vpop.f32.mrf.mxu0
    %v2166 = vadd.f32 %v2125, %v2165
    %2167 = vdwg.mxu0
    %2168 = vmatpush.msra.mxu0 %v588
    %2169 = vmatpush.msra.mxu0 %v584
    %2170 = vmatpush.msra.mxu0 %v580
    %2171 = vmatpush.msra.mxu0 %v576
    %2172 = vmatpush.msra.mxu0 %v572
    %2173 = vmatpush.msra.mxu0 %v568
    %2174 = vmatpush.msra.mxu0 %v564
    %2175 = vmatpush.msra.mxu0 %v560
    %2176 = vmatpush.msra.mxu0 %v556
    %2177 = vmatpush.msra.mxu0 %v552
    %2178 = vmatpush.msra.mxu0 %v548
    %2179 = vmatpush.msra.mxu0 %v544
    %2180 = vmatpush.msra.mxu0 %v540
    %2181 = vmatpush.msra.mxu0 %v536
    %2182 = vmatpush.msra.mxu0 %v532
    %2183 = vmatpush.msra.mxu0 %v528
    %2184 = vmatmul.f32.gmra.mxu0 %v1976
    %v2185 = vpop.f32.mrf.mxu0
    %v2186 = vadd.f32 %v2126, %v2185
    %2187 = vdwg.mxu0
    %2188 = vmatpush.msra.mxu0 %v589
    %2189 = vmatpush.msra.mxu0 %v585
    %2190 = vmatpush.msra.mxu0 %v581
    %2191 = vmatpush.msra.mxu0 %v577
    %2192 = vmatpush.msra.mxu0 %v573
    %2193 = vmatpush.msra.mxu0 %v569
    %2194 = vmatpush.msra.mxu0 %v565
    %2195 = vmatpush.msra.mxu0 %v561
    %2196 = vmatpush.msra.mxu0 %v557
    %2197 = vmatpush.msra.mxu0 %v553
    %2198 = vmatpush.msra.mxu0 %v549
    %2199 = vmatpush.msra.mxu0 %v545
    %2200 = vmatpush.msra.mxu0 %v541
    %2201 = vmatpush.msra.mxu0 %v537
    %2202 = vmatpush.msra.mxu0 %v533
    %2203 = vmatpush.msra.mxu0 %v529
    %2204 = vmatmul.f32.gmra.mxu0 %v1976
    %v2205 = vpop.f32.mrf.mxu0
    %v2206 = vadd.f32 %v2127, %v2205
    %2207 = vdwg.mxu0
    %v2208 = vxor.u32 %v2146, 2147483648
    %v2209 = vmul.f32 %v2208, 1.442695
    %v2210 = vpow.pop %v2209
    %v2211 = vadd.f32 %v2210, 1.0
    %v2212 = vrcp.pop %v2211
    %v2213 = vmul.f32 %v2211, %v2212
    %v2214 = vsub.f32 1.0, %v2213
    %v2215 = vmul.f32 %v2212, %v2214
    %v2216 = vadd.f32 %v2212, %v2215
    %vm2217 = vweird.f32 %v2211
    %vm2218 = vweird.f32 %v2212
    %vm2219 = vmor %vm2217, %vm2218
    %v2220 = vsel %vm2219, %v2212, %v2216
    %v2221 = vand.u32 2147483647, %v2211
    %vm2222 = vcmp.eq.f32.partialorder %v2221, 8.507059e+37
    %v2223 = vand.u32 %v2211, 2147483648
    %v2224 = vor.u32 1.1754944e-38, %v2223
    %v2225 = vsel %vm2222, %v2224, %v2220
    %v2226 = vmul.f32 1.0, %v2225
    %v2227 = vxor.u32 %v2166, 2147483648
    %v2228 = vmul.f32 %v2227, 1.442695
    %v2229 = vpow.pop %v2228
    %v2230 = vadd.f32 %v2229, 1.0
    %v2231 = vrcp.pop %v2230
    %v2232 = vmul.f32 %v2230, %v2231
    %v2233 = vsub.f32 1.0, %v2232
    %v2234 = vmul.f32 %v2231, %v2233
    %v2235 = vadd.f32 %v2231, %v2234
    %vm2236 = vweird.f32 %v2230
    %vm2237 = vweird.f32 %v2231
    %vm2238 = vmor %vm2236, %vm2237
    %v2239 = vsel %vm2238, %v2231, %v2235
    %v2240 = vand.u32 2147483647, %v2230
    %vm2241 = vcmp.eq.f32.partialorder %v2240, 8.507059e+37
    %v2242 = vand.u32 %v2230, 2147483648
    %v2243 = vor.u32 1.1754944e-38, %v2242
    %v2244 = vsel %vm2241, %v2243, %v2239
    %v2245 = vmul.f32 1.0, %v2244
    %v2246 = vtanh.pop %v2186
    %v2247 = vxor.u32 %v2206, 2147483648
    %v2248 = vmul.f32 %v2247, 1.442695
    %v2249 = vpow.pop %v2248
    %v2250 = vadd.f32 %v2249, 1.0
    %v2251 = vrcp.pop %v2250
    %v2252 = vmul.f32 %v2250, %v2251
    %v2253 = vsub.f32 1.0, %v2252
    %v2254 = vmul.f32 %v2251, %v2253
    %v2255 = vadd.f32 %v2251, %v2254
    %vm2256 = vweird.f32 %v2250
    %vm2257 = vweird.f32 %v2251
    %vm2258 = vmor %vm2256, %vm2257
    %v2259 = vsel %vm2258, %v2251, %v2255
    %v2260 = vand.u32 2147483647, %v2250
    %vm2261 = vcmp.eq.f32.partialorder %v2260, 8.507059e+37
    %v2262 = vand.u32 %v2250, 2147483648
    %v2263 = vor.u32 1.1754944e-38, %v2262
    %v2264 = vsel %vm2261, %v2263, %v2259
    %v2265 = vmul.f32 1.0, %v2264
    %v2266 = vmul.f32 %v2245, %v1974
    %v2267 = vmul.f32 %v2226, %v2246
    %v2268 = vadd.f32 %v2266, %v2267
    %v2269 = vtanh.pop %v2268
    %v2270 = vmul.f32 %v2265, %v2269
    %v2271 = vld [vmem:[#allocation2 + $0x60] sm:$0xff]
    %v2272 = vld [vmem:[#allocation2 + $0x68] sm:$0xff]
    %v2273 = vld [vmem:[#allocation2 + $0x70] sm:$0xff]
    %v2274 = vld [vmem:[#allocation2 + $0x78] sm:$0xff]
    %2275 = vmatpush.msra.mxu0 %v650
    %2276 = vmatpush.msra.mxu0 %v646
    %2277 = vmatpush.msra.mxu0 %v642
    %2278 = vmatpush.msra.mxu0 %v638
    %2279 = vmatpush.msra.mxu0 %v634
    %2280 = vmatpush.msra.mxu0 %v630
    %2281 = vmatpush.msra.mxu0 %v626
    %2282 = vmatpush.msra.mxu0 %v622
    %2283 = vmatpush.msra.mxu0 %v618
    %2284 = vmatpush.msra.mxu0 %v614
    %2285 = vmatpush.msra.mxu0 %v610
    %2286 = vmatpush.msra.mxu0 %v606
    %2287 = vmatpush.msra.mxu0 %v602
    %2288 = vmatpush.msra.mxu0 %v598
    %2289 = vmatpush.msra.mxu0 %v594
    %2290 = vmatpush.msra.mxu0 %v590
    %2291 = vmatmul.f32.gmra.mxu0 %v2123
    %v2292 = vpop.f32.mrf.mxu0
    %v2293 = vadd.f32 %v2271, %v2292
    %2294 = vdwg.mxu0
    %2295 = vmatpush.msra.mxu0 %v651
    %2296 = vmatpush.msra.mxu0 %v647
    %2297 = vmatpush.msra.mxu0 %v643
    %2298 = vmatpush.msra.mxu0 %v639
    %2299 = vmatpush.msra.mxu0 %v635
    %2300 = vmatpush.msra.mxu0 %v631
    %2301 = vmatpush.msra.mxu0 %v627
    %2302 = vmatpush.msra.mxu0 %v623
    %2303 = vmatpush.msra.mxu0 %v619
    %2304 = vmatpush.msra.mxu0 %v615
    %2305 = vmatpush.msra.mxu0 %v611
    %2306 = vmatpush.msra.mxu0 %v607
    %2307 = vmatpush.msra.mxu0 %v603
    %2308 = vmatpush.msra.mxu0 %v599
    %2309 = vmatpush.msra.mxu0 %v595
    %2310 = vmatpush.msra.mxu0 %v591
    %2311 = vmatmul.f32.gmra.mxu0 %v2123
    %v2312 = vpop.f32.mrf.mxu0
    %v2313 = vadd.f32 %v2272, %v2312
    %2314 = vdwg.mxu0
    %2315 = vmatpush.msra.mxu0 %v652
    %2316 = vmatpush.msra.mxu0 %v648
    %2317 = vmatpush.msra.mxu0 %v644
    %2318 = vmatpush.msra.mxu0 %v640
    %2319 = vmatpush.msra.mxu0 %v636
    %2320 = vmatpush.msra.mxu0 %v632
    %2321 = vmatpush.msra.mxu0 %v628
    %2322 = vmatpush.msra.mxu0 %v624
    %2323 = vmatpush.msra.mxu0 %v620
    %2324 = vmatpush.msra.mxu0 %v616
    %2325 = vmatpush.msra.mxu0 %v612
    %2326 = vmatpush.msra.mxu0 %v608
    %2327 = vmatpush.msra.mxu0 %v604
    %2328 = vmatpush.msra.mxu0 %v600
    %2329 = vmatpush.msra.mxu0 %v596
    %2330 = vmatpush.msra.mxu0 %v592
    %2331 = vmatmul.f32.gmra.mxu0 %v2123
    %v2332 = vpop.f32.mrf.mxu0
    %v2333 = vadd.f32 %v2273, %v2332
    %2334 = vdwg.mxu0
    %2335 = vmatpush.msra.mxu0 %v653
    %2336 = vmatpush.msra.mxu0 %v649
    %2337 = vmatpush.msra.mxu0 %v645
    %2338 = vmatpush.msra.mxu0 %v641
    %2339 = vmatpush.msra.mxu0 %v637
    %2340 = vmatpush.msra.mxu0 %v633
    %2341 = vmatpush.msra.mxu0 %v629
    %2342 = vmatpush.msra.mxu0 %v625
    %2343 = vmatpush.msra.mxu0 %v621
    %2344 = vmatpush.msra.mxu0 %v617
    %2345 = vmatpush.msra.mxu0 %v613
    %2346 = vmatpush.msra.mxu0 %v609
    %2347 = vmatpush.msra.mxu0 %v605
    %2348 = vmatpush.msra.mxu0 %v601
    %2349 = vmatpush.msra.mxu0 %v597
    %2350 = vmatpush.msra.mxu0 %v593
    %2351 = vmatmul.f32.gmra.mxu0 %v2123
    %v2352 = vpop.f32.mrf.mxu0
    %v2353 = vadd.f32 %v2274, %v2352
    %2354 = vdwg.mxu0
    %v2355 = vxor.u32 %v2293, 2147483648
    %v2356 = vmul.f32 %v2355, 1.442695
    %v2357 = vpow.pop %v2356
    %v2358 = vadd.f32 %v2357, 1.0
    %v2359 = vrcp.pop %v2358
    %v2360 = vmul.f32 %v2358, %v2359
    %v2361 = vsub.f32 1.0, %v2360
    %v2362 = vmul.f32 %v2359, %v2361
    %v2363 = vadd.f32 %v2359, %v2362
    %vm2364 = vweird.f32 %v2358
    %vm2365 = vweird.f32 %v2359
    %vm2366 = vmor %vm2364, %vm2365
    %v2367 = vsel %vm2366, %v2359, %v2363
    %v2368 = vand.u32 2147483647, %v2358
    %vm2369 = vcmp.eq.f32.partialorder %v2368, 8.507059e+37
    %v2370 = vand.u32 %v2358, 2147483648
    %v2371 = vor.u32 1.1754944e-38, %v2370
    %v2372 = vsel %vm2369, %v2371, %v2367
    %v2373 = vmul.f32 1.0, %v2372
    %v2374 = vxor.u32 %v2313, 2147483648
    %v2375 = vmul.f32 %v2374, 1.442695
    %v2376 = vpow.pop %v2375
    %v2377 = vadd.f32 %v2376, 1.0
    %v2378 = vrcp.pop %v2377
    %v2379 = vmul.f32 %v2377, %v2378
    %v2380 = vsub.f32 1.0, %v2379
    %v2381 = vmul.f32 %v2378, %v2380
    %v2382 = vadd.f32 %v2378, %v2381
    %vm2383 = vweird.f32 %v2377
    %vm2384 = vweird.f32 %v2378
    %vm2385 = vmor %vm2383, %vm2384
    %v2386 = vsel %vm2385, %v2378, %v2382
    %v2387 = vand.u32 2147483647, %v2377
    %vm2388 = vcmp.eq.f32.partialorder %v2387, 8.507059e+37
    %v2389 = vand.u32 %v2377, 2147483648
    %v2390 = vor.u32 1.1754944e-38, %v2389
    %v2391 = vsel %vm2388, %v2390, %v2386
    %v2392 = vmul.f32 1.0, %v2391
    %v2393 = vtanh.pop %v2333
    %v2394 = vxor.u32 %v2353, 2147483648
    %v2395 = vmul.f32 %v2394, 1.442695
    %v2396 = vpow.pop %v2395
    %v2397 = vadd.f32 %v2396, 1.0
    %v2398 = vrcp.pop %v2397
    %v2399 = vmul.f32 %v2397, %v2398
    %v2400 = vsub.f32 1.0, %v2399
    %v2401 = vmul.f32 %v2398, %v2400
    %v2402 = vadd.f32 %v2398, %v2401
    %vm2403 = vweird.f32 %v2397
    %vm2404 = vweird.f32 %v2398
    %vm2405 = vmor %vm2403, %vm2404
    %v2406 = vsel %vm2405, %v2398, %v2402
    %v2407 = vand.u32 2147483647, %v2397
    %vm2408 = vcmp.eq.f32.partialorder %v2407, 8.507059e+37
    %v2409 = vand.u32 %v2397, 2147483648
    %v2410 = vor.u32 1.1754944e-38, %v2409
    %v2411 = vsel %vm2408, %v2410, %v2406
    %v2412 = vmul.f32 1.0, %v2411
    %v2413 = vmul.f32 %v2392, %v2121
    %v2414 = vmul.f32 %v2373, %v2393
    %v2415 = vadd.f32 %v2413, %v2414
    %v2416 = vtanh.pop %v2415
    %v2417 = vmul.f32 %v2412, %v2416
    %v2418 = vld [vmem:[#allocation2 + $0x1c0] sm:$0xff]
    %v2419 = vld [vmem:[#allocation2 + $0x1c8] sm:$0xff]
    %v2420 = vld [vmem:[#allocation2 + $0x1d0] sm:$0xff]
    %v2421 = vld [vmem:[#allocation2 + $0x1d8] sm:$0xff]
    %2422 = vmatpush.msra.mxu0 %v586
    %2423 = vmatpush.msra.mxu0 %v582
    %2424 = vmatpush.msra.mxu0 %v578
    %2425 = vmatpush.msra.mxu0 %v574
    %2426 = vmatpush.msra.mxu0 %v570
    %2427 = vmatpush.msra.mxu0 %v566
    %2428 = vmatpush.msra.mxu0 %v562
    %2429 = vmatpush.msra.mxu0 %v558
    %2430 = vmatpush.msra.mxu0 %v554
    %2431 = vmatpush.msra.mxu0 %v550
    %2432 = vmatpush.msra.mxu0 %v546
    %2433 = vmatpush.msra.mxu0 %v542
    %2434 = vmatpush.msra.mxu0 %v538
    %2435 = vmatpush.msra.mxu0 %v534
    %2436 = vmatpush.msra.mxu0 %v530
    %2437 = vmatpush.msra.mxu0 %v526
    %2438 = vmatmul.f32.gmra.mxu0 %v2270
    %v2439 = vpop.f32.mrf.mxu0
    %v2440 = vadd.f32 %v2418, %v2439
    %2441 = vdwg.mxu0
    %2442 = vmatpush.msra.mxu0 %v587
    %2443 = vmatpush.msra.mxu0 %v583
    %2444 = vmatpush.msra.mxu0 %v579
    %2445 = vmatpush.msra.mxu0 %v575
    %2446 = vmatpush.msra.mxu0 %v571
    %2447 = vmatpush.msra.mxu0 %v567
    %2448 = vmatpush.msra.mxu0 %v563
    %2449 = vmatpush.msra.mxu0 %v559
    %2450 = vmatpush.msra.mxu0 %v555
    %2451 = vmatpush.msra.mxu0 %v551
    %2452 = vmatpush.msra.mxu0 %v547
    %2453 = vmatpush.msra.mxu0 %v543
    %2454 = vmatpush.msra.mxu0 %v539
    %2455 = vmatpush.msra.mxu0 %v535
    %2456 = vmatpush.msra.mxu0 %v531
    %2457 = vmatpush.msra.mxu0 %v527
    %2458 = vmatmul.f32.gmra.mxu0 %v2270
    %v2459 = vpop.f32.mrf.mxu0
    %v2460 = vadd.f32 %v2419, %v2459
    %2461 = vdwg.mxu0
    %2462 = vmatpush.msra.mxu0 %v588
    %2463 = vmatpush.msra.mxu0 %v584
    %2464 = vmatpush.msra.mxu0 %v580
    %2465 = vmatpush.msra.mxu0 %v576
    %2466 = vmatpush.msra.mxu0 %v572
    %2467 = vmatpush.msra.mxu0 %v568
    %2468 = vmatpush.msra.mxu0 %v564
    %2469 = vmatpush.msra.mxu0 %v560
    %2470 = vmatpush.msra.mxu0 %v556
    %2471 = vmatpush.msra.mxu0 %v552
    %2472 = vmatpush.msra.mxu0 %v548
    %2473 = vmatpush.msra.mxu0 %v544
    %2474 = vmatpush.msra.mxu0 %v540
    %2475 = vmatpush.msra.mxu0 %v536
    %2476 = vmatpush.msra.mxu0 %v532
    %2477 = vmatpush.msra.mxu0 %v528
    %2478 = vmatmul.f32.gmra.mxu0 %v2270
    %v2479 = vpop.f32.mrf.mxu0
    %v2480 = vadd.f32 %v2420, %v2479
    %2481 = vdwg.mxu0
    %2482 = vmatpush.msra.mxu0 %v589
    %2483 = vmatpush.msra.mxu0 %v585
    %2484 = vmatpush.msra.mxu0 %v581
    %2485 = vmatpush.msra.mxu0 %v577
    %2486 = vmatpush.msra.mxu0 %v573
    %2487 = vmatpush.msra.mxu0 %v569
    %2488 = vmatpush.msra.mxu0 %v565
    %2489 = vmatpush.msra.mxu0 %v561
    %2490 = vmatpush.msra.mxu0 %v557
    %2491 = vmatpush.msra.mxu0 %v553
    %2492 = vmatpush.msra.mxu0 %v549
    %2493 = vmatpush.msra.mxu0 %v545
    %2494 = vmatpush.msra.mxu0 %v541
    %2495 = vmatpush.msra.mxu0 %v537
    %2496 = vmatpush.msra.mxu0 %v533
    %2497 = vmatpush.msra.mxu0 %v529
    %2498 = vmatmul.f32.gmra.mxu0 %v2270
    %v2499 = vpop.f32.mrf.mxu0
    %v2500 = vadd.f32 %v2421, %v2499
    %2501 = vdwg.mxu0
    %v2502 = vxor.u32 %v2440, 2147483648
    %v2503 = vmul.f32 %v2502, 1.442695
    %v2504 = vpow.pop %v2503
    %v2505 = vadd.f32 %v2504, 1.0
    %v2506 = vrcp.pop %v2505
    %v2507 = vmul.f32 %v2505, %v2506
    %v2508 = vsub.f32 1.0, %v2507
    %v2509 = vmul.f32 %v2506, %v2508
    %v2510 = vadd.f32 %v2506, %v2509
    %vm2511 = vweird.f32 %v2505
    %vm2512 = vweird.f32 %v2506
    %vm2513 = vmor %vm2511, %vm2512
    %v2514 = vsel %vm2513, %v2506, %v2510
    %v2515 = vand.u32 2147483647, %v2505
    %vm2516 = vcmp.eq.f32.partialorder %v2515, 8.507059e+37
    %v2517 = vand.u32 %v2505, 2147483648
    %v2518 = vor.u32 1.1754944e-38, %v2517
    %v2519 = vsel %vm2516, %v2518, %v2514
    %v2520 = vmul.f32 1.0, %v2519
    %v2521 = vxor.u32 %v2460, 2147483648
    %v2522 = vmul.f32 %v2521, 1.442695
    %v2523 = vpow.pop %v2522
    %v2524 = vadd.f32 %v2523, 1.0
    %v2525 = vrcp.pop %v2524
    %v2526 = vmul.f32 %v2524, %v2525
    %v2527 = vsub.f32 1.0, %v2526
    %v2528 = vmul.f32 %v2525, %v2527
    %v2529 = vadd.f32 %v2525, %v2528
    %vm2530 = vweird.f32 %v2524
    %vm2531 = vweird.f32 %v2525
    %vm2532 = vmor %vm2530, %vm2531
    %v2533 = vsel %vm2532, %v2525, %v2529
    %v2534 = vand.u32 2147483647, %v2524
    %vm2535 = vcmp.eq.f32.partialorder %v2534, 8.507059e+37
    %v2536 = vand.u32 %v2524, 2147483648
    %v2537 = vor.u32 1.1754944e-38, %v2536
    %v2538 = vsel %vm2535, %v2537, %v2533
    %v2539 = vmul.f32 1.0, %v2538
    %v2540 = vtanh.pop %v2480
    %v2541 = vxor.u32 %v2500, 2147483648
    %v2542 = vmul.f32 %v2541, 1.442695
    %v2543 = vpow.pop %v2542
    %v2544 = vadd.f32 %v2543, 1.0
    %v2545 = vrcp.pop %v2544
    %v2546 = vmul.f32 %v2544, %v2545
    %v2547 = vsub.f32 1.0, %v2546
    %v2548 = vmul.f32 %v2545, %v2547
    %v2549 = vadd.f32 %v2545, %v2548
    %vm2550 = vweird.f32 %v2544
    %vm2551 = vweird.f32 %v2545
    %vm2552 = vmor %vm2550, %vm2551
    %v2553 = vsel %vm2552, %v2545, %v2549
    %v2554 = vand.u32 2147483647, %v2544
    %vm2555 = vcmp.eq.f32.partialorder %v2554, 8.507059e+37
    %v2556 = vand.u32 %v2544, 2147483648
    %v2557 = vor.u32 1.1754944e-38, %v2556
    %v2558 = vsel %vm2555, %v2557, %v2553
    %v2559 = vmul.f32 1.0, %v2558
    %v2560 = vmul.f32 %v2539, %v2268
    %v2561 = vmul.f32 %v2520, %v2540
    %v2562 = vadd.f32 %v2560, %v2561
    %v2563 = vtanh.pop %v2562
    %v2564 = vmul.f32 %v2559, %v2563
    %v2565 = vld [vmem:[#allocation2 + $0x20] sm:$0xff]
    %v2566 = vld [vmem:[#allocation2 + $0x28] sm:$0xff]
    %v2567 = vld [vmem:[#allocation2 + $0x30] sm:$0xff]
    %v2568 = vld [vmem:[#allocation2 + $0x38] sm:$0xff]
    %2569 = vmatpush.msra.mxu0 %v650
    %2570 = vmatpush.msra.mxu0 %v646
    %2571 = vmatpush.msra.mxu0 %v642
    %2572 = vmatpush.msra.mxu0 %v638
    %2573 = vmatpush.msra.mxu0 %v634
    %2574 = vmatpush.msra.mxu0 %v630
    %2575 = vmatpush.msra.mxu0 %v626
    %2576 = vmatpush.msra.mxu0 %v622
    %2577 = vmatpush.msra.mxu0 %v618
    %2578 = vmatpush.msra.mxu0 %v614
    %2579 = vmatpush.msra.mxu0 %v610
    %2580 = vmatpush.msra.mxu0 %v606
    %2581 = vmatpush.msra.mxu0 %v602
    %2582 = vmatpush.msra.mxu0 %v598
    %2583 = vmatpush.msra.mxu0 %v594
    %2584 = vmatpush.msra.mxu0 %v590
    %2585 = vmatmul.f32.gmra.mxu0 %v2417
    %v2586 = vpop.f32.mrf.mxu0
    %v2587 = vadd.f32 %v2565, %v2586
    %2588 = vdwg.mxu0
    %2589 = vmatpush.msra.mxu0 %v651
    %2590 = vmatpush.msra.mxu0 %v647
    %2591 = vmatpush.msra.mxu0 %v643
    %2592 = vmatpush.msra.mxu0 %v639
    %2593 = vmatpush.msra.mxu0 %v635
    %2594 = vmatpush.msra.mxu0 %v631
    %2595 = vmatpush.msra.mxu0 %v627
    %2596 = vmatpush.msra.mxu0 %v623
    %2597 = vmatpush.msra.mxu0 %v619
    %2598 = vmatpush.msra.mxu0 %v615
    %2599 = vmatpush.msra.mxu0 %v611
    %2600 = vmatpush.msra.mxu0 %v607
    %2601 = vmatpush.msra.mxu0 %v603
    %2602 = vmatpush.msra.mxu0 %v599
    %2603 = vmatpush.msra.mxu0 %v595
    %2604 = vmatpush.msra.mxu0 %v591
    %2605 = vmatmul.f32.gmra.mxu0 %v2417
    %v2606 = vpop.f32.mrf.mxu0
    %v2607 = vadd.f32 %v2566, %v2606
    %2608 = vdwg.mxu0
    %2609 = vmatpush.msra.mxu0 %v652
    %2610 = vmatpush.msra.mxu0 %v648
    %2611 = vmatpush.msra.mxu0 %v644
    %2612 = vmatpush.msra.mxu0 %v640
    %2613 = vmatpush.msra.mxu0 %v636
    %2614 = vmatpush.msra.mxu0 %v632
    %2615 = vmatpush.msra.mxu0 %v628
    %2616 = vmatpush.msra.mxu0 %v624
    %2617 = vmatpush.msra.mxu0 %v620
    %2618 = vmatpush.msra.mxu0 %v616
    %2619 = vmatpush.msra.mxu0 %v612
    %2620 = vmatpush.msra.mxu0 %v608
    %2621 = vmatpush.msra.mxu0 %v604
    %2622 = vmatpush.msra.mxu0 %v600
    %2623 = vmatpush.msra.mxu0 %v596
    %2624 = vmatpush.msra.mxu0 %v592
    %2625 = vmatmul.f32.gmra.mxu0 %v2417
    %v2626 = vpop.f32.mrf.mxu0
    %v2627 = vadd.f32 %v2567, %v2626
    %2628 = vdwg.mxu0
    %2629 = vmatpush.msra.mxu0 %v653
    %2630 = vmatpush.msra.mxu0 %v649
    %2631 = vmatpush.msra.mxu0 %v645
    %2632 = vmatpush.msra.mxu0 %v641
    %2633 = vmatpush.msra.mxu0 %v637
    %2634 = vmatpush.msra.mxu0 %v633
    %2635 = vmatpush.msra.mxu0 %v629
    %2636 = vmatpush.msra.mxu0 %v625
    %2637 = vmatpush.msra.mxu0 %v621
    %2638 = vmatpush.msra.mxu0 %v617
    %2639 = vmatpush.msra.mxu0 %v613
    %2640 = vmatpush.msra.mxu0 %v609
    %2641 = vmatpush.msra.mxu0 %v605
    %2642 = vmatpush.msra.mxu0 %v601
    %2643 = vmatpush.msra.mxu0 %v597
    %2644 = vmatpush.msra.mxu0 %v593
    %2645 = vmatmul.f32.gmra.mxu0 %v2417
    %v2646 = vpop.f32.mrf.mxu0
    %v2647 = vadd.f32 %v2568, %v2646
    %2648 = vdwg.mxu0
    %v2649 = vxor.u32 %v2587, 2147483648
    %v2650 = vmul.f32 %v2649, 1.442695
    %v2651 = vpow.pop %v2650
    %v2652 = vadd.f32 %v2651, 1.0
    %v2653 = vrcp.pop %v2652
    %v2654 = vmul.f32 %v2652, %v2653
    %v2655 = vsub.f32 1.0, %v2654
    %v2656 = vmul.f32 %v2653, %v2655
    %v2657 = vadd.f32 %v2653, %v2656
    %vm2658 = vweird.f32 %v2652
    %vm2659 = vweird.f32 %v2653
    %vm2660 = vmor %vm2658, %vm2659
    %v2661 = vsel %vm2660, %v2653, %v2657
    %v2662 = vand.u32 2147483647, %v2652
    %vm2663 = vcmp.eq.f32.partialorder %v2662, 8.507059e+37
    %v2664 = vand.u32 %v2652, 2147483648
    %v2665 = vor.u32 1.1754944e-38, %v2664
    %v2666 = vsel %vm2663, %v2665, %v2661
    %v2667 = vmul.f32 1.0, %v2666
    %v2668 = vxor.u32 %v2607, 2147483648
    %v2669 = vmul.f32 %v2668, 1.442695
    %v2670 = vpow.pop %v2669
    %v2671 = vadd.f32 %v2670, 1.0
    %v2672 = vrcp.pop %v2671
    %v2673 = vmul.f32 %v2671, %v2672
    %v2674 = vsub.f32 1.0, %v2673
    %v2675 = vmul.f32 %v2672, %v2674
    %v2676 = vadd.f32 %v2672, %v2675
    %vm2677 = vweird.f32 %v2671
    %vm2678 = vweird.f32 %v2672
    %vm2679 = vmor %vm2677, %vm2678
    %v2680 = vsel %vm2679, %v2672, %v2676
    %v2681 = vand.u32 2147483647, %v2671
    %vm2682 = vcmp.eq.f32.partialorder %v2681, 8.507059e+37
    %v2683 = vand.u32 %v2671, 2147483648
    %v2684 = vor.u32 1.1754944e-38, %v2683
    %v2685 = vsel %vm2682, %v2684, %v2680
    %v2686 = vmul.f32 1.0, %v2685
    %v2687 = vtanh.pop %v2627
    %v2688 = vxor.u32 %v2647, 2147483648
    %v2689 = vmul.f32 %v2688, 1.442695
    %v2690 = vpow.pop %v2689
    %v2691 = vadd.f32 %v2690, 1.0
    %v2692 = vrcp.pop %v2691
    %v2693 = vmul.f32 %v2691, %v2692
    %v2694 = vsub.f32 1.0, %v2693
    %v2695 = vmul.f32 %v2692, %v2694
    %v2696 = vadd.f32 %v2692, %v2695
    %vm2697 = vweird.f32 %v2691
    %vm2698 = vweird.f32 %v2692
    %vm2699 = vmor %vm2697, %vm2698
    %v2700 = vsel %vm2699, %v2692, %v2696
    %v2701 = vand.u32 2147483647, %v2691
    %vm2702 = vcmp.eq.f32.partialorder %v2701, 8.507059e+37
    %v2703 = vand.u32 %v2691, 2147483648
    %v2704 = vor.u32 1.1754944e-38, %v2703
    %v2705 = vsel %vm2702, %v2704, %v2700
    %v2706 = vmul.f32 1.0, %v2705
    %v2707 = vmul.f32 %v2686, %v2415
    %v2708 = vmul.f32 %v2667, %v2687
    %v2709 = vadd.f32 %v2707, %v2708
    %v2710 = vtanh.pop %v2709
    %v2711 = vmul.f32 %v2706, %v2710
    %v2712 = vld [vmem:[#allocation8] sm:$0xff]
    %v2713 = vld [vmem:[#allocation8 + $0x8] sm:$0xff]
    %v2714 = vld [vmem:[#allocation8 + $0x10] sm:$0xff]
    %v2715 = vld [vmem:[#allocation8 + $0x18] sm:$0xff]
    %v2716 = vld [vmem:[#allocation8 + $0x20] sm:$0xff]
    %v2717 = vld [vmem:[#allocation8 + $0x28] sm:$0xff]
    %v2718 = vld [vmem:[#allocation8 + $0x30] sm:$0xff]
    %v2719 = vld [vmem:[#allocation8 + $0x38] sm:$0xff]
    %v2720 = vld [vmem:[#allocation8 + $0x40] sm:$0xff]
    %v2721 = vld [vmem:[#allocation8 + $0x48] sm:$0xff]
    %v2722 = vld [vmem:[#allocation8 + $0x50] sm:$0xff]
    %v2723 = vld [vmem:[#allocation8 + $0x58] sm:$0xff]
    %v2724 = vld [vmem:[#allocation8 + $0x60] sm:$0xff]
    %v2725 = vld [vmem:[#allocation8 + $0x68] sm:$0xff]
    %v2726 = vld [vmem:[#allocation8 + $0x70] sm:$0xff]
    %v2727 = vld [vmem:[#allocation8 + $0x78] sm:$0xff]
    %v2728 = vld [vmem:[#allocation8 + $0x80] sm:$0xff]
    %v2729 = vld [vmem:[#allocation8 + $0x88] sm:$0xff]
    %v2730 = vld [vmem:[#allocation8 + $0x90] sm:$0xff]
    %v2731 = vld [vmem:[#allocation8 + $0x98] sm:$0xff]
    %v2732 = vld [vmem:[#allocation8 + $0xa0] sm:$0xff]
    %v2733 = vld [vmem:[#allocation8 + $0xa8] sm:$0xff]
    %v2734 = vld [vmem:[#allocation8 + $0xb0] sm:$0xff]
    %v2735 = vld [vmem:[#allocation8 + $0xb8] sm:$0xff]
    %v2736 = vld [vmem:[#allocation8 + $0xc0] sm:$0xff]
    %v2737 = vld [vmem:[#allocation8 + $0xc8] sm:$0xff]
    %v2738 = vld [vmem:[#allocation8 + $0xd0] sm:$0xff]
    %v2739 = vld [vmem:[#allocation8 + $0xd8] sm:$0xff]
    %v2740 = vld [vmem:[#allocation8 + $0xe0] sm:$0xff]
    %v2741 = vld [vmem:[#allocation8 + $0xe8] sm:$0xff]
    %v2742 = vld [vmem:[#allocation8 + $0xf0] sm:$0xff]
    %v2743 = vld [vmem:[#allocation8 + $0xf8] sm:$0xff]
    %v2744 = vld [vmem:[#allocation8 + $0x100] sm:$0xff]
    %v2745 = vld [vmem:[#allocation8 + $0x108] sm:$0xff]
    %v2746 = vld [vmem:[#allocation8 + $0x110] sm:$0xff]
    %v2747 = vld [vmem:[#allocation8 + $0x118] sm:$0xff]
    %v2748 = vld [vmem:[#allocation8 + $0x120] sm:$0xff]
    %v2749 = vld [vmem:[#allocation8 + $0x128] sm:$0xff]
    %v2750 = vld [vmem:[#allocation8 + $0x130] sm:$0xff]
    %v2751 = vld [vmem:[#allocation8 + $0x138] sm:$0xff]
    %v2752 = vld [vmem:[#allocation8 + $0x140] sm:$0xff]
    %v2753 = vld [vmem:[#allocation8 + $0x148] sm:$0xff]
    %v2754 = vld [vmem:[#allocation8 + $0x150] sm:$0xff]
    %v2755 = vld [vmem:[#allocation8 + $0x158] sm:$0xff]
    %v2756 = vld [vmem:[#allocation8 + $0x160] sm:$0xff]
    %v2757 = vld [vmem:[#allocation8 + $0x168] sm:$0xff]
    %v2758 = vld [vmem:[#allocation8 + $0x170] sm:$0xff]
    %v2759 = vld [vmem:[#allocation8 + $0x178] sm:$0xff]
    %v2760 = vld [vmem:[#allocation8 + $0x180] sm:$0xff]
    %v2761 = vld [vmem:[#allocation8 + $0x188] sm:$0xff]
    %v2762 = vld [vmem:[#allocation8 + $0x190] sm:$0xff]
    %v2763 = vld [vmem:[#allocation8 + $0x198] sm:$0xff]
    %v2764 = vld [vmem:[#allocation8 + $0x1a0] sm:$0xff]
    %v2765 = vld [vmem:[#allocation8 + $0x1a8] sm:$0xff]
    %v2766 = vld [vmem:[#allocation8 + $0x1b0] sm:$0xff]
    %v2767 = vld [vmem:[#allocation8 + $0x1b8] sm:$0xff]
    %v2768 = vld [vmem:[#allocation8 + $0x1c0] sm:$0xff]
    %v2769 = vld [vmem:[#allocation8 + $0x1c8] sm:$0xff]
    %v2770 = vld [vmem:[#allocation8 + $0x1d0] sm:$0xff]
    %v2771 = vld [vmem:[#allocation8 + $0x1d8] sm:$0xff]
    %v2772 = vld [vmem:[#allocation8 + $0x1e0] sm:$0xff]
    %v2773 = vld [vmem:[#allocation8 + $0x1e8] sm:$0xff]
    %v2774 = vld [vmem:[#allocation8 + $0x1f0] sm:$0xff]
    %v2775 = vld [vmem:[#allocation8 + $0x1f8] sm:$0xff]
    %v2776 = vld [vmem:[#allocation8 + $0x200] sm:$0xff]
    %v2777 = vld [vmem:[#allocation8 + $0x208] sm:$0xff]
    %v2778 = vld [vmem:[#allocation8 + $0x210] sm:$0xff]
    %v2779 = vld [vmem:[#allocation8 + $0x218] sm:$0xff]
    %v2780 = vld [vmem:[#allocation8 + $0x220] sm:$0xff]
    %v2781 = vld [vmem:[#allocation8 + $0x228] sm:$0xff]
    %v2782 = vld [vmem:[#allocation8 + $0x230] sm:$0xff]
    %v2783 = vld [vmem:[#allocation8 + $0x238] sm:$0xff]
    %v2784 = vld [vmem:[#allocation8 + $0x240] sm:$0xff]
    %v2785 = vld [vmem:[#allocation8 + $0x248] sm:$0xff]
    %v2786 = vld [vmem:[#allocation8 + $0x250] sm:$0xff]
    %v2787 = vld [vmem:[#allocation8 + $0x258] sm:$0xff]
    %v2788 = vld [vmem:[#allocation8 + $0x260] sm:$0xff]
    %v2789 = vld [vmem:[#allocation8 + $0x268] sm:$0xff]
    %v2790 = vld [vmem:[#allocation8 + $0x270] sm:$0xff]
    %v2791 = vld [vmem:[#allocation8 + $0x278] sm:$0xff]
    %v2792 = vld [vmem:[#allocation8 + $0x280] sm:$0xff]
    %v2793 = vld [vmem:[#allocation8 + $0x288] sm:$0xff]
    %v2794 = vld [vmem:[#allocation8 + $0x290] sm:$0xff]
    %v2795 = vld [vmem:[#allocation8 + $0x298] sm:$0xff]
    %v2796 = vld [vmem:[#allocation8 + $0x2a0] sm:$0xff]
    %v2797 = vld [vmem:[#allocation8 + $0x2a8] sm:$0xff]
    %v2798 = vld [vmem:[#allocation8 + $0x2b0] sm:$0xff]
    %v2799 = vld [vmem:[#allocation8 + $0x2b8] sm:$0xff]
    %v2800 = vld [vmem:[#allocation8 + $0x2c0] sm:$0xff]
    %v2801 = vld [vmem:[#allocation8 + $0x2c8] sm:$0xff]
    %v2802 = vld [vmem:[#allocation8 + $0x2d0] sm:$0xff]
    %v2803 = vld [vmem:[#allocation8 + $0x2d8] sm:$0xff]
    %v2804 = vld [vmem:[#allocation8 + $0x2e0] sm:$0xff]
    %v2805 = vld [vmem:[#allocation8 + $0x2e8] sm:$0xff]
    %v2806 = vld [vmem:[#allocation8 + $0x2f0] sm:$0xff]
    %v2807 = vld [vmem:[#allocation8 + $0x2f8] sm:$0xff]
    %v2808 = vld [vmem:[#allocation8 + $0x300] sm:$0xff]
    %v2809 = vld [vmem:[#allocation8 + $0x308] sm:$0xff]
    %v2810 = vld [vmem:[#allocation8 + $0x310] sm:$0xff]
    %v2811 = vld [vmem:[#allocation8 + $0x318] sm:$0xff]
    %v2812 = vld [vmem:[#allocation8 + $0x320] sm:$0xff]
    %v2813 = vld [vmem:[#allocation8 + $0x328] sm:$0xff]
    %v2814 = vld [vmem:[#allocation8 + $0x330] sm:$0xff]
    %v2815 = vld [vmem:[#allocation8 + $0x338] sm:$0xff]
    %v2816 = vld [vmem:[#allocation8 + $0x340] sm:$0xff]
    %v2817 = vld [vmem:[#allocation8 + $0x348] sm:$0xff]
    %v2818 = vld [vmem:[#allocation8 + $0x350] sm:$0xff]
    %v2819 = vld [vmem:[#allocation8 + $0x358] sm:$0xff]
    %v2820 = vld [vmem:[#allocation8 + $0x360] sm:$0xff]
    %v2821 = vld [vmem:[#allocation8 + $0x368] sm:$0xff]
    %v2822 = vld [vmem:[#allocation8 + $0x370] sm:$0xff]
    %v2823 = vld [vmem:[#allocation8 + $0x378] sm:$0xff]
    %v2824 = vld [vmem:[#allocation8 + $0x380] sm:$0xff]
    %v2825 = vld [vmem:[#allocation8 + $0x388] sm:$0xff]
    %v2826 = vld [vmem:[#allocation8 + $0x390] sm:$0xff]
    %v2827 = vld [vmem:[#allocation8 + $0x398] sm:$0xff]
    %v2828 = vld [vmem:[#allocation8 + $0x3a0] sm:$0xff]
    %v2829 = vld [vmem:[#allocation8 + $0x3a8] sm:$0xff]
    %v2830 = vld [vmem:[#allocation8 + $0x3b0] sm:$0xff]
    %v2831 = vld [vmem:[#allocation8 + $0x3b8] sm:$0xff]
    %v2832 = vld [vmem:[#allocation8 + $0x3c0] sm:$0xff]
    %v2833 = vld [vmem:[#allocation8 + $0x3c8] sm:$0xff]
    %v2834 = vld [vmem:[#allocation8 + $0x3d0] sm:$0xff]
    %v2835 = vld [vmem:[#allocation8 + $0x3d8] sm:$0xff]
    %v2836 = vld [vmem:[#allocation8 + $0x3e0] sm:$0xff]
    %v2837 = vld [vmem:[#allocation8 + $0x3e8] sm:$0xff]
    %v2838 = vld [vmem:[#allocation8 + $0x3f0] sm:$0xff]
    %v2839 = vld [vmem:[#allocation8 + $0x3f8] sm:$0xff]
    %v2840 = vld [vmem:[#allocation8 + $0x400] sm:$0xff]
    %v2841 = vld [vmem:[#allocation8 + $0x408] sm:$0xff]
    %v2842 = vld [vmem:[#allocation8 + $0x410] sm:$0xff]
    %v2843 = vld [vmem:[#allocation8 + $0x418] sm:$0xff]
    %v2844 = vld [vmem:[#allocation8 + $0x420] sm:$0xff]
    %v2845 = vld [vmem:[#allocation8 + $0x428] sm:$0xff]
    %v2846 = vld [vmem:[#allocation8 + $0x430] sm:$0xff]
    %v2847 = vld [vmem:[#allocation8 + $0x438] sm:$0xff]
    %v2848 = vld [vmem:[#allocation8 + $0x440] sm:$0xff]
    %v2849 = vld [vmem:[#allocation8 + $0x448] sm:$0xff]
    %v2850 = vld [vmem:[#allocation8 + $0x450] sm:$0xff]
    %v2851 = vld [vmem:[#allocation8 + $0x458] sm:$0xff]
    %v2852 = vld [vmem:[#allocation8 + $0x460] sm:$0xff]
    %v2853 = vld [vmem:[#allocation8 + $0x468] sm:$0xff]
    %v2854 = vld [vmem:[#allocation8 + $0x470] sm:$0xff]
    %v2855 = vld [vmem:[#allocation8 + $0x478] sm:$0xff]
    %v2856 = vld [vmem:[#allocation8 + $0x480] sm:$0xff]
    %v2857 = vld [vmem:[#allocation8 + $0x488] sm:$0xff]
    %v2858 = vld [vmem:[#allocation8 + $0x490] sm:$0xff]
    %v2859 = vld [vmem:[#allocation8 + $0x498] sm:$0xff]
    %v2860 = vld [vmem:[#allocation8 + $0x4a0] sm:$0xff]
    %v2861 = vld [vmem:[#allocation8 + $0x4a8] sm:$0xff]
    %v2862 = vld [vmem:[#allocation8 + $0x4b0] sm:$0xff]
    %v2863 = vld [vmem:[#allocation8 + $0x4b8] sm:$0xff]
    %v2864 = vld [vmem:[#allocation8 + $0x4c0] sm:$0xff]
    %v2865 = vld [vmem:[#allocation8 + $0x4c8] sm:$0xff]
    %v2866 = vld [vmem:[#allocation8 + $0x4d0] sm:$0xff]
    %v2867 = vld [vmem:[#allocation8 + $0x4d8] sm:$0xff]
    %v2868 = vld [vmem:[#allocation8 + $0x4e0] sm:$0xff]
    %v2869 = vld [vmem:[#allocation8 + $0x4e8] sm:$0xff]
    %v2870 = vld [vmem:[#allocation8 + $0x4f0] sm:$0xff]
    %v2871 = vld [vmem:[#allocation8 + $0x4f8] sm:$0xff]
    %v2872 = vld [vmem:[#allocation8 + $0x500] sm:$0xff]
    %v2873 = vld [vmem:[#allocation8 + $0x508] sm:$0xff]
    %v2874 = vld [vmem:[#allocation8 + $0x510] sm:$0xff]
    %v2875 = vld [vmem:[#allocation8 + $0x518] sm:$0xff]
    %v2876 = vld [vmem:[#allocation8 + $0x520] sm:$0xff]
    %v2877 = vld [vmem:[#allocation8 + $0x528] sm:$0xff]
    %v2878 = vld [vmem:[#allocation8 + $0x530] sm:$0xff]
    %v2879 = vld [vmem:[#allocation8 + $0x538] sm:$0xff]
    %v2880 = vld [vmem:[#allocation8 + $0x540] sm:$0xff]
    %v2881 = vld [vmem:[#allocation8 + $0x548] sm:$0xff]
    %v2882 = vld [vmem:[#allocation8 + $0x550] sm:$0xff]
    %v2883 = vld [vmem:[#allocation8 + $0x558] sm:$0xff]
    %v2884 = vld [vmem:[#allocation8 + $0x560] sm:$0xff]
    %v2885 = vld [vmem:[#allocation8 + $0x568] sm:$0xff]
    %v2886 = vld [vmem:[#allocation8 + $0x570] sm:$0xff]
    %v2887 = vld [vmem:[#allocation8 + $0x578] sm:$0xff]
    %v2888 = vld [vmem:[#allocation8 + $0x580] sm:$0xff]
    %v2889 = vld [vmem:[#allocation8 + $0x588] sm:$0xff]
    %v2890 = vld [vmem:[#allocation8 + $0x590] sm:$0xff]
    %v2891 = vld [vmem:[#allocation8 + $0x598] sm:$0xff]
    %v2892 = vld [vmem:[#allocation8 + $0x5a0] sm:$0xff]
    %v2893 = vld [vmem:[#allocation8 + $0x5a8] sm:$0xff]
    %v2894 = vld [vmem:[#allocation8 + $0x5b0] sm:$0xff]
    %v2895 = vld [vmem:[#allocation8 + $0x5b8] sm:$0xff]
    %v2896 = vld [vmem:[#allocation8 + $0x5c0] sm:$0xff]
    %v2897 = vld [vmem:[#allocation8 + $0x5c8] sm:$0xff]
    %v2898 = vld [vmem:[#allocation8 + $0x5d0] sm:$0xff]
    %v2899 = vld [vmem:[#allocation8 + $0x5d8] sm:$0xff]
    %v2900 = vld [vmem:[#allocation8 + $0x5e0] sm:$0xff]
    %v2901 = vld [vmem:[#allocation8 + $0x5e8] sm:$0xff]
    %v2902 = vld [vmem:[#allocation8 + $0x5f0] sm:$0xff]
    %v2903 = vld [vmem:[#allocation8 + $0x5f8] sm:$0xff]
    %v2904 = vld [vmem:[#allocation8 + $0x600] sm:$0xff]
    %v2905 = vld [vmem:[#allocation8 + $0x608] sm:$0xff]
    %v2906 = vld [vmem:[#allocation8 + $0x610] sm:$0xff]
    %v2907 = vld [vmem:[#allocation8 + $0x618] sm:$0xff]
    %v2908 = vld [vmem:[#allocation8 + $0x620] sm:$0xff]
    %v2909 = vld [vmem:[#allocation8 + $0x628] sm:$0xff]
    %v2910 = vld [vmem:[#allocation8 + $0x630] sm:$0xff]
    %v2911 = vld [vmem:[#allocation8 + $0x638] sm:$0xff]
    %v2912 = vld [vmem:[#allocation8 + $0x640] sm:$0xff]
    %v2913 = vld [vmem:[#allocation8 + $0x648] sm:$0xff]
    %v2914 = vld [vmem:[#allocation8 + $0x650] sm:$0xff]
    %v2915 = vld [vmem:[#allocation8 + $0x658] sm:$0xff]
    %v2916 = vld [vmem:[#allocation8 + $0x660] sm:$0xff]
    %v2917 = vld [vmem:[#allocation8 + $0x668] sm:$0xff]
    %v2918 = vld [vmem:[#allocation8 + $0x670] sm:$0xff]
    %v2919 = vld [vmem:[#allocation8 + $0x678] sm:$0xff]
    %v2920 = vld [vmem:[#allocation8 + $0x680] sm:$0xff]
    %v2921 = vld [vmem:[#allocation8 + $0x688] sm:$0xff]
    %v2922 = vld [vmem:[#allocation8 + $0x690] sm:$0xff]
    %v2923 = vld [vmem:[#allocation8 + $0x698] sm:$0xff]
    %v2924 = vld [vmem:[#allocation8 + $0x6a0] sm:$0xff]
    %v2925 = vld [vmem:[#allocation8 + $0x6a8] sm:$0xff]
    %v2926 = vld [vmem:[#allocation8 + $0x6b0] sm:$0xff]
    %v2927 = vld [vmem:[#allocation8 + $0x6b8] sm:$0xff]
    %v2928 = vld [vmem:[#allocation8 + $0x6c0] sm:$0xff]
    %v2929 = vld [vmem:[#allocation8 + $0x6c8] sm:$0xff]
    %v2930 = vld [vmem:[#allocation8 + $0x6d0] sm:$0xff]
    %v2931 = vld [vmem:[#allocation8 + $0x6d8] sm:$0xff]
    %v2932 = vld [vmem:[#allocation8 + $0x6e0] sm:$0xff]
    %v2933 = vld [vmem:[#allocation8 + $0x6e8] sm:$0xff]
    %v2934 = vld [vmem:[#allocation8 + $0x6f0] sm:$0xff]
    %v2935 = vld [vmem:[#allocation8 + $0x6f8] sm:$0xff]
    %v2936 = vld [vmem:[#allocation8 + $0x700] sm:$0xff]
    %v2937 = vld [vmem:[#allocation8 + $0x708] sm:$0xff]
    %v2938 = vld [vmem:[#allocation8 + $0x710] sm:$0xff]
    %v2939 = vld [vmem:[#allocation8 + $0x718] sm:$0xff]
    %v2940 = vld [vmem:[#allocation8 + $0x720] sm:$0xff]
    %v2941 = vld [vmem:[#allocation8 + $0x728] sm:$0xff]
    %v2942 = vld [vmem:[#allocation8 + $0x730] sm:$0xff]
    %v2943 = vld [vmem:[#allocation8 + $0x738] sm:$0xff]
    %v2944 = vld [vmem:[#allocation8 + $0x740] sm:$0xff]
    %v2945 = vld [vmem:[#allocation8 + $0x748] sm:$0xff]
    %v2946 = vld [vmem:[#allocation8 + $0x750] sm:$0xff]
    %v2947 = vld [vmem:[#allocation8 + $0x758] sm:$0xff]
    %v2948 = vld [vmem:[#allocation8 + $0x760] sm:$0xff]
    %v2949 = vld [vmem:[#allocation8 + $0x768] sm:$0xff]
    %v2950 = vld [vmem:[#allocation8 + $0x770] sm:$0xff]
    %v2951 = vld [vmem:[#allocation8 + $0x778] sm:$0xff]
    %v2952 = vld [vmem:[#allocation8 + $0x780] sm:$0xff]
    %v2953 = vld [vmem:[#allocation8 + $0x788] sm:$0xff]
    %v2954 = vld [vmem:[#allocation8 + $0x790] sm:$0xff]
    %v2955 = vld [vmem:[#allocation8 + $0x798] sm:$0xff]
    %v2956 = vld [vmem:[#allocation8 + $0x7a0] sm:$0xff]
    %v2957 = vld [vmem:[#allocation8 + $0x7a8] sm:$0xff]
    %v2958 = vld [vmem:[#allocation8 + $0x7b0] sm:$0xff]
    %v2959 = vld [vmem:[#allocation8 + $0x7b8] sm:$0xff]
    %v2960 = vld [vmem:[#allocation8 + $0x7c0] sm:$0xff]
    %v2961 = vld [vmem:[#allocation8 + $0x7c8] sm:$0xff]
    %v2962 = vld [vmem:[#allocation8 + $0x7d0] sm:$0xff]
    %v2963 = vld [vmem:[#allocation8 + $0x7d8] sm:$0xff]
    %v2964 = vld [vmem:[#allocation8 + $0x7e0] sm:$0xff]
    %v2965 = vld [vmem:[#allocation8 + $0x7e8] sm:$0xff]
    %v2966 = vld [vmem:[#allocation8 + $0x7f0] sm:$0xff]
    %v2967 = vld [vmem:[#allocation8 + $0x7f8] sm:$0xff]
    %v2968 = vld [vmem:[%s6] sm:$0xff]
    %v2970 = vperm.slane %v2968, 0
    %v2971 = vperm.slane %v2968, 1
    %v2972 = vperm.slane %v2968, 2
    %v2973 = vperm.slane %v2968, 3
    %v2974 = vperm.slane %v2968, 4
    %v2975 = vperm.slane %v2968, 5
    %v2976 = vperm.slane %v2968, 6
    %v2977 = vperm.slane %v2968, 7
    %2986 = vmatpush.msra.mxu0 %v2832
    %2987 = vmatpush.msra.mxu0 %v2824
    %2988 = vmatpush.msra.mxu0 %v2816
    %2989 = vmatpush.msra.mxu0 %v2808
    %2990 = vmatpush.msra.mxu0 %v2800
    %2991 = vmatpush.msra.mxu0 %v2792
    %2992 = vmatpush.msra.mxu0 %v2784
    %2993 = vmatpush.msra.mxu0 %v2776
    %2994 = vmatpush.msra.mxu0 %v2768
    %2995 = vmatpush.msra.mxu0 %v2760
    %2996 = vmatpush.msra.mxu0 %v2752
    %2997 = vmatpush.msra.mxu0 %v2744
    %2998 = vmatpush.msra.mxu0 %v2736
    %2999 = vmatpush.msra.mxu0 %v2728
    %3000 = vmatpush.msra.mxu0 %v2720
    %3001 = vmatpush.msra.mxu0 %v2712
    %3002 = vmatmul.f32.gmra.mxu0 %v2564
    %v3003 = vpop.f32.mrf.mxu0
    %v3004 = vadd.f32 %v2970, %v3003
    %3005 = vdwg.mxu0
    %3006 = vmatpush.msra.mxu0 %v2960
    %3007 = vmatpush.msra.mxu0 %v2952
    %3008 = vmatpush.msra.mxu0 %v2944
    %3009 = vmatpush.msra.mxu0 %v2936
    %3010 = vmatpush.msra.mxu0 %v2928
    %3011 = vmatpush.msra.mxu0 %v2920
    %3012 = vmatpush.msra.mxu0 %v2912
    %3013 = vmatpush.msra.mxu0 %v2904
    %3014 = vmatpush.msra.mxu0 %v2896
    %3015 = vmatpush.msra.mxu0 %v2888
    %3016 = vmatpush.msra.mxu0 %v2880
    %3017 = vmatpush.msra.mxu0 %v2872
    %3018 = vmatpush.msra.mxu0 %v2864
    %3019 = vmatpush.msra.mxu0 %v2856
    %3020 = vmatpush.msra.mxu0 %v2848
    %3021 = vmatpush.msra.mxu0 %v2840
    %3022 = vmatmul.f32.gmra.mxu0 %v2711
    %v3023 = vpop.f32.mrf.mxu0
    %v3024 = vadd.f32 %v3004, %v3023
    %3025 = vdwg.mxu0
    %3026 = vmatpush.msra.mxu0 %v2833
    %3027 = vmatpush.msra.mxu0 %v2825
    %3028 = vmatpush.msra.mxu0 %v2817
    %3029 = vmatpush.msra.mxu0 %v2809
    %3030 = vmatpush.msra.mxu0 %v2801
    %3031 = vmatpush.msra.mxu0 %v2793
    %3032 = vmatpush.msra.mxu0 %v2785
    %3033 = vmatpush.msra.mxu0 %v2777
    %3034 = vmatpush.msra.mxu0 %v2769
    %3035 = vmatpush.msra.mxu0 %v2761
    %3036 = vmatpush.msra.mxu0 %v2753
    %3037 = vmatpush.msra.mxu0 %v2745
    %3038 = vmatpush.msra.mxu0 %v2737
    %3039 = vmatpush.msra.mxu0 %v2729
    %3040 = vmatpush.msra.mxu0 %v2721
    %3041 = vmatpush.msra.mxu0 %v2713
    %3042 = vmatmul.f32.gmra.mxu0 %v2564
    %v3043 = vpop.f32.mrf.mxu0
    %v3044 = vadd.f32 %v2971, %v3043
    %3045 = vdwg.mxu0
    %3046 = vmatpush.msra.mxu0 %v2961
    %3047 = vmatpush.msra.mxu0 %v2953
    %3048 = vmatpush.msra.mxu0 %v2945
    %3049 = vmatpush.msra.mxu0 %v2937
    %3050 = vmatpush.msra.mxu0 %v2929
    %3051 = vmatpush.msra.mxu0 %v2921
    %3052 = vmatpush.msra.mxu0 %v2913
    %3053 = vmatpush.msra.mxu0 %v2905
    %3054 = vmatpush.msra.mxu0 %v2897
    %3055 = vmatpush.msra.mxu0 %v2889
    %3056 = vmatpush.msra.mxu0 %v2881
    %3057 = vmatpush.msra.mxu0 %v2873
    %3058 = vmatpush.msra.mxu0 %v2865
    %3059 = vmatpush.msra.mxu0 %v2857
    %3060 = vmatpush.msra.mxu0 %v2849
    %3061 = vmatpush.msra.mxu0 %v2841
    %3062 = vmatmul.f32.gmra.mxu0 %v2711
    %v3063 = vpop.f32.mrf.mxu0
    %v3064 = vadd.f32 %v3044, %v3063
    %3065 = vdwg.mxu0
    %3066 = vmatpush.msra.mxu0 %v2834
    %3067 = vmatpush.msra.mxu0 %v2826
    %3068 = vmatpush.msra.mxu0 %v2818
    %3069 = vmatpush.msra.mxu0 %v2810
    %3070 = vmatpush.msra.mxu0 %v2802
    %3071 = vmatpush.msra.mxu0 %v2794
    %3072 = vmatpush.msra.mxu0 %v2786
    %3073 = vmatpush.msra.mxu0 %v2778
    %3074 = vmatpush.msra.mxu0 %v2770
    %3075 = vmatpush.msra.mxu0 %v2762
    %3076 = vmatpush.msra.mxu0 %v2754
    %3077 = vmatpush.msra.mxu0 %v2746
    %3078 = vmatpush.msra.mxu0 %v2738
    %3079 = vmatpush.msra.mxu0 %v2730
    %3080 = vmatpush.msra.mxu0 %v2722
    %3081 = vmatpush.msra.mxu0 %v2714
    %3082 = vmatmul.f32.gmra.mxu0 %v2564
    %v3083 = vpop.f32.mrf.mxu0
    %v3084 = vadd.f32 %v2972, %v3083
    %3085 = vdwg.mxu0
    %3086 = vmatpush.msra.mxu0 %v2962
    %3087 = vmatpush.msra.mxu0 %v2954
    %3088 = vmatpush.msra.mxu0 %v2946
    %3089 = vmatpush.msra.mxu0 %v2938
    %3090 = vmatpush.msra.mxu0 %v2930
    %3091 = vmatpush.msra.mxu0 %v2922
    %3092 = vmatpush.msra.mxu0 %v2914
    %3093 = vmatpush.msra.mxu0 %v2906
    %3094 = vmatpush.msra.mxu0 %v2898
    %3095 = vmatpush.msra.mxu0 %v2890
    %3096 = vmatpush.msra.mxu0 %v2882
    %3097 = vmatpush.msra.mxu0 %v2874
    %3098 = vmatpush.msra.mxu0 %v2866
    %3099 = vmatpush.msra.mxu0 %v2858
    %3100 = vmatpush.msra.mxu0 %v2850
    %3101 = vmatpush.msra.mxu0 %v2842
    %3102 = vmatmul.f32.gmra.mxu0 %v2711
    %v3103 = vpop.f32.mrf.mxu0
    %v3104 = vadd.f32 %v3084, %v3103
    %3105 = vdwg.mxu0
    %3106 = vmatpush.msra.mxu0 %v2835
    %3107 = vmatpush.msra.mxu0 %v2827
    %3108 = vmatpush.msra.mxu0 %v2819
    %3109 = vmatpush.msra.mxu0 %v2811
    %3110 = vmatpush.msra.mxu0 %v2803
    %3111 = vmatpush.msra.mxu0 %v2795
    %3112 = vmatpush.msra.mxu0 %v2787
    %3113 = vmatpush.msra.mxu0 %v2779
    %3114 = vmatpush.msra.mxu0 %v2771
    %3115 = vmatpush.msra.mxu0 %v2763
    %3116 = vmatpush.msra.mxu0 %v2755
    %3117 = vmatpush.msra.mxu0 %v2747
    %3118 = vmatpush.msra.mxu0 %v2739
    %3119 = vmatpush.msra.mxu0 %v2731
    %3120 = vmatpush.msra.mxu0 %v2723
    %3121 = vmatpush.msra.mxu0 %v2715
    %3122 = vmatmul.f32.gmra.mxu0 %v2564
    %v3123 = vpop.f32.mrf.mxu0
    %v3124 = vadd.f32 %v2973, %v3123
    %3125 = vdwg.mxu0
    %3126 = vmatpush.msra.mxu0 %v2963
    %3127 = vmatpush.msra.mxu0 %v2955
    %3128 = vmatpush.msra.mxu0 %v2947
    %3129 = vmatpush.msra.mxu0 %v2939
    %3130 = vmatpush.msra.mxu0 %v2931
    %3131 = vmatpush.msra.mxu0 %v2923
    %3132 = vmatpush.msra.mxu0 %v2915
    %3133 = vmatpush.msra.mxu0 %v2907
    %3134 = vmatpush.msra.mxu0 %v2899
    %3135 = vmatpush.msra.mxu0 %v2891
    %3136 = vmatpush.msra.mxu0 %v2883
    %3137 = vmatpush.msra.mxu0 %v2875
    %3138 = vmatpush.msra.mxu0 %v2867
    %3139 = vmatpush.msra.mxu0 %v2859
    %3140 = vmatpush.msra.mxu0 %v2851
    %3141 = vmatpush.msra.mxu0 %v2843
    %3142 = vmatmul.f32.gmra.mxu0 %v2711
    %v3143 = vpop.f32.mrf.mxu0
    %v3144 = vadd.f32 %v3124, %v3143
    %3145 = vdwg.mxu0
    %3146 = vmatpush.msra.mxu0 %v2836
    %3147 = vmatpush.msra.mxu0 %v2828
    %3148 = vmatpush.msra.mxu0 %v2820
    %3149 = vmatpush.msra.mxu0 %v2812
    %3150 = vmatpush.msra.mxu0 %v2804
    %3151 = vmatpush.msra.mxu0 %v2796
    %3152 = vmatpush.msra.mxu0 %v2788
    %3153 = vmatpush.msra.mxu0 %v2780
    %3154 = vmatpush.msra.mxu0 %v2772
    %3155 = vmatpush.msra.mxu0 %v2764
    %3156 = vmatpush.msra.mxu0 %v2756
    %3157 = vmatpush.msra.mxu0 %v2748
    %3158 = vmatpush.msra.mxu0 %v2740
    %3159 = vmatpush.msra.mxu0 %v2732
    %3160 = vmatpush.msra.mxu0 %v2724
    %3161 = vmatpush.msra.mxu0 %v2716
    %3162 = vmatmul.f32.gmra.mxu0 %v2564
    %v3163 = vpop.f32.mrf.mxu0
    %v3164 = vadd.f32 %v2974, %v3163
    %3165 = vdwg.mxu0
    %3166 = vmatpush.msra.mxu0 %v2964
    %3167 = vmatpush.msra.mxu0 %v2956
    %3168 = vmatpush.msra.mxu0 %v2948
    %3169 = vmatpush.msra.mxu0 %v2940
    %3170 = vmatpush.msra.mxu0 %v2932
    %3171 = vmatpush.msra.mxu0 %v2924
    %3172 = vmatpush.msra.mxu0 %v2916
    %3173 = vmatpush.msra.mxu0 %v2908
    %3174 = vmatpush.msra.mxu0 %v2900
    %3175 = vmatpush.msra.mxu0 %v2892
    %3176 = vmatpush.msra.mxu0 %v2884
    %3177 = vmatpush.msra.mxu0 %v2876
    %3178 = vmatpush.msra.mxu0 %v2868
    %3179 = vmatpush.msra.mxu0 %v2860
    %3180 = vmatpush.msra.mxu0 %v2852
    %3181 = vmatpush.msra.mxu0 %v2844
    %3182 = vmatmul.f32.gmra.mxu0 %v2711
    %v3183 = vpop.f32.mrf.mxu0
    %v3184 = vadd.f32 %v3164, %v3183
    %3185 = vdwg.mxu0
    %3186 = vmatpush.msra.mxu0 %v2837
    %3187 = vmatpush.msra.mxu0 %v2829
    %3188 = vmatpush.msra.mxu0 %v2821
    %3189 = vmatpush.msra.mxu0 %v2813
    %3190 = vmatpush.msra.mxu0 %v2805
    %3191 = vmatpush.msra.mxu0 %v2797
    %3192 = vmatpush.msra.mxu0 %v2789
    %3193 = vmatpush.msra.mxu0 %v2781
    %3194 = vmatpush.msra.mxu0 %v2773
    %3195 = vmatpush.msra.mxu0 %v2765
    %3196 = vmatpush.msra.mxu0 %v2757
    %3197 = vmatpush.msra.mxu0 %v2749
    %3198 = vmatpush.msra.mxu0 %v2741
    %3199 = vmatpush.msra.mxu0 %v2733
    %3200 = vmatpush.msra.mxu0 %v2725
    %3201 = vmatpush.msra.mxu0 %v2717
    %3202 = vmatmul.f32.gmra.mxu0 %v2564
    %v3203 = vpop.f32.mrf.mxu0
    %v3204 = vadd.f32 %v2975, %v3203
    %3205 = vdwg.mxu0
    %3206 = vmatpush.msra.mxu0 %v2965
    %3207 = vmatpush.msra.mxu0 %v2957
    %3208 = vmatpush.msra.mxu0 %v2949
    %3209 = vmatpush.msra.mxu0 %v2941
    %3210 = vmatpush.msra.mxu0 %v2933
    %3211 = vmatpush.msra.mxu0 %v2925
    %3212 = vmatpush.msra.mxu0 %v2917
    %3213 = vmatpush.msra.mxu0 %v2909
    %3214 = vmatpush.msra.mxu0 %v2901
    %3215 = vmatpush.msra.mxu0 %v2893
    %3216 = vmatpush.msra.mxu0 %v2885
    %3217 = vmatpush.msra.mxu0 %v2877
    %3218 = vmatpush.msra.mxu0 %v2869
    %3219 = vmatpush.msra.mxu0 %v2861
    %3220 = vmatpush.msra.mxu0 %v2853
    %3221 = vmatpush.msra.mxu0 %v2845
    %3222 = vmatmul.f32.gmra.mxu0 %v2711
    %v3223 = vpop.f32.mrf.mxu0
    %v3224 = vadd.f32 %v3204, %v3223
    %3225 = vdwg.mxu0
    %3226 = vmatpush.msra.mxu0 %v2838
    %3227 = vmatpush.msra.mxu0 %v2830
    %3228 = vmatpush.msra.mxu0 %v2822
    %3229 = vmatpush.msra.mxu0 %v2814
    %3230 = vmatpush.msra.mxu0 %v2806
    %3231 = vmatpush.msra.mxu0 %v2798
    %3232 = vmatpush.msra.mxu0 %v2790
    %3233 = vmatpush.msra.mxu0 %v2782
    %3234 = vmatpush.msra.mxu0 %v2774
    %3235 = vmatpush.msra.mxu0 %v2766
    %3236 = vmatpush.msra.mxu0 %v2758
    %3237 = vmatpush.msra.mxu0 %v2750
    %3238 = vmatpush.msra.mxu0 %v2742
    %3239 = vmatpush.msra.mxu0 %v2734
    %3240 = vmatpush.msra.mxu0 %v2726
    %3241 = vmatpush.msra.mxu0 %v2718
    %3242 = vmatmul.f32.gmra.mxu0 %v2564
    %v3243 = vpop.f32.mrf.mxu0
    %v3244 = vadd.f32 %v2976, %v3243
    %3245 = vdwg.mxu0
    %3246 = vmatpush.msra.mxu0 %v2966
    %3247 = vmatpush.msra.mxu0 %v2958
    %3248 = vmatpush.msra.mxu0 %v2950
    %3249 = vmatpush.msra.mxu0 %v2942
    %3250 = vmatpush.msra.mxu0 %v2934
    %3251 = vmatpush.msra.mxu0 %v2926
    %3252 = vmatpush.msra.mxu0 %v2918
    %3253 = vmatpush.msra.mxu0 %v2910
    %3254 = vmatpush.msra.mxu0 %v2902
    %3255 = vmatpush.msra.mxu0 %v2894
    %3256 = vmatpush.msra.mxu0 %v2886
    %3257 = vmatpush.msra.mxu0 %v2878
    %3258 = vmatpush.msra.mxu0 %v2870
    %3259 = vmatpush.msra.mxu0 %v2862
    %3260 = vmatpush.msra.mxu0 %v2854
    %3261 = vmatpush.msra.mxu0 %v2846
    %3262 = vmatmul.f32.gmra.mxu0 %v2711
    %v3263 = vpop.f32.mrf.mxu0
    %v3264 = vadd.f32 %v3244, %v3263
    %3265 = vdwg.mxu0
    %3266 = vmatpush.msra.mxu0 %v2839
    %3267 = vmatpush.msra.mxu0 %v2831
    %3268 = vmatpush.msra.mxu0 %v2823
    %3269 = vmatpush.msra.mxu0 %v2815
    %3270 = vmatpush.msra.mxu0 %v2807
    %3271 = vmatpush.msra.mxu0 %v2799
    %3272 = vmatpush.msra.mxu0 %v2791
    %3273 = vmatpush.msra.mxu0 %v2783
    %3274 = vmatpush.msra.mxu0 %v2775
    %3275 = vmatpush.msra.mxu0 %v2767
    %3276 = vmatpush.msra.mxu0 %v2759
    %3277 = vmatpush.msra.mxu0 %v2751
    %3278 = vmatpush.msra.mxu0 %v2743
    %3279 = vmatpush.msra.mxu0 %v2735
    %3280 = vmatpush.msra.mxu0 %v2727
    %3281 = vmatpush.msra.mxu0 %v2719
    %3282 = vmatmul.f32.gmra.mxu0 %v2564
    %v3283 = vpop.f32.mrf.mxu0
    %v3284 = vadd.f32 %v2977, %v3283
    %3285 = vdwg.mxu0
    %3286 = vmatpush.msra.mxu0 %v2967
    %3287 = vmatpush.msra.mxu0 %v2959
    %3288 = vmatpush.msra.mxu0 %v2951
    %3289 = vmatpush.msra.mxu0 %v2943
    %3290 = vmatpush.msra.mxu0 %v2935
    %3291 = vmatpush.msra.mxu0 %v2927
    %3292 = vmatpush.msra.mxu0 %v2919
    %3293 = vmatpush.msra.mxu0 %v2911
    %3294 = vmatpush.msra.mxu0 %v2903
    %3295 = vmatpush.msra.mxu0 %v2895
    %3296 = vmatpush.msra.mxu0 %v2887
    %3297 = vmatpush.msra.mxu0 %v2879
    %3298 = vmatpush.msra.mxu0 %v2871
    %3299 = vmatpush.msra.mxu0 %v2863
    %3300 = vmatpush.msra.mxu0 %v2855
    %3301 = vmatpush.msra.mxu0 %v2847
    %3302 = vmatmul.f32.gmra.mxu0 %v2711
    %v3303 = vpop.f32.mrf.mxu0
    %v3304 = vadd.f32 %v3284, %v3303
    %3305 = vdwg.mxu0
    %v3306 = vxor.u32 %v3024, 2147483648
    %v3307 = vxor.u32 %v3064, 2147483648
    %v3308 = vmul.f32 %v3306, 1.442695
    %v3309 = vpow.pop %v3308
    %v3310 = vmul.f32 %v3307, 1.442695
    %v3311 = vpow.pop %v3310
    %v3312 = vadd.f32 %v3309, 1.0
    %v3313 = vadd.f32 %v3311, 1.0
    %v3314 = vrcp.pop %v3312
    %v3315 = vmul.f32 %v3312, %v3314
    %v3316 = vsub.f32 1.0, %v3315
    %v3317 = vmul.f32 %v3314, %v3316
    %v3318 = vadd.f32 %v3314, %v3317
    %vm3319 = vweird.f32 %v3312
    %vm3320 = vweird.f32 %v3314
    %vm3321 = vmor %vm3319, %vm3320
    %v3322 = vsel %vm3321, %v3314, %v3318
    %v3323 = vand.u32 2147483647, %v3312
    %vm3324 = vcmp.eq.f32.partialorder %v3323, 8.507059e+37
    %v3325 = vand.u32 %v3312, 2147483648
    %v3326 = vor.u32 1.1754944e-38, %v3325
    %v3327 = vsel %vm3324, %v3326, %v3322
    %v3328 = vmul.f32 1.0, %v3327
    %v3329 = vrcp.pop %v3313
    %v3330 = vmul.f32 %v3313, %v3329
    %v3331 = vsub.f32 1.0, %v3330
    %v3332 = vmul.f32 %v3329, %v3331
    %v3333 = vadd.f32 %v3329, %v3332
    %vm3334 = vweird.f32 %v3313
    %vm3335 = vweird.f32 %v3329
    %vm3336 = vmor %vm3334, %vm3335
    %v3337 = vsel %vm3336, %v3329, %v3333
    %v3338 = vand.u32 2147483647, %v3313
    %vm3339 = vcmp.eq.f32.partialorder %v3338, 8.507059e+37
    %v3340 = vand.u32 %v3313, 2147483648
    %v3341 = vor.u32 1.1754944e-38, %v3340
    %v3342 = vsel %vm3339, %v3341, %v3337
    %v3343 = vmul.f32 1.0, %v3342
    %v3344 = vxor.u32 %v3104, 2147483648
    %v3345 = vxor.u32 %v3144, 2147483648
    %v3346 = vmul.f32 %v3344, 1.442695
    %v3347 = vpow.pop %v3346
    %v3348 = vmul.f32 %v3345, 1.442695
    %v3349 = vpow.pop %v3348
    %v3350 = vadd.f32 %v3347, 1.0
    %v3351 = vadd.f32 %v3349, 1.0
    %v3352 = vrcp.pop %v3350
    %v3353 = vmul.f32 %v3350, %v3352
    %v3354 = vsub.f32 1.0, %v3353
    %v3355 = vmul.f32 %v3352, %v3354
    %v3356 = vadd.f32 %v3352, %v3355
    %vm3357 = vweird.f32 %v3350
    %vm3358 = vweird.f32 %v3352
    %vm3359 = vmor %vm3357, %vm3358
    %v3360 = vsel %vm3359, %v3352, %v3356
    %v3361 = vand.u32 2147483647, %v3350
    %vm3362 = vcmp.eq.f32.partialorder %v3361, 8.507059e+37
    %v3363 = vand.u32 %v3350, 2147483648
    %v3364 = vor.u32 1.1754944e-38, %v3363
    %v3365 = vsel %vm3362, %v3364, %v3360
    %v3366 = vmul.f32 1.0, %v3365
    %v3367 = vrcp.pop %v3351
    %v3368 = vmul.f32 %v3351, %v3367
    %v3369 = vsub.f32 1.0, %v3368
    %v3370 = vmul.f32 %v3367, %v3369
    %v3371 = vadd.f32 %v3367, %v3370
    %vm3372 = vweird.f32 %v3351
    %vm3373 = vweird.f32 %v3367
    %vm3374 = vmor %vm3372, %vm3373
    %v3375 = vsel %vm3374, %v3367, %v3371
    %v3376 = vand.u32 2147483647, %v3351
    %vm3377 = vcmp.eq.f32.partialorder %v3376, 8.507059e+37
    %v3378 = vand.u32 %v3351, 2147483648
    %v3379 = vor.u32 1.1754944e-38, %v3378
    %v3380 = vsel %vm3377, %v3379, %v3375
    %v3381 = vmul.f32 1.0, %v3380
    %v3382 = vtanh.pop %v3184
    %v3383 = vtanh.pop %v3224
    %v3384 = vxor.u32 %v3264, 2147483648
    %v3385 = vxor.u32 %v3304, 2147483648
    %v3386 = vmul.f32 %v3384, 1.442695
    %v3387 = vpow.pop %v3386
    %v3388 = vmul.f32 %v3385, 1.442695
    %v3389 = vpow.pop %v3388
    %v3390 = vadd.f32 %v3387, 1.0
    %v3391 = vadd.f32 %v3389, 1.0
    %v3392 = vrcp.pop %v3390
    %v3393 = vmul.f32 %v3390, %v3392
    %v3394 = vsub.f32 1.0, %v3393
    %v3395 = vmul.f32 %v3392, %v3394
    %v3396 = vadd.f32 %v3392, %v3395
    %vm3397 = vweird.f32 %v3390
    %vm3398 = vweird.f32 %v3392
    %vm3399 = vmor %vm3397, %vm3398
    %v3400 = vsel %vm3399, %v3392, %v3396
    %v3401 = vand.u32 2147483647, %v3390
    %vm3402 = vcmp.eq.f32.partialorder %v3401, 8.507059e+37
    %v3403 = vand.u32 %v3390, 2147483648
    %v3404 = vor.u32 1.1754944e-38, %v3403
    %v3405 = vsel %vm3402, %v3404, %v3400
    %v3406 = vmul.f32 1.0, %v3405
    %v3407 = vrcp.pop %v3391
    %v3408 = vmul.f32 %v3391, %v3407
    %v3409 = vsub.f32 1.0, %v3408
    %v3410 = vmul.f32 %v3407, %v3409
    %v3411 = vadd.f32 %v3407, %v3410
    %vm3412 = vweird.f32 %v3391
    %vm3413 = vweird.f32 %v3407
    %vm3414 = vmor %vm3412, %vm3413
    %v3415 = vsel %vm3414, %v3407, %v3411
    %v3416 = vand.u32 2147483647, %v3391
    %vm3417 = vcmp.eq.f32.partialorder %v3416, 8.507059e+37
    %v3418 = vand.u32 %v3391, 2147483648
    %v3419 = vor.u32 1.1754944e-38, %v3418
    %v3420 = vsel %vm3417, %v3419, %v3415
    %v3421 = vmul.f32 1.0, %v3420
    %v3422 = vmul.f32 %v3366, %v2562
    %v3423 = vmul.f32 %v3381, %v2709
    %v3424 = vmul.f32 %v3328, %v3382
    %v3425 = vmul.f32 %v3343, %v3383
    %v3426 = vadd.f32 %v3422, %v3424
    %v3427 = vadd.f32 %v3423, %v3425
    %v3428 = vtanh.pop %v3426
    %v3429 = vtanh.pop %v3427
    %v3430 = vmul.f32 %v3406, %v3428
    %v3431 = vmul.f32 %v3421, %v3429
    %3432 = vst [vmem:[#allocation3] sm:$0xff] %v3430
    %3433 = vst [vmem:[#allocation3 + $0x8] sm:$0xff] %v3431
    %v3434 = vld [vmem:[#allocation9] sm:$0xff]
    %v3435 = vld [vmem:[#allocation9 + $0x8] sm:$0xff]
    %v3436 = vld [vmem:[#allocation9 + $0x10] sm:$0xff]
    %v3437 = vld [vmem:[#allocation9 + $0x18] sm:$0xff]
    %v3438 = vld [vmem:[#allocation9 + $0x20] sm:$0xff]
    %v3439 = vld [vmem:[#allocation9 + $0x28] sm:$0xff]
    %v3440 = vld [vmem:[#allocation9 + $0x30] sm:$0xff]
    %v3441 = vld [vmem:[#allocation9 + $0x38] sm:$0xff]
    %v3442 = vld [vmem:[#allocation9 + $0x40] sm:$0xff]
    %v3443 = vld [vmem:[#allocation9 + $0x48] sm:$0xff]
    %v3444 = vld [vmem:[#allocation9 + $0x50] sm:$0xff]
    %v3445 = vld [vmem:[#allocation9 + $0x58] sm:$0xff]
    %v3446 = vld [vmem:[#allocation9 + $0x60] sm:$0xff]
    %v3447 = vld [vmem:[#allocation9 + $0x68] sm:$0xff]
    %v3448 = vld [vmem:[#allocation9 + $0x70] sm:$0xff]
    %v3449 = vld [vmem:[#allocation9 + $0x78] sm:$0xff]
    %v3450 = vld [vmem:[#allocation9 + $0x80] sm:$0xff]
    %v3451 = vld [vmem:[#allocation9 + $0x88] sm:$0xff]
    %v3452 = vld [vmem:[#allocation9 + $0x90] sm:$0xff]
    %v3453 = vld [vmem:[#allocation9 + $0x98] sm:$0xff]
    %v3454 = vld [vmem:[#allocation9 + $0xa0] sm:$0xff]
    %v3455 = vld [vmem:[#allocation9 + $0xa8] sm:$0xff]
    %v3456 = vld [vmem:[#allocation9 + $0xb0] sm:$0xff]
    %v3457 = vld [vmem:[#allocation9 + $0xb8] sm:$0xff]
    %v3458 = vld [vmem:[#allocation9 + $0xc0] sm:$0xff]
    %v3459 = vld [vmem:[#allocation9 + $0xc8] sm:$0xff]
    %v3460 = vld [vmem:[#allocation9 + $0xd0] sm:$0xff]
    %v3461 = vld [vmem:[#allocation9 + $0xd8] sm:$0xff]
    %v3462 = vld [vmem:[#allocation9 + $0xe0] sm:$0xff]
    %v3463 = vld [vmem:[#allocation9 + $0xe8] sm:$0xff]
    %v3464 = vld [vmem:[#allocation9 + $0xf0] sm:$0xff]
    %v3465 = vld [vmem:[#allocation9 + $0xf8] sm:$0xff]
    %v3466 = vld [vmem:[#allocation9 + $0x100] sm:$0xff]
    %v3467 = vld [vmem:[#allocation9 + $0x108] sm:$0xff]
    %v3468 = vld [vmem:[#allocation9 + $0x110] sm:$0xff]
    %v3469 = vld [vmem:[#allocation9 + $0x118] sm:$0xff]
    %v3470 = vld [vmem:[#allocation9 + $0x120] sm:$0xff]
    %v3471 = vld [vmem:[#allocation9 + $0x128] sm:$0xff]
    %v3472 = vld [vmem:[#allocation9 + $0x130] sm:$0xff]
    %v3473 = vld [vmem:[#allocation9 + $0x138] sm:$0xff]
    %v3474 = vld [vmem:[#allocation9 + $0x140] sm:$0xff]
    %v3475 = vld [vmem:[#allocation9 + $0x148] sm:$0xff]
    %v3476 = vld [vmem:[#allocation9 + $0x150] sm:$0xff]
    %v3477 = vld [vmem:[#allocation9 + $0x158] sm:$0xff]
    %v3478 = vld [vmem:[#allocation9 + $0x160] sm:$0xff]
    %v3479 = vld [vmem:[#allocation9 + $0x168] sm:$0xff]
    %v3480 = vld [vmem:[#allocation9 + $0x170] sm:$0xff]
    %v3481 = vld [vmem:[#allocation9 + $0x178] sm:$0xff]
    %v3482 = vld [vmem:[#allocation9 + $0x180] sm:$0xff]
    %v3483 = vld [vmem:[#allocation9 + $0x188] sm:$0xff]
    %v3484 = vld [vmem:[#allocation9 + $0x190] sm:$0xff]
    %v3485 = vld [vmem:[#allocation9 + $0x198] sm:$0xff]
    %v3486 = vld [vmem:[#allocation9 + $0x1a0] sm:$0xff]
    %v3487 = vld [vmem:[#allocation9 + $0x1a8] sm:$0xff]
    %v3488 = vld [vmem:[#allocation9 + $0x1b0] sm:$0xff]
    %v3489 = vld [vmem:[#allocation9 + $0x1b8] sm:$0xff]
    %v3490 = vld [vmem:[#allocation9 + $0x1c0] sm:$0xff]
    %v3491 = vld [vmem:[#allocation9 + $0x1c8] sm:$0xff]
    %v3492 = vld [vmem:[#allocation9 + $0x1d0] sm:$0xff]
    %v3493 = vld [vmem:[#allocation9 + $0x1d8] sm:$0xff]
    %v3494 = vld [vmem:[#allocation9 + $0x1e0] sm:$0xff]
    %v3495 = vld [vmem:[#allocation9 + $0x1e8] sm:$0xff]
    %v3496 = vld [vmem:[#allocation9 + $0x1f0] sm:$0xff]
    %v3497 = vld [vmem:[#allocation9 + $0x1f8] sm:$0xff]
    %v3498 = vld [vmem:[#allocation9 + $0x200] sm:$0xff]
    %v3499 = vld [vmem:[#allocation9 + $0x208] sm:$0xff]
    %v3500 = vld [vmem:[#allocation9 + $0x210] sm:$0xff]
    %v3501 = vld [vmem:[#allocation9 + $0x218] sm:$0xff]
    %v3502 = vld [vmem:[#allocation9 + $0x220] sm:$0xff]
    %v3503 = vld [vmem:[#allocation9 + $0x228] sm:$0xff]
    %v3504 = vld [vmem:[#allocation9 + $0x230] sm:$0xff]
    %v3505 = vld [vmem:[#allocation9 + $0x238] sm:$0xff]
    %v3506 = vld [vmem:[#allocation9 + $0x240] sm:$0xff]
    %v3507 = vld [vmem:[#allocation9 + $0x248] sm:$0xff]
    %v3508 = vld [vmem:[#allocation9 + $0x250] sm:$0xff]
    %v3509 = vld [vmem:[#allocation9 + $0x258] sm:$0xff]
    %v3510 = vld [vmem:[#allocation9 + $0x260] sm:$0xff]
    %v3511 = vld [vmem:[#allocation9 + $0x268] sm:$0xff]
    %v3512 = vld [vmem:[#allocation9 + $0x270] sm:$0xff]
    %v3513 = vld [vmem:[#allocation9 + $0x278] sm:$0xff]
    %v3514 = vld [vmem:[#allocation9 + $0x280] sm:$0xff]
    %v3515 = vld [vmem:[#allocation9 + $0x288] sm:$0xff]
    %v3516 = vld [vmem:[#allocation9 + $0x290] sm:$0xff]
    %v3517 = vld [vmem:[#allocation9 + $0x298] sm:$0xff]
    %v3518 = vld [vmem:[#allocation9 + $0x2a0] sm:$0xff]
    %v3519 = vld [vmem:[#allocation9 + $0x2a8] sm:$0xff]
    %v3520 = vld [vmem:[#allocation9 + $0x2b0] sm:$0xff]
    %v3521 = vld [vmem:[#allocation9 + $0x2b8] sm:$0xff]
    %v3522 = vld [vmem:[#allocation9 + $0x2c0] sm:$0xff]
    %v3523 = vld [vmem:[#allocation9 + $0x2c8] sm:$0xff]
    %v3524 = vld [vmem:[#allocation9 + $0x2d0] sm:$0xff]
    %v3525 = vld [vmem:[#allocation9 + $0x2d8] sm:$0xff]
    %v3526 = vld [vmem:[#allocation9 + $0x2e0] sm:$0xff]
    %v3527 = vld [vmem:[#allocation9 + $0x2e8] sm:$0xff]
    %v3528 = vld [vmem:[#allocation9 + $0x2f0] sm:$0xff]
    %v3529 = vld [vmem:[#allocation9 + $0x2f8] sm:$0xff]
    %v3530 = vld [vmem:[#allocation9 + $0x300] sm:$0xff]
    %v3531 = vld [vmem:[#allocation9 + $0x308] sm:$0xff]
    %v3532 = vld [vmem:[#allocation9 + $0x310] sm:$0xff]
    %v3533 = vld [vmem:[#allocation9 + $0x318] sm:$0xff]
    %v3534 = vld [vmem:[#allocation9 + $0x320] sm:$0xff]
    %v3535 = vld [vmem:[#allocation9 + $0x328] sm:$0xff]
    %v3536 = vld [vmem:[#allocation9 + $0x330] sm:$0xff]
    %v3537 = vld [vmem:[#allocation9 + $0x338] sm:$0xff]
    %v3538 = vld [vmem:[#allocation9 + $0x340] sm:$0xff]
    %v3539 = vld [vmem:[#allocation9 + $0x348] sm:$0xff]
    %v3540 = vld [vmem:[#allocation9 + $0x350] sm:$0xff]
    %v3541 = vld [vmem:[#allocation9 + $0x358] sm:$0xff]
    %v3542 = vld [vmem:[#allocation9 + $0x360] sm:$0xff]
    %v3543 = vld [vmem:[#allocation9 + $0x368] sm:$0xff]
    %v3544 = vld [vmem:[#allocation9 + $0x370] sm:$0xff]
    %v3545 = vld [vmem:[#allocation9 + $0x378] sm:$0xff]
    %v3546 = vld [vmem:[#allocation9 + $0x380] sm:$0xff]
    %v3547 = vld [vmem:[#allocation9 + $0x388] sm:$0xff]
    %v3548 = vld [vmem:[#allocation9 + $0x390] sm:$0xff]
    %v3549 = vld [vmem:[#allocation9 + $0x398] sm:$0xff]
    %v3550 = vld [vmem:[#allocation9 + $0x3a0] sm:$0xff]
    %v3551 = vld [vmem:[#allocation9 + $0x3a8] sm:$0xff]
    %v3552 = vld [vmem:[#allocation9 + $0x3b0] sm:$0xff]
    %v3553 = vld [vmem:[#allocation9 + $0x3b8] sm:$0xff]
    %v3554 = vld [vmem:[#allocation9 + $0x3c0] sm:$0xff]
    %v3555 = vld [vmem:[#allocation9 + $0x3c8] sm:$0xff]
    %v3556 = vld [vmem:[#allocation9 + $0x3d0] sm:$0xff]
    %v3557 = vld [vmem:[#allocation9 + $0x3d8] sm:$0xff]
    %v3558 = vld [vmem:[#allocation9 + $0x3e0] sm:$0xff]
    %v3559 = vld [vmem:[#allocation9 + $0x3e8] sm:$0xff]
    %v3560 = vld [vmem:[#allocation9 + $0x3f0] sm:$0xff]
    %v3561 = vld [vmem:[#allocation9 + $0x3f8] sm:$0xff]
    %v3562 = vld [vmem:[#allocation9 + $0x400] sm:$0xff]
    %v3563 = vld [vmem:[#allocation9 + $0x408] sm:$0xff]
    %v3564 = vld [vmem:[#allocation9 + $0x410] sm:$0xff]
    %v3565 = vld [vmem:[#allocation9 + $0x418] sm:$0xff]
    %v3566 = vld [vmem:[#allocation9 + $0x420] sm:$0xff]
    %v3567 = vld [vmem:[#allocation9 + $0x428] sm:$0xff]
    %v3568 = vld [vmem:[#allocation9 + $0x430] sm:$0xff]
    %v3569 = vld [vmem:[#allocation9 + $0x438] sm:$0xff]
    %v3570 = vld [vmem:[#allocation9 + $0x440] sm:$0xff]
    %v3571 = vld [vmem:[#allocation9 + $0x448] sm:$0xff]
    %v3572 = vld [vmem:[#allocation9 + $0x450] sm:$0xff]
    %v3573 = vld [vmem:[#allocation9 + $0x458] sm:$0xff]
    %v3574 = vld [vmem:[#allocation9 + $0x460] sm:$0xff]
    %v3575 = vld [vmem:[#allocation9 + $0x468] sm:$0xff]
    %v3576 = vld [vmem:[#allocation9 + $0x470] sm:$0xff]
    %v3577 = vld [vmem:[#allocation9 + $0x478] sm:$0xff]
    %v3578 = vld [vmem:[#allocation9 + $0x480] sm:$0xff]
    %v3579 = vld [vmem:[#allocation9 + $0x488] sm:$0xff]
    %v3580 = vld [vmem:[#allocation9 + $0x490] sm:$0xff]
    %v3581 = vld [vmem:[#allocation9 + $0x498] sm:$0xff]
    %v3582 = vld [vmem:[#allocation9 + $0x4a0] sm:$0xff]
    %v3583 = vld [vmem:[#allocation9 + $0x4a8] sm:$0xff]
    %v3584 = vld [vmem:[#allocation9 + $0x4b0] sm:$0xff]
    %v3585 = vld [vmem:[#allocation9 + $0x4b8] sm:$0xff]
    %v3586 = vld [vmem:[#allocation9 + $0x4c0] sm:$0xff]
    %v3587 = vld [vmem:[#allocation9 + $0x4c8] sm:$0xff]
    %v3588 = vld [vmem:[#allocation9 + $0x4d0] sm:$0xff]
    %v3589 = vld [vmem:[#allocation9 + $0x4d8] sm:$0xff]
    %v3590 = vld [vmem:[#allocation9 + $0x4e0] sm:$0xff]
    %v3591 = vld [vmem:[#allocation9 + $0x4e8] sm:$0xff]
    %v3592 = vld [vmem:[#allocation9 + $0x4f0] sm:$0xff]
    %v3593 = vld [vmem:[#allocation9 + $0x4f8] sm:$0xff]
    %v3594 = vld [vmem:[#allocation9 + $0x500] sm:$0xff]
    %v3595 = vld [vmem:[#allocation9 + $0x508] sm:$0xff]
    %v3596 = vld [vmem:[#allocation9 + $0x510] sm:$0xff]
    %v3597 = vld [vmem:[#allocation9 + $0x518] sm:$0xff]
    %v3598 = vld [vmem:[#allocation9 + $0x520] sm:$0xff]
    %v3599 = vld [vmem:[#allocation9 + $0x528] sm:$0xff]
    %v3600 = vld [vmem:[#allocation9 + $0x530] sm:$0xff]
    %v3601 = vld [vmem:[#allocation9 + $0x538] sm:$0xff]
    %v3602 = vld [vmem:[#allocation9 + $0x540] sm:$0xff]
    %v3603 = vld [vmem:[#allocation9 + $0x548] sm:$0xff]
    %v3604 = vld [vmem:[#allocation9 + $0x550] sm:$0xff]
    %v3605 = vld [vmem:[#allocation9 + $0x558] sm:$0xff]
    %v3606 = vld [vmem:[#allocation9 + $0x560] sm:$0xff]
    %v3607 = vld [vmem:[#allocation9 + $0x568] sm:$0xff]
    %v3608 = vld [vmem:[#allocation9 + $0x570] sm:$0xff]
    %v3609 = vld [vmem:[#allocation9 + $0x578] sm:$0xff]
    %v3610 = vld [vmem:[#allocation9 + $0x580] sm:$0xff]
    %v3611 = vld [vmem:[#allocation9 + $0x588] sm:$0xff]
    %v3612 = vld [vmem:[#allocation9 + $0x590] sm:$0xff]
    %v3613 = vld [vmem:[#allocation9 + $0x598] sm:$0xff]
    %v3614 = vld [vmem:[#allocation9 + $0x5a0] sm:$0xff]
    %v3615 = vld [vmem:[#allocation9 + $0x5a8] sm:$0xff]
    %v3616 = vld [vmem:[#allocation9 + $0x5b0] sm:$0xff]
    %v3617 = vld [vmem:[#allocation9 + $0x5b8] sm:$0xff]
    %v3618 = vld [vmem:[#allocation9 + $0x5c0] sm:$0xff]
    %v3619 = vld [vmem:[#allocation9 + $0x5c8] sm:$0xff]
    %v3620 = vld [vmem:[#allocation9 + $0x5d0] sm:$0xff]
    %v3621 = vld [vmem:[#allocation9 + $0x5d8] sm:$0xff]
    %v3622 = vld [vmem:[#allocation9 + $0x5e0] sm:$0xff]
    %v3623 = vld [vmem:[#allocation9 + $0x5e8] sm:$0xff]
    %v3624 = vld [vmem:[#allocation9 + $0x5f0] sm:$0xff]
    %v3625 = vld [vmem:[#allocation9 + $0x5f8] sm:$0xff]
    %v3626 = vld [vmem:[#allocation9 + $0x600] sm:$0xff]
    %v3627 = vld [vmem:[#allocation9 + $0x608] sm:$0xff]
    %v3628 = vld [vmem:[#allocation9 + $0x610] sm:$0xff]
    %v3629 = vld [vmem:[#allocation9 + $0x618] sm:$0xff]
    %v3630 = vld [vmem:[#allocation9 + $0x620] sm:$0xff]
    %v3631 = vld [vmem:[#allocation9 + $0x628] sm:$0xff]
    %v3632 = vld [vmem:[#allocation9 + $0x630] sm:$0xff]
    %v3633 = vld [vmem:[#allocation9 + $0x638] sm:$0xff]
    %v3634 = vld [vmem:[#allocation9 + $0x640] sm:$0xff]
    %v3635 = vld [vmem:[#allocation9 + $0x648] sm:$0xff]
    %v3636 = vld [vmem:[#allocation9 + $0x650] sm:$0xff]
    %v3637 = vld [vmem:[#allocation9 + $0x658] sm:$0xff]
    %v3638 = vld [vmem:[#allocation9 + $0x660] sm:$0xff]
    %v3639 = vld [vmem:[#allocation9 + $0x668] sm:$0xff]
    %v3640 = vld [vmem:[#allocation9 + $0x670] sm:$0xff]
    %v3641 = vld [vmem:[#allocation9 + $0x678] sm:$0xff]
    %v3642 = vld [vmem:[#allocation9 + $0x680] sm:$0xff]
    %v3643 = vld [vmem:[#allocation9 + $0x688] sm:$0xff]
    %v3644 = vld [vmem:[#allocation9 + $0x690] sm:$0xff]
    %v3645 = vld [vmem:[#allocation9 + $0x698] sm:$0xff]
    %v3646 = vld [vmem:[#allocation9 + $0x6a0] sm:$0xff]
    %v3647 = vld [vmem:[#allocation9 + $0x6a8] sm:$0xff]
    %v3648 = vld [vmem:[#allocation9 + $0x6b0] sm:$0xff]
    %v3649 = vld [vmem:[#allocation9 + $0x6b8] sm:$0xff]
    %v3650 = vld [vmem:[#allocation9 + $0x6c0] sm:$0xff]
    %v3651 = vld [vmem:[#allocation9 + $0x6c8] sm:$0xff]
    %v3652 = vld [vmem:[#allocation9 + $0x6d0] sm:$0xff]
    %v3653 = vld [vmem:[#allocation9 + $0x6d8] sm:$0xff]
    %v3654 = vld [vmem:[#allocation9 + $0x6e0] sm:$0xff]
    %v3655 = vld [vmem:[#allocation9 + $0x6e8] sm:$0xff]
    %v3656 = vld [vmem:[#allocation9 + $0x6f0] sm:$0xff]
    %v3657 = vld [vmem:[#allocation9 + $0x6f8] sm:$0xff]
    %v3658 = vld [vmem:[#allocation9 + $0x700] sm:$0xff]
    %v3659 = vld [vmem:[#allocation9 + $0x708] sm:$0xff]
    %v3660 = vld [vmem:[#allocation9 + $0x710] sm:$0xff]
    %v3661 = vld [vmem:[#allocation9 + $0x718] sm:$0xff]
    %v3662 = vld [vmem:[#allocation9 + $0x720] sm:$0xff]
    %v3663 = vld [vmem:[#allocation9 + $0x728] sm:$0xff]
    %v3664 = vld [vmem:[#allocation9 + $0x730] sm:$0xff]
    %v3665 = vld [vmem:[#allocation9 + $0x738] sm:$0xff]
    %v3666 = vld [vmem:[#allocation9 + $0x740] sm:$0xff]
    %v3667 = vld [vmem:[#allocation9 + $0x748] sm:$0xff]
    %v3668 = vld [vmem:[#allocation9 + $0x750] sm:$0xff]
    %v3669 = vld [vmem:[#allocation9 + $0x758] sm:$0xff]
    %v3670 = vld [vmem:[#allocation9 + $0x760] sm:$0xff]
    %v3671 = vld [vmem:[#allocation9 + $0x768] sm:$0xff]
    %v3672 = vld [vmem:[#allocation9 + $0x770] sm:$0xff]
    %v3673 = vld [vmem:[#allocation9 + $0x778] sm:$0xff]
    %v3674 = vld [vmem:[#allocation9 + $0x780] sm:$0xff]
    %v3675 = vld [vmem:[#allocation9 + $0x788] sm:$0xff]
    %v3676 = vld [vmem:[#allocation9 + $0x790] sm:$0xff]
    %v3677 = vld [vmem:[#allocation9 + $0x798] sm:$0xff]
    %v3678 = vld [vmem:[#allocation9 + $0x7a0] sm:$0xff]
    %v3679 = vld [vmem:[#allocation9 + $0x7a8] sm:$0xff]
    %v3680 = vld [vmem:[#allocation9 + $0x7b0] sm:$0xff]
    %v3681 = vld [vmem:[#allocation9 + $0x7b8] sm:$0xff]
    %v3682 = vld [vmem:[#allocation9 + $0x7c0] sm:$0xff]
    %v3683 = vld [vmem:[#allocation9 + $0x7c8] sm:$0xff]
    %v3684 = vld [vmem:[#allocation9 + $0x7d0] sm:$0xff]
    %v3685 = vld [vmem:[#allocation9 + $0x7d8] sm:$0xff]
    %v3686 = vld [vmem:[#allocation9 + $0x7e0] sm:$0xff]
    %v3687 = vld [vmem:[#allocation9 + $0x7e8] sm:$0xff]
    %v3688 = vld [vmem:[#allocation9 + $0x7f0] sm:$0xff]
    %v3689 = vld [vmem:[#allocation9 + $0x7f8] sm:$0xff]
    %v3690 = vld [vmem:[%s8] sm:$0xff]
    %v3692 = vperm.slane %v3690, 0
    %v3693 = vperm.slane %v3690, 1
    %v3694 = vperm.slane %v3690, 2
    %v3695 = vperm.slane %v3690, 3
    %v3696 = vperm.slane %v3690, 4
    %v3697 = vperm.slane %v3690, 5
    %v3698 = vperm.slane %v3690, 6
    %v3699 = vperm.slane %v3690, 7
    %3708 = vmatpush.msra.mxu0 %v3554
    %3709 = vmatpush.msra.mxu0 %v3546
    %3710 = vmatpush.msra.mxu0 %v3538
    %3711 = vmatpush.msra.mxu0 %v3530
    %3712 = vmatpush.msra.mxu0 %v3522
    %3713 = vmatpush.msra.mxu0 %v3514
    %3714 = vmatpush.msra.mxu0 %v3506
    %3715 = vmatpush.msra.mxu0 %v3498
    %3716 = vmatpush.msra.mxu0 %v3490
    %3717 = vmatpush.msra.mxu0 %v3482
    %3718 = vmatpush.msra.mxu0 %v3474
    %3719 = vmatpush.msra.mxu0 %v3466
    %3720 = vmatpush.msra.mxu0 %v3458
    %3721 = vmatpush.msra.mxu0 %v3450
    %3722 = vmatpush.msra.mxu0 %v3442
    %3723 = vmatpush.msra.mxu0 %v3434
    %3724 = vmatmul.f32.gmra.mxu0 %v3430
    %v3725 = vpop.f32.mrf.mxu0
    %v3726 = vadd.f32 %v3692, %v3725
    %3727 = vdwg.mxu0
    %3728 = vmatpush.msra.mxu0 %v3682
    %3729 = vmatpush.msra.mxu0 %v3674
    %3730 = vmatpush.msra.mxu0 %v3666
    %3731 = vmatpush.msra.mxu0 %v3658
    %3732 = vmatpush.msra.mxu0 %v3650
    %3733 = vmatpush.msra.mxu0 %v3642
    %3734 = vmatpush.msra.mxu0 %v3634
    %3735 = vmatpush.msra.mxu0 %v3626
    %3736 = vmatpush.msra.mxu0 %v3618
    %3737 = vmatpush.msra.mxu0 %v3610
    %3738 = vmatpush.msra.mxu0 %v3602
    %3739 = vmatpush.msra.mxu0 %v3594
    %3740 = vmatpush.msra.mxu0 %v3586
    %3741 = vmatpush.msra.mxu0 %v3578
    %3742 = vmatpush.msra.mxu0 %v3570
    %3743 = vmatpush.msra.mxu0 %v3562
    %3744 = vmatmul.f32.gmra.mxu0 %v3431
    %v3745 = vpop.f32.mrf.mxu0
    %v3746 = vadd.f32 %v3726, %v3745
    %3747 = vdwg.mxu0
    %3748 = vmatpush.msra.mxu0 %v3555
    %3749 = vmatpush.msra.mxu0 %v3547
    %3750 = vmatpush.msra.mxu0 %v3539
    %3751 = vmatpush.msra.mxu0 %v3531
    %3752 = vmatpush.msra.mxu0 %v3523
    %3753 = vmatpush.msra.mxu0 %v3515
    %3754 = vmatpush.msra.mxu0 %v3507
    %3755 = vmatpush.msra.mxu0 %v3499
    %3756 = vmatpush.msra.mxu0 %v3491
    %3757 = vmatpush.msra.mxu0 %v3483
    %3758 = vmatpush.msra.mxu0 %v3475
    %3759 = vmatpush.msra.mxu0 %v3467
    %3760 = vmatpush.msra.mxu0 %v3459
    %3761 = vmatpush.msra.mxu0 %v3451
    %3762 = vmatpush.msra.mxu0 %v3443
    %3763 = vmatpush.msra.mxu0 %v3435
    %3764 = vmatmul.f32.gmra.mxu0 %v3430
    %v3765 = vpop.f32.mrf.mxu0
    %v3766 = vadd.f32 %v3693, %v3765
    %3767 = vdwg.mxu0
    %3768 = vmatpush.msra.mxu0 %v3683
    %3769 = vmatpush.msra.mxu0 %v3675
    %3770 = vmatpush.msra.mxu0 %v3667
    %3771 = vmatpush.msra.mxu0 %v3659
    %3772 = vmatpush.msra.mxu0 %v3651
    %3773 = vmatpush.msra.mxu0 %v3643
    %3774 = vmatpush.msra.mxu0 %v3635
    %3775 = vmatpush.msra.mxu0 %v3627
    %3776 = vmatpush.msra.mxu0 %v3619
    %3777 = vmatpush.msra.mxu0 %v3611
    %3778 = vmatpush.msra.mxu0 %v3603
    %3779 = vmatpush.msra.mxu0 %v3595
    %3780 = vmatpush.msra.mxu0 %v3587
    %3781 = vmatpush.msra.mxu0 %v3579
    %3782 = vmatpush.msra.mxu0 %v3571
    %3783 = vmatpush.msra.mxu0 %v3563
    %3784 = vmatmul.f32.gmra.mxu0 %v3431
    %v3785 = vpop.f32.mrf.mxu0
    %v3786 = vadd.f32 %v3766, %v3785
    %3787 = vdwg.mxu0
    %3788 = vmatpush.msra.mxu0 %v3556
    %3789 = vmatpush.msra.mxu0 %v3548
    %3790 = vmatpush.msra.mxu0 %v3540
    %3791 = vmatpush.msra.mxu0 %v3532
    %3792 = vmatpush.msra.mxu0 %v3524
    %3793 = vmatpush.msra.mxu0 %v3516
    %3794 = vmatpush.msra.mxu0 %v3508
    %3795 = vmatpush.msra.mxu0 %v3500
    %3796 = vmatpush.msra.mxu0 %v3492
    %3797 = vmatpush.msra.mxu0 %v3484
    %3798 = vmatpush.msra.mxu0 %v3476
    %3799 = vmatpush.msra.mxu0 %v3468
    %3800 = vmatpush.msra.mxu0 %v3460
    %3801 = vmatpush.msra.mxu0 %v3452
    %3802 = vmatpush.msra.mxu0 %v3444
    %3803 = vmatpush.msra.mxu0 %v3436
    %3804 = vmatmul.f32.gmra.mxu0 %v3430
    %v3805 = vpop.f32.mrf.mxu0
    %v3806 = vadd.f32 %v3694, %v3805
    %3807 = vdwg.mxu0
    %3808 = vmatpush.msra.mxu0 %v3684
    %3809 = vmatpush.msra.mxu0 %v3676
    %3810 = vmatpush.msra.mxu0 %v3668
    %3811 = vmatpush.msra.mxu0 %v3660
    %3812 = vmatpush.msra.mxu0 %v3652
    %3813 = vmatpush.msra.mxu0 %v3644
    %3814 = vmatpush.msra.mxu0 %v3636
    %3815 = vmatpush.msra.mxu0 %v3628
    %3816 = vmatpush.msra.mxu0 %v3620
    %3817 = vmatpush.msra.mxu0 %v3612
    %3818 = vmatpush.msra.mxu0 %v3604
    %3819 = vmatpush.msra.mxu0 %v3596
    %3820 = vmatpush.msra.mxu0 %v3588
    %3821 = vmatpush.msra.mxu0 %v3580
    %3822 = vmatpush.msra.mxu0 %v3572
    %3823 = vmatpush.msra.mxu0 %v3564
    %3824 = vmatmul.f32.gmra.mxu0 %v3431
    %v3825 = vpop.f32.mrf.mxu0
    %v3826 = vadd.f32 %v3806, %v3825
    %3827 = vdwg.mxu0
    %3828 = vmatpush.msra.mxu0 %v3557
    %3829 = vmatpush.msra.mxu0 %v3549
    %3830 = vmatpush.msra.mxu0 %v3541
    %3831 = vmatpush.msra.mxu0 %v3533
    %3832 = vmatpush.msra.mxu0 %v3525
    %3833 = vmatpush.msra.mxu0 %v3517
    %3834 = vmatpush.msra.mxu0 %v3509
    %3835 = vmatpush.msra.mxu0 %v3501
    %3836 = vmatpush.msra.mxu0 %v3493
    %3837 = vmatpush.msra.mxu0 %v3485
    %3838 = vmatpush.msra.mxu0 %v3477
    %3839 = vmatpush.msra.mxu0 %v3469
    %3840 = vmatpush.msra.mxu0 %v3461
    %3841 = vmatpush.msra.mxu0 %v3453
    %3842 = vmatpush.msra.mxu0 %v3445
    %3843 = vmatpush.msra.mxu0 %v3437
    %3844 = vmatmul.f32.gmra.mxu0 %v3430
    %v3845 = vpop.f32.mrf.mxu0
    %v3846 = vadd.f32 %v3695, %v3845
    %3847 = vdwg.mxu0
    %3848 = vmatpush.msra.mxu0 %v3685
    %3849 = vmatpush.msra.mxu0 %v3677
    %3850 = vmatpush.msra.mxu0 %v3669
    %3851 = vmatpush.msra.mxu0 %v3661
    %3852 = vmatpush.msra.mxu0 %v3653
    %3853 = vmatpush.msra.mxu0 %v3645
    %3854 = vmatpush.msra.mxu0 %v3637
    %3855 = vmatpush.msra.mxu0 %v3629
    %3856 = vmatpush.msra.mxu0 %v3621
    %3857 = vmatpush.msra.mxu0 %v3613
    %3858 = vmatpush.msra.mxu0 %v3605
    %3859 = vmatpush.msra.mxu0 %v3597
    %3860 = vmatpush.msra.mxu0 %v3589
    %3861 = vmatpush.msra.mxu0 %v3581
    %3862 = vmatpush.msra.mxu0 %v3573
    %3863 = vmatpush.msra.mxu0 %v3565
    %3864 = vmatmul.f32.gmra.mxu0 %v3431
    %v3865 = vpop.f32.mrf.mxu0
    %v3866 = vadd.f32 %v3846, %v3865
    %3867 = vdwg.mxu0
    %3868 = vmatpush.msra.mxu0 %v3558
    %3869 = vmatpush.msra.mxu0 %v3550
    %3870 = vmatpush.msra.mxu0 %v3542
    %3871 = vmatpush.msra.mxu0 %v3534
    %3872 = vmatpush.msra.mxu0 %v3526
    %3873 = vmatpush.msra.mxu0 %v3518
    %3874 = vmatpush.msra.mxu0 %v3510
    %3875 = vmatpush.msra.mxu0 %v3502
    %3876 = vmatpush.msra.mxu0 %v3494
    %3877 = vmatpush.msra.mxu0 %v3486
    %3878 = vmatpush.msra.mxu0 %v3478
    %3879 = vmatpush.msra.mxu0 %v3470
    %3880 = vmatpush.msra.mxu0 %v3462
    %3881 = vmatpush.msra.mxu0 %v3454
    %3882 = vmatpush.msra.mxu0 %v3446
    %3883 = vmatpush.msra.mxu0 %v3438
    %3884 = vmatmul.f32.gmra.mxu0 %v3430
    %v3885 = vpop.f32.mrf.mxu0
    %v3886 = vadd.f32 %v3696, %v3885
    %3887 = vdwg.mxu0
    %3888 = vmatpush.msra.mxu0 %v3686
    %3889 = vmatpush.msra.mxu0 %v3678
    %3890 = vmatpush.msra.mxu0 %v3670
    %3891 = vmatpush.msra.mxu0 %v3662
    %3892 = vmatpush.msra.mxu0 %v3654
    %3893 = vmatpush.msra.mxu0 %v3646
    %3894 = vmatpush.msra.mxu0 %v3638
    %3895 = vmatpush.msra.mxu0 %v3630
    %3896 = vmatpush.msra.mxu0 %v3622
    %3897 = vmatpush.msra.mxu0 %v3614
    %3898 = vmatpush.msra.mxu0 %v3606
    %3899 = vmatpush.msra.mxu0 %v3598
    %3900 = vmatpush.msra.mxu0 %v3590
    %3901 = vmatpush.msra.mxu0 %v3582
    %3902 = vmatpush.msra.mxu0 %v3574
    %3903 = vmatpush.msra.mxu0 %v3566
    %3904 = vmatmul.f32.gmra.mxu0 %v3431
    %v3905 = vpop.f32.mrf.mxu0
    %v3906 = vadd.f32 %v3886, %v3905
    %3907 = vdwg.mxu0
    %3908 = vmatpush.msra.mxu0 %v3559
    %3909 = vmatpush.msra.mxu0 %v3551
    %3910 = vmatpush.msra.mxu0 %v3543
    %3911 = vmatpush.msra.mxu0 %v3535
    %3912 = vmatpush.msra.mxu0 %v3527
    %3913 = vmatpush.msra.mxu0 %v3519
    %3914 = vmatpush.msra.mxu0 %v3511
    %3915 = vmatpush.msra.mxu0 %v3503
    %3916 = vmatpush.msra.mxu0 %v3495
    %3917 = vmatpush.msra.mxu0 %v3487
    %3918 = vmatpush.msra.mxu0 %v3479
    %3919 = vmatpush.msra.mxu0 %v3471
    %3920 = vmatpush.msra.mxu0 %v3463
    %3921 = vmatpush.msra.mxu0 %v3455
    %3922 = vmatpush.msra.mxu0 %v3447
    %3923 = vmatpush.msra.mxu0 %v3439
    %3924 = vmatmul.f32.gmra.mxu0 %v3430
    %v3925 = vpop.f32.mrf.mxu0
    %v3926 = vadd.f32 %v3697, %v3925
    %3927 = vdwg.mxu0
    %3928 = vmatpush.msra.mxu0 %v3687
    %3929 = vmatpush.msra.mxu0 %v3679
    %3930 = vmatpush.msra.mxu0 %v3671
    %3931 = vmatpush.msra.mxu0 %v3663
    %3932 = vmatpush.msra.mxu0 %v3655
    %3933 = vmatpush.msra.mxu0 %v3647
    %3934 = vmatpush.msra.mxu0 %v3639
    %3935 = vmatpush.msra.mxu0 %v3631
    %3936 = vmatpush.msra.mxu0 %v3623
    %3937 = vmatpush.msra.mxu0 %v3615
    %3938 = vmatpush.msra.mxu0 %v3607
    %3939 = vmatpush.msra.mxu0 %v3599
    %3940 = vmatpush.msra.mxu0 %v3591
    %3941 = vmatpush.msra.mxu0 %v3583
    %3942 = vmatpush.msra.mxu0 %v3575
    %3943 = vmatpush.msra.mxu0 %v3567
    %3944 = vmatmul.f32.gmra.mxu0 %v3431
    %v3945 = vpop.f32.mrf.mxu0
    %v3946 = vadd.f32 %v3926, %v3945
    %3947 = vdwg.mxu0
    %3948 = vmatpush.msra.mxu0 %v3560
    %3949 = vmatpush.msra.mxu0 %v3552
    %3950 = vmatpush.msra.mxu0 %v3544
    %3951 = vmatpush.msra.mxu0 %v3536
    %3952 = vmatpush.msra.mxu0 %v3528
    %3953 = vmatpush.msra.mxu0 %v3520
    %3954 = vmatpush.msra.mxu0 %v3512
    %3955 = vmatpush.msra.mxu0 %v3504
    %3956 = vmatpush.msra.mxu0 %v3496
    %3957 = vmatpush.msra.mxu0 %v3488
    %3958 = vmatpush.msra.mxu0 %v3480
    %3959 = vmatpush.msra.mxu0 %v3472
    %3960 = vmatpush.msra.mxu0 %v3464
    %3961 = vmatpush.msra.mxu0 %v3456
    %3962 = vmatpush.msra.mxu0 %v3448
    %3963 = vmatpush.msra.mxu0 %v3440
    %3964 = vmatmul.f32.gmra.mxu0 %v3430
    %v3965 = vpop.f32.mrf.mxu0
    %v3966 = vadd.f32 %v3698, %v3965
    %3967 = vdwg.mxu0
    %3968 = vmatpush.msra.mxu0 %v3688
    %3969 = vmatpush.msra.mxu0 %v3680
    %3970 = vmatpush.msra.mxu0 %v3672
    %3971 = vmatpush.msra.mxu0 %v3664
    %3972 = vmatpush.msra.mxu0 %v3656
    %3973 = vmatpush.msra.mxu0 %v3648
    %3974 = vmatpush.msra.mxu0 %v3640
    %3975 = vmatpush.msra.mxu0 %v3632
    %3976 = vmatpush.msra.mxu0 %v3624
    %3977 = vmatpush.msra.mxu0 %v3616
    %3978 = vmatpush.msra.mxu0 %v3608
    %3979 = vmatpush.msra.mxu0 %v3600
    %3980 = vmatpush.msra.mxu0 %v3592
    %3981 = vmatpush.msra.mxu0 %v3584
    %3982 = vmatpush.msra.mxu0 %v3576
    %3983 = vmatpush.msra.mxu0 %v3568
    %3984 = vmatmul.f32.gmra.mxu0 %v3431
    %v3985 = vpop.f32.mrf.mxu0
    %v3986 = vadd.f32 %v3966, %v3985
    %3987 = vdwg.mxu0
    %3988 = vmatpush.msra.mxu0 %v3561
    %3989 = vmatpush.msra.mxu0 %v3553
    %3990 = vmatpush.msra.mxu0 %v3545
    %3991 = vmatpush.msra.mxu0 %v3537
    %3992 = vmatpush.msra.mxu0 %v3529
    %3993 = vmatpush.msra.mxu0 %v3521
    %3994 = vmatpush.msra.mxu0 %v3513
    %3995 = vmatpush.msra.mxu0 %v3505
    %3996 = vmatpush.msra.mxu0 %v3497
    %3997 = vmatpush.msra.mxu0 %v3489
    %3998 = vmatpush.msra.mxu0 %v3481
    %3999 = vmatpush.msra.mxu0 %v3473
    %4000 = vmatpush.msra.mxu0 %v3465
    %4001 = vmatpush.msra.mxu0 %v3457
    %4002 = vmatpush.msra.mxu0 %v3449
    %4003 = vmatpush.msra.mxu0 %v3441
    %4004 = vmatmul.f32.gmra.mxu0 %v3430
    %v4005 = vpop.f32.mrf.mxu0
    %v4006 = vadd.f32 %v3699, %v4005
    %4007 = vdwg.mxu0
    %4008 = vmatpush.msra.mxu0 %v3689
    %4009 = vmatpush.msra.mxu0 %v3681
    %4010 = vmatpush.msra.mxu0 %v3673
    %4011 = vmatpush.msra.mxu0 %v3665
    %4012 = vmatpush.msra.mxu0 %v3657
    %4013 = vmatpush.msra.mxu0 %v3649
    %4014 = vmatpush.msra.mxu0 %v3641
    %4015 = vmatpush.msra.mxu0 %v3633
    %4016 = vmatpush.msra.mxu0 %v3625
    %4017 = vmatpush.msra.mxu0 %v3617
    %4018 = vmatpush.msra.mxu0 %v3609
    %4019 = vmatpush.msra.mxu0 %v3601
    %4020 = vmatpush.msra.mxu0 %v3593
    %4021 = vmatpush.msra.mxu0 %v3585
    %4022 = vmatpush.msra.mxu0 %v3577
    %4023 = vmatpush.msra.mxu0 %v3569
    %4024 = vmatmul.f32.gmra.mxu0 %v3431
    %v4025 = vpop.f32.mrf.mxu0
    %v4026 = vadd.f32 %v4006, %v4025
    %4027 = vdwg.mxu0
    %v4028 = vxor.u32 %v3746, 2147483648
    %v4029 = vxor.u32 %v3786, 2147483648
    %v4030 = vmul.f32 %v4028, 1.442695
    %v4031 = vpow.pop %v4030
    %v4032 = vmul.f32 %v4029, 1.442695
    %v4033 = vpow.pop %v4032
    %v4034 = vadd.f32 %v4031, 1.0
    %v4035 = vadd.f32 %v4033, 1.0
    %v4036 = vrcp.pop %v4034
    %v4037 = vmul.f32 %v4034, %v4036
    %v4038 = vsub.f32 1.0, %v4037
    %v4039 = vmul.f32 %v4036, %v4038
    %v4040 = vadd.f32 %v4036, %v4039
    %vm4041 = vweird.f32 %v4034
    %vm4042 = vweird.f32 %v4036
    %vm4043 = vmor %vm4041, %vm4042
    %v4044 = vsel %vm4043, %v4036, %v4040
    %v4045 = vand.u32 2147483647, %v4034
    %vm4046 = vcmp.eq.f32.partialorder %v4045, 8.507059e+37
    %v4047 = vand.u32 %v4034, 2147483648
    %v4048 = vor.u32 1.1754944e-38, %v4047
    %v4049 = vsel %vm4046, %v4048, %v4044
    %v4050 = vmul.f32 1.0, %v4049
    %v4051 = vrcp.pop %v4035
    %v4052 = vmul.f32 %v4035, %v4051
    %v4053 = vsub.f32 1.0, %v4052
    %v4054 = vmul.f32 %v4051, %v4053
    %v4055 = vadd.f32 %v4051, %v4054
    %vm4056 = vweird.f32 %v4035
    %vm4057 = vweird.f32 %v4051
    %vm4058 = vmor %vm4056, %vm4057
    %v4059 = vsel %vm4058, %v4051, %v4055
    %v4060 = vand.u32 2147483647, %v4035
    %vm4061 = vcmp.eq.f32.partialorder %v4060, 8.507059e+37
    %v4062 = vand.u32 %v4035, 2147483648
    %v4063 = vor.u32 1.1754944e-38, %v4062
    %v4064 = vsel %vm4061, %v4063, %v4059
    %v4065 = vmul.f32 1.0, %v4064
    %v4066 = vxor.u32 %v3826, 2147483648
    %v4067 = vxor.u32 %v3866, 2147483648
    %v4068 = vmul.f32 %v4066, 1.442695
    %v4069 = vpow.pop %v4068
    %v4070 = vmul.f32 %v4067, 1.442695
    %v4071 = vpow.pop %v4070
    %v4072 = vadd.f32 %v4069, 1.0
    %v4073 = vadd.f32 %v4071, 1.0
    %v4074 = vrcp.pop %v4072
    %v4075 = vmul.f32 %v4072, %v4074
    %v4076 = vsub.f32 1.0, %v4075
    %v4077 = vmul.f32 %v4074, %v4076
    %v4078 = vadd.f32 %v4074, %v4077
    %vm4079 = vweird.f32 %v4072
    %vm4080 = vweird.f32 %v4074
    %vm4081 = vmor %vm4079, %vm4080
    %v4082 = vsel %vm4081, %v4074, %v4078
    %v4083 = vand.u32 2147483647, %v4072
    %vm4084 = vcmp.eq.f32.partialorder %v4083, 8.507059e+37
    %v4085 = vand.u32 %v4072, 2147483648
    %v4086 = vor.u32 1.1754944e-38, %v4085
    %v4087 = vsel %vm4084, %v4086, %v4082
    %v4088 = vmul.f32 1.0, %v4087
    %v4089 = vrcp.pop %v4073
    %v4090 = vmul.f32 %v4073, %v4089
    %v4091 = vsub.f32 1.0, %v4090
    %v4092 = vmul.f32 %v4089, %v4091
    %v4093 = vadd.f32 %v4089, %v4092
    %vm4094 = vweird.f32 %v4073
    %vm4095 = vweird.f32 %v4089
    %vm4096 = vmor %vm4094, %vm4095
    %v4097 = vsel %vm4096, %v4089, %v4093
    %v4098 = vand.u32 2147483647, %v4073
    %vm4099 = vcmp.eq.f32.partialorder %v4098, 8.507059e+37
    %v4100 = vand.u32 %v4073, 2147483648
    %v4101 = vor.u32 1.1754944e-38, %v4100
    %v4102 = vsel %vm4099, %v4101, %v4097
    %v4103 = vmul.f32 1.0, %v4102
    %v4104 = vtanh.pop %v3906
    %v4105 = vtanh.pop %v3946
    %v4106 = vxor.u32 %v3986, 2147483648
    %v4107 = vxor.u32 %v4026, 2147483648
    %v4108 = vmul.f32 %v4106, 1.442695
    %v4109 = vpow.pop %v4108
    %v4110 = vmul.f32 %v4107, 1.442695
    %v4111 = vpow.pop %v4110
    %v4112 = vadd.f32 %v4109, 1.0
    %v4113 = vadd.f32 %v4111, 1.0
    %v4114 = vrcp.pop %v4112
    %v4115 = vmul.f32 %v4112, %v4114
    %v4116 = vsub.f32 1.0, %v4115
    %v4117 = vmul.f32 %v4114, %v4116
    %v4118 = vadd.f32 %v4114, %v4117
    %vm4119 = vweird.f32 %v4112
    %vm4120 = vweird.f32 %v4114
    %vm4121 = vmor %vm4119, %vm4120
    %v4122 = vsel %vm4121, %v4114, %v4118
    %v4123 = vand.u32 2147483647, %v4112
    %vm4124 = vcmp.eq.f32.partialorder %v4123, 8.507059e+37
    %v4125 = vand.u32 %v4112, 2147483648
    %v4126 = vor.u32 1.1754944e-38, %v4125
    %v4127 = vsel %vm4124, %v4126, %v4122
    %v4128 = vmul.f32 1.0, %v4127
    %v4129 = vrcp.pop %v4113
    %v4130 = vmul.f32 %v4113, %v4129
    %v4131 = vsub.f32 1.0, %v4130
    %v4132 = vmul.f32 %v4129, %v4131
    %v4133 = vadd.f32 %v4129, %v4132
    %vm4134 = vweird.f32 %v4113
    %vm4135 = vweird.f32 %v4129
    %vm4136 = vmor %vm4134, %vm4135
    %v4137 = vsel %vm4136, %v4129, %v4133
    %v4138 = vand.u32 2147483647, %v4113
    %vm4139 = vcmp.eq.f32.partialorder %v4138, 8.507059e+37
    %v4140 = vand.u32 %v4113, 2147483648
    %v4141 = vor.u32 1.1754944e-38, %v4140
    %v4142 = vsel %vm4139, %v4141, %v4137
    %v4143 = vmul.f32 1.0, %v4142
    %v4144 = vmul.f32 %v4088, %v3426
    %v4145 = vmul.f32 %v4103, %v3427
    %v4146 = vmul.f32 %v4050, %v4104
    %v4147 = vmul.f32 %v4065, %v4105
    %v4148 = vadd.f32 %v4144, %v4146
    %v4149 = vadd.f32 %v4145, %v4147
    %v4150 = vtanh.pop %v4148
    %v4151 = vtanh.pop %v4149
    %v4152 = vmul.f32 %v4128, %v4150
    %v4153 = vmul.f32 %v4143, %v4151
    %4154 = vst [vmem:[#allocation3 + $0x10] sm:$0xff] %v4152
    %4155 = vst [vmem:[#allocation3 + $0x18] sm:$0xff] %v4153
    %v4156 = vld [vmem:[#allocation9] sm:$0xff]
    %v4157 = vld [vmem:[#allocation9 + $0x8] sm:$0xff]
    %v4158 = vld [vmem:[#allocation9 + $0x10] sm:$0xff]
    %v4159 = vld [vmem:[#allocation9 + $0x18] sm:$0xff]
    %v4160 = vld [vmem:[#allocation9 + $0x20] sm:$0xff]
    %v4161 = vld [vmem:[#allocation9 + $0x28] sm:$0xff]
    %v4162 = vld [vmem:[#allocation9 + $0x30] sm:$0xff]
    %v4163 = vld [vmem:[#allocation9 + $0x38] sm:$0xff]
    %v4164 = vld [vmem:[#allocation9 + $0x40] sm:$0xff]
    %v4165 = vld [vmem:[#allocation9 + $0x48] sm:$0xff]
    %v4166 = vld [vmem:[#allocation9 + $0x50] sm:$0xff]
    %v4167 = vld [vmem:[#allocation9 + $0x58] sm:$0xff]
    %v4168 = vld [vmem:[#allocation9 + $0x60] sm:$0xff]
    %v4169 = vld [vmem:[#allocation9 + $0x68] sm:$0xff]
    %v4170 = vld [vmem:[#allocation9 + $0x70] sm:$0xff]
    %v4171 = vld [vmem:[#allocation9 + $0x78] sm:$0xff]
    %v4172 = vld [vmem:[#allocation9 + $0x80] sm:$0xff]
    %v4173 = vld [vmem:[#allocation9 + $0x88] sm:$0xff]
    %v4174 = vld [vmem:[#allocation9 + $0x90] sm:$0xff]
    %v4175 = vld [vmem:[#allocation9 + $0x98] sm:$0xff]
    %v4176 = vld [vmem:[#allocation9 + $0xa0] sm:$0xff]
    %v4177 = vld [vmem:[#allocation9 + $0xa8] sm:$0xff]
    %v4178 = vld [vmem:[#allocation9 + $0xb0] sm:$0xff]
    %v4179 = vld [vmem:[#allocation9 + $0xb8] sm:$0xff]
    %v4180 = vld [vmem:[#allocation9 + $0xc0] sm:$0xff]
    %v4181 = vld [vmem:[#allocation9 + $0xc8] sm:$0xff]
    %v4182 = vld [vmem:[#allocation9 + $0xd0] sm:$0xff]
    %v4183 = vld [vmem:[#allocation9 + $0xd8] sm:$0xff]
    %v4184 = vld [vmem:[#allocation9 + $0xe0] sm:$0xff]
    %v4185 = vld [vmem:[#allocation9 + $0xe8] sm:$0xff]
    %v4186 = vld [vmem:[#allocation9 + $0xf0] sm:$0xff]
    %v4187 = vld [vmem:[#allocation9 + $0xf8] sm:$0xff]
    %v4188 = vld [vmem:[#allocation9 + $0x100] sm:$0xff]
    %v4189 = vld [vmem:[#allocation9 + $0x108] sm:$0xff]
    %v4190 = vld [vmem:[#allocation9 + $0x110] sm:$0xff]
    %v4191 = vld [vmem:[#allocation9 + $0x118] sm:$0xff]
    %v4192 = vld [vmem:[#allocation9 + $0x120] sm:$0xff]
    %v4193 = vld [vmem:[#allocation9 + $0x128] sm:$0xff]
    %v4194 = vld [vmem:[#allocation9 + $0x130] sm:$0xff]
    %v4195 = vld [vmem:[#allocation9 + $0x138] sm:$0xff]
    %v4196 = vld [vmem:[#allocation9 + $0x140] sm:$0xff]
    %v4197 = vld [vmem:[#allocation9 + $0x148] sm:$0xff]
    %v4198 = vld [vmem:[#allocation9 + $0x150] sm:$0xff]
    %v4199 = vld [vmem:[#allocation9 + $0x158] sm:$0xff]
    %v4200 = vld [vmem:[#allocation9 + $0x160] sm:$0xff]
    %v4201 = vld [vmem:[#allocation9 + $0x168] sm:$0xff]
    %v4202 = vld [vmem:[#allocation9 + $0x170] sm:$0xff]
    %v4203 = vld [vmem:[#allocation9 + $0x178] sm:$0xff]
    %v4204 = vld [vmem:[#allocation9 + $0x180] sm:$0xff]
    %v4205 = vld [vmem:[#allocation9 + $0x188] sm:$0xff]
    %v4206 = vld [vmem:[#allocation9 + $0x190] sm:$0xff]
    %v4207 = vld [vmem:[#allocation9 + $0x198] sm:$0xff]
    %v4208 = vld [vmem:[#allocation9 + $0x1a0] sm:$0xff]
    %v4209 = vld [vmem:[#allocation9 + $0x1a8] sm:$0xff]
    %v4210 = vld [vmem:[#allocation9 + $0x1b0] sm:$0xff]
    %v4211 = vld [vmem:[#allocation9 + $0x1b8] sm:$0xff]
    %v4212 = vld [vmem:[#allocation9 + $0x1c0] sm:$0xff]
    %v4213 = vld [vmem:[#allocation9 + $0x1c8] sm:$0xff]
    %v4214 = vld [vmem:[#allocation9 + $0x1d0] sm:$0xff]
    %v4215 = vld [vmem:[#allocation9 + $0x1d8] sm:$0xff]
    %v4216 = vld [vmem:[#allocation9 + $0x1e0] sm:$0xff]
    %v4217 = vld [vmem:[#allocation9 + $0x1e8] sm:$0xff]
    %v4218 = vld [vmem:[#allocation9 + $0x1f0] sm:$0xff]
    %v4219 = vld [vmem:[#allocation9 + $0x1f8] sm:$0xff]
    %v4220 = vld [vmem:[#allocation9 + $0x200] sm:$0xff]
    %v4221 = vld [vmem:[#allocation9 + $0x208] sm:$0xff]
    %v4222 = vld [vmem:[#allocation9 + $0x210] sm:$0xff]
    %v4223 = vld [vmem:[#allocation9 + $0x218] sm:$0xff]
    %v4224 = vld [vmem:[#allocation9 + $0x220] sm:$0xff]
    %v4225 = vld [vmem:[#allocation9 + $0x228] sm:$0xff]
    %v4226 = vld [vmem:[#allocation9 + $0x230] sm:$0xff]
    %v4227 = vld [vmem:[#allocation9 + $0x238] sm:$0xff]
    %v4228 = vld [vmem:[#allocation9 + $0x240] sm:$0xff]
    %v4229 = vld [vmem:[#allocation9 + $0x248] sm:$0xff]
    %v4230 = vld [vmem:[#allocation9 + $0x250] sm:$0xff]
    %v4231 = vld [vmem:[#allocation9 + $0x258] sm:$0xff]
    %v4232 = vld [vmem:[#allocation9 + $0x260] sm:$0xff]
    %v4233 = vld [vmem:[#allocation9 + $0x268] sm:$0xff]
    %v4234 = vld [vmem:[#allocation9 + $0x270] sm:$0xff]
    %v4235 = vld [vmem:[#allocation9 + $0x278] sm:$0xff]
    %v4236 = vld [vmem:[#allocation9 + $0x280] sm:$0xff]
    %v4237 = vld [vmem:[#allocation9 + $0x288] sm:$0xff]
    %v4238 = vld [vmem:[#allocation9 + $0x290] sm:$0xff]
    %v4239 = vld [vmem:[#allocation9 + $0x298] sm:$0xff]
    %v4240 = vld [vmem:[#allocation9 + $0x2a0] sm:$0xff]
    %v4241 = vld [vmem:[#allocation9 + $0x2a8] sm:$0xff]
    %v4242 = vld [vmem:[#allocation9 + $0x2b0] sm:$0xff]
    %v4243 = vld [vmem:[#allocation9 + $0x2b8] sm:$0xff]
    %v4244 = vld [vmem:[#allocation9 + $0x2c0] sm:$0xff]
    %v4245 = vld [vmem:[#allocation9 + $0x2c8] sm:$0xff]
    %v4246 = vld [vmem:[#allocation9 + $0x2d0] sm:$0xff]
    %v4247 = vld [vmem:[#allocation9 + $0x2d8] sm:$0xff]
    %v4248 = vld [vmem:[#allocation9 + $0x2e0] sm:$0xff]
    %v4249 = vld [vmem:[#allocation9 + $0x2e8] sm:$0xff]
    %v4250 = vld [vmem:[#allocation9 + $0x2f0] sm:$0xff]
    %v4251 = vld [vmem:[#allocation9 + $0x2f8] sm:$0xff]
    %v4252 = vld [vmem:[#allocation9 + $0x300] sm:$0xff]
    %v4253 = vld [vmem:[#allocation9 + $0x308] sm:$0xff]
    %v4254 = vld [vmem:[#allocation9 + $0x310] sm:$0xff]
    %v4255 = vld [vmem:[#allocation9 + $0x318] sm:$0xff]
    %v4256 = vld [vmem:[#allocation9 + $0x320] sm:$0xff]
    %v4257 = vld [vmem:[#allocation9 + $0x328] sm:$0xff]
    %v4258 = vld [vmem:[#allocation9 + $0x330] sm:$0xff]
    %v4259 = vld [vmem:[#allocation9 + $0x338] sm:$0xff]
    %v4260 = vld [vmem:[#allocation9 + $0x340] sm:$0xff]
    %v4261 = vld [vmem:[#allocation9 + $0x348] sm:$0xff]
    %v4262 = vld [vmem:[#allocation9 + $0x350] sm:$0xff]
    %v4263 = vld [vmem:[#allocation9 + $0x358] sm:$0xff]
    %v4264 = vld [vmem:[#allocation9 + $0x360] sm:$0xff]
    %v4265 = vld [vmem:[#allocation9 + $0x368] sm:$0xff]
    %v4266 = vld [vmem:[#allocation9 + $0x370] sm:$0xff]
    %v4267 = vld [vmem:[#allocation9 + $0x378] sm:$0xff]
    %v4268 = vld [vmem:[#allocation9 + $0x380] sm:$0xff]
    %v4269 = vld [vmem:[#allocation9 + $0x388] sm:$0xff]
    %v4270 = vld [vmem:[#allocation9 + $0x390] sm:$0xff]
    %v4271 = vld [vmem:[#allocation9 + $0x398] sm:$0xff]
    %v4272 = vld [vmem:[#allocation9 + $0x3a0] sm:$0xff]
    %v4273 = vld [vmem:[#allocation9 + $0x3a8] sm:$0xff]
    %v4274 = vld [vmem:[#allocation9 + $0x3b0] sm:$0xff]
    %v4275 = vld [vmem:[#allocation9 + $0x3b8] sm:$0xff]
    %v4276 = vld [vmem:[#allocation9 + $0x3c0] sm:$0xff]
    %v4277 = vld [vmem:[#allocation9 + $0x3c8] sm:$0xff]
    %v4278 = vld [vmem:[#allocation9 + $0x3d0] sm:$0xff]
    %v4279 = vld [vmem:[#allocation9 + $0x3d8] sm:$0xff]
    %v4280 = vld [vmem:[#allocation9 + $0x3e0] sm:$0xff]
    %v4281 = vld [vmem:[#allocation9 + $0x3e8] sm:$0xff]
    %v4282 = vld [vmem:[#allocation9 + $0x3f0] sm:$0xff]
    %v4283 = vld [vmem:[#allocation9 + $0x3f8] sm:$0xff]
    %v4284 = vld [vmem:[#allocation9 + $0x400] sm:$0xff]
    %v4285 = vld [vmem:[#allocation9 + $0x408] sm:$0xff]
    %v4286 = vld [vmem:[#allocation9 + $0x410] sm:$0xff]
    %v4287 = vld [vmem:[#allocation9 + $0x418] sm:$0xff]
    %v4288 = vld [vmem:[#allocation9 + $0x420] sm:$0xff]
    %v4289 = vld [vmem:[#allocation9 + $0x428] sm:$0xff]
    %v4290 = vld [vmem:[#allocation9 + $0x430] sm:$0xff]
    %v4291 = vld [vmem:[#allocation9 + $0x438] sm:$0xff]
    %v4292 = vld [vmem:[#allocation9 + $0x440] sm:$0xff]
    %v4293 = vld [vmem:[#allocation9 + $0x448] sm:$0xff]
    %v4294 = vld [vmem:[#allocation9 + $0x450] sm:$0xff]
    %v4295 = vld [vmem:[#allocation9 + $0x458] sm:$0xff]
    %v4296 = vld [vmem:[#allocation9 + $0x460] sm:$0xff]
    %v4297 = vld [vmem:[#allocation9 + $0x468] sm:$0xff]
    %v4298 = vld [vmem:[#allocation9 + $0x470] sm:$0xff]
    %v4299 = vld [vmem:[#allocation9 + $0x478] sm:$0xff]
    %v4300 = vld [vmem:[#allocation9 + $0x480] sm:$0xff]
    %v4301 = vld [vmem:[#allocation9 + $0x488] sm:$0xff]
    %v4302 = vld [vmem:[#allocation9 + $0x490] sm:$0xff]
    %v4303 = vld [vmem:[#allocation9 + $0x498] sm:$0xff]
    %v4304 = vld [vmem:[#allocation9 + $0x4a0] sm:$0xff]
    %v4305 = vld [vmem:[#allocation9 + $0x4a8] sm:$0xff]
    %v4306 = vld [vmem:[#allocation9 + $0x4b0] sm:$0xff]
    %v4307 = vld [vmem:[#allocation9 + $0x4b8] sm:$0xff]
    %v4308 = vld [vmem:[#allocation9 + $0x4c0] sm:$0xff]
    %v4309 = vld [vmem:[#allocation9 + $0x4c8] sm:$0xff]
    %v4310 = vld [vmem:[#allocation9 + $0x4d0] sm:$0xff]
    %v4311 = vld [vmem:[#allocation9 + $0x4d8] sm:$0xff]
    %v4312 = vld [vmem:[#allocation9 + $0x4e0] sm:$0xff]
    %v4313 = vld [vmem:[#allocation9 + $0x4e8] sm:$0xff]
    %v4314 = vld [vmem:[#allocation9 + $0x4f0] sm:$0xff]
    %v4315 = vld [vmem:[#allocation9 + $0x4f8] sm:$0xff]
    %v4316 = vld [vmem:[#allocation9 + $0x500] sm:$0xff]
    %v4317 = vld [vmem:[#allocation9 + $0x508] sm:$0xff]
    %v4318 = vld [vmem:[#allocation9 + $0x510] sm:$0xff]
    %v4319 = vld [vmem:[#allocation9 + $0x518] sm:$0xff]
    %v4320 = vld [vmem:[#allocation9 + $0x520] sm:$0xff]
    %v4321 = vld [vmem:[#allocation9 + $0x528] sm:$0xff]
    %v4322 = vld [vmem:[#allocation9 + $0x530] sm:$0xff]
    %v4323 = vld [vmem:[#allocation9 + $0x538] sm:$0xff]
    %v4324 = vld [vmem:[#allocation9 + $0x540] sm:$0xff]
    %v4325 = vld [vmem:[#allocation9 + $0x548] sm:$0xff]
    %v4326 = vld [vmem:[#allocation9 + $0x550] sm:$0xff]
    %v4327 = vld [vmem:[#allocation9 + $0x558] sm:$0xff]
    %v4328 = vld [vmem:[#allocation9 + $0x560] sm:$0xff]
    %v4329 = vld [vmem:[#allocation9 + $0x568] sm:$0xff]
    %v4330 = vld [vmem:[#allocation9 + $0x570] sm:$0xff]
    %v4331 = vld [vmem:[#allocation9 + $0x578] sm:$0xff]
    %v4332 = vld [vmem:[#allocation9 + $0x580] sm:$0xff]
    %v4333 = vld [vmem:[#allocation9 + $0x588] sm:$0xff]
    %v4334 = vld [vmem:[#allocation9 + $0x590] sm:$0xff]
    %v4335 = vld [vmem:[#allocation9 + $0x598] sm:$0xff]
    %v4336 = vld [vmem:[#allocation9 + $0x5a0] sm:$0xff]
    %v4337 = vld [vmem:[#allocation9 + $0x5a8] sm:$0xff]
    %v4338 = vld [vmem:[#allocation9 + $0x5b0] sm:$0xff]
    %v4339 = vld [vmem:[#allocation9 + $0x5b8] sm:$0xff]
    %v4340 = vld [vmem:[#allocation9 + $0x5c0] sm:$0xff]
    %v4341 = vld [vmem:[#allocation9 + $0x5c8] sm:$0xff]
    %v4342 = vld [vmem:[#allocation9 + $0x5d0] sm:$0xff]
    %v4343 = vld [vmem:[#allocation9 + $0x5d8] sm:$0xff]
    %v4344 = vld [vmem:[#allocation9 + $0x5e0] sm:$0xff]
    %v4345 = vld [vmem:[#allocation9 + $0x5e8] sm:$0xff]
    %v4346 = vld [vmem:[#allocation9 + $0x5f0] sm:$0xff]
    %v4347 = vld [vmem:[#allocation9 + $0x5f8] sm:$0xff]
    %v4348 = vld [vmem:[#allocation9 + $0x600] sm:$0xff]
    %v4349 = vld [vmem:[#allocation9 + $0x608] sm:$0xff]
    %v4350 = vld [vmem:[#allocation9 + $0x610] sm:$0xff]
    %v4351 = vld [vmem:[#allocation9 + $0x618] sm:$0xff]
    %v4352 = vld [vmem:[#allocation9 + $0x620] sm:$0xff]
    %v4353 = vld [vmem:[#allocation9 + $0x628] sm:$0xff]
    %v4354 = vld [vmem:[#allocation9 + $0x630] sm:$0xff]
    %v4355 = vld [vmem:[#allocation9 + $0x638] sm:$0xff]
    %v4356 = vld [vmem:[#allocation9 + $0x640] sm:$0xff]
    %v4357 = vld [vmem:[#allocation9 + $0x648] sm:$0xff]
    %v4358 = vld [vmem:[#allocation9 + $0x650] sm:$0xff]
    %v4359 = vld [vmem:[#allocation9 + $0x658] sm:$0xff]
    %v4360 = vld [vmem:[#allocation9 + $0x660] sm:$0xff]
    %v4361 = vld [vmem:[#allocation9 + $0x668] sm:$0xff]
    %v4362 = vld [vmem:[#allocation9 + $0x670] sm:$0xff]
    %v4363 = vld [vmem:[#allocation9 + $0x678] sm:$0xff]
    %v4364 = vld [vmem:[#allocation9 + $0x680] sm:$0xff]
    %v4365 = vld [vmem:[#allocation9 + $0x688] sm:$0xff]
    %v4366 = vld [vmem:[#allocation9 + $0x690] sm:$0xff]
    %v4367 = vld [vmem:[#allocation9 + $0x698] sm:$0xff]
    %v4368 = vld [vmem:[#allocation9 + $0x6a0] sm:$0xff]
    %v4369 = vld [vmem:[#allocation9 + $0x6a8] sm:$0xff]
    %v4370 = vld [vmem:[#allocation9 + $0x6b0] sm:$0xff]
    %v4371 = vld [vmem:[#allocation9 + $0x6b8] sm:$0xff]
    %v4372 = vld [vmem:[#allocation9 + $0x6c0] sm:$0xff]
    %v4373 = vld [vmem:[#allocation9 + $0x6c8] sm:$0xff]
    %v4374 = vld [vmem:[#allocation9 + $0x6d0] sm:$0xff]
    %v4375 = vld [vmem:[#allocation9 + $0x6d8] sm:$0xff]
    %v4376 = vld [vmem:[#allocation9 + $0x6e0] sm:$0xff]
    %v4377 = vld [vmem:[#allocation9 + $0x6e8] sm:$0xff]
    %v4378 = vld [vmem:[#allocation9 + $0x6f0] sm:$0xff]
    %v4379 = vld [vmem:[#allocation9 + $0x6f8] sm:$0xff]
    %v4380 = vld [vmem:[#allocation9 + $0x700] sm:$0xff]
    %v4381 = vld [vmem:[#allocation9 + $0x708] sm:$0xff]
    %v4382 = vld [vmem:[#allocation9 + $0x710] sm:$0xff]
    %v4383 = vld [vmem:[#allocation9 + $0x718] sm:$0xff]
    %v4384 = vld [vmem:[#allocation9 + $0x720] sm:$0xff]
    %v4385 = vld [vmem:[#allocation9 + $0x728] sm:$0xff]
    %v4386 = vld [vmem:[#allocation9 + $0x730] sm:$0xff]
    %v4387 = vld [vmem:[#allocation9 + $0x738] sm:$0xff]
    %v4388 = vld [vmem:[#allocation9 + $0x740] sm:$0xff]
    %v4389 = vld [vmem:[#allocation9 + $0x748] sm:$0xff]
    %v4390 = vld [vmem:[#allocation9 + $0x750] sm:$0xff]
    %v4391 = vld [vmem:[#allocation9 + $0x758] sm:$0xff]
    %v4392 = vld [vmem:[#allocation9 + $0x760] sm:$0xff]
    %v4393 = vld [vmem:[#allocation9 + $0x768] sm:$0xff]
    %v4394 = vld [vmem:[#allocation9 + $0x770] sm:$0xff]
    %v4395 = vld [vmem:[#allocation9 + $0x778] sm:$0xff]
    %v4396 = vld [vmem:[#allocation9 + $0x780] sm:$0xff]
    %v4397 = vld [vmem:[#allocation9 + $0x788] sm:$0xff]
    %v4398 = vld [vmem:[#allocation9 + $0x790] sm:$0xff]
    %v4399 = vld [vmem:[#allocation9 + $0x798] sm:$0xff]
    %v4400 = vld [vmem:[#allocation9 + $0x7a0] sm:$0xff]
    %v4401 = vld [vmem:[#allocation9 + $0x7a8] sm:$0xff]
    %v4402 = vld [vmem:[#allocation9 + $0x7b0] sm:$0xff]
    %v4403 = vld [vmem:[#allocation9 + $0x7b8] sm:$0xff]
    %v4404 = vld [vmem:[#allocation9 + $0x7c0] sm:$0xff]
    %v4405 = vld [vmem:[#allocation9 + $0x7c8] sm:$0xff]
    %v4406 = vld [vmem:[#allocation9 + $0x7d0] sm:$0xff]
    %v4407 = vld [vmem:[#allocation9 + $0x7d8] sm:$0xff]
    %v4408 = vld [vmem:[#allocation9 + $0x7e0] sm:$0xff]
    %v4409 = vld [vmem:[#allocation9 + $0x7e8] sm:$0xff]
    %v4410 = vld [vmem:[#allocation9 + $0x7f0] sm:$0xff]
    %v4411 = vld [vmem:[#allocation9 + $0x7f8] sm:$0xff]
    %v4412 = vld [vmem:[%s8] sm:$0xff]
    %v4414 = vperm.slane %v4412, 0
    %v4415 = vperm.slane %v4412, 1
    %v4416 = vperm.slane %v4412, 2
    %v4417 = vperm.slane %v4412, 3
    %v4418 = vperm.slane %v4412, 4
    %v4419 = vperm.slane %v4412, 5
    %v4420 = vperm.slane %v4412, 6
    %v4421 = vperm.slane %v4412, 7
    %4430 = vmatpush.msra.mxu0 %v4276
    %4431 = vmatpush.msra.mxu0 %v4268
    %4432 = vmatpush.msra.mxu0 %v4260
    %4433 = vmatpush.msra.mxu0 %v4252
    %4434 = vmatpush.msra.mxu0 %v4244
    %4435 = vmatpush.msra.mxu0 %v4236
    %4436 = vmatpush.msra.mxu0 %v4228
    %4437 = vmatpush.msra.mxu0 %v4220
    %4438 = vmatpush.msra.mxu0 %v4212
    %4439 = vmatpush.msra.mxu0 %v4204
    %4440 = vmatpush.msra.mxu0 %v4196
    %4441 = vmatpush.msra.mxu0 %v4188
    %4442 = vmatpush.msra.mxu0 %v4180
    %4443 = vmatpush.msra.mxu0 %v4172
    %4444 = vmatpush.msra.mxu0 %v4164
    %4445 = vmatpush.msra.mxu0 %v4156
    %4446 = vmatmul.f32.gmra.mxu0 %v4152
    %v4447 = vpop.f32.mrf.mxu0
    %v4448 = vadd.f32 %v4414, %v4447
    %4449 = vdwg.mxu0
    %4450 = vmatpush.msra.mxu0 %v4404
    %4451 = vmatpush.msra.mxu0 %v4396
    %4452 = vmatpush.msra.mxu0 %v4388
    %4453 = vmatpush.msra.mxu0 %v4380
    %4454 = vmatpush.msra.mxu0 %v4372
    %4455 = vmatpush.msra.mxu0 %v4364
    %4456 = vmatpush.msra.mxu0 %v4356
    %4457 = vmatpush.msra.mxu0 %v4348
    %4458 = vmatpush.msra.mxu0 %v4340
    %4459 = vmatpush.msra.mxu0 %v4332
    %4460 = vmatpush.msra.mxu0 %v4324
    %4461 = vmatpush.msra.mxu0 %v4316
    %4462 = vmatpush.msra.mxu0 %v4308
    %4463 = vmatpush.msra.mxu0 %v4300
    %4464 = vmatpush.msra.mxu0 %v4292
    %4465 = vmatpush.msra.mxu0 %v4284
    %4466 = vmatmul.f32.gmra.mxu0 %v4153
    %v4467 = vpop.f32.mrf.mxu0
    %v4468 = vadd.f32 %v4448, %v4467
    %4469 = vdwg.mxu0
    %4470 = vmatpush.msra.mxu0 %v4277
    %4471 = vmatpush.msra.mxu0 %v4269
    %4472 = vmatpush.msra.mxu0 %v4261
    %4473 = vmatpush.msra.mxu0 %v4253
    %4474 = vmatpush.msra.mxu0 %v4245
    %4475 = vmatpush.msra.mxu0 %v4237
    %4476 = vmatpush.msra.mxu0 %v4229
    %4477 = vmatpush.msra.mxu0 %v4221
    %4478 = vmatpush.msra.mxu0 %v4213
    %4479 = vmatpush.msra.mxu0 %v4205
    %4480 = vmatpush.msra.mxu0 %v4197
    %4481 = vmatpush.msra.mxu0 %v4189
    %4482 = vmatpush.msra.mxu0 %v4181
    %4483 = vmatpush.msra.mxu0 %v4173
    %4484 = vmatpush.msra.mxu0 %v4165
    %4485 = vmatpush.msra.mxu0 %v4157
    %4486 = vmatmul.f32.gmra.mxu0 %v4152
    %v4487 = vpop.f32.mrf.mxu0
    %v4488 = vadd.f32 %v4415, %v4487
    %4489 = vdwg.mxu0
    %4490 = vmatpush.msra.mxu0 %v4405
    %4491 = vmatpush.msra.mxu0 %v4397
    %4492 = vmatpush.msra.mxu0 %v4389
    %4493 = vmatpush.msra.mxu0 %v4381
    %4494 = vmatpush.msra.mxu0 %v4373
    %4495 = vmatpush.msra.mxu0 %v4365
    %4496 = vmatpush.msra.mxu0 %v4357
    %4497 = vmatpush.msra.mxu0 %v4349
    %4498 = vmatpush.msra.mxu0 %v4341
    %4499 = vmatpush.msra.mxu0 %v4333
    %4500 = vmatpush.msra.mxu0 %v4325
    %4501 = vmatpush.msra.mxu0 %v4317
    %4502 = vmatpush.msra.mxu0 %v4309
    %4503 = vmatpush.msra.mxu0 %v4301
    %4504 = vmatpush.msra.mxu0 %v4293
    %4505 = vmatpush.msra.mxu0 %v4285
    %4506 = vmatmul.f32.gmra.mxu0 %v4153
    %v4507 = vpop.f32.mrf.mxu0
    %v4508 = vadd.f32 %v4488, %v4507
    %4509 = vdwg.mxu0
    %4510 = vmatpush.msra.mxu0 %v4278
    %4511 = vmatpush.msra.mxu0 %v4270
    %4512 = vmatpush.msra.mxu0 %v4262
    %4513 = vmatpush.msra.mxu0 %v4254
    %4514 = vmatpush.msra.mxu0 %v4246
    %4515 = vmatpush.msra.mxu0 %v4238
    %4516 = vmatpush.msra.mxu0 %v4230
    %4517 = vmatpush.msra.mxu0 %v4222
    %4518 = vmatpush.msra.mxu0 %v4214
    %4519 = vmatpush.msra.mxu0 %v4206
    %4520 = vmatpush.msra.mxu0 %v4198
    %4521 = vmatpush.msra.mxu0 %v4190
    %4522 = vmatpush.msra.mxu0 %v4182
    %4523 = vmatpush.msra.mxu0 %v4174
    %4524 = vmatpush.msra.mxu0 %v4166
    %4525 = vmatpush.msra.mxu0 %v4158
    %4526 = vmatmul.f32.gmra.mxu0 %v4152
    %v4527 = vpop.f32.mrf.mxu0
    %v4528 = vadd.f32 %v4416, %v4527
    %4529 = vdwg.mxu0
    %4530 = vmatpush.msra.mxu0 %v4406
    %4531 = vmatpush.msra.mxu0 %v4398
    %4532 = vmatpush.msra.mxu0 %v4390
    %4533 = vmatpush.msra.mxu0 %v4382
    %4534 = vmatpush.msra.mxu0 %v4374
    %4535 = vmatpush.msra.mxu0 %v4366
    %4536 = vmatpush.msra.mxu0 %v4358
    %4537 = vmatpush.msra.mxu0 %v4350
    %4538 = vmatpush.msra.mxu0 %v4342
    %4539 = vmatpush.msra.mxu0 %v4334
    %4540 = vmatpush.msra.mxu0 %v4326
    %4541 = vmatpush.msra.mxu0 %v4318
    %4542 = vmatpush.msra.mxu0 %v4310
    %4543 = vmatpush.msra.mxu0 %v4302
    %4544 = vmatpush.msra.mxu0 %v4294
    %4545 = vmatpush.msra.mxu0 %v4286
    %4546 = vmatmul.f32.gmra.mxu0 %v4153
    %v4547 = vpop.f32.mrf.mxu0
    %v4548 = vadd.f32 %v4528, %v4547
    %4549 = vdwg.mxu0
    %4550 = vmatpush.msra.mxu0 %v4279
    %4551 = vmatpush.msra.mxu0 %v4271
    %4552 = vmatpush.msra.mxu0 %v4263
    %4553 = vmatpush.msra.mxu0 %v4255
    %4554 = vmatpush.msra.mxu0 %v4247
    %4555 = vmatpush.msra.mxu0 %v4239
    %4556 = vmatpush.msra.mxu0 %v4231
    %4557 = vmatpush.msra.mxu0 %v4223
    %4558 = vmatpush.msra.mxu0 %v4215
    %4559 = vmatpush.msra.mxu0 %v4207
    %4560 = vmatpush.msra.mxu0 %v4199
    %4561 = vmatpush.msra.mxu0 %v4191
    %4562 = vmatpush.msra.mxu0 %v4183
    %4563 = vmatpush.msra.mxu0 %v4175
    %4564 = vmatpush.msra.mxu0 %v4167
    %4565 = vmatpush.msra.mxu0 %v4159
    %4566 = vmatmul.f32.gmra.mxu0 %v4152
    %v4567 = vpop.f32.mrf.mxu0
    %v4568 = vadd.f32 %v4417, %v4567
    %4569 = vdwg.mxu0
    %4570 = vmatpush.msra.mxu0 %v4407
    %4571 = vmatpush.msra.mxu0 %v4399
    %4572 = vmatpush.msra.mxu0 %v4391
    %4573 = vmatpush.msra.mxu0 %v4383
    %4574 = vmatpush.msra.mxu0 %v4375
    %4575 = vmatpush.msra.mxu0 %v4367
    %4576 = vmatpush.msra.mxu0 %v4359
    %4577 = vmatpush.msra.mxu0 %v4351
    %4578 = vmatpush.msra.mxu0 %v4343
    %4579 = vmatpush.msra.mxu0 %v4335
    %4580 = vmatpush.msra.mxu0 %v4327
    %4581 = vmatpush.msra.mxu0 %v4319
    %4582 = vmatpush.msra.mxu0 %v4311
    %4583 = vmatpush.msra.mxu0 %v4303
    %4584 = vmatpush.msra.mxu0 %v4295
    %4585 = vmatpush.msra.mxu0 %v4287
    %4586 = vmatmul.f32.gmra.mxu0 %v4153
    %v4587 = vpop.f32.mrf.mxu0
    %v4588 = vadd.f32 %v4568, %v4587
    %4589 = vdwg.mxu0
    %4590 = vmatpush.msra.mxu0 %v4280
    %4591 = vmatpush.msra.mxu0 %v4272
    %4592 = vmatpush.msra.mxu0 %v4264
    %4593 = vmatpush.msra.mxu0 %v4256
    %4594 = vmatpush.msra.mxu0 %v4248
    %4595 = vmatpush.msra.mxu0 %v4240
    %4596 = vmatpush.msra.mxu0 %v4232
    %4597 = vmatpush.msra.mxu0 %v4224
    %4598 = vmatpush.msra.mxu0 %v4216
    %4599 = vmatpush.msra.mxu0 %v4208
    %4600 = vmatpush.msra.mxu0 %v4200
    %4601 = vmatpush.msra.mxu0 %v4192
    %4602 = vmatpush.msra.mxu0 %v4184
    %4603 = vmatpush.msra.mxu0 %v4176
    %4604 = vmatpush.msra.mxu0 %v4168
    %4605 = vmatpush.msra.mxu0 %v4160
    %4606 = vmatmul.f32.gmra.mxu0 %v4152
    %v4607 = vpop.f32.mrf.mxu0
    %v4608 = vadd.f32 %v4418, %v4607
    %4609 = vdwg.mxu0
    %4610 = vmatpush.msra.mxu0 %v4408
    %4611 = vmatpush.msra.mxu0 %v4400
    %4612 = vmatpush.msra.mxu0 %v4392
    %4613 = vmatpush.msra.mxu0 %v4384
    %4614 = vmatpush.msra.mxu0 %v4376
    %4615 = vmatpush.msra.mxu0 %v4368
    %4616 = vmatpush.msra.mxu0 %v4360
    %4617 = vmatpush.msra.mxu0 %v4352
    %4618 = vmatpush.msra.mxu0 %v4344
    %4619 = vmatpush.msra.mxu0 %v4336
    %4620 = vmatpush.msra.mxu0 %v4328
    %4621 = vmatpush.msra.mxu0 %v4320
    %4622 = vmatpush.msra.mxu0 %v4312
    %4623 = vmatpush.msra.mxu0 %v4304
    %4624 = vmatpush.msra.mxu0 %v4296
    %4625 = vmatpush.msra.mxu0 %v4288
    %4626 = vmatmul.f32.gmra.mxu0 %v4153
    %v4627 = vpop.f32.mrf.mxu0
    %v4628 = vadd.f32 %v4608, %v4627
    %4629 = vdwg.mxu0
    %4630 = vmatpush.msra.mxu0 %v4281
    %4631 = vmatpush.msra.mxu0 %v4273
    %4632 = vmatpush.msra.mxu0 %v4265
    %4633 = vmatpush.msra.mxu0 %v4257
    %4634 = vmatpush.msra.mxu0 %v4249
    %4635 = vmatpush.msra.mxu0 %v4241
    %4636 = vmatpush.msra.mxu0 %v4233
    %4637 = vmatpush.msra.mxu0 %v4225
    %4638 = vmatpush.msra.mxu0 %v4217
    %4639 = vmatpush.msra.mxu0 %v4209
    %4640 = vmatpush.msra.mxu0 %v4201
    %4641 = vmatpush.msra.mxu0 %v4193
    %4642 = vmatpush.msra.mxu0 %v4185
    %4643 = vmatpush.msra.mxu0 %v4177
    %4644 = vmatpush.msra.mxu0 %v4169
    %4645 = vmatpush.msra.mxu0 %v4161
    %4646 = vmatmul.f32.gmra.mxu0 %v4152
    %v4647 = vpop.f32.mrf.mxu0
    %v4648 = vadd.f32 %v4419, %v4647
    %4649 = vdwg.mxu0
    %4650 = vmatpush.msra.mxu0 %v4409
    %4651 = vmatpush.msra.mxu0 %v4401
    %4652 = vmatpush.msra.mxu0 %v4393
    %4653 = vmatpush.msra.mxu0 %v4385
    %4654 = vmatpush.msra.mxu0 %v4377
    %4655 = vmatpush.msra.mxu0 %v4369
    %4656 = vmatpush.msra.mxu0 %v4361
    %4657 = vmatpush.msra.mxu0 %v4353
    %4658 = vmatpush.msra.mxu0 %v4345
    %4659 = vmatpush.msra.mxu0 %v4337
    %4660 = vmatpush.msra.mxu0 %v4329
    %4661 = vmatpush.msra.mxu0 %v4321
    %4662 = vmatpush.msra.mxu0 %v4313
    %4663 = vmatpush.msra.mxu0 %v4305
    %4664 = vmatpush.msra.mxu0 %v4297
    %4665 = vmatpush.msra.mxu0 %v4289
    %4666 = vmatmul.f32.gmra.mxu0 %v4153
    %v4667 = vpop.f32.mrf.mxu0
    %v4668 = vadd.f32 %v4648, %v4667
    %4669 = vdwg.mxu0
    %4670 = vmatpush.msra.mxu0 %v4282
    %4671 = vmatpush.msra.mxu0 %v4274
    %4672 = vmatpush.msra.mxu0 %v4266
    %4673 = vmatpush.msra.mxu0 %v4258
    %4674 = vmatpush.msra.mxu0 %v4250
    %4675 = vmatpush.msra.mxu0 %v4242
    %4676 = vmatpush.msra.mxu0 %v4234
    %4677 = vmatpush.msra.mxu0 %v4226
    %4678 = vmatpush.msra.mxu0 %v4218
    %4679 = vmatpush.msra.mxu0 %v4210
    %4680 = vmatpush.msra.mxu0 %v4202
    %4681 = vmatpush.msra.mxu0 %v4194
    %4682 = vmatpush.msra.mxu0 %v4186
    %4683 = vmatpush.msra.mxu0 %v4178
    %4684 = vmatpush.msra.mxu0 %v4170
    %4685 = vmatpush.msra.mxu0 %v4162
    %4686 = vmatmul.f32.gmra.mxu0 %v4152
    %v4687 = vpop.f32.mrf.mxu0
    %v4688 = vadd.f32 %v4420, %v4687
    %4689 = vdwg.mxu0
    %4690 = vmatpush.msra.mxu0 %v4410
    %4691 = vmatpush.msra.mxu0 %v4402
    %4692 = vmatpush.msra.mxu0 %v4394
    %4693 = vmatpush.msra.mxu0 %v4386
    %4694 = vmatpush.msra.mxu0 %v4378
    %4695 = vmatpush.msra.mxu0 %v4370
    %4696 = vmatpush.msra.mxu0 %v4362
    %4697 = vmatpush.msra.mxu0 %v4354
    %4698 = vmatpush.msra.mxu0 %v4346
    %4699 = vmatpush.msra.mxu0 %v4338
    %4700 = vmatpush.msra.mxu0 %v4330
    %4701 = vmatpush.msra.mxu0 %v4322
    %4702 = vmatpush.msra.mxu0 %v4314
    %4703 = vmatpush.msra.mxu0 %v4306
    %4704 = vmatpush.msra.mxu0 %v4298
    %4705 = vmatpush.msra.mxu0 %v4290
    %4706 = vmatmul.f32.gmra.mxu0 %v4153
    %v4707 = vpop.f32.mrf.mxu0
    %v4708 = vadd.f32 %v4688, %v4707
    %4709 = vdwg.mxu0
    %4710 = vmatpush.msra.mxu0 %v4283
    %4711 = vmatpush.msra.mxu0 %v4275
    %4712 = vmatpush.msra.mxu0 %v4267
    %4713 = vmatpush.msra.mxu0 %v4259
    %4714 = vmatpush.msra.mxu0 %v4251
    %4715 = vmatpush.msra.mxu0 %v4243
    %4716 = vmatpush.msra.mxu0 %v4235
    %4717 = vmatpush.msra.mxu0 %v4227
    %4718 = vmatpush.msra.mxu0 %v4219
    %4719 = vmatpush.msra.mxu0 %v4211
    %4720 = vmatpush.msra.mxu0 %v4203
    %4721 = vmatpush.msra.mxu0 %v4195
    %4722 = vmatpush.msra.mxu0 %v4187
    %4723 = vmatpush.msra.mxu0 %v4179
    %4724 = vmatpush.msra.mxu0 %v4171
    %4725 = vmatpush.msra.mxu0 %v4163
    %4726 = vmatmul.f32.gmra.mxu0 %v4152
    %v4727 = vpop.f32.mrf.mxu0
    %v4728 = vadd.f32 %v4421, %v4727
    %4729 = vdwg.mxu0
    %4730 = vmatpush.msra.mxu0 %v4411
    %4731 = vmatpush.msra.mxu0 %v4403
    %4732 = vmatpush.msra.mxu0 %v4395
    %4733 = vmatpush.msra.mxu0 %v4387
    %4734 = vmatpush.msra.mxu0 %v4379
    %4735 = vmatpush.msra.mxu0 %v4371
    %4736 = vmatpush.msra.mxu0 %v4363
    %4737 = vmatpush.msra.mxu0 %v4355
    %4738 = vmatpush.msra.mxu0 %v4347
    %4739 = vmatpush.msra.mxu0 %v4339
    %4740 = vmatpush.msra.mxu0 %v4331
    %4741 = vmatpush.msra.mxu0 %v4323
    %4742 = vmatpush.msra.mxu0 %v4315
    %4743 = vmatpush.msra.mxu0 %v4307
    %4744 = vmatpush.msra.mxu0 %v4299
    %4745 = vmatpush.msra.mxu0 %v4291
    %4746 = vmatmul.f32.gmra.mxu0 %v4153
    %v4747 = vpop.f32.mrf.mxu0
    %v4748 = vadd.f32 %v4728, %v4747
    %4749 = vdwg.mxu0
    %v4750 = vxor.u32 %v4468, 2147483648
    %v4751 = vxor.u32 %v4508, 2147483648
    %v4752 = vmul.f32 %v4750, 1.442695
    %v4753 = vpow.pop %v4752
    %v4754 = vmul.f32 %v4751, 1.442695
    %v4755 = vpow.pop %v4754
    %v4756 = vadd.f32 %v4753, 1.0
    %v4757 = vadd.f32 %v4755, 1.0
    %v4758 = vrcp.pop %v4756
    %v4759 = vmul.f32 %v4756, %v4758
    %v4760 = vsub.f32 1.0, %v4759
    %v4761 = vmul.f32 %v4758, %v4760
    %v4762 = vadd.f32 %v4758, %v4761
    %vm4763 = vweird.f32 %v4756
    %vm4764 = vweird.f32 %v4758
    %vm4765 = vmor %vm4763, %vm4764
    %v4766 = vsel %vm4765, %v4758, %v4762
    %v4767 = vand.u32 2147483647, %v4756
    %vm4768 = vcmp.eq.f32.partialorder %v4767, 8.507059e+37
    %v4769 = vand.u32 %v4756, 2147483648
    %v4770 = vor.u32 1.1754944e-38, %v4769
    %v4771 = vsel %vm4768, %v4770, %v4766
    %v4772 = vmul.f32 1.0, %v4771
    %v4773 = vrcp.pop %v4757
    %v4774 = vmul.f32 %v4757, %v4773
    %v4775 = vsub.f32 1.0, %v4774
    %v4776 = vmul.f32 %v4773, %v4775
    %v4777 = vadd.f32 %v4773, %v4776
    %vm4778 = vweird.f32 %v4757
    %vm4779 = vweird.f32 %v4773
    %vm4780 = vmor %vm4778, %vm4779
    %v4781 = vsel %vm4780, %v4773, %v4777
    %v4782 = vand.u32 2147483647, %v4757
    %vm4783 = vcmp.eq.f32.partialorder %v4782, 8.507059e+37
    %v4784 = vand.u32 %v4757, 2147483648
    %v4785 = vor.u32 1.1754944e-38, %v4784
    %v4786 = vsel %vm4783, %v4785, %v4781
    %v4787 = vmul.f32 1.0, %v4786
    %v4788 = vxor.u32 %v4548, 2147483648
    %v4789 = vxor.u32 %v4588, 2147483648
    %v4790 = vmul.f32 %v4788, 1.442695
    %v4791 = vpow.pop %v4790
    %v4792 = vmul.f32 %v4789, 1.442695
    %v4793 = vpow.pop %v4792
    %v4794 = vadd.f32 %v4791, 1.0
    %v4795 = vadd.f32 %v4793, 1.0
    %v4796 = vrcp.pop %v4794
    %v4797 = vmul.f32 %v4794, %v4796
    %v4798 = vsub.f32 1.0, %v4797
    %v4799 = vmul.f32 %v4796, %v4798
    %v4800 = vadd.f32 %v4796, %v4799
    %vm4801 = vweird.f32 %v4794
    %vm4802 = vweird.f32 %v4796
    %vm4803 = vmor %vm4801, %vm4802
    %v4804 = vsel %vm4803, %v4796, %v4800
    %v4805 = vand.u32 2147483647, %v4794
    %vm4806 = vcmp.eq.f32.partialorder %v4805, 8.507059e+37
    %v4807 = vand.u32 %v4794, 2147483648
    %v4808 = vor.u32 1.1754944e-38, %v4807
    %v4809 = vsel %vm4806, %v4808, %v4804
    %v4810 = vmul.f32 1.0, %v4809
    %v4811 = vrcp.pop %v4795
    %v4812 = vmul.f32 %v4795, %v4811
    %v4813 = vsub.f32 1.0, %v4812
    %v4814 = vmul.f32 %v4811, %v4813
    %v4815 = vadd.f32 %v4811, %v4814
    %vm4816 = vweird.f32 %v4795
    %vm4817 = vweird.f32 %v4811
    %vm4818 = vmor %vm4816, %vm4817
    %v4819 = vsel %vm4818, %v4811, %v4815
    %v4820 = vand.u32 2147483647, %v4795
    %vm4821 = vcmp.eq.f32.partialorder %v4820, 8.507059e+37
    %v4822 = vand.u32 %v4795, 2147483648
    %v4823 = vor.u32 1.1754944e-38, %v4822
    %v4824 = vsel %vm4821, %v4823, %v4819
    %v4825 = vmul.f32 1.0, %v4824
    %v4826 = vtanh.pop %v4628
    %v4827 = vtanh.pop %v4668
    %v4828 = vxor.u32 %v4708, 2147483648
    %v4829 = vxor.u32 %v4748, 2147483648
    %v4830 = vmul.f32 %v4828, 1.442695
    %v4831 = vpow.pop %v4830
    %v4832 = vmul.f32 %v4829, 1.442695
    %v4833 = vpow.pop %v4832
    %v4834 = vadd.f32 %v4831, 1.0
    %v4835 = vadd.f32 %v4833, 1.0
    %v4836 = vrcp.pop %v4834
    %v4837 = vmul.f32 %v4834, %v4836
    %v4838 = vsub.f32 1.0, %v4837
    %v4839 = vmul.f32 %v4836, %v4838
    %v4840 = vadd.f32 %v4836, %v4839
    %vm4841 = vweird.f32 %v4834
    %vm4842 = vweird.f32 %v4836
    %vm4843 = vmor %vm4841, %vm4842
    %v4844 = vsel %vm4843, %v4836, %v4840
    %v4845 = vand.u32 2147483647, %v4834
    %vm4846 = vcmp.eq.f32.partialorder %v4845, 8.507059e+37
    %v4847 = vand.u32 %v4834, 2147483648
    %v4848 = vor.u32 1.1754944e-38, %v4847
    %v4849 = vsel %vm4846, %v4848, %v4844
    %v4850 = vmul.f32 1.0, %v4849
    %v4851 = vrcp.pop %v4835
    %v4852 = vmul.f32 %v4835, %v4851
    %v4853 = vsub.f32 1.0, %v4852
    %v4854 = vmul.f32 %v4851, %v4853
    %v4855 = vadd.f32 %v4851, %v4854
    %vm4856 = vweird.f32 %v4835
    %vm4857 = vweird.f32 %v4851
    %vm4858 = vmor %vm4856, %vm4857
    %v4859 = vsel %vm4858, %v4851, %v4855
    %v4860 = vand.u32 2147483647, %v4835
    %vm4861 = vcmp.eq.f32.partialorder %v4860, 8.507059e+37
    %v4862 = vand.u32 %v4835, 2147483648
    %v4863 = vor.u32 1.1754944e-38, %v4862
    %v4864 = vsel %vm4861, %v4863, %v4859
    %v4865 = vmul.f32 1.0, %v4864
    %v4866 = vmul.f32 %v4810, %v4148
    %v4867 = vmul.f32 %v4825, %v4149
    %v4868 = vmul.f32 %v4772, %v4826
    %v4869 = vmul.f32 %v4787, %v4827
    %v4870 = vadd.f32 %v4866, %v4868
    %v4871 = vadd.f32 %v4867, %v4869
    %v4872 = vtanh.pop %v4870
    %v4873 = vtanh.pop %v4871
    %v4874 = vmul.f32 %v4850, %v4872
    %v4875 = vmul.f32 %v4865, %v4873
    %4876 = vst [vmem:[#allocation3 + $0x20] sm:$0xff] %v4874
    %4877 = vst [vmem:[#allocation3 + $0x28] sm:$0xff] %v4875
    %v4878 = vld [vmem:[#allocation9] sm:$0xff]
    %v4879 = vld [vmem:[#allocation9 + $0x8] sm:$0xff]
    %v4880 = vld [vmem:[#allocation9 + $0x10] sm:$0xff]
    %v4881 = vld [vmem:[#allocation9 + $0x18] sm:$0xff]
    %v4882 = vld [vmem:[#allocation9 + $0x20] sm:$0xff]
    %v4883 = vld [vmem:[#allocation9 + $0x28] sm:$0xff]
    %v4884 = vld [vmem:[#allocation9 + $0x30] sm:$0xff]
    %v4885 = vld [vmem:[#allocation9 + $0x38] sm:$0xff]
    %v4886 = vld [vmem:[#allocation9 + $0x40] sm:$0xff]
    %v4887 = vld [vmem:[#allocation9 + $0x48] sm:$0xff]
    %v4888 = vld [vmem:[#allocation9 + $0x50] sm:$0xff]
    %v4889 = vld [vmem:[#allocation9 + $0x58] sm:$0xff]
    %v4890 = vld [vmem:[#allocation9 + $0x60] sm:$0xff]
    %v4891 = vld [vmem:[#allocation9 + $0x68] sm:$0xff]
    %v4892 = vld [vmem:[#allocation9 + $0x70] sm:$0xff]
    %v4893 = vld [vmem:[#allocation9 + $0x78] sm:$0xff]
    %v4894 = vld [vmem:[#allocation9 + $0x80] sm:$0xff]
    %v4895 = vld [vmem:[#allocation9 + $0x88] sm:$0xff]
    %v4896 = vld [vmem:[#allocation9 + $0x90] sm:$0xff]
    %v4897 = vld [vmem:[#allocation9 + $0x98] sm:$0xff]
    %v4898 = vld [vmem:[#allocation9 + $0xa0] sm:$0xff]
    %v4899 = vld [vmem:[#allocation9 + $0xa8] sm:$0xff]
    %v4900 = vld [vmem:[#allocation9 + $0xb0] sm:$0xff]
    %v4901 = vld [vmem:[#allocation9 + $0xb8] sm:$0xff]
    %v4902 = vld [vmem:[#allocation9 + $0xc0] sm:$0xff]
    %v4903 = vld [vmem:[#allocation9 + $0xc8] sm:$0xff]
    %v4904 = vld [vmem:[#allocation9 + $0xd0] sm:$0xff]
    %v4905 = vld [vmem:[#allocation9 + $0xd8] sm:$0xff]
    %v4906 = vld [vmem:[#allocation9 + $0xe0] sm:$0xff]
    %v4907 = vld [vmem:[#allocation9 + $0xe8] sm:$0xff]
    %v4908 = vld [vmem:[#allocation9 + $0xf0] sm:$0xff]
    %v4909 = vld [vmem:[#allocation9 + $0xf8] sm:$0xff]
    %v4910 = vld [vmem:[#allocation9 + $0x100] sm:$0xff]
    %v4911 = vld [vmem:[#allocation9 + $0x108] sm:$0xff]
    %v4912 = vld [vmem:[#allocation9 + $0x110] sm:$0xff]
    %v4913 = vld [vmem:[#allocation9 + $0x118] sm:$0xff]
    %v4914 = vld [vmem:[#allocation9 + $0x120] sm:$0xff]
    %v4915 = vld [vmem:[#allocation9 + $0x128] sm:$0xff]
    %v4916 = vld [vmem:[#allocation9 + $0x130] sm:$0xff]
    %v4917 = vld [vmem:[#allocation9 + $0x138] sm:$0xff]
    %v4918 = vld [vmem:[#allocation9 + $0x140] sm:$0xff]
    %v4919 = vld [vmem:[#allocation9 + $0x148] sm:$0xff]
    %v4920 = vld [vmem:[#allocation9 + $0x150] sm:$0xff]
    %v4921 = vld [vmem:[#allocation9 + $0x158] sm:$0xff]
    %v4922 = vld [vmem:[#allocation9 + $0x160] sm:$0xff]
    %v4923 = vld [vmem:[#allocation9 + $0x168] sm:$0xff]
    %v4924 = vld [vmem:[#allocation9 + $0x170] sm:$0xff]
    %v4925 = vld [vmem:[#allocation9 + $0x178] sm:$0xff]
    %v4926 = vld [vmem:[#allocation9 + $0x180] sm:$0xff]
    %v4927 = vld [vmem:[#allocation9 + $0x188] sm:$0xff]
    %v4928 = vld [vmem:[#allocation9 + $0x190] sm:$0xff]
    %v4929 = vld [vmem:[#allocation9 + $0x198] sm:$0xff]
    %v4930 = vld [vmem:[#allocation9 + $0x1a0] sm:$0xff]
    %v4931 = vld [vmem:[#allocation9 + $0x1a8] sm:$0xff]
    %v4932 = vld [vmem:[#allocation9 + $0x1b0] sm:$0xff]
    %v4933 = vld [vmem:[#allocation9 + $0x1b8] sm:$0xff]
    %v4934 = vld [vmem:[#allocation9 + $0x1c0] sm:$0xff]
    %v4935 = vld [vmem:[#allocation9 + $0x1c8] sm:$0xff]
    %v4936 = vld [vmem:[#allocation9 + $0x1d0] sm:$0xff]
    %v4937 = vld [vmem:[#allocation9 + $0x1d8] sm:$0xff]
    %v4938 = vld [vmem:[#allocation9 + $0x1e0] sm:$0xff]
    %v4939 = vld [vmem:[#allocation9 + $0x1e8] sm:$0xff]
    %v4940 = vld [vmem:[#allocation9 + $0x1f0] sm:$0xff]
    %v4941 = vld [vmem:[#allocation9 + $0x1f8] sm:$0xff]
    %v4942 = vld [vmem:[#allocation9 + $0x200] sm:$0xff]
    %v4943 = vld [vmem:[#allocation9 + $0x208] sm:$0xff]
    %v4944 = vld [vmem:[#allocation9 + $0x210] sm:$0xff]
    %v4945 = vld [vmem:[#allocation9 + $0x218] sm:$0xff]
    %v4946 = vld [vmem:[#allocation9 + $0x220] sm:$0xff]
    %v4947 = vld [vmem:[#allocation9 + $0x228] sm:$0xff]
    %v4948 = vld [vmem:[#allocation9 + $0x230] sm:$0xff]
    %v4949 = vld [vmem:[#allocation9 + $0x238] sm:$0xff]
    %v4950 = vld [vmem:[#allocation9 + $0x240] sm:$0xff]
    %v4951 = vld [vmem:[#allocation9 + $0x248] sm:$0xff]
    %v4952 = vld [vmem:[#allocation9 + $0x250] sm:$0xff]
    %v4953 = vld [vmem:[#allocation9 + $0x258] sm:$0xff]
    %v4954 = vld [vmem:[#allocation9 + $0x260] sm:$0xff]
    %v4955 = vld [vmem:[#allocation9 + $0x268] sm:$0xff]
    %v4956 = vld [vmem:[#allocation9 + $0x270] sm:$0xff]
    %v4957 = vld [vmem:[#allocation9 + $0x278] sm:$0xff]
    %v4958 = vld [vmem:[#allocation9 + $0x280] sm:$0xff]
    %v4959 = vld [vmem:[#allocation9 + $0x288] sm:$0xff]
    %v4960 = vld [vmem:[#allocation9 + $0x290] sm:$0xff]
    %v4961 = vld [vmem:[#allocation9 + $0x298] sm:$0xff]
    %v4962 = vld [vmem:[#allocation9 + $0x2a0] sm:$0xff]
    %v4963 = vld [vmem:[#allocation9 + $0x2a8] sm:$0xff]
    %v4964 = vld [vmem:[#allocation9 + $0x2b0] sm:$0xff]
    %v4965 = vld [vmem:[#allocation9 + $0x2b8] sm:$0xff]
    %v4966 = vld [vmem:[#allocation9 + $0x2c0] sm:$0xff]
    %v4967 = vld [vmem:[#allocation9 + $0x2c8] sm:$0xff]
    %v4968 = vld [vmem:[#allocation9 + $0x2d0] sm:$0xff]
    %v4969 = vld [vmem:[#allocation9 + $0x2d8] sm:$0xff]
    %v4970 = vld [vmem:[#allocation9 + $0x2e0] sm:$0xff]
    %v4971 = vld [vmem:[#allocation9 + $0x2e8] sm:$0xff]
    %v4972 = vld [vmem:[#allocation9 + $0x2f0] sm:$0xff]
    %v4973 = vld [vmem:[#allocation9 + $0x2f8] sm:$0xff]
    %v4974 = vld [vmem:[#allocation9 + $0x300] sm:$0xff]
    %v4975 = vld [vmem:[#allocation9 + $0x308] sm:$0xff]
    %v4976 = vld [vmem:[#allocation9 + $0x310] sm:$0xff]
    %v4977 = vld [vmem:[#allocation9 + $0x318] sm:$0xff]
    %v4978 = vld [vmem:[#allocation9 + $0x320] sm:$0xff]
    %v4979 = vld [vmem:[#allocation9 + $0x328] sm:$0xff]
    %v4980 = vld [vmem:[#allocation9 + $0x330] sm:$0xff]
    %v4981 = vld [vmem:[#allocation9 + $0x338] sm:$0xff]
    %v4982 = vld [vmem:[#allocation9 + $0x340] sm:$0xff]
    %v4983 = vld [vmem:[#allocation9 + $0x348] sm:$0xff]
    %v4984 = vld [vmem:[#allocation9 + $0x350] sm:$0xff]
    %v4985 = vld [vmem:[#allocation9 + $0x358] sm:$0xff]
    %v4986 = vld [vmem:[#allocation9 + $0x360] sm:$0xff]
    %v4987 = vld [vmem:[#allocation9 + $0x368] sm:$0xff]
    %v4988 = vld [vmem:[#allocation9 + $0x370] sm:$0xff]
    %v4989 = vld [vmem:[#allocation9 + $0x378] sm:$0xff]
    %v4990 = vld [vmem:[#allocation9 + $0x380] sm:$0xff]
    %v4991 = vld [vmem:[#allocation9 + $0x388] sm:$0xff]
    %v4992 = vld [vmem:[#allocation9 + $0x390] sm:$0xff]
    %v4993 = vld [vmem:[#allocation9 + $0x398] sm:$0xff]
    %v4994 = vld [vmem:[#allocation9 + $0x3a0] sm:$0xff]
    %v4995 = vld [vmem:[#allocation9 + $0x3a8] sm:$0xff]
    %v4996 = vld [vmem:[#allocation9 + $0x3b0] sm:$0xff]
    %v4997 = vld [vmem:[#allocation9 + $0x3b8] sm:$0xff]
    %v4998 = vld [vmem:[#allocation9 + $0x3c0] sm:$0xff]
    %v4999 = vld [vmem:[#allocation9 + $0x3c8] sm:$0xff]
    %v5000 = vld [vmem:[#allocation9 + $0x3d0] sm:$0xff]
    %v5001 = vld [vmem:[#allocation9 + $0x3d8] sm:$0xff]
    %v5002 = vld [vmem:[#allocation9 + $0x3e0] sm:$0xff]
    %v5003 = vld [vmem:[#allocation9 + $0x3e8] sm:$0xff]
    %v5004 = vld [vmem:[#allocation9 + $0x3f0] sm:$0xff]
    %v5005 = vld [vmem:[#allocation9 + $0x3f8] sm:$0xff]
    %v5006 = vld [vmem:[#allocation9 + $0x400] sm:$0xff]
    %v5007 = vld [vmem:[#allocation9 + $0x408] sm:$0xff]
    %v5008 = vld [vmem:[#allocation9 + $0x410] sm:$0xff]
    %v5009 = vld [vmem:[#allocation9 + $0x418] sm:$0xff]
    %v5010 = vld [vmem:[#allocation9 + $0x420] sm:$0xff]
    %v5011 = vld [vmem:[#allocation9 + $0x428] sm:$0xff]
    %v5012 = vld [vmem:[#allocation9 + $0x430] sm:$0xff]
    %v5013 = vld [vmem:[#allocation9 + $0x438] sm:$0xff]
    %v5014 = vld [vmem:[#allocation9 + $0x440] sm:$0xff]
    %v5015 = vld [vmem:[#allocation9 + $0x448] sm:$0xff]
    %v5016 = vld [vmem:[#allocation9 + $0x450] sm:$0xff]
    %v5017 = vld [vmem:[#allocation9 + $0x458] sm:$0xff]
    %v5018 = vld [vmem:[#allocation9 + $0x460] sm:$0xff]
    %v5019 = vld [vmem:[#allocation9 + $0x468] sm:$0xff]
    %v5020 = vld [vmem:[#allocation9 + $0x470] sm:$0xff]
    %v5021 = vld [vmem:[#allocation9 + $0x478] sm:$0xff]
    %v5022 = vld [vmem:[#allocation9 + $0x480] sm:$0xff]
    %v5023 = vld [vmem:[#allocation9 + $0x488] sm:$0xff]
    %v5024 = vld [vmem:[#allocation9 + $0x490] sm:$0xff]
    %v5025 = vld [vmem:[#allocation9 + $0x498] sm:$0xff]
    %v5026 = vld [vmem:[#allocation9 + $0x4a0] sm:$0xff]
    %v5027 = vld [vmem:[#allocation9 + $0x4a8] sm:$0xff]
    %v5028 = vld [vmem:[#allocation9 + $0x4b0] sm:$0xff]
    %v5029 = vld [vmem:[#allocation9 + $0x4b8] sm:$0xff]
    %v5030 = vld [vmem:[#allocation9 + $0x4c0] sm:$0xff]
    %v5031 = vld [vmem:[#allocation9 + $0x4c8] sm:$0xff]
    %v5032 = vld [vmem:[#allocation9 + $0x4d0] sm:$0xff]
    %v5033 = vld [vmem:[#allocation9 + $0x4d8] sm:$0xff]
    %v5034 = vld [vmem:[#allocation9 + $0x4e0] sm:$0xff]
    %v5035 = vld [vmem:[#allocation9 + $0x4e8] sm:$0xff]
    %v5036 = vld [vmem:[#allocation9 + $0x4f0] sm:$0xff]
    %v5037 = vld [vmem:[#allocation9 + $0x4f8] sm:$0xff]
    %v5038 = vld [vmem:[#allocation9 + $0x500] sm:$0xff]
    %v5039 = vld [vmem:[#allocation9 + $0x508] sm:$0xff]
    %v5040 = vld [vmem:[#allocation9 + $0x510] sm:$0xff]
    %v5041 = vld [vmem:[#allocation9 + $0x518] sm:$0xff]
    %v5042 = vld [vmem:[#allocation9 + $0x520] sm:$0xff]
    %v5043 = vld [vmem:[#allocation9 + $0x528] sm:$0xff]
    %v5044 = vld [vmem:[#allocation9 + $0x530] sm:$0xff]
    %v5045 = vld [vmem:[#allocation9 + $0x538] sm:$0xff]
    %v5046 = vld [vmem:[#allocation9 + $0x540] sm:$0xff]
    %v5047 = vld [vmem:[#allocation9 + $0x548] sm:$0xff]
    %v5048 = vld [vmem:[#allocation9 + $0x550] sm:$0xff]
    %v5049 = vld [vmem:[#allocation9 + $0x558] sm:$0xff]
    %v5050 = vld [vmem:[#allocation9 + $0x560] sm:$0xff]
    %v5051 = vld [vmem:[#allocation9 + $0x568] sm:$0xff]
    %v5052 = vld [vmem:[#allocation9 + $0x570] sm:$0xff]
    %v5053 = vld [vmem:[#allocation9 + $0x578] sm:$0xff]
    %v5054 = vld [vmem:[#allocation9 + $0x580] sm:$0xff]
    %v5055 = vld [vmem:[#allocation9 + $0x588] sm:$0xff]
    %v5056 = vld [vmem:[#allocation9 + $0x590] sm:$0xff]
    %v5057 = vld [vmem:[#allocation9 + $0x598] sm:$0xff]
    %v5058 = vld [vmem:[#allocation9 + $0x5a0] sm:$0xff]
    %v5059 = vld [vmem:[#allocation9 + $0x5a8] sm:$0xff]
    %v5060 = vld [vmem:[#allocation9 + $0x5b0] sm:$0xff]
    %v5061 = vld [vmem:[#allocation9 + $0x5b8] sm:$0xff]
    %v5062 = vld [vmem:[#allocation9 + $0x5c0] sm:$0xff]
    %v5063 = vld [vmem:[#allocation9 + $0x5c8] sm:$0xff]
    %v5064 = vld [vmem:[#allocation9 + $0x5d0] sm:$0xff]
    %v5065 = vld [vmem:[#allocation9 + $0x5d8] sm:$0xff]
    %v5066 = vld [vmem:[#allocation9 + $0x5e0] sm:$0xff]
    %v5067 = vld [vmem:[#allocation9 + $0x5e8] sm:$0xff]
    %v5068 = vld [vmem:[#allocation9 + $0x5f0] sm:$0xff]
    %v5069 = vld [vmem:[#allocation9 + $0x5f8] sm:$0xff]
    %v5070 = vld [vmem:[#allocation9 + $0x600] sm:$0xff]
    %v5071 = vld [vmem:[#allocation9 + $0x608] sm:$0xff]
    %v5072 = vld [vmem:[#allocation9 + $0x610] sm:$0xff]
    %v5073 = vld [vmem:[#allocation9 + $0x618] sm:$0xff]
    %v5074 = vld [vmem:[#allocation9 + $0x620] sm:$0xff]
    %v5075 = vld [vmem:[#allocation9 + $0x628] sm:$0xff]
    %v5076 = vld [vmem:[#allocation9 + $0x630] sm:$0xff]
    %v5077 = vld [vmem:[#allocation9 + $0x638] sm:$0xff]
    %v5078 = vld [vmem:[#allocation9 + $0x640] sm:$0xff]
    %v5079 = vld [vmem:[#allocation9 + $0x648] sm:$0xff]
    %v5080 = vld [vmem:[#allocation9 + $0x650] sm:$0xff]
    %v5081 = vld [vmem:[#allocation9 + $0x658] sm:$0xff]
    %v5082 = vld [vmem:[#allocation9 + $0x660] sm:$0xff]
    %v5083 = vld [vmem:[#allocation9 + $0x668] sm:$0xff]
    %v5084 = vld [vmem:[#allocation9 + $0x670] sm:$0xff]
    %v5085 = vld [vmem:[#allocation9 + $0x678] sm:$0xff]
    %v5086 = vld [vmem:[#allocation9 + $0x680] sm:$0xff]
    %v5087 = vld [vmem:[#allocation9 + $0x688] sm:$0xff]
    %v5088 = vld [vmem:[#allocation9 + $0x690] sm:$0xff]
    %v5089 = vld [vmem:[#allocation9 + $0x698] sm:$0xff]
    %v5090 = vld [vmem:[#allocation9 + $0x6a0] sm:$0xff]
    %v5091 = vld [vmem:[#allocation9 + $0x6a8] sm:$0xff]
    %v5092 = vld [vmem:[#allocation9 + $0x6b0] sm:$0xff]
    %v5093 = vld [vmem:[#allocation9 + $0x6b8] sm:$0xff]
    %v5094 = vld [vmem:[#allocation9 + $0x6c0] sm:$0xff]
    %v5095 = vld [vmem:[#allocation9 + $0x6c8] sm:$0xff]
    %v5096 = vld [vmem:[#allocation9 + $0x6d0] sm:$0xff]
    %v5097 = vld [vmem:[#allocation9 + $0x6d8] sm:$0xff]
    %v5098 = vld [vmem:[#allocation9 + $0x6e0] sm:$0xff]
    %v5099 = vld [vmem:[#allocation9 + $0x6e8] sm:$0xff]
    %v5100 = vld [vmem:[#allocation9 + $0x6f0] sm:$0xff]
    %v5101 = vld [vmem:[#allocation9 + $0x6f8] sm:$0xff]
    %v5102 = vld [vmem:[#allocation9 + $0x700] sm:$0xff]
    %v5103 = vld [vmem:[#allocation9 + $0x708] sm:$0xff]
    %v5104 = vld [vmem:[#allocation9 + $0x710] sm:$0xff]
    %v5105 = vld [vmem:[#allocation9 + $0x718] sm:$0xff]
    %v5106 = vld [vmem:[#allocation9 + $0x720] sm:$0xff]
    %v5107 = vld [vmem:[#allocation9 + $0x728] sm:$0xff]
    %v5108 = vld [vmem:[#allocation9 + $0x730] sm:$0xff]
    %v5109 = vld [vmem:[#allocation9 + $0x738] sm:$0xff]
    %v5110 = vld [vmem:[#allocation9 + $0x740] sm:$0xff]
    %v5111 = vld [vmem:[#allocation9 + $0x748] sm:$0xff]
    %v5112 = vld [vmem:[#allocation9 + $0x750] sm:$0xff]
    %v5113 = vld [vmem:[#allocation9 + $0x758] sm:$0xff]
    %v5114 = vld [vmem:[#allocation9 + $0x760] sm:$0xff]
    %v5115 = vld [vmem:[#allocation9 + $0x768] sm:$0xff]
    %v5116 = vld [vmem:[#allocation9 + $0x770] sm:$0xff]
    %v5117 = vld [vmem:[#allocation9 + $0x778] sm:$0xff]
    %v5118 = vld [vmem:[#allocation9 + $0x780] sm:$0xff]
    %v5119 = vld [vmem:[#allocation9 + $0x788] sm:$0xff]
    %v5120 = vld [vmem:[#allocation9 + $0x790] sm:$0xff]
    %v5121 = vld [vmem:[#allocation9 + $0x798] sm:$0xff]
    %v5122 = vld [vmem:[#allocation9 + $0x7a0] sm:$0xff]
    %v5123 = vld [vmem:[#allocation9 + $0x7a8] sm:$0xff]
    %v5124 = vld [vmem:[#allocation9 + $0x7b0] sm:$0xff]
    %v5125 = vld [vmem:[#allocation9 + $0x7b8] sm:$0xff]
    %v5126 = vld [vmem:[#allocation9 + $0x7c0] sm:$0xff]
    %v5127 = vld [vmem:[#allocation9 + $0x7c8] sm:$0xff]
    %v5128 = vld [vmem:[#allocation9 + $0x7d0] sm:$0xff]
    %v5129 = vld [vmem:[#allocation9 + $0x7d8] sm:$0xff]
    %v5130 = vld [vmem:[#allocation9 + $0x7e0] sm:$0xff]
    %v5131 = vld [vmem:[#allocation9 + $0x7e8] sm:$0xff]
    %v5132 = vld [vmem:[#allocation9 + $0x7f0] sm:$0xff]
    %v5133 = vld [vmem:[#allocation9 + $0x7f8] sm:$0xff]
    %v5134 = vld [vmem:[%s8] sm:$0xff]
    %v5136 = vperm.slane %v5134, 0
    %v5137 = vperm.slane %v5134, 1
    %v5138 = vperm.slane %v5134, 2
    %v5139 = vperm.slane %v5134, 3
    %v5140 = vperm.slane %v5134, 4
    %v5141 = vperm.slane %v5134, 5
    %v5142 = vperm.slane %v5134, 6
    %v5143 = vperm.slane %v5134, 7
    %5152 = vmatpush.msra.mxu0 %v4998
    %5153 = vmatpush.msra.mxu0 %v4990
    %5154 = vmatpush.msra.mxu0 %v4982
    %5155 = vmatpush.msra.mxu0 %v4974
    %5156 = vmatpush.msra.mxu0 %v4966
    %5157 = vmatpush.msra.mxu0 %v4958
    %5158 = vmatpush.msra.mxu0 %v4950
    %5159 = vmatpush.msra.mxu0 %v4942
    %5160 = vmatpush.msra.mxu0 %v4934
    %5161 = vmatpush.msra.mxu0 %v4926
    %5162 = vmatpush.msra.mxu0 %v4918
    %5163 = vmatpush.msra.mxu0 %v4910
    %5164 = vmatpush.msra.mxu0 %v4902
    %5165 = vmatpush.msra.mxu0 %v4894
    %5166 = vmatpush.msra.mxu0 %v4886
    %5167 = vmatpush.msra.mxu0 %v4878
    %5168 = vmatmul.f32.gmra.mxu0 %v4874
    %v5169 = vpop.f32.mrf.mxu0
    %v5170 = vadd.f32 %v5136, %v5169
    %5171 = vdwg.mxu0
    %5172 = vmatpush.msra.mxu0 %v5126
    %5173 = vmatpush.msra.mxu0 %v5118
    %5174 = vmatpush.msra.mxu0 %v5110
    %5175 = vmatpush.msra.mxu0 %v5102
    %5176 = vmatpush.msra.mxu0 %v5094
    %5177 = vmatpush.msra.mxu0 %v5086
    %5178 = vmatpush.msra.mxu0 %v5078
    %5179 = vmatpush.msra.mxu0 %v5070
    %5180 = vmatpush.msra.mxu0 %v5062
    %5181 = vmatpush.msra.mxu0 %v5054
    %5182 = vmatpush.msra.mxu0 %v5046
    %5183 = vmatpush.msra.mxu0 %v5038
    %5184 = vmatpush.msra.mxu0 %v5030
    %5185 = vmatpush.msra.mxu0 %v5022
    %5186 = vmatpush.msra.mxu0 %v5014
    %5187 = vmatpush.msra.mxu0 %v5006
    %5188 = vmatmul.f32.gmra.mxu0 %v4875
    %v5189 = vpop.f32.mrf.mxu0
    %v5190 = vadd.f32 %v5170, %v5189
    %5191 = vdwg.mxu0
    %5192 = vmatpush.msra.mxu0 %v4999
    %5193 = vmatpush.msra.mxu0 %v4991
    %5194 = vmatpush.msra.mxu0 %v4983
    %5195 = vmatpush.msra.mxu0 %v4975
    %5196 = vmatpush.msra.mxu0 %v4967
    %5197 = vmatpush.msra.mxu0 %v4959
    %5198 = vmatpush.msra.mxu0 %v4951
    %5199 = vmatpush.msra.mxu0 %v4943
    %5200 = vmatpush.msra.mxu0 %v4935
    %5201 = vmatpush.msra.mxu0 %v4927
    %5202 = vmatpush.msra.mxu0 %v4919
    %5203 = vmatpush.msra.mxu0 %v4911
    %5204 = vmatpush.msra.mxu0 %v4903
    %5205 = vmatpush.msra.mxu0 %v4895
    %5206 = vmatpush.msra.mxu0 %v4887
    %5207 = vmatpush.msra.mxu0 %v4879
    %5208 = vmatmul.f32.gmra.mxu0 %v4874
    %v5209 = vpop.f32.mrf.mxu0
    %v5210 = vadd.f32 %v5137, %v5209
    %5211 = vdwg.mxu0
    %5212 = vmatpush.msra.mxu0 %v5127
    %5213 = vmatpush.msra.mxu0 %v5119
    %5214 = vmatpush.msra.mxu0 %v5111
    %5215 = vmatpush.msra.mxu0 %v5103
    %5216 = vmatpush.msra.mxu0 %v5095
    %5217 = vmatpush.msra.mxu0 %v5087
    %5218 = vmatpush.msra.mxu0 %v5079
    %5219 = vmatpush.msra.mxu0 %v5071
    %5220 = vmatpush.msra.mxu0 %v5063
    %5221 = vmatpush.msra.mxu0 %v5055
    %5222 = vmatpush.msra.mxu0 %v5047
    %5223 = vmatpush.msra.mxu0 %v5039
    %5224 = vmatpush.msra.mxu0 %v5031
    %5225 = vmatpush.msra.mxu0 %v5023
    %5226 = vmatpush.msra.mxu0 %v5015
    %5227 = vmatpush.msra.mxu0 %v5007
    %5228 = vmatmul.f32.gmra.mxu0 %v4875
    %v5229 = vpop.f32.mrf.mxu0
    %v5230 = vadd.f32 %v5210, %v5229
    %5231 = vdwg.mxu0
    %5232 = vmatpush.msra.mxu0 %v5000
    %5233 = vmatpush.msra.mxu0 %v4992
    %5234 = vmatpush.msra.mxu0 %v4984
    %5235 = vmatpush.msra.mxu0 %v4976
    %5236 = vmatpush.msra.mxu0 %v4968
    %5237 = vmatpush.msra.mxu0 %v4960
    %5238 = vmatpush.msra.mxu0 %v4952
    %5239 = vmatpush.msra.mxu0 %v4944
    %5240 = vmatpush.msra.mxu0 %v4936
    %5241 = vmatpush.msra.mxu0 %v4928
    %5242 = vmatpush.msra.mxu0 %v4920
    %5243 = vmatpush.msra.mxu0 %v4912
    %5244 = vmatpush.msra.mxu0 %v4904
    %5245 = vmatpush.msra.mxu0 %v4896
    %5246 = vmatpush.msra.mxu0 %v4888
    %5247 = vmatpush.msra.mxu0 %v4880
    %5248 = vmatmul.f32.gmra.mxu0 %v4874
    %v5249 = vpop.f32.mrf.mxu0
    %v5250 = vadd.f32 %v5138, %v5249
    %5251 = vdwg.mxu0
    %5252 = vmatpush.msra.mxu0 %v5128
    %5253 = vmatpush.msra.mxu0 %v5120
    %5254 = vmatpush.msra.mxu0 %v5112
    %5255 = vmatpush.msra.mxu0 %v5104
    %5256 = vmatpush.msra.mxu0 %v5096
    %5257 = vmatpush.msra.mxu0 %v5088
    %5258 = vmatpush.msra.mxu0 %v5080
    %5259 = vmatpush.msra.mxu0 %v5072
    %5260 = vmatpush.msra.mxu0 %v5064
    %5261 = vmatpush.msra.mxu0 %v5056
    %5262 = vmatpush.msra.mxu0 %v5048
    %5263 = vmatpush.msra.mxu0 %v5040
    %5264 = vmatpush.msra.mxu0 %v5032
    %5265 = vmatpush.msra.mxu0 %v5024
    %5266 = vmatpush.msra.mxu0 %v5016
    %5267 = vmatpush.msra.mxu0 %v5008
    %5268 = vmatmul.f32.gmra.mxu0 %v4875
    %v5269 = vpop.f32.mrf.mxu0
    %v5270 = vadd.f32 %v5250, %v5269
    %5271 = vdwg.mxu0
    %5272 = vmatpush.msra.mxu0 %v5001
    %5273 = vmatpush.msra.mxu0 %v4993
    %5274 = vmatpush.msra.mxu0 %v4985
    %5275 = vmatpush.msra.mxu0 %v4977
    %5276 = vmatpush.msra.mxu0 %v4969
    %5277 = vmatpush.msra.mxu0 %v4961
    %5278 = vmatpush.msra.mxu0 %v4953
    %5279 = vmatpush.msra.mxu0 %v4945
    %5280 = vmatpush.msra.mxu0 %v4937
    %5281 = vmatpush.msra.mxu0 %v4929
    %5282 = vmatpush.msra.mxu0 %v4921
    %5283 = vmatpush.msra.mxu0 %v4913
    %5284 = vmatpush.msra.mxu0 %v4905
    %5285 = vmatpush.msra.mxu0 %v4897
    %5286 = vmatpush.msra.mxu0 %v4889
    %5287 = vmatpush.msra.mxu0 %v4881
    %5288 = vmatmul.f32.gmra.mxu0 %v4874
    %v5289 = vpop.f32.mrf.mxu0
    %v5290 = vadd.f32 %v5139, %v5289
    %5291 = vdwg.mxu0
    %5292 = vmatpush.msra.mxu0 %v5129
    %5293 = vmatpush.msra.mxu0 %v5121
    %5294 = vmatpush.msra.mxu0 %v5113
    %5295 = vmatpush.msra.mxu0 %v5105
    %5296 = vmatpush.msra.mxu0 %v5097
    %5297 = vmatpush.msra.mxu0 %v5089
    %5298 = vmatpush.msra.mxu0 %v5081
    %5299 = vmatpush.msra.mxu0 %v5073
    %5300 = vmatpush.msra.mxu0 %v5065
    %5301 = vmatpush.msra.mxu0 %v5057
    %5302 = vmatpush.msra.mxu0 %v5049
    %5303 = vmatpush.msra.mxu0 %v5041
    %5304 = vmatpush.msra.mxu0 %v5033
    %5305 = vmatpush.msra.mxu0 %v5025
    %5306 = vmatpush.msra.mxu0 %v5017
    %5307 = vmatpush.msra.mxu0 %v5009
    %5308 = vmatmul.f32.gmra.mxu0 %v4875
    %v5309 = vpop.f32.mrf.mxu0
    %v5310 = vadd.f32 %v5290, %v5309
    %5311 = vdwg.mxu0
    %5312 = vmatpush.msra.mxu0 %v5002
    %5313 = vmatpush.msra.mxu0 %v4994
    %5314 = vmatpush.msra.mxu0 %v4986
    %5315 = vmatpush.msra.mxu0 %v4978
    %5316 = vmatpush.msra.mxu0 %v4970
    %5317 = vmatpush.msra.mxu0 %v4962
    %5318 = vmatpush.msra.mxu0 %v4954
    %5319 = vmatpush.msra.mxu0 %v4946
    %5320 = vmatpush.msra.mxu0 %v4938
    %5321 = vmatpush.msra.mxu0 %v4930
    %5322 = vmatpush.msra.mxu0 %v4922
    %5323 = vmatpush.msra.mxu0 %v4914
    %5324 = vmatpush.msra.mxu0 %v4906
    %5325 = vmatpush.msra.mxu0 %v4898
    %5326 = vmatpush.msra.mxu0 %v4890
    %5327 = vmatpush.msra.mxu0 %v4882
    %5328 = vmatmul.f32.gmra.mxu0 %v4874
    %v5329 = vpop.f32.mrf.mxu0
    %v5330 = vadd.f32 %v5140, %v5329
    %5331 = vdwg.mxu0
    %5332 = vmatpush.msra.mxu0 %v5130
    %5333 = vmatpush.msra.mxu0 %v5122
    %5334 = vmatpush.msra.mxu0 %v5114
    %5335 = vmatpush.msra.mxu0 %v5106
    %5336 = vmatpush.msra.mxu0 %v5098
    %5337 = vmatpush.msra.mxu0 %v5090
    %5338 = vmatpush.msra.mxu0 %v5082
    %5339 = vmatpush.msra.mxu0 %v5074
    %5340 = vmatpush.msra.mxu0 %v5066
    %5341 = vmatpush.msra.mxu0 %v5058
    %5342 = vmatpush.msra.mxu0 %v5050
    %5343 = vmatpush.msra.mxu0 %v5042
    %5344 = vmatpush.msra.mxu0 %v5034
    %5345 = vmatpush.msra.mxu0 %v5026
    %5346 = vmatpush.msra.mxu0 %v5018
    %5347 = vmatpush.msra.mxu0 %v5010
    %5348 = vmatmul.f32.gmra.mxu0 %v4875
    %v5349 = vpop.f32.mrf.mxu0
    %v5350 = vadd.f32 %v5330, %v5349
    %5351 = vdwg.mxu0
    %5352 = vmatpush.msra.mxu0 %v5003
    %5353 = vmatpush.msra.mxu0 %v4995
    %5354 = vmatpush.msra.mxu0 %v4987
    %5355 = vmatpush.msra.mxu0 %v4979
    %5356 = vmatpush.msra.mxu0 %v4971
    %5357 = vmatpush.msra.mxu0 %v4963
    %5358 = vmatpush.msra.mxu0 %v4955
    %5359 = vmatpush.msra.mxu0 %v4947
    %5360 = vmatpush.msra.mxu0 %v4939
    %5361 = vmatpush.msra.mxu0 %v4931
    %5362 = vmatpush.msra.mxu0 %v4923
    %5363 = vmatpush.msra.mxu0 %v4915
    %5364 = vmatpush.msra.mxu0 %v4907
    %5365 = vmatpush.msra.mxu0 %v4899
    %5366 = vmatpush.msra.mxu0 %v4891
    %5367 = vmatpush.msra.mxu0 %v4883
    %5368 = vmatmul.f32.gmra.mxu0 %v4874
    %v5369 = vpop.f32.mrf.mxu0
    %v5370 = vadd.f32 %v5141, %v5369
    %5371 = vdwg.mxu0
    %5372 = vmatpush.msra.mxu0 %v5131
    %5373 = vmatpush.msra.mxu0 %v5123
    %5374 = vmatpush.msra.mxu0 %v5115
    %5375 = vmatpush.msra.mxu0 %v5107
    %5376 = vmatpush.msra.mxu0 %v5099
    %5377 = vmatpush.msra.mxu0 %v5091
    %5378 = vmatpush.msra.mxu0 %v5083
    %5379 = vmatpush.msra.mxu0 %v5075
    %5380 = vmatpush.msra.mxu0 %v5067
    %5381 = vmatpush.msra.mxu0 %v5059
    %5382 = vmatpush.msra.mxu0 %v5051
    %5383 = vmatpush.msra.mxu0 %v5043
    %5384 = vmatpush.msra.mxu0 %v5035
    %5385 = vmatpush.msra.mxu0 %v5027
    %5386 = vmatpush.msra.mxu0 %v5019
    %5387 = vmatpush.msra.mxu0 %v5011
    %5388 = vmatmul.f32.gmra.mxu0 %v4875
    %v5389 = vpop.f32.mrf.mxu0
    %v5390 = vadd.f32 %v5370, %v5389
    %5391 = vdwg.mxu0
    %5392 = vmatpush.msra.mxu0 %v5004
    %5393 = vmatpush.msra.mxu0 %v4996
    %5394 = vmatpush.msra.mxu0 %v4988
    %5395 = vmatpush.msra.mxu0 %v4980
    %5396 = vmatpush.msra.mxu0 %v4972
    %5397 = vmatpush.msra.mxu0 %v4964
    %5398 = vmatpush.msra.mxu0 %v4956
    %5399 = vmatpush.msra.mxu0 %v4948
    %5400 = vmatpush.msra.mxu0 %v4940
    %5401 = vmatpush.msra.mxu0 %v4932
    %5402 = vmatpush.msra.mxu0 %v4924
    %5403 = vmatpush.msra.mxu0 %v4916
    %5404 = vmatpush.msra.mxu0 %v4908
    %5405 = vmatpush.msra.mxu0 %v4900
    %5406 = vmatpush.msra.mxu0 %v4892
    %5407 = vmatpush.msra.mxu0 %v4884
    %5408 = vmatmul.f32.gmra.mxu0 %v4874
    %v5409 = vpop.f32.mrf.mxu0
    %v5410 = vadd.f32 %v5142, %v5409
    %5411 = vdwg.mxu0
    %5412 = vmatpush.msra.mxu0 %v5132
    %5413 = vmatpush.msra.mxu0 %v5124
    %5414 = vmatpush.msra.mxu0 %v5116
    %5415 = vmatpush.msra.mxu0 %v5108
    %5416 = vmatpush.msra.mxu0 %v5100
    %5417 = vmatpush.msra.mxu0 %v5092
    %5418 = vmatpush.msra.mxu0 %v5084
    %5419 = vmatpush.msra.mxu0 %v5076
    %5420 = vmatpush.msra.mxu0 %v5068
    %5421 = vmatpush.msra.mxu0 %v5060
    %5422 = vmatpush.msra.mxu0 %v5052
    %5423 = vmatpush.msra.mxu0 %v5044
    %5424 = vmatpush.msra.mxu0 %v5036
    %5425 = vmatpush.msra.mxu0 %v5028
    %5426 = vmatpush.msra.mxu0 %v5020
    %5427 = vmatpush.msra.mxu0 %v5012
    %5428 = vmatmul.f32.gmra.mxu0 %v4875
    %v5429 = vpop.f32.mrf.mxu0
    %v5430 = vadd.f32 %v5410, %v5429
    %5431 = vdwg.mxu0
    %5432 = vmatpush.msra.mxu0 %v5005
    %5433 = vmatpush.msra.mxu0 %v4997
    %5434 = vmatpush.msra.mxu0 %v4989
    %5435 = vmatpush.msra.mxu0 %v4981
    %5436 = vmatpush.msra.mxu0 %v4973
    %5437 = vmatpush.msra.mxu0 %v4965
    %5438 = vmatpush.msra.mxu0 %v4957
    %5439 = vmatpush.msra.mxu0 %v4949
    %5440 = vmatpush.msra.mxu0 %v4941
    %5441 = vmatpush.msra.mxu0 %v4933
    %5442 = vmatpush.msra.mxu0 %v4925
    %5443 = vmatpush.msra.mxu0 %v4917
    %5444 = vmatpush.msra.mxu0 %v4909
    %5445 = vmatpush.msra.mxu0 %v4901
    %5446 = vmatpush.msra.mxu0 %v4893
    %5447 = vmatpush.msra.mxu0 %v4885
    %5448 = vmatmul.f32.gmra.mxu0 %v4874
    %v5449 = vpop.f32.mrf.mxu0
    %v5450 = vadd.f32 %v5143, %v5449
    %5451 = vdwg.mxu0
    %5452 = vmatpush.msra.mxu0 %v5133
    %5453 = vmatpush.msra.mxu0 %v5125
    %5454 = vmatpush.msra.mxu0 %v5117
    %5455 = vmatpush.msra.mxu0 %v5109
    %5456 = vmatpush.msra.mxu0 %v5101
    %5457 = vmatpush.msra.mxu0 %v5093
    %5458 = vmatpush.msra.mxu0 %v5085
    %5459 = vmatpush.msra.mxu0 %v5077
    %5460 = vmatpush.msra.mxu0 %v5069
    %5461 = vmatpush.msra.mxu0 %v5061
    %5462 = vmatpush.msra.mxu0 %v5053
    %5463 = vmatpush.msra.mxu0 %v5045
    %5464 = vmatpush.msra.mxu0 %v5037
    %5465 = vmatpush.msra.mxu0 %v5029
    %5466 = vmatpush.msra.mxu0 %v5021
    %5467 = vmatpush.msra.mxu0 %v5013
    %5468 = vmatmul.f32.gmra.mxu0 %v4875
    %v5469 = vpop.f32.mrf.mxu0
    %v5470 = vadd.f32 %v5450, %v5469
    %5471 = vdwg.mxu0
    %v5472 = vxor.u32 %v5190, 2147483648
    %v5473 = vxor.u32 %v5230, 2147483648
    %v5474 = vmul.f32 %v5472, 1.442695
    %v5475 = vpow.pop %v5474
    %v5476 = vmul.f32 %v5473, 1.442695
    %v5477 = vpow.pop %v5476
    %v5478 = vadd.f32 %v5475, 1.0
    %v5479 = vadd.f32 %v5477, 1.0
    %v5480 = vrcp.pop %v5478
    %v5481 = vmul.f32 %v5478, %v5480
    %v5482 = vsub.f32 1.0, %v5481
    %v5483 = vmul.f32 %v5480, %v5482
    %v5484 = vadd.f32 %v5480, %v5483
    %vm5485 = vweird.f32 %v5478
    %vm5486 = vweird.f32 %v5480
    %vm5487 = vmor %vm5485, %vm5486
    %v5488 = vsel %vm5487, %v5480, %v5484
    %v5489 = vand.u32 2147483647, %v5478
    %vm5490 = vcmp.eq.f32.partialorder %v5489, 8.507059e+37
    %v5491 = vand.u32 %v5478, 2147483648
    %v5492 = vor.u32 1.1754944e-38, %v5491
    %v5493 = vsel %vm5490, %v5492, %v5488
    %v5494 = vmul.f32 1.0, %v5493
    %v5495 = vrcp.pop %v5479
    %v5496 = vmul.f32 %v5479, %v5495
    %v5497 = vsub.f32 1.0, %v5496
    %v5498 = vmul.f32 %v5495, %v5497
    %v5499 = vadd.f32 %v5495, %v5498
    %vm5500 = vweird.f32 %v5479
    %vm5501 = vweird.f32 %v5495
    %vm5502 = vmor %vm5500, %vm5501
    %v5503 = vsel %vm5502, %v5495, %v5499
    %v5504 = vand.u32 2147483647, %v5479
    %vm5505 = vcmp.eq.f32.partialorder %v5504, 8.507059e+37
    %v5506 = vand.u32 %v5479, 2147483648
    %v5507 = vor.u32 1.1754944e-38, %v5506
    %v5508 = vsel %vm5505, %v5507, %v5503
    %v5509 = vmul.f32 1.0, %v5508
    %v5510 = vxor.u32 %v5270, 2147483648
    %v5511 = vxor.u32 %v5310, 2147483648
    %v5512 = vmul.f32 %v5510, 1.442695
    %v5513 = vpow.pop %v5512
    %v5514 = vmul.f32 %v5511, 1.442695
    %v5515 = vpow.pop %v5514
    %v5516 = vadd.f32 %v5513, 1.0
    %v5517 = vadd.f32 %v5515, 1.0
    %v5518 = vrcp.pop %v5516
    %v5519 = vmul.f32 %v5516, %v5518
    %v5520 = vsub.f32 1.0, %v5519
    %v5521 = vmul.f32 %v5518, %v5520
    %v5522 = vadd.f32 %v5518, %v5521
    %vm5523 = vweird.f32 %v5516
    %vm5524 = vweird.f32 %v5518
    %vm5525 = vmor %vm5523, %vm5524
    %v5526 = vsel %vm5525, %v5518, %v5522
    %v5527 = vand.u32 2147483647, %v5516
    %vm5528 = vcmp.eq.f32.partialorder %v5527, 8.507059e+37
    %v5529 = vand.u32 %v5516, 2147483648
    %v5530 = vor.u32 1.1754944e-38, %v5529
    %v5531 = vsel %vm5528, %v5530, %v5526
    %v5532 = vmul.f32 1.0, %v5531
    %v5533 = vrcp.pop %v5517
    %v5534 = vmul.f32 %v5517, %v5533
    %v5535 = vsub.f32 1.0, %v5534
    %v5536 = vmul.f32 %v5533, %v5535
    %v5537 = vadd.f32 %v5533, %v5536
    %vm5538 = vweird.f32 %v5517
    %vm5539 = vweird.f32 %v5533
    %vm5540 = vmor %vm5538, %vm5539
    %v5541 = vsel %vm5540, %v5533, %v5537
    %v5542 = vand.u32 2147483647, %v5517
    %vm5543 = vcmp.eq.f32.partialorder %v5542, 8.507059e+37
    %v5544 = vand.u32 %v5517, 2147483648
    %v5545 = vor.u32 1.1754944e-38, %v5544
    %v5546 = vsel %vm5543, %v5545, %v5541
    %v5547 = vmul.f32 1.0, %v5546
    %v5548 = vtanh.pop %v5350
    %v5549 = vtanh.pop %v5390
    %v5550 = vxor.u32 %v5430, 2147483648
    %v5551 = vxor.u32 %v5470, 2147483648
    %v5552 = vmul.f32 %v5550, 1.442695
    %v5553 = vpow.pop %v5552
    %v5554 = vmul.f32 %v5551, 1.442695
    %v5555 = vpow.pop %v5554
    %v5556 = vadd.f32 %v5553, 1.0
    %v5557 = vadd.f32 %v5555, 1.0
    %v5558 = vrcp.pop %v5556
    %v5559 = vmul.f32 %v5556, %v5558
    %v5560 = vsub.f32 1.0, %v5559
    %v5561 = vmul.f32 %v5558, %v5560
    %v5562 = vadd.f32 %v5558, %v5561
    %vm5563 = vweird.f32 %v5556
    %vm5564 = vweird.f32 %v5558
    %vm5565 = vmor %vm5563, %vm5564
    %v5566 = vsel %vm5565, %v5558, %v5562
    %v5567 = vand.u32 2147483647, %v5556
    %vm5568 = vcmp.eq.f32.partialorder %v5567, 8.507059e+37
    %v5569 = vand.u32 %v5556, 2147483648
    %v5570 = vor.u32 1.1754944e-38, %v5569
    %v5571 = vsel %vm5568, %v5570, %v5566
    %v5572 = vmul.f32 1.0, %v5571
    %v5573 = vrcp.pop %v5557
    %v5574 = vmul.f32 %v5557, %v5573
    %v5575 = vsub.f32 1.0, %v5574
    %v5576 = vmul.f32 %v5573, %v5575
    %v5577 = vadd.f32 %v5573, %v5576
    %vm5578 = vweird.f32 %v5557
    %vm5579 = vweird.f32 %v5573
    %vm5580 = vmor %vm5578, %vm5579
    %v5581 = vsel %vm5580, %v5573, %v5577
    %v5582 = vand.u32 2147483647, %v5557
    %vm5583 = vcmp.eq.f32.partialorder %v5582, 8.507059e+37
    %v5584 = vand.u32 %v5557, 2147483648
    %v5585 = vor.u32 1.1754944e-38, %v5584
    %v5586 = vsel %vm5583, %v5585, %v5581
    %v5587 = vmul.f32 1.0, %v5586
    %v5588 = vmul.f32 %v5532, %v4870
    %v5589 = vmul.f32 %v5547, %v4871
    %v5590 = vmul.f32 %v5494, %v5548
    %v5591 = vmul.f32 %v5509, %v5549
    %v5592 = vadd.f32 %v5588, %v5590
    %v5593 = vadd.f32 %v5589, %v5591
    %v5594 = vtanh.pop %v5592
    %v5595 = vtanh.pop %v5593
    %v5596 = vmul.f32 %v5572, %v5594
    %v5597 = vmul.f32 %v5587, %v5595
    %5598 = vst [vmem:[#allocation3 + $0x30] sm:$0xff] %v5596
    %5599 = vst [vmem:[#allocation3 + $0x38] sm:$0xff] %v5597
    %v5600 = vld [vmem:[#allocation3] sm:$0xff]
    %v5601 = vld [vmem:[#allocation3 + $0x8] sm:$0xff]
    %v5602 = vld [vmem:[#allocation3 + $0x10] sm:$0xff]
    %v5603 = vld [vmem:[#allocation3 + $0x18] sm:$0xff]
    %v5604 = vld [vmem:[#allocation3 + $0x20] sm:$0xff]
    %v5605 = vld [vmem:[#allocation3 + $0x28] sm:$0xff]
    %v5606 = vld [vmem:[#allocation3 + $0x30] sm:$0xff]
    %v5607 = vld [vmem:[#allocation3 + $0x38] sm:$0xff]
    %v5608 = vld [vmem:[#allocation11] sm:$0xff]
    %v5609 = vld [vmem:[#allocation11 + $0x8] sm:$0xff]
    %v5610 = vld [vmem:[#allocation11 + $0x10] sm:$0xff]
    %v5611 = vld [vmem:[#allocation11 + $0x18] sm:$0xff]
    %v5612 = vld [vmem:[#allocation11 + $0x20] sm:$0xff]
    %v5613 = vld [vmem:[#allocation11 + $0x28] sm:$0xff]
    %v5614 = vld [vmem:[#allocation11 + $0x30] sm:$0xff]
    %v5615 = vld [vmem:[#allocation11 + $0x38] sm:$0xff]
    %v5616 = vld [vmem:[#allocation11 + $0x40] sm:$0xff]
    %v5617 = vld [vmem:[#allocation11 + $0x48] sm:$0xff]
    %v5618 = vld [vmem:[#allocation11 + $0x50] sm:$0xff]
    %v5619 = vld [vmem:[#allocation11 + $0x58] sm:$0xff]
    %v5620 = vld [vmem:[#allocation11 + $0x60] sm:$0xff]
    %v5621 = vld [vmem:[#allocation11 + $0x68] sm:$0xff]
    %v5622 = vld [vmem:[#allocation11 + $0x70] sm:$0xff]
    %v5623 = vld [vmem:[#allocation11 + $0x78] sm:$0xff]
    %v5624 = vld [vmem:[#allocation11 + $0x80] sm:$0xff]
    %v5625 = vld [vmem:[#allocation11 + $0x88] sm:$0xff]
    %v5626 = vld [vmem:[#allocation11 + $0x90] sm:$0xff]
    %v5627 = vld [vmem:[#allocation11 + $0x98] sm:$0xff]
    %v5628 = vld [vmem:[#allocation11 + $0xa0] sm:$0xff]
    %v5629 = vld [vmem:[#allocation11 + $0xa8] sm:$0xff]
    %v5630 = vld [vmem:[#allocation11 + $0xb0] sm:$0xff]
    %v5631 = vld [vmem:[#allocation11 + $0xb8] sm:$0xff]
    %v5632 = vld [vmem:[#allocation11 + $0xc0] sm:$0xff]
    %v5633 = vld [vmem:[#allocation11 + $0xc8] sm:$0xff]
    %v5634 = vld [vmem:[#allocation11 + $0xd0] sm:$0xff]
    %v5635 = vld [vmem:[#allocation11 + $0xd8] sm:$0xff]
    %v5636 = vld [vmem:[#allocation11 + $0xe0] sm:$0xff]
    %v5637 = vld [vmem:[#allocation11 + $0xe8] sm:$0xff]
    %v5638 = vld [vmem:[#allocation11 + $0xf0] sm:$0xff]
    %v5639 = vld [vmem:[#allocation11 + $0xf8] sm:$0xff]
    %v5640 = vld [vmem:[%s10] sm:$0x1]
    %v5642 = vperm.slane %v5640, 0
    %5644 = vmatpush.msra.mxu0 %v5623
    %5645 = vmatpush.msra.mxu0 %v5622
    %5646 = vmatpush.msra.mxu0 %v5621
    %5647 = vmatpush.msra.mxu0 %v5620
    %5648 = vmatpush.msra.mxu0 %v5619
    %5649 = vmatpush.msra.mxu0 %v5618
    %5650 = vmatpush.msra.mxu0 %v5617
    %5651 = vmatpush.msra.mxu0 %v5616
    %5652 = vmatpush.msra.mxu0 %v5615
    %5653 = vmatpush.msra.mxu0 %v5614
    %5654 = vmatpush.msra.mxu0 %v5613
    %5655 = vmatpush.msra.mxu0 %v5612
    %5656 = vmatpush.msra.mxu0 %v5611
    %5657 = vmatpush.msra.mxu0 %v5610
    %5658 = vmatpush.msra.mxu0 %v5609
    %5659 = vmatpush.msra.mxu0 %v5608
    %5660 = vmatmul.f32.gmra.mxu0 %v5600
    %v5661 = vpop.f32.mrf.mxu0
    %v5662 = vadd.f32 %v5642, %v5661
    %5663 = vmatmul.f32.gmra.mxu0 %v5602
    %v5664 = vpop.f32.mrf.mxu0
    %v5665 = vadd.f32 %v5642, %v5664
    %5666 = vmatmul.f32.gmra.mxu0 %v5604
    %v5667 = vpop.f32.mrf.mxu0
    %v5668 = vadd.f32 %v5642, %v5667
    %5669 = vmatmul.f32.gmra.mxu0 %v5606
    %v5670 = vpop.f32.mrf.mxu0
    %v5671 = vadd.f32 %v5642, %v5670
    %5672 = vdwg.mxu0
    %5673 = vmatpush.msra.mxu0 %v5639
    %5674 = vmatpush.msra.mxu0 %v5638
    %5675 = vmatpush.msra.mxu0 %v5637
    %5676 = vmatpush.msra.mxu0 %v5636
    %5677 = vmatpush.msra.mxu0 %v5635
    %5678 = vmatpush.msra.mxu0 %v5634
    %5679 = vmatpush.msra.mxu0 %v5633
    %5680 = vmatpush.msra.mxu0 %v5632
    %5681 = vmatpush.msra.mxu0 %v5631
    %5682 = vmatpush.msra.mxu0 %v5630
    %5683 = vmatpush.msra.mxu0 %v5629
    %5684 = vmatpush.msra.mxu0 %v5628
    %5685 = vmatpush.msra.mxu0 %v5627
    %5686 = vmatpush.msra.mxu0 %v5626
    %5687 = vmatpush.msra.mxu0 %v5625
    %5688 = vmatpush.msra.mxu0 %v5624
    %5689 = vmatmul.f32.gmra.mxu0 %v5601
    %v5690 = vpop.f32.mrf.mxu0
    %v5691 = vadd.f32 %v5662, %v5690
    %5692 = vmatmul.f32.gmra.mxu0 %v5603
    %v5693 = vpop.f32.mrf.mxu0
    %v5694 = vadd.f32 %v5665, %v5693
    %5695 = vmatmul.f32.gmra.mxu0 %v5605
    %v5696 = vpop.f32.mrf.mxu0
    %v5697 = vadd.f32 %v5668, %v5696
    %5698 = vmatmul.f32.gmra.mxu0 %v5607
    %v5699 = vpop.f32.mrf.mxu0
    %v5700 = vadd.f32 %v5671, %v5699
    %5701 = vdwg.mxu0
    %5702 = vst [vmem:[%s11] sm:$0xff] %v5691
    %5703 = vst [vmem:[%s11 + $0x8] sm:$0xff] %v5694
    %5704 = vst [vmem:[%s11 + $0x10] sm:$0xff] %v5697
    %5705 = vst [vmem:[%s11 + $0x18] sm:$0xff] %v5700
    // Predicated region
    $region66: #{seq2seq_forward.1} parent=1 // pred_check
      _
    $region67: #{seq2seq_forward.1} parent=1 // pred_check_branch
      %5707 = sbr.rel (0) target = $region69
    $region68: #{seq2seq_forward.1} parent=1 // pred_region
      _
    $region69: #{seq2seq_forward.1} parent=1 // pred_fallthru
      _
    // Predicated region
    $region70: #{seq2seq_forward.1} parent=1 // pred_check
      _
    $region71: #{seq2seq_forward.1} parent=1 // pred_check_branch
      %5709 = sbr.rel (0) target = $region73
    $region72: #{seq2seq_forward.1} parent=1 // pred_region
      _
    $region73: #{seq2seq_forward.1} parent=1 // pred_fallthru
      _
    %5710 = vsyncpa [#allocation5], 1
    %5711 = vsyncpa [#allocation7], 1
    %5712 = vsyncpa [#allocation10], 1

</llo_original>
